<compile_context>
chip_gen: v7x
topology: tpu7x:2x2x1
jax: 0.10.0
libtpu: 0.0.40
codegen_flags: <defaults>
</compile_context>

<pallas_src>
import jax
import jax.numpy as jnp
from jax.experimental import pallas as pl
from jax.experimental.pallas import tpu as pltpu

# Problem sizes (from the PyTorch module / input8)
N, CI, IH, IW = 2, 12, 41, 21
CO, KH, KW = 12, 5, 8
OH, OW = IH + KH - 1, IW + KW - 1            # 45, 28  (stride=1, padding=0)
M = OH * OW                                   # 1260 valid output pixels per (n, co)

# Fused-im2col geometry (strided-flat layout, width PW).
PH, PW = IH + 2 * (KH - 1), IW + 2 * (KW - 1)        # 49, 35 padded spatial dims
FLAT = PH * PW                                        # 1715
L_VALID = (OH - 1) * PW + OW                          # 1568: flat index oh*PW + ow
L_PAD = ((L_VALID + 127) // 128) * 128                # 1664: lane-aligned conv width
KWCI = KW * CI                                        # 96: fused contraction depth per kh
# Width of each kw-pre-shifted copy: must cover the largest kh window.
WX = (((KH - 1) * PW + L_PAD) + 127) // 128 * 128     # 1920


def _model_kernel(x_ref, w_ref, b_ref, valid_ref, out_ref):
    # x_ref:     (N, KW*CI, WX)  bf16  kw-pre-shifted flat padded input
    # w_ref:     (KH, CO, KW*CI) bf16  per-kh fused weight slabs
    # b_ref:     (CO, 1)         f32   bias column
    # valid_ref: (1, L_PAD)      f32   1.0 on real output pixels, 0.0 on gaps/tail
    # out_ref:   (N, CO, 1)      f32   per-(n, co) adaptive-avg-pool result
    v = valid_ref[...]

    pos, cnt, tot = [], [], []
    for n in range(N):
        # --- ConvTranspose2d: 5 large-K dots (K = KW*CI = 96) per batch ---
        # out_flat[co, l] = sum_{kh} W_kh[co, :] @ x_kw[n, :, kh*PW + l]
        acc = None
        for kh in range(KH):
            rhs = x_ref[n, :, pl.ds(kh * PW, L_PAD)]               # (96, L_PAD) bf16
            d = jnp.dot(w_ref[kh], rhs, preferred_element_type=jnp.float32)
            acc = d if acc is None else acc + d
        conv = acc + b_ref[...]                                     # (CO, L_PAD) f32

        # --- where(out > 0, out, out * -0.9) ---
        leaky = jnp.where(conv > 0, conv, conv * jnp.float32(-0.9))

        # --- single-pass masked lane reductions over valid pixels only ---
        pos.append(jnp.sum(jnp.where(leaky > 0, leaky, 0.0) * v,
                           axis=1, keepdims=True))                  # (CO, 1)
        cnt.append(jnp.sum(jnp.where(leaky > 0, 0.0, v),
                           axis=1, keepdims=True))                  # (CO, 1)
        tot.append(jnp.sum(leaky * v, keepdims=True))                # (1, 1)

    # Global scalar sum S over both batches (second where uses out.sum()).
    S = tot[0]
    for n in range(1, N):
        S = S + tot[n]

    # mean_{HW} where(leaky > 0, leaky, S) = (pos_sum + cnt * S) / M
    inv_m = jnp.float32(1.0 / M)
    for n in range(N):
        out_ref[n] = (pos[n] + cnt[n] * S) * inv_m


def model_forward_impl(x, w, b):
    """x: (N, CI, IH, IW) NCHW; w: (CI, CO, KH, KW) ConvTranspose2d layout; b: (CO,)."""
    x = x.astype(jnp.float32)
    w = w.astype(jnp.float32)
    b = b.astype(jnp.float32)

    # Zero-pad spatially by (KH-1, KW-1), flatten row-major with width PW, then
    # pre-stack the KW column-shifted copies so in-kernel only the KH lane
    # shifts (by kh*PW) remain.  ~0.7 MB total in bf16 — trivial HBM.
    pad = jnp.pad(x, ((0, 0), (0, 0), (KH - 1, KH - 1), (KW - 1, KW - 1)))
    x_flat = pad.reshape(N, CI, FLAT)
    x_flat = jnp.pad(x_flat, ((0, 0), (0, 0), (0, WX + KW - 1 - FLAT)))
    x_kw = jnp.stack([x_flat[:, :, kw:kw + WX] for kw in range(KW)], axis=1)
    x_kw = x_kw.reshape(N, KWCI, WX).astype(jnp.bfloat16)

    # Fused per-kh weight slabs of the equivalent full correlation (flipped
    # kernel): w_all[kh, co, kw*CI + ci] = w[ci, co, KH-1-kh, KW-1-kw].
    w_flip = w[:, :, ::-1, ::-1]
    w_all = w_flip.transpose(2, 1, 3, 0).reshape(KH, CO, KWCI).astype(jnp.bfloat16)
    bias_col = b.reshape(CO, 1)

    # Lane-validity mask for the strided-flat output layout (gaps + tail pad).
    lane = jnp.arange(L_PAD, dtype=jnp.int32)
    valid = ((lane < L_VALID) & ((lane % PW) < OW)).astype(jnp.float32).reshape(1, L_PAD)

    out = pl.pallas_call(
        _model_kernel,
        out_shape=jax.ShapeDtypeStruct((N, CO, 1), jnp.float32),
        grid=(1,),
        in_specs=[
            pl.BlockSpec((N, KWCI, WX), lambda i: (0, 0, 0)),    # pre-shifted input
            pl.BlockSpec((KH, CO, KWCI), lambda i: (0, 0, 0)),   # fused weights
            pl.BlockSpec((CO, 1), lambda i: (0, 0)),             # bias column
            pl.BlockSpec((1, L_PAD), lambda i: (0, 0)),          # validity mask
        ],
        out_specs=pl.BlockSpec((N, CO, 1), lambda i: (0, 0, 0)),
        compiler_params=pltpu.CompilerParams(
            dimension_semantics=("arbitrary",),
            vmem_limit_bytes=32 * 1024 * 1024,
        ),
    )(x_kw, w_all, bias_col, valid)

    return out.reshape(N, CO, 1, 1)


model_forward = jax.jit(model_forward_impl)


def reference(x, w, b):
    """Pure-JAX reference, direct scatter form of ConvTranspose2d."""
    out = jnp.zeros((N, CO, OH, OW), jnp.float32)
    for kh in range(KH):
        for kw in range(KW):
            contrib = jnp.einsum('ncij,ck->nkij', x, w[:, :, kh, kw])
            out = out.at[:, :, kh:kh + IH, kw:kw + IW].add(contrib)
    out = out + b[None, :, None, None]
    out = jnp.where(out > 0, out, out * -0.9)
    out = jnp.where(out > 0, out, jnp.sum(out))
    return jnp.mean(out, axis=(2, 3), keepdims=True)             # (N, CO, 1, 1)


if __name__ == "__main__":
    key = jax.random.PRNGKey(0)
    kx, kw_, kb = jax.random.split(key, 3)
    x = jax.random.normal(kx, (N, CI, IH, IW), jnp.float32)
    # ConvTranspose2d weight shape: (in_channels, out_channels, KH, KW)
    w = jax.random.normal(kw_, (CI, CO, KH, KW), jnp.float32) * 0.05
    b = jax.random.normal(kb, (CO,), jnp.float32) * 0.05

    out = jax.block_until_ready(model_forward(x, w, b))
    ref = jax.block_until_ready(reference(x, w, b))

    assert out.shape == (N, CO, 1, 1), out.shape
    diff = float(jnp.max(jnp.abs(out - ref)))
    scale = float(jnp.max(jnp.abs(ref))) + 1e-6
    assert diff / scale < 2e-2, f"mismatch: max|diff|={diff}, scale={scale}"
    print("KERNEL_OK")
</pallas_src>

<mosaic_0001>
module attributes {stable_mosaic.version = 11 : i64} {
  func.func @_model_kernel(%arg0: i32, %arg1: memref<2x96x1920xbf16, #tpu.memory_space<vmem>>, %arg2: memref<5x12x96xbf16, #tpu.memory_space<vmem>>, %arg3: memref<12x1xf32, #tpu.memory_space<vmem>>, %arg4: memref<1x1664xf32, #tpu.memory_space<vmem>>, %arg5: memref<2x12x1xf32, #tpu.memory_space<vmem>>) attributes {dimension_semantics = [#tpu.dimension_semantics<arbitrary>], iteration_bounds = array<i64: 1>, scalar_prefetch = 0 : i64, scratch_operands = 0 : i64, tpu.core_type = #tpu.core_type<tc>, window_params = [{pipeline_mode = #tpu.pipeline_mode<synchronous>, transform_indices = @transform_0, window_bounds = array<i64: 2, 96, 1920>}, {pipeline_mode = #tpu.pipeline_mode<synchronous>, transform_indices = @transform_1, window_bounds = array<i64: 5, 12, 96>}, {pipeline_mode = #tpu.pipeline_mode<synchronous>, transform_indices = @transform_2, window_bounds = array<i64: 12, 1>}, {pipeline_mode = #tpu.pipeline_mode<synchronous>, transform_indices = @transform_3, window_bounds = array<i64: 1, 1664>}, {pipeline_mode = #tpu.pipeline_mode<synchronous>, transform_indices = @transform_4, window_bounds = array<i64: 2, 12, 1>}]} {
    %c0 = arith.constant 0 : index
    %c0_0 = arith.constant 0 : index
    %0 = vector.load %arg4[%c0, %c0_0] : memref<1x1664xf32, #tpu.memory_space<vmem>>, vector<1x1664xf32>
    %c0_1 = arith.constant 0 : index
    %c0_2 = arith.constant 0 : index
    %c0_3 = arith.constant 0 : index
    %1 = vector.load %arg1[%c0_1, %c0_2, %c0_3] : memref<2x96x1920xbf16, #tpu.memory_space<vmem>>, vector<1x96x1664xbf16>
    %2 = vector.shape_cast %1 : vector<1x96x1664xbf16> to vector<96x1664xbf16>
    %c0_4 = arith.constant 0 : index
    %c0_5 = arith.constant 0 : index
    %c0_6 = arith.constant 0 : index
    %3 = vector.load %arg2[%c0_4, %c0_5, %c0_6] : memref<5x12x96xbf16, #tpu.memory_space<vmem>>, vector<1x12x96xbf16>
    %4 = vector.shape_cast %3 : vector<1x12x96xbf16> to vector<12x96xbf16>
    %cst = arith.constant dense<0.000000e+00> : vector<12x1664xf32>
    %5 = tpu.matmul %4, %2, %cst {dimension_numbers = #tpu.dot_dimension_numbers<[1], [0], [0], [1], [0, 0, 1, 1], [], []>} : vector<12x96xbf16>, vector<96x1664xbf16>, vector<12x1664xf32> -> vector<12x1664xf32>
    %c0_7 = arith.constant 0 : index
    %c0_8 = arith.constant 0 : index
    %c35 = arith.constant 35 : index
    %6 = vector.load %arg1[%c0_7, %c0_8, %c35] : memref<2x96x1920xbf16, #tpu.memory_space<vmem>>, vector<1x96x1664xbf16>
    %7 = vector.shape_cast %6 : vector<1x96x1664xbf16> to vector<96x1664xbf16>
    %c1 = arith.constant 1 : index
    %c0_9 = arith.constant 0 : index
    %c0_10 = arith.constant 0 : index
    %8 = vector.load %arg2[%c1, %c0_9, %c0_10] : memref<5x12x96xbf16, #tpu.memory_space<vmem>>, vector<1x12x96xbf16>
    %9 = vector.shape_cast %8 : vector<1x12x96xbf16> to vector<12x96xbf16>
    %cst_11 = arith.constant dense<0.000000e+00> : vector<12x1664xf32>
    %10 = tpu.matmul %9, %7, %cst_11 {dimension_numbers = #tpu.dot_dimension_numbers<[1], [0], [0], [1], [0, 0, 1, 1], [], []>} : vector<12x96xbf16>, vector<96x1664xbf16>, vector<12x1664xf32> -> vector<12x1664xf32>
    %11 = arith.addf %5, %10 : vector<12x1664xf32>
    %c0_12 = arith.constant 0 : index
    %c0_13 = arith.constant 0 : index
    %c70 = arith.constant 70 : index
    %12 = vector.load %arg1[%c0_12, %c0_13, %c70] : memref<2x96x1920xbf16, #tpu.memory_space<vmem>>, vector<1x96x1664xbf16>
    %13 = vector.shape_cast %12 : vector<1x96x1664xbf16> to vector<96x1664xbf16>
    %c2 = arith.constant 2 : index
    %c0_14 = arith.constant 0 : index
    %c0_15 = arith.constant 0 : index
    %14 = vector.load %arg2[%c2, %c0_14, %c0_15] : memref<5x12x96xbf16, #tpu.memory_space<vmem>>, vector<1x12x96xbf16>
    %15 = vector.shape_cast %14 : vector<1x12x96xbf16> to vector<12x96xbf16>
    %cst_16 = arith.constant dense<0.000000e+00> : vector<12x1664xf32>
    %16 = tpu.matmul %15, %13, %cst_16 {dimension_numbers = #tpu.dot_dimension_numbers<[1], [0], [0], [1], [0, 0, 1, 1], [], []>} : vector<12x96xbf16>, vector<96x1664xbf16>, vector<12x1664xf32> -> vector<12x1664xf32>
    %17 = arith.addf %11, %16 : vector<12x1664xf32>
    %c0_17 = arith.constant 0 : index
    %c0_18 = arith.constant 0 : index
    %c105 = arith.constant 105 : index
    %18 = vector.load %arg1[%c0_17, %c0_18, %c105] : memref<2x96x1920xbf16, #tpu.memory_space<vmem>>, vector<1x96x1664xbf16>
    %19 = vector.shape_cast %18 : vector<1x96x1664xbf16> to vector<96x1664xbf16>
    %c3 = arith.constant 3 : index
    %c0_19 = arith.constant 0 : index
    %c0_20 = arith.constant 0 : index
    %20 = vector.load %arg2[%c3, %c0_19, %c0_20] : memref<5x12x96xbf16, #tpu.memory_space<vmem>>, vector<1x12x96xbf16>
    %21 = vector.shape_cast %20 : vector<1x12x96xbf16> to vector<12x96xbf16>
    %cst_21 = arith.constant dense<0.000000e+00> : vector<12x1664xf32>
    %22 = tpu.matmul %21, %19, %cst_21 {dimension_numbers = #tpu.dot_dimension_numbers<[1], [0], [0], [1], [0, 0, 1, 1], [], []>} : vector<12x96xbf16>, vector<96x1664xbf16>, vector<12x1664xf32> -> vector<12x1664xf32>
    %23 = arith.addf %17, %22 : vector<12x1664xf32>
    %c0_22 = arith.constant 0 : index
    %c0_23 = arith.constant 0 : index
    %c140 = arith.constant 140 : index
    %24 = vector.load %arg1[%c0_22, %c0_23, %c140] : memref<2x96x1920xbf16, #tpu.memory_space<vmem>>, vector<1x96x1664xbf16>
    %25 = vector.shape_cast %24 : vector<1x96x1664xbf16> to vector<96x1664xbf16>
    %c4 = arith.constant 4 : index
    %c0_24 = arith.constant 0 : index
    %c0_25 = arith.constant 0 : index
    %26 = vector.load %arg2[%c4, %c0_24, %c0_25] : memref<5x12x96xbf16, #tpu.memory_space<vmem>>, vector<1x12x96xbf16>
    %27 = vector.shape_cast %26 : vector<1x12x96xbf16> to vector<12x96xbf16>
    %cst_26 = arith.constant dense<0.000000e+00> : vector<12x1664xf32>
    %28 = tpu.matmul %27, %25, %cst_26 {dimension_numbers = #tpu.dot_dimension_numbers<[1], [0], [0], [1], [0, 0, 1, 1], [], []>} : vector<12x96xbf16>, vector<96x1664xbf16>, vector<12x1664xf32> -> vector<12x1664xf32>
    %29 = arith.addf %23, %28 : vector<12x1664xf32>
    %c0_27 = arith.constant 0 : index
    %c0_28 = arith.constant 0 : index
    %30 = vector.load %arg3[%c0_27, %c0_28] : memref<12x1xf32, #tpu.memory_space<vmem>>, vector<12x1xf32>
    %31 = vector.broadcast %30 : vector<12x1xf32> to vector<12x1664xf32>
    %32 = arith.addf %29, %31 : vector<12x1664xf32>
    %cst_29 = arith.constant 0.000000e+00 : f32
    %33 = vector.broadcast %cst_29 : f32 to vector<12x1664xf32>
    %34 = arith.cmpf ogt, %32, %33 : vector<12x1664xf32>
    %cst_30 = arith.constant -0.899999976 : f32
    %35 = vector.broadcast %cst_30 : f32 to vector<12x1664xf32>
    %36 = arith.mulf %32, %35 : vector<12x1664xf32>
    %37 = arith.select %34, %32, %36 : vector<12x1664xi1>, vector<12x1664xf32>
    %cst_31 = arith.constant 0.000000e+00 : f32
    %38 = vector.broadcast %cst_31 : f32 to vector<12x1664xf32>
    %39 = arith.cmpf ogt, %37, %38 : vector<12x1664xf32>
    %cst_32 = arith.constant 0.000000e+00 : f32
    %40 = vector.broadcast %cst_32 : f32 to vector<12x1664xf32>
    %41 = arith.select %39, %37, %40 : vector<12x1664xi1>, vector<12x1664xf32>
    %42 = vector.broadcast %0 : vector<1x1664xf32> to vector<12x1664xf32>
    %43 = arith.mulf %41, %42 : vector<12x1664xf32>
    %cst_33 = arith.constant dense<0.000000e+00> : vector<12xf32>
    %44 = vector.multi_reduction <add>, %43, %cst_33 [1] : vector<12x1664xf32> to vector<12xf32>
    %45 = vector.shape_cast %44 : vector<12xf32> to vector<12x1xf32>
    %cst_34 = arith.constant 0.000000e+00 : f32
    %46 = vector.broadcast %cst_34 : f32 to vector<12x1664xf32>
    %47 = arith.cmpf ogt, %37, %46 : vector<12x1664xf32>
    %cst_35 = arith.constant 0.000000e+00 : f32
    %48 = vector.broadcast %cst_35 : f32 to vector<12x1664xf32>
    %49 = vector.shape_cast %0 : vector<1x1664xf32> to vector<1x1664xf32>
    %50 = vector.broadcast %49 : vector<1x1664xf32> to vector<12x1664xf32>
    %51 = arith.select %47, %48, %50 : vector<12x1664xi1>, vector<12x1664xf32>
    %cst_36 = arith.constant dense<0.000000e+00> : vector<12xf32>
    %52 = vector.multi_reduction <add>, %51, %cst_36 [1] : vector<12x1664xf32> to vector<12xf32>
    %53 = vector.shape_cast %52 : vector<12xf32> to vector<12x1xf32>
    %54 = vector.broadcast %0 : vector<1x1664xf32> to vector<12x1664xf32>
    %55 = arith.mulf %37, %54 : vector<12x1664xf32>
    %56 = vector.shape_cast %55 : vector<12x1664xf32> to vector<1x12x1664xf32>
    %cst_37 = arith.constant dense<0.000000e+00> : vector<1xf32>
    %57 = vector.multi_reduction <add>, %56, %cst_37 [1, 2] : vector<1x12x1664xf32> to vector<1xf32>
    %58 = vector.shape_cast %57 : vector<1xf32> to vector<1x1x1xf32>
    %59 = vector.extract %58[0, 0, 0] : f32 from vector<1x1x1xf32>
    %60 = vector.broadcast %59 : f32 to vector<1x1xf32>
    %c1_38 = arith.constant 1 : index
    %c0_39 = arith.constant 0 : index
    %c0_40 = arith.constant 0 : index
    %61 = vector.load %arg1[%c1_38, %c0_39, %c0_40] : memref<2x96x1920xbf16, #tpu.memory_space<vmem>>, vector<1x96x1664xbf16>
    %62 = vector.shape_cast %61 : vector<1x96x1664xbf16> to vector<96x1664xbf16>
    %c0_41 = arith.constant 0 : index
    %c0_42 = arith.constant 0 : index
    %c0_43 = arith.constant 0 : index
    %63 = vector.load %arg2[%c0_41, %c0_42, %c0_43] : memref<5x12x96xbf16, #tpu.memory_space<vmem>>, vector<1x12x96xbf16>
    %64 = vector.shape_cast %63 : vector<1x12x96xbf16> to vector<12x96xbf16>
    %cst_44 = arith.constant dense<0.000000e+00> : vector<12x1664xf32>
    %65 = tpu.matmul %64, %62, %cst_44 {dimension_numbers = #tpu.dot_dimension_numbers<[1], [0], [0], [1], [0, 0, 1, 1], [], []>} : vector<12x96xbf16>, vector<96x1664xbf16>, vector<12x1664xf32> -> vector<12x1664xf32>
    %c1_45 = arith.constant 1 : index
    %c0_46 = arith.constant 0 : index
    %c35_47 = arith.constant 35 : index
    %66 = vector.load %arg1[%c1_45, %c0_46, %c35_47] : memref<2x96x1920xbf16, #tpu.memory_space<vmem>>, vector<1x96x1664xbf16>
    %67 = vector.shape_cast %66 : vector<1x96x1664xbf16> to vector<96x1664xbf16>
    %c1_48 = arith.constant 1 : index
    %c0_49 = arith.constant 0 : index
    %c0_50 = arith.constant 0 : index
    %68 = vector.load %arg2[%c1_48, %c0_49, %c0_50] : memref<5x12x96xbf16, #tpu.memory_space<vmem>>, vector<1x12x96xbf16>
    %69 = vector.shape_cast %68 : vector<1x12x96xbf16> to vector<12x96xbf16>
    %cst_51 = arith.constant dense<0.000000e+00> : vector<12x1664xf32>
    %70 = tpu.matmul %69, %67, %cst_51 {dimension_numbers = #tpu.dot_dimension_numbers<[1], [0], [0], [1], [0, 0, 1, 1], [], []>} : vector<12x96xbf16>, vector<96x1664xbf16>, vector<12x1664xf32> -> vector<12x1664xf32>
    %71 = arith.addf %65, %70 : vector<12x1664xf32>
    %c1_52 = arith.constant 1 : index
    %c0_53 = arith.constant 0 : index
    %c70_54 = arith.constant 70 : index
    %72 = vector.load %arg1[%c1_52, %c0_53, %c70_54] : memref<2x96x1920xbf16, #tpu.memory_space<vmem>>, vector<1x96x1664xbf16>
    %73 = vector.shape_cast %72 : vector<1x96x1664xbf16> to vector<96x1664xbf16>
    %c2_55 = arith.constant 2 : index
    %c0_56 = arith.constant 0 : index
    %c0_57 = arith.constant 0 : index
    %74 = vector.load %arg2[%c2_55, %c0_56, %c0_57] : memref<5x12x96xbf16, #tpu.memory_space<vmem>>, vector<1x12x96xbf16>
    %75 = vector.shape_cast %74 : vector<1x12x96xbf16> to vector<12x96xbf16>
    %cst_58 = arith.constant dense<0.000000e+00> : vector<12x1664xf32>
    %76 = tpu.matmul %75, %73, %cst_58 {dimension_numbers = #tpu.dot_dimension_numbers<[1], [0], [0], [1], [0, 0, 1, 1], [], []>} : vector<12x96xbf16>, vector<96x1664xbf16>, vector<12x1664xf32> -> vector<12x1664xf32>
    %77 = arith.addf %71, %76 : vector<12x1664xf32>
    %c1_59 = arith.constant 1 : index
    %c0_60 = arith.constant 0 : index
    %c105_61 = arith.constant 105 : index
    %78 = vector.load %arg1[%c1_59, %c0_60, %c105_61] : memref<2x96x1920xbf16, #tpu.memory_space<vmem>>, vector<1x96x1664xbf16>
    %79 = vector.shape_cast %78 : vector<1x96x1664xbf16> to vector<96x1664xbf16>
    %c3_62 = arith.constant 3 : index
    %c0_63 = arith.constant 0 : index
    %c0_64 = arith.constant 0 : index
    %80 = vector.load %arg2[%c3_62, %c0_63, %c0_64] : memref<5x12x96xbf16, #tpu.memory_space<vmem>>, vector<1x12x96xbf16>
    %81 = vector.shape_cast %80 : vector<1x12x96xbf16> to vector<12x96xbf16>
    %cst_65 = arith.constant dense<0.000000e+00> : vector<12x1664xf32>
    %82 = tpu.matmul %81, %79, %cst_65 {dimension_numbers = #tpu.dot_dimension_numbers<[1], [0], [0], [1], [0, 0, 1, 1], [], []>} : vector<12x96xbf16>, vector<96x1664xbf16>, vector<12x1664xf32> -> vector<12x1664xf32>
    %83 = arith.addf %77, %82 : vector<12x1664xf32>
    %c1_66 = arith.constant 1 : index
    %c0_67 = arith.constant 0 : index
    %c140_68 = arith.constant 140 : index
    %84 = vector.load %arg1[%c1_66, %c0_67, %c140_68] : memref<2x96x1920xbf16, #tpu.memory_space<vmem>>, vector<1x96x1664xbf16>
    %85 = vector.shape_cast %84 : vector<1x96x1664xbf16> to vector<96x1664xbf16>
    %c4_69 = arith.constant 4 : index
    %c0_70 = arith.constant 0 : index
    %c0_71 = arith.constant 0 : index
    %86 = vector.load %arg2[%c4_69, %c0_70, %c0_71] : memref<5x12x96xbf16, #tpu.memory_space<vmem>>, vector<1x12x96xbf16>
    %87 = vector.shape_cast %86 : vector<1x12x96xbf16> to vector<12x96xbf16>
    %cst_72 = arith.constant dense<0.000000e+00> : vector<12x1664xf32>
    %88 = tpu.matmul %87, %85, %cst_72 {dimension_numbers = #tpu.dot_dimension_numbers<[1], [0], [0], [1], [0, 0, 1, 1], [], []>} : vector<12x96xbf16>, vector<96x1664xbf16>, vector<12x1664xf32> -> vector<12x1664xf32>
    %89 = arith.addf %83, %88 : vector<12x1664xf32>
    %c0_73 = arith.constant 0 : index
    %c0_74 = arith.constant 0 : index
    %90 = vector.load %arg3[%c0_73, %c0_74] : memref<12x1xf32, #tpu.memory_space<vmem>>, vector<12x1xf32>
    %91 = vector.broadcast %90 : vector<12x1xf32> to vector<12x1664xf32>
    %92 = arith.addf %89, %91 : vector<12x1664xf32>
    %cst_75 = arith.constant 0.000000e+00 : f32
    %93 = vector.broadcast %cst_75 : f32 to vector<12x1664xf32>
    %94 = arith.cmpf ogt, %92, %93 : vector<12x1664xf32>
    %cst_76 = arith.constant -0.899999976 : f32
    %95 = vector.broadcast %cst_76 : f32 to vector<12x1664xf32>
    %96 = arith.mulf %92, %95 : vector<12x1664xf32>
    %97 = arith.select %94, %92, %96 : vector<12x1664xi1>, vector<12x1664xf32>
    %cst_77 = arith.constant 0.000000e+00 : f32
    %98 = vector.broadcast %cst_77 : f32 to vector<12x1664xf32>
    %99 = arith.cmpf ogt, %97, %98 : vector<12x1664xf32>
    %cst_78 = arith.constant 0.000000e+00 : f32
    %100 = vector.broadcast %cst_78 : f32 to vector<12x1664xf32>
    %101 = arith.select %99, %97, %100 : vector<12x1664xi1>, vector<12x1664xf32>
    %102 = vector.broadcast %0 : vector<1x1664xf32> to vector<12x1664xf32>
    %103 = arith.mulf %101, %102 : vector<12x1664xf32>
    %cst_79 = arith.constant dense<0.000000e+00> : vector<12xf32>
    %104 = vector.multi_reduction <add>, %103, %cst_79 [1] : vector<12x1664xf32> to vector<12xf32>
    %105 = vector.shape_cast %104 : vector<12xf32> to vector<12x1xf32>
    %cst_80 = arith.constant 0.000000e+00 : f32
    %106 = vector.broadcast %cst_80 : f32 to vector<12x1664xf32>
    %107 = arith.cmpf ogt, %97, %106 : vector<12x1664xf32>
    %cst_81 = arith.constant 0.000000e+00 : f32
    %108 = vector.broadcast %cst_81 : f32 to vector<12x1664xf32>
    %109 = vector.shape_cast %0 : vector<1x1664xf32> to vector<1x1664xf32>
    %110 = vector.broadcast %109 : vector<1x1664xf32> to vector<12x1664xf32>
    %111 = arith.select %107, %108, %110 : vector<12x1664xi1>, vector<12x1664xf32>
    %cst_82 = arith.constant dense<0.000000e+00> : vector<12xf32>
    %112 = vector.multi_reduction <add>, %111, %cst_82 [1] : vector<12x1664xf32> to vector<12xf32>
    %113 = vector.shape_cast %112 : vector<12xf32> to vector<12x1xf32>
    %114 = vector.broadcast %0 : vector<1x1664xf32> to vector<12x1664xf32>
    %115 = arith.mulf %97, %114 : vector<12x1664xf32>
    %116 = vector.shape_cast %115 : vector<12x1664xf32> to vector<1x12x1664xf32>
    %cst_83 = arith.constant dense<0.000000e+00> : vector<1xf32>
    %117 = vector.multi_reduction <add>, %116, %cst_83 [1, 2] : vector<1x12x1664xf32> to vector<1xf32>
    %118 = vector.shape_cast %117 : vector<1xf32> to vector<1x1x1xf32>
    %119 = vector.extract %118[0, 0, 0] : f32 from vector<1x1x1xf32>
    %120 = vector.broadcast %119 : f32 to vector<1x1xf32>
    %121 = arith.addf %60, %120 : vector<1x1xf32>
    %122 = vector.broadcast %121 : vector<1x1xf32> to vector<12x1xf32>
    %123 = arith.mulf %53, %122 : vector<12x1xf32>
    %124 = arith.addf %45, %123 : vector<12x1xf32>
    %cst_84 = arith.constant 7.93650805E-4 : f32
    %125 = vector.broadcast %cst_84 : f32 to vector<12x1xf32>
    %126 = arith.mulf %124, %125 : vector<12x1xf32>
    %c0_85 = arith.constant 0 : index
    %c0_86 = arith.constant 0 : index
    %c0_87 = arith.constant 0 : index
    %127 = vector.load %arg5[%c0_85, %c0_86, %c0_87] : memref<2x12x1xf32, #tpu.memory_space<vmem>>, vector<1x12x1xf32>
    %128 = vector.shape_cast %127 : vector<1x12x1xf32> to vector<12x1xf32>
    %129 = vector.shape_cast %126 : vector<12x1xf32> to vector<1x12x1xf32>
    tpu.vector_store %arg5[%c0_85, %c0_86, %c0_87], %129 {strides = array<i32>} : memref<2x12x1xf32, #tpu.memory_space<vmem>>, vector<1x12x1xf32>,
    %130 = vector.broadcast %121 : vector<1x1xf32> to vector<12x1xf32>
    %131 = arith.mulf %113, %130 : vector<12x1xf32>
    %132 = arith.addf %105, %131 : vector<12x1xf32>
    %cst_88 = arith.constant 7.93650805E-4 : f32
    %133 = vector.broadcast %cst_88 : f32 to vector<12x1xf32>
    %134 = arith.mulf %132, %133 : vector<12x1xf32>
    %c1_89 = arith.constant 1 : index
    %c0_90 = arith.constant 0 : index
    %c0_91 = arith.constant 0 : index
    %135 = vector.load %arg5[%c1_89, %c0_90, %c0_91] : memref<2x12x1xf32, #tpu.memory_space<vmem>>, vector<1x12x1xf32>
    %136 = vector.shape_cast %135 : vector<1x12x1xf32> to vector<12x1xf32>
    %137 = vector.shape_cast %134 : vector<12x1xf32> to vector<1x12x1xf32>
    tpu.vector_store %arg5[%c1_89, %c0_90, %c0_91], %137 {strides = array<i32>} : memref<2x12x1xf32, #tpu.memory_space<vmem>>, vector<1x12x1xf32>,
    return
  }
  func.func @transform_0(%arg0: i32) -> (i32, i32, i32) {
    %c0_i32 = arith.constant 0 : i32
    %c0_i32_0 = arith.constant 0 : i32
    %c0_i32_1 = arith.constant 0 : i32
    %c0_i32_2 = arith.constant 0 : i32
    return %c0_i32, %c0_i32_0, %c0_i32_1 : i32, i32, i32
  }
  func.func @transform_1(%arg0: i32) -> (i32, i32, i32) {
    %c0_i32 = arith.constant 0 : i32
    %c0_i32_0 = arith.constant 0 : i32
    %c0_i32_1 = arith.constant 0 : i32
    %c0_i32_2 = arith.constant 0 : i32
    return %c0_i32, %c0_i32_0, %c0_i32_1 : i32, i32, i32
  }
  func.func @transform_2(%arg0: i32) -> (i32, i32) {
    %c0_i32 = arith.constant 0 : i32
    %c0_i32_0 = arith.constant 0 : i32
    %c0_i32_1 = arith.constant 0 : i32
    return %c0_i32, %c0_i32_0 : i32, i32
  }
  func.func @transform_3(%arg0: i32) -> (i32, i32) {
    %c0_i32 = arith.constant 0 : i32
    %c0_i32_0 = arith.constant 0 : i32
    %c0_i32_1 = arith.constant 0 : i32
    return %c0_i32, %c0_i32_0 : i32, i32
  }
  func.func @transform_4(%arg0: i32) -> (i32, i32, i32) {
    %c0_i32 = arith.constant 0 : i32
    %c0_i32_0 = arith.constant 0 : i32
    %c0_i32_1 = arith.constant 0 : i32
    %c0_i32_2 = arith.constant 0 : i32
    return %c0_i32, %c0_i32_0, %c0_i32_1 : i32, i32, i32
  }
}

</mosaic_0001>

<llo_original>
// kernel: model_forward_impl.1
$region0: #{model_forward_impl.1}
  #allocation0 [shape = 'u32[]', space=smem, size = 0x4, offset = 0x4, fixed_abs, tag = 'smem constant byte address 0x4 - core index']
  #allocation1 [shape = 'u32[144,128]{1,0:T(1,128)}', space=vmem, size = 0x12000, scoped, tag = 'internal scratch']
  %s0 = inlined_call_operand.vmem [shape: bf16[2,96,1920], index: 0, kind: input, shape index: {}]
  %s1 = inlined_call_operand.vmem [shape: bf16[5,12,96], index: 1, kind: input, shape index: {}]
  %s2 = inlined_call_operand.vmem [shape: f32[12,1], index: 2, kind: input, shape index: {}]
  %s3 = inlined_call_operand.vmem [shape: f32[1,1664], index: 3, kind: input, shape index: {}]
  %s4 = inlined_call_operand.vmem [shape: f32[2,12,1], index: 4, kind: output, shape index: {}]
  %s5 = sld [smem:[#allocation0]]
  $region26: #{model_forward_impl.1} parent=0
    _
  %s7 = ssub.s32 1, %s5
  %s8 = scalar_select 0, %s7, %s5
  // Predicated region
  $region2: #{model_forward_impl.1} parent=0 // pred_check
    _
  $region3: #{model_forward_impl.1} parent=0 // pred_check_branch
    %10 = sbr.rel (0) target = $region5
  $region4: #{model_forward_impl.1} parent=0 // pred_region
    _
  $region5: #{model_forward_impl.1} parent=0 // pred_fallthru
    _
  // Predicated region
  $region6: #{model_forward_impl.1} parent=0 // pred_check
    _
  $region7: #{model_forward_impl.1} parent=0 // pred_check_branch
    %12 = sbr.rel (0) target = $region9
  $region8: #{model_forward_impl.1} parent=0 // pred_region
    _
  $region9: #{model_forward_impl.1} parent=0 // pred_fallthru
    _
  // Predicated region
  $region10: #{model_forward_impl.1} parent=0 // pred_check
    _
  $region11: #{model_forward_impl.1} parent=0 // pred_check_branch
    %14 = sbr.rel (0) target = $region13
  $region12: #{model_forward_impl.1} parent=0 // pred_region
    _
  $region13: #{model_forward_impl.1} parent=0 // pred_fallthru
    _
  // Predicated region
  $region14: #{model_forward_impl.1} parent=0 // pred_check
    _
  $region15: #{model_forward_impl.1} parent=0 // pred_check_branch
    %16 = sbr.rel (0) target = $region17
  $region16: #{model_forward_impl.1} parent=0 // pred_region
    _
  $region17: #{model_forward_impl.1} parent=0 // pred_fallthru
    _
  %v18 = vld [vmem:[%s3] sm:$0xff]
  %v19 = vld [vmem:[%s3 + $0x8] sm:$0x1f]
  %v20 = vld [vmem:[%s0] sm:$0xff]
  %v21 = vld [vmem:[%s0 + $0x8] sm:$0xff]
  %v22 = vld [vmem:[%s0 + $0x10] sm:$0xff]
  %v23 = vld [vmem:[%s0 + $0x18] sm:$0xff]
  %v24 = vld [vmem:[%s0 + $0x20] sm:$0xff]
  %v25 = vld [vmem:[%s0 + $0x28] sm:$0xff]
  %v26 = vld [vmem:[%s0 + $0x30] sm:$0xf]
  %v27 = vld [vmem:[%s0 + $0x3c] sm:$0xff]
  %v28 = vld [vmem:[%s0 + $0x44] sm:$0xff]
  %v29 = vld [vmem:[%s0 + $0x4c] sm:$0xff]
  %v30 = vld [vmem:[%s0 + $0x54] sm:$0xff]
  %v31 = vld [vmem:[%s0 + $0x5c] sm:$0xff]
  %v32 = vld [vmem:[%s0 + $0x64] sm:$0xff]
  %v33 = vld [vmem:[%s0 + $0x6c] sm:$0xf]
  %v34 = vld [vmem:[%s0 + $0x78] sm:$0xff]
  %v35 = vld [vmem:[%s0 + $0x80] sm:$0xff]
  %v36 = vld [vmem:[%s0 + $0x88] sm:$0xff]
  %v37 = vld [vmem:[%s0 + $0x90] sm:$0xff]
  %v38 = vld [vmem:[%s0 + $0x98] sm:$0xff]
  %v39 = vld [vmem:[%s0 + $0xa0] sm:$0xff]
  %v40 = vld [vmem:[%s0 + $0xa8] sm:$0xf]
  %v41 = vld [vmem:[%s0 + $0xb4] sm:$0xff]
  %v42 = vld [vmem:[%s0 + $0xbc] sm:$0xff]
  %v43 = vld [vmem:[%s0 + $0xc4] sm:$0xff]
  %v44 = vld [vmem:[%s0 + $0xcc] sm:$0xff]
  %v45 = vld [vmem:[%s0 + $0xd4] sm:$0xff]
  %v46 = vld [vmem:[%s0 + $0xdc] sm:$0xff]
  %v47 = vld [vmem:[%s0 + $0xe4] sm:$0xf]
  %v48 = vld [vmem:[%s0 + $0xf0] sm:$0xff]
  %v49 = vld [vmem:[%s0 + $0xf8] sm:$0xff]
  %v50 = vld [vmem:[%s0 + $0x100] sm:$0xff]
  %v51 = vld [vmem:[%s0 + $0x108] sm:$0xff]
  %v52 = vld [vmem:[%s0 + $0x110] sm:$0xff]
  %v53 = vld [vmem:[%s0 + $0x118] sm:$0xff]
  %v54 = vld [vmem:[%s0 + $0x120] sm:$0xf]
  %v55 = vld [vmem:[%s0 + $0x12c] sm:$0xff]
  %v56 = vld [vmem:[%s0 + $0x134] sm:$0xff]
  %v57 = vld [vmem:[%s0 + $0x13c] sm:$0xff]
  %v58 = vld [vmem:[%s0 + $0x144] sm:$0xff]
  %v59 = vld [vmem:[%s0 + $0x14c] sm:$0xff]
  %v60 = vld [vmem:[%s0 + $0x154] sm:$0xff]
  %v61 = vld [vmem:[%s0 + $0x15c] sm:$0xf]
  %v62 = vld [vmem:[%s0 + $0x168] sm:$0xff]
  %v63 = vld [vmem:[%s0 + $0x170] sm:$0xff]
  %v64 = vld [vmem:[%s0 + $0x178] sm:$0xff]
  %v65 = vld [vmem:[%s0 + $0x180] sm:$0xff]
  %v66 = vld [vmem:[%s0 + $0x188] sm:$0xff]
  %v67 = vld [vmem:[%s0 + $0x190] sm:$0xff]
  %v68 = vld [vmem:[%s0 + $0x198] sm:$0xf]
  %v69 = vld [vmem:[%s0 + $0x1a4] sm:$0xff]
  %v70 = vld [vmem:[%s0 + $0x1ac] sm:$0xff]
  %v71 = vld [vmem:[%s0 + $0x1b4] sm:$0xff]
  %v72 = vld [vmem:[%s0 + $0x1bc] sm:$0xff]
  %v73 = vld [vmem:[%s0 + $0x1c4] sm:$0xff]
  %v74 = vld [vmem:[%s0 + $0x1cc] sm:$0xff]
  %v75 = vld [vmem:[%s0 + $0x1d4] sm:$0xf]
  %v76 = vld [vmem:[%s0 + $0x1e0] sm:$0xff]
  %v77 = vld [vmem:[%s0 + $0x1e8] sm:$0xff]
  %v78 = vld [vmem:[%s0 + $0x1f0] sm:$0xff]
  %v79 = vld [vmem:[%s0 + $0x1f8] sm:$0xff]
  %v80 = vld [vmem:[%s0 + $0x200] sm:$0xff]
  %v81 = vld [vmem:[%s0 + $0x208] sm:$0xff]
  %v82 = vld [vmem:[%s0 + $0x210] sm:$0xf]
  %v83 = vld [vmem:[%s0 + $0x21c] sm:$0xff]
  %v84 = vld [vmem:[%s0 + $0x224] sm:$0xff]
  %v85 = vld [vmem:[%s0 + $0x22c] sm:$0xff]
  %v86 = vld [vmem:[%s0 + $0x234] sm:$0xff]
  %v87 = vld [vmem:[%s0 + $0x23c] sm:$0xff]
  %v88 = vld [vmem:[%s0 + $0x244] sm:$0xff]
  %v89 = vld [vmem:[%s0 + $0x24c] sm:$0xf]
  %v90 = vld [vmem:[%s0 + $0x258] sm:$0xff]
  %v91 = vld [vmem:[%s0 + $0x260] sm:$0xff]
  %v92 = vld [vmem:[%s0 + $0x268] sm:$0xff]
  %v93 = vld [vmem:[%s0 + $0x270] sm:$0xff]
  %v94 = vld [vmem:[%s0 + $0x278] sm:$0xff]
  %v95 = vld [vmem:[%s0 + $0x280] sm:$0xff]
  %v96 = vld [vmem:[%s0 + $0x288] sm:$0xf]
  %v97 = vld [vmem:[%s0 + $0x294] sm:$0xff]
  %v98 = vld [vmem:[%s0 + $0x29c] sm:$0xff]
  %v99 = vld [vmem:[%s0 + $0x2a4] sm:$0xff]
  %v100 = vld [vmem:[%s0 + $0x2ac] sm:$0xff]
  %v101 = vld [vmem:[%s0 + $0x2b4] sm:$0xff]
  %v102 = vld [vmem:[%s0 + $0x2bc] sm:$0xff]
  %v103 = vld [vmem:[%s0 + $0x2c4] sm:$0xf]
  %v104 = vld [vmem:[%s1] sm:$0xf]
  %v105 = vld [vmem:[%s1 + $0x4] sm:$0x3]
  %v106 = vld [vmem:[%s0 + $0x30] sm:$0xff]
  %v107 = vld [vmem:[%s0 + $0x6c] sm:$0xff]
  %v108 = vld [vmem:[%s0 + $0xa8] sm:$0xff]
  %v109 = vld [vmem:[%s0 + $0xe4] sm:$0xff]
  %v110 = vld [vmem:[%s0 + $0x120] sm:$0xff]
  %v111 = vld [vmem:[%s0 + $0x15c] sm:$0xff]
  %v112 = vld [vmem:[%s0 + $0x198] sm:$0xff]
  %v113 = vld [vmem:[%s0 + $0x1d4] sm:$0xff]
  %v114 = vld [vmem:[%s0 + $0x210] sm:$0xff]
  %v115 = vld [vmem:[%s0 + $0x24c] sm:$0xff]
  %v116 = vld [vmem:[%s0 + $0x288] sm:$0xff]
  %v117 = vld [vmem:[%s0 + $0x2c4] sm:$0xff]
  %s118 = scalar_lea.vmem %s1, 8
  %v119 = vld [vmem:[%s118] sm:$0xf]
  %v120 = vld [vmem:[%s118 + $0x4] sm:$0x3]
  %v123 = vunpack.c.l.b16 %v119
  %v124 = vunpack.c.l.b16 %v120
  %v125 = vpack.c.b16 %v124, %v123
  %v210 = vunpack.c.l.b16 %v20
  %v211 = vunpack.c.h.b16 %v20
  %v212 = vunpack.c.l.b16 %v21
  %v213 = vunpack.c.h.b16 %v21
  %v214 = vunpack.c.l.b16 %v22
  %v215 = vunpack.c.h.b16 %v22
  %v216 = vunpack.c.l.b16 %v23
  %v217 = vunpack.c.h.b16 %v23
  %v218 = vunpack.c.l.b16 %v24
  %v219 = vunpack.c.h.b16 %v24
  %v220 = vunpack.c.l.b16 %v25
  %v221 = vunpack.c.h.b16 %v25
  %v222 = vunpack.c.l.b16 %v106
  %v223 = vunpack.c.h.b16 %v106
  %v224 = vunpack.c.l.b16 %v27
  %v225 = vunpack.c.h.b16 %v27
  %v226 = vunpack.c.l.b16 %v28
  %v227 = vunpack.c.h.b16 %v28
  %v228 = vunpack.c.l.b16 %v29
  %v229 = vunpack.c.h.b16 %v29
  %v230 = vunpack.c.l.b16 %v30
  %v231 = vunpack.c.h.b16 %v30
  %v232 = vunpack.c.l.b16 %v31
  %v233 = vunpack.c.h.b16 %v31
  %v234 = vunpack.c.l.b16 %v32
  %v235 = vunpack.c.h.b16 %v32
  %v236 = vunpack.c.l.b16 %v107
  %v237 = vunpack.c.h.b16 %v107
  %v238 = vunpack.c.l.b16 %v34
  %v239 = vunpack.c.h.b16 %v34
  %v240 = vunpack.c.l.b16 %v35
  %v241 = vunpack.c.h.b16 %v35
  %v242 = vunpack.c.l.b16 %v36
  %v243 = vunpack.c.h.b16 %v36
  %v244 = vunpack.c.l.b16 %v37
  %v245 = vunpack.c.h.b16 %v37
  %v246 = vunpack.c.l.b16 %v38
  %v247 = vunpack.c.h.b16 %v38
  %v248 = vunpack.c.l.b16 %v39
  %v249 = vunpack.c.h.b16 %v39
  %v250 = vunpack.c.l.b16 %v108
  %v251 = vunpack.c.h.b16 %v108
  %v252 = vunpack.c.l.b16 %v41
  %v253 = vunpack.c.h.b16 %v41
  %v254 = vunpack.c.l.b16 %v42
  %v255 = vunpack.c.h.b16 %v42
  %v256 = vunpack.c.l.b16 %v43
  %v257 = vunpack.c.h.b16 %v43
  %v258 = vunpack.c.l.b16 %v44
  %v259 = vunpack.c.h.b16 %v44
  %v260 = vunpack.c.l.b16 %v45
  %v261 = vunpack.c.h.b16 %v45
  %v262 = vunpack.c.l.b16 %v46
  %v263 = vunpack.c.h.b16 %v46
  %v264 = vunpack.c.l.b16 %v109
  %v265 = vunpack.c.h.b16 %v109
  %v266 = vunpack.c.l.b16 %v48
  %v267 = vunpack.c.h.b16 %v48
  %v268 = vunpack.c.l.b16 %v49
  %v269 = vunpack.c.h.b16 %v49
  %v270 = vunpack.c.l.b16 %v50
  %v271 = vunpack.c.h.b16 %v50
  %v272 = vunpack.c.l.b16 %v51
  %v273 = vunpack.c.h.b16 %v51
  %v274 = vunpack.c.l.b16 %v52
  %v275 = vunpack.c.h.b16 %v52
  %v276 = vunpack.c.l.b16 %v53
  %v277 = vunpack.c.h.b16 %v53
  %v278 = vunpack.c.l.b16 %v110
  %v279 = vunpack.c.h.b16 %v110
  %v280 = vunpack.c.l.b16 %v55
  %v281 = vunpack.c.h.b16 %v55
  %v282 = vunpack.c.l.b16 %v56
  %v283 = vunpack.c.h.b16 %v56
  %v284 = vunpack.c.l.b16 %v57
  %v285 = vunpack.c.h.b16 %v57
  %v286 = vunpack.c.l.b16 %v58
  %v287 = vunpack.c.h.b16 %v58
  %v288 = vunpack.c.l.b16 %v59
  %v289 = vunpack.c.h.b16 %v59
  %v290 = vunpack.c.l.b16 %v60
  %v291 = vunpack.c.h.b16 %v60
  %v292 = vunpack.c.l.b16 %v111
  %v293 = vunpack.c.h.b16 %v111
  %v294 = vunpack.c.l.b16 %v62
  %v295 = vunpack.c.h.b16 %v62
  %v296 = vunpack.c.l.b16 %v63
  %v297 = vunpack.c.h.b16 %v63
  %v298 = vunpack.c.l.b16 %v64
  %v299 = vunpack.c.h.b16 %v64
  %v300 = vunpack.c.l.b16 %v65
  %v301 = vunpack.c.h.b16 %v65
  %v302 = vunpack.c.l.b16 %v66
  %v303 = vunpack.c.h.b16 %v66
  %v304 = vunpack.c.l.b16 %v67
  %v305 = vunpack.c.h.b16 %v67
  %v306 = vunpack.c.l.b16 %v112
  %v307 = vunpack.c.h.b16 %v112
  %v308 = vunpack.c.l.b16 %v69
  %v309 = vunpack.c.h.b16 %v69
  %v310 = vunpack.c.l.b16 %v70
  %v311 = vunpack.c.h.b16 %v70
  %v312 = vunpack.c.l.b16 %v71
  %v313 = vunpack.c.h.b16 %v71
  %v314 = vunpack.c.l.b16 %v72
  %v315 = vunpack.c.h.b16 %v72
  %v316 = vunpack.c.l.b16 %v73
  %v317 = vunpack.c.h.b16 %v73
  %v318 = vunpack.c.l.b16 %v74
  %v319 = vunpack.c.h.b16 %v74
  %v320 = vunpack.c.l.b16 %v113
  %v321 = vunpack.c.h.b16 %v113
  %v322 = vunpack.c.l.b16 %v76
  %v323 = vunpack.c.h.b16 %v76
  %v324 = vunpack.c.l.b16 %v77
  %v325 = vunpack.c.h.b16 %v77
  %v326 = vunpack.c.l.b16 %v78
  %v327 = vunpack.c.h.b16 %v78
  %v328 = vunpack.c.l.b16 %v79
  %v329 = vunpack.c.h.b16 %v79
  %v330 = vunpack.c.l.b16 %v80
  %v331 = vunpack.c.h.b16 %v80
  %v332 = vunpack.c.l.b16 %v81
  %v333 = vunpack.c.h.b16 %v81
  %v334 = vunpack.c.l.b16 %v114
  %v335 = vunpack.c.h.b16 %v114
  %v336 = vunpack.c.l.b16 %v83
  %v337 = vunpack.c.h.b16 %v83
  %v338 = vunpack.c.l.b16 %v84
  %v339 = vunpack.c.h.b16 %v84
  %v340 = vunpack.c.l.b16 %v85
  %v341 = vunpack.c.h.b16 %v85
  %v342 = vunpack.c.l.b16 %v86
  %v343 = vunpack.c.h.b16 %v86
  %v344 = vunpack.c.l.b16 %v87
  %v345 = vunpack.c.h.b16 %v87
  %v346 = vunpack.c.l.b16 %v88
  %v347 = vunpack.c.h.b16 %v88
  %v348 = vunpack.c.l.b16 %v115
  %v349 = vunpack.c.h.b16 %v115
  %v350 = vunpack.c.l.b16 %v90
  %v351 = vunpack.c.h.b16 %v90
  %v352 = vunpack.c.l.b16 %v91
  %v353 = vunpack.c.h.b16 %v91
  %v354 = vunpack.c.l.b16 %v92
  %v355 = vunpack.c.h.b16 %v92
  %v356 = vunpack.c.l.b16 %v93
  %v357 = vunpack.c.h.b16 %v93
  %v358 = vunpack.c.l.b16 %v94
  %v359 = vunpack.c.h.b16 %v94
  %v360 = vunpack.c.l.b16 %v95
  %v361 = vunpack.c.h.b16 %v95
  %v362 = vunpack.c.l.b16 %v116
  %v363 = vunpack.c.h.b16 %v116
  %v364 = vunpack.c.l.b16 %v97
  %v365 = vunpack.c.h.b16 %v97
  %v366 = vunpack.c.l.b16 %v98
  %v367 = vunpack.c.h.b16 %v98
  %v368 = vunpack.c.l.b16 %v99
  %v369 = vunpack.c.h.b16 %v99
  %v370 = vunpack.c.l.b16 %v100
  %v371 = vunpack.c.h.b16 %v100
  %v372 = vunpack.c.l.b16 %v101
  %v373 = vunpack.c.h.b16 %v101
  %v374 = vunpack.c.l.b16 %v102
  %v375 = vunpack.c.h.b16 %v102
  %v376 = vunpack.c.l.b16 %v117
  %v377 = vunpack.c.h.b16 %v117
  %v378 = vpack.c.b16 %v224, %v210
  %v379 = vpack.c.b16 %v225, %v211
  %v380 = vpack.c.b16 %v226, %v212
  %v381 = vpack.c.b16 %v227, %v213
  %v382 = vpack.c.b16 %v228, %v214
  %v383 = vpack.c.b16 %v229, %v215
  %v384 = vpack.c.b16 %v230, %v216
  %v385 = vpack.c.b16 %v231, %v217
  %v386 = vpack.c.b16 %v232, %v218
  %v387 = vpack.c.b16 %v233, %v219
  %v388 = vpack.c.b16 %v234, %v220
  %v389 = vpack.c.b16 %v235, %v221
  %v390 = vpack.c.b16 %v236, %v222
  %v391 = vpack.c.b16 %v237, %v223
  %v392 = vpack.c.b16 %v252, %v238
  %v393 = vpack.c.b16 %v253, %v239
  %v394 = vpack.c.b16 %v254, %v240
  %v395 = vpack.c.b16 %v255, %v241
  %v396 = vpack.c.b16 %v256, %v242
  %v397 = vpack.c.b16 %v257, %v243
  %v398 = vpack.c.b16 %v258, %v244
  %v399 = vpack.c.b16 %v259, %v245
  %v400 = vpack.c.b16 %v260, %v246
  %v401 = vpack.c.b16 %v261, %v247
  %v402 = vpack.c.b16 %v262, %v248
  %v403 = vpack.c.b16 %v263, %v249
  %v404 = vpack.c.b16 %v264, %v250
  %v405 = vpack.c.b16 %v265, %v251
  %v406 = vpack.c.b16 %v280, %v266
  %v407 = vpack.c.b16 %v281, %v267
  %v408 = vpack.c.b16 %v282, %v268
  %v409 = vpack.c.b16 %v283, %v269
  %v410 = vpack.c.b16 %v284, %v270
  %v411 = vpack.c.b16 %v285, %v271
  %v412 = vpack.c.b16 %v286, %v272
  %v413 = vpack.c.b16 %v287, %v273
  %v414 = vpack.c.b16 %v288, %v274
  %v415 = vpack.c.b16 %v289, %v275
  %v416 = vpack.c.b16 %v290, %v276
  %v417 = vpack.c.b16 %v291, %v277
  %v418 = vpack.c.b16 %v292, %v278
  %v419 = vpack.c.b16 %v293, %v279
  %v420 = vpack.c.b16 %v308, %v294
  %v421 = vpack.c.b16 %v309, %v295
  %v422 = vpack.c.b16 %v310, %v296
  %v423 = vpack.c.b16 %v311, %v297
  %v424 = vpack.c.b16 %v312, %v298
  %v425 = vpack.c.b16 %v313, %v299
  %v426 = vpack.c.b16 %v314, %v300
  %v427 = vpack.c.b16 %v315, %v301
  %v428 = vpack.c.b16 %v316, %v302
  %v429 = vpack.c.b16 %v317, %v303
  %v430 = vpack.c.b16 %v318, %v304
  %v431 = vpack.c.b16 %v319, %v305
  %v432 = vpack.c.b16 %v320, %v306
  %v433 = vpack.c.b16 %v321, %v307
  %v434 = vpack.c.b16 %v336, %v322
  %v435 = vpack.c.b16 %v337, %v323
  %v436 = vpack.c.b16 %v338, %v324
  %v437 = vpack.c.b16 %v339, %v325
  %v438 = vpack.c.b16 %v340, %v326
  %v439 = vpack.c.b16 %v341, %v327
  %v440 = vpack.c.b16 %v342, %v328
  %v441 = vpack.c.b16 %v343, %v329
  %v442 = vpack.c.b16 %v344, %v330
  %v443 = vpack.c.b16 %v345, %v331
  %v444 = vpack.c.b16 %v346, %v332
  %v445 = vpack.c.b16 %v347, %v333
  %v446 = vpack.c.b16 %v348, %v334
  %v447 = vpack.c.b16 %v349, %v335
  %v448 = vpack.c.b16 %v364, %v350
  %v449 = vpack.c.b16 %v365, %v351
  %v450 = vpack.c.b16 %v366, %v352
  %v451 = vpack.c.b16 %v367, %v353
  %v452 = vpack.c.b16 %v368, %v354
  %v453 = vpack.c.b16 %v369, %v355
  %v454 = vpack.c.b16 %v370, %v356
  %v455 = vpack.c.b16 %v371, %v357
  %v456 = vpack.c.b16 %v372, %v358
  %v457 = vpack.c.b16 %v373, %v359
  %v458 = vpack.c.b16 %v374, %v360
  %v459 = vpack.c.b16 %v375, %v361
  %v460 = vpack.c.b16 %v376, %v362
  %v461 = vpack.c.b16 %v377, %v363
  %462 = vrot.lane.b32.xlu0 %v378, 93
  %v463 = vpop.permute.xlu0 %462
  %464 = vrot.lane.b32.xlu0 %v379, 93
  %v465 = vpop.permute.xlu0 %464
  %466 = vrot.lane.b32.xlu0 %v380, 93
  %v467 = vpop.permute.xlu0 %466
  %468 = vrot.lane.b32.xlu0 %v381, 93
  %v469 = vpop.permute.xlu0 %468
  %470 = vrot.lane.b32.xlu0 %v382, 93
  %v471 = vpop.permute.xlu0 %470
  %472 = vrot.lane.b32.xlu0 %v383, 93
  %v473 = vpop.permute.xlu0 %472
  %474 = vrot.lane.b32.xlu0 %v384, 93
  %v475 = vpop.permute.xlu0 %474
  %476 = vrot.lane.b32.xlu0 %v385, 93
  %v477 = vpop.permute.xlu0 %476
  %478 = vrot.lane.b32.xlu0 %v386, 93
  %v479 = vpop.permute.xlu0 %478
  %480 = vrot.lane.b32.xlu0 %v387, 93
  %v481 = vpop.permute.xlu0 %480
  %482 = vrot.lane.b32.xlu0 %v388, 93
  %v483 = vpop.permute.xlu0 %482
  %484 = vrot.lane.b32.xlu0 %v389, 93
  %v485 = vpop.permute.xlu0 %484
  %486 = vrot.lane.b32.xlu0 %v390, 93
  %v487 = vpop.permute.xlu0 %486
  %488 = vrot.lane.b32.xlu0 %v391, 93
  %v489 = vpop.permute.xlu0 %488
  %490 = vrot.lane.b32.xlu0 %v392, 93
  %v491 = vpop.permute.xlu0 %490
  %492 = vrot.lane.b32.xlu0 %v393, 93
  %v493 = vpop.permute.xlu0 %492
  %494 = vrot.lane.b32.xlu0 %v394, 93
  %v495 = vpop.permute.xlu0 %494
  %496 = vrot.lane.b32.xlu0 %v395, 93
  %v497 = vpop.permute.xlu0 %496
  %498 = vrot.lane.b32.xlu0 %v396, 93
  %v499 = vpop.permute.xlu0 %498
  %500 = vrot.lane.b32.xlu0 %v397, 93
  %v501 = vpop.permute.xlu0 %500
  %502 = vrot.lane.b32.xlu0 %v398, 93
  %v503 = vpop.permute.xlu0 %502
  %504 = vrot.lane.b32.xlu0 %v399, 93
  %v505 = vpop.permute.xlu0 %504
  %506 = vrot.lane.b32.xlu0 %v400, 93
  %v507 = vpop.permute.xlu0 %506
  %508 = vrot.lane.b32.xlu0 %v401, 93
  %v509 = vpop.permute.xlu0 %508
  %510 = vrot.lane.b32.xlu0 %v402, 93
  %v511 = vpop.permute.xlu0 %510
  %512 = vrot.lane.b32.xlu0 %v403, 93
  %v513 = vpop.permute.xlu0 %512
  %514 = vrot.lane.b32.xlu0 %v404, 93
  %v515 = vpop.permute.xlu0 %514
  %516 = vrot.lane.b32.xlu0 %v405, 93
  %v517 = vpop.permute.xlu0 %516
  %518 = vrot.lane.b32.xlu0 %v406, 93
  %v519 = vpop.permute.xlu0 %518
  %520 = vrot.lane.b32.xlu0 %v407, 93
  %v521 = vpop.permute.xlu0 %520
  %522 = vrot.lane.b32.xlu0 %v408, 93
  %v523 = vpop.permute.xlu0 %522
  %524 = vrot.lane.b32.xlu0 %v409, 93
  %v525 = vpop.permute.xlu0 %524
  %526 = vrot.lane.b32.xlu0 %v410, 93
  %v527 = vpop.permute.xlu0 %526
  %528 = vrot.lane.b32.xlu0 %v411, 93
  %v529 = vpop.permute.xlu0 %528
  %530 = vrot.lane.b32.xlu0 %v412, 93
  %v531 = vpop.permute.xlu0 %530
  %532 = vrot.lane.b32.xlu0 %v413, 93
  %v533 = vpop.permute.xlu0 %532
  %534 = vrot.lane.b32.xlu0 %v414, 93
  %v535 = vpop.permute.xlu0 %534
  %536 = vrot.lane.b32.xlu0 %v415, 93
  %v537 = vpop.permute.xlu0 %536
  %538 = vrot.lane.b32.xlu0 %v416, 93
  %v539 = vpop.permute.xlu0 %538
  %540 = vrot.lane.b32.xlu0 %v417, 93
  %v541 = vpop.permute.xlu0 %540
  %542 = vrot.lane.b32.xlu0 %v418, 93
  %v543 = vpop.permute.xlu0 %542
  %544 = vrot.lane.b32.xlu0 %v419, 93
  %v545 = vpop.permute.xlu0 %544
  %546 = vrot.lane.b32.xlu0 %v420, 93
  %v547 = vpop.permute.xlu0 %546
  %548 = vrot.lane.b32.xlu0 %v421, 93
  %v549 = vpop.permute.xlu0 %548
  %550 = vrot.lane.b32.xlu0 %v422, 93
  %v551 = vpop.permute.xlu0 %550
  %552 = vrot.lane.b32.xlu0 %v423, 93
  %v553 = vpop.permute.xlu0 %552
  %554 = vrot.lane.b32.xlu0 %v424, 93
  %v555 = vpop.permute.xlu0 %554
  %556 = vrot.lane.b32.xlu0 %v425, 93
  %v557 = vpop.permute.xlu0 %556
  %558 = vrot.lane.b32.xlu0 %v426, 93
  %v559 = vpop.permute.xlu0 %558
  %560 = vrot.lane.b32.xlu0 %v427, 93
  %v561 = vpop.permute.xlu0 %560
  %562 = vrot.lane.b32.xlu0 %v428, 93
  %v563 = vpop.permute.xlu0 %562
  %564 = vrot.lane.b32.xlu0 %v429, 93
  %v565 = vpop.permute.xlu0 %564
  %566 = vrot.lane.b32.xlu0 %v430, 93
  %v567 = vpop.permute.xlu0 %566
  %568 = vrot.lane.b32.xlu0 %v431, 93
  %v569 = vpop.permute.xlu0 %568
  %570 = vrot.lane.b32.xlu0 %v432, 93
  %v571 = vpop.permute.xlu0 %570
  %572 = vrot.lane.b32.xlu0 %v433, 93
  %v573 = vpop.permute.xlu0 %572
  %574 = vrot.lane.b32.xlu0 %v434, 93
  %v575 = vpop.permute.xlu0 %574
  %576 = vrot.lane.b32.xlu0 %v435, 93
  %v577 = vpop.permute.xlu0 %576
  %578 = vrot.lane.b32.xlu0 %v436, 93
  %v579 = vpop.permute.xlu0 %578
  %580 = vrot.lane.b32.xlu0 %v437, 93
  %v581 = vpop.permute.xlu0 %580
  %582 = vrot.lane.b32.xlu0 %v438, 93
  %v583 = vpop.permute.xlu0 %582
  %584 = vrot.lane.b32.xlu0 %v439, 93
  %v585 = vpop.permute.xlu0 %584
  %586 = vrot.lane.b32.xlu0 %v440, 93
  %v587 = vpop.permute.xlu0 %586
  %588 = vrot.lane.b32.xlu0 %v441, 93
  %v589 = vpop.permute.xlu0 %588
  %590 = vrot.lane.b32.xlu0 %v442, 93
  %v591 = vpop.permute.xlu0 %590
  %592 = vrot.lane.b32.xlu0 %v443, 93
  %v593 = vpop.permute.xlu0 %592
  %594 = vrot.lane.b32.xlu0 %v444, 93
  %v595 = vpop.permute.xlu0 %594
  %596 = vrot.lane.b32.xlu0 %v445, 93
  %v597 = vpop.permute.xlu0 %596
  %598 = vrot.lane.b32.xlu0 %v446, 93
  %v599 = vpop.permute.xlu0 %598
  %600 = vrot.lane.b32.xlu0 %v447, 93
  %v601 = vpop.permute.xlu0 %600
  %602 = vrot.lane.b32.xlu0 %v448, 93
  %v603 = vpop.permute.xlu0 %602
  %604 = vrot.lane.b32.xlu0 %v449, 93
  %v605 = vpop.permute.xlu0 %604
  %606 = vrot.lane.b32.xlu0 %v450, 93
  %v607 = vpop.permute.xlu0 %606
  %608 = vrot.lane.b32.xlu0 %v451, 93
  %v609 = vpop.permute.xlu0 %608
  %610 = vrot.lane.b32.xlu0 %v452, 93
  %v611 = vpop.permute.xlu0 %610
  %612 = vrot.lane.b32.xlu0 %v453, 93
  %v613 = vpop.permute.xlu0 %612
  %614 = vrot.lane.b32.xlu0 %v454, 93
  %v615 = vpop.permute.xlu0 %614
  %616 = vrot.lane.b32.xlu0 %v455, 93
  %v617 = vpop.permute.xlu0 %616
  %618 = vrot.lane.b32.xlu0 %v456, 93
  %v619 = vpop.permute.xlu0 %618
  %620 = vrot.lane.b32.xlu0 %v457, 93
  %v621 = vpop.permute.xlu0 %620
  %622 = vrot.lane.b32.xlu0 %v458, 93
  %v623 = vpop.permute.xlu0 %622
  %624 = vrot.lane.b32.xlu0 %v459, 93
  %v625 = vpop.permute.xlu0 %624
  %626 = vrot.lane.b32.xlu0 %v460, 93
  %v627 = vpop.permute.xlu0 %626
  %628 = vrot.lane.b32.xlu0 %v461, 93
  %v629 = vpop.permute.xlu0 %628
  %vm630 = vcmask 760832
  %v631 = vsel %vm630, %v463, %v465
  %v632 = vsel %vm630, %v465, %v467
  %v633 = vsel %vm630, %v467, %v469
  %v634 = vsel %vm630, %v469, %v471
  %v635 = vsel %vm630, %v471, %v473
  %v636 = vsel %vm630, %v473, %v475
  %v637 = vsel %vm630, %v475, %v477
  %v638 = vsel %vm630, %v477, %v479
  %v639 = vsel %vm630, %v479, %v481
  %v640 = vsel %vm630, %v481, %v483
  %v641 = vsel %vm630, %v483, %v485
  %v642 = vsel %vm630, %v485, %v487
  %v643 = vsel %vm630, %v487, %v489
  %v644 = vsel %vm630, %v491, %v493
  %v645 = vsel %vm630, %v493, %v495
  %v646 = vsel %vm630, %v495, %v497
  %v647 = vsel %vm630, %v497, %v499
  %v648 = vsel %vm630, %v499, %v501
  %v649 = vsel %vm630, %v501, %v503
  %v650 = vsel %vm630, %v503, %v505
  %v651 = vsel %vm630, %v505, %v507
  %v652 = vsel %vm630, %v507, %v509
  %v653 = vsel %vm630, %v509, %v511
  %v654 = vsel %vm630, %v511, %v513
  %v655 = vsel %vm630, %v513, %v515
  %v656 = vsel %vm630, %v515, %v517
  %v657 = vsel %vm630, %v519, %v521
  %v658 = vsel %vm630, %v521, %v523
  %v659 = vsel %vm630, %v523, %v525
  %v660 = vsel %vm630, %v525, %v527
  %v661 = vsel %vm630, %v527, %v529
  %v662 = vsel %vm630, %v529, %v531
  %v663 = vsel %vm630, %v531, %v533
  %v664 = vsel %vm630, %v533, %v535
  %v665 = vsel %vm630, %v535, %v537
  %v666 = vsel %vm630, %v537, %v539
  %v667 = vsel %vm630, %v539, %v541
  %v668 = vsel %vm630, %v541, %v543
  %v669 = vsel %vm630, %v543, %v545
  %v670 = vsel %vm630, %v547, %v549
  %v671 = vsel %vm630, %v549, %v551
  %v672 = vsel %vm630, %v551, %v553
  %v673 = vsel %vm630, %v553, %v555
  %v674 = vsel %vm630, %v555, %v557
  %v675 = vsel %vm630, %v557, %v559
  %v676 = vsel %vm630, %v559, %v561
  %v677 = vsel %vm630, %v561, %v563
  %v678 = vsel %vm630, %v563, %v565
  %v679 = vsel %vm630, %v565, %v567
  %v680 = vsel %vm630, %v567, %v569
  %v681 = vsel %vm630, %v569, %v571
  %v682 = vsel %vm630, %v571, %v573
  %v683 = vsel %vm630, %v575, %v577
  %v684 = vsel %vm630, %v577, %v579
  %v685 = vsel %vm630, %v579, %v581
  %v686 = vsel %vm630, %v581, %v583
  %v687 = vsel %vm630, %v583, %v585
  %v688 = vsel %vm630, %v585, %v587
  %v689 = vsel %vm630, %v587, %v589
  %v690 = vsel %vm630, %v589, %v591
  %v691 = vsel %vm630, %v591, %v593
  %v692 = vsel %vm630, %v593, %v595
  %v693 = vsel %vm630, %v595, %v597
  %v694 = vsel %vm630, %v597, %v599
  %v695 = vsel %vm630, %v599, %v601
  %v696 = vsel %vm630, %v603, %v605
  %v697 = vsel %vm630, %v605, %v607
  %v698 = vsel %vm630, %v607, %v609
  %v699 = vsel %vm630, %v609, %v611
  %v700 = vsel %vm630, %v611, %v613
  %v701 = vsel %vm630, %v613, %v615
  %v702 = vsel %vm630, %v615, %v617
  %v703 = vsel %vm630, %v617, %v619
  %v704 = vsel %vm630, %v619, %v621
  %v705 = vsel %vm630, %v621, %v623
  %v706 = vsel %vm630, %v623, %v625
  %v707 = vsel %vm630, %v625, %v627
  %v708 = vsel %vm630, %v627, %v629
  %vm787 = vcmask 785408
  %v789 = vsel %vm787, %v125, 0
  %791 = vmatprep.subr.bf16.mxu0 %v632
  %792 = vmatpush1.bf16.msra.mxu0 %v631
  %793 = vmatprep.subr.bf16.mxu0 %v645
  %794 = vmatpush1.bf16.msra.mxu0 %v644
  %795 = vmatprep.subr.bf16.mxu0 %v658
  %796 = vmatpush1.bf16.msra.mxu0 %v657
  %797 = vmatprep.subr.bf16.mxu0 %v671
  %798 = vmatpush1.bf16.msra.mxu0 %v670
  %799 = vmatprep.subr.bf16.mxu0 %v684
  %800 = vmatpush1.bf16.msra.mxu0 %v683
  %801 = vmatprep.subr.bf16.mxu0 %v697
  %802 = vmatpush1.bf16.msra.mxu0 %v696
  %803 = vmatprep.subr.bf16.mxu0 0
  %804 = vmatpush1.bf16.msra.mxu0 0
  %805 = vmatprep.subr.bf16.mxu0 0
  %806 = vmatpush1.bf16.msra.mxu0 0
  %807 = vmatprep.subr.bf16.mxu0 0
  %808 = vmatpush1.bf16.msra.mxu0 0
  %809 = vmatprep.subr.bf16.mxu0 0
  %810 = vmatpush1.bf16.msra.mxu0 0
  %811 = vmatprep.subr.bf16.mxu0 0
  %812 = vmatpush1.bf16.msra.mxu0 0
  %813 = vmatprep.subr.bf16.mxu0 0
  %814 = vmatpush1.bf16.msra.mxu0 0
  %815 = vmatprep.subr.bf16.mxu0 0
  %816 = vmatpush1.bf16.msra.mxu0 0
  %817 = vmatprep.subr.bf16.mxu0 0
  %818 = vmatpush1.bf16.msra.mxu0 0
  %819 = vmatprep.subr.bf16.mxu0 0
  %820 = vmatpush1.bf16.msra.mxu0 0
  %821 = vmatprep.subr.bf16.mxu0 0
  %822 = vmatpush1.bf16.msra.mxu0 0
  %823 = vmatprep.mubr.bf16.mxu0 0
  %824 = vmatmul.mubr.bf16.gmra.mrb[0].mxu0 %v789
  %v825 = vpop.f32.mrb[0].mxu0
  %v826 = vadd.f32 0.0, %v825
  %v827 = vpop.f32.mrb[0].mxu0
  %v828 = vadd.f32 0.0, %v827
  %v829 = vpop.f32.mrb[0].mxu0
  %v830 = vadd.f32 0.0, %v829
  %v831 = vpop.f32.mrb[0].mxu0
  %v832 = vadd.f32 0.0, %v831
  %833 = vdwg.mxu0
  %834 = vmatprep.subr.bf16.mxu0 %v634
  %835 = vmatpush1.bf16.msra.mxu0 %v633
  %836 = vmatprep.subr.bf16.mxu0 %v647
  %837 = vmatpush1.bf16.msra.mxu0 %v646
  %838 = vmatprep.subr.bf16.mxu0 %v660
  %839 = vmatpush1.bf16.msra.mxu0 %v659
  %840 = vmatprep.subr.bf16.mxu0 %v673
  %841 = vmatpush1.bf16.msra.mxu0 %v672
  %842 = vmatprep.subr.bf16.mxu0 %v686
  %843 = vmatpush1.bf16.msra.mxu0 %v685
  %844 = vmatprep.subr.bf16.mxu0 %v699
  %845 = vmatpush1.bf16.msra.mxu0 %v698
  %846 = vmatprep.subr.bf16.mxu0 0
  %847 = vmatpush1.bf16.msra.mxu0 0
  %848 = vmatprep.subr.bf16.mxu0 0
  %849 = vmatpush1.bf16.msra.mxu0 0
  %850 = vmatprep.subr.bf16.mxu0 0
  %851 = vmatpush1.bf16.msra.mxu0 0
  %852 = vmatprep.subr.bf16.mxu0 0
  %853 = vmatpush1.bf16.msra.mxu0 0
  %854 = vmatprep.subr.bf16.mxu0 0
  %855 = vmatpush1.bf16.msra.mxu0 0
  %856 = vmatprep.subr.bf16.mxu0 0
  %857 = vmatpush1.bf16.msra.mxu0 0
  %858 = vmatprep.subr.bf16.mxu0 0
  %859 = vmatpush1.bf16.msra.mxu0 0
  %860 = vmatprep.subr.bf16.mxu0 0
  %861 = vmatpush1.bf16.msra.mxu0 0
  %862 = vmatprep.subr.bf16.mxu0 0
  %863 = vmatpush1.bf16.msra.mxu0 0
  %864 = vmatprep.subr.bf16.mxu0 0
  %865 = vmatpush1.bf16.msra.mxu0 0
  %866 = vmatprep.mubr.bf16.mxu0 0
  %867 = vmatmul.mubr.bf16.gmra.mrb[0].mxu0 %v789
  %v868 = vpop.f32.mrb[0].mxu0
  %v869 = vadd.f32 0.0, %v868
  %v870 = vpop.f32.mrb[0].mxu0
  %v871 = vadd.f32 0.0, %v870
  %v872 = vpop.f32.mrb[0].mxu0
  %v873 = vadd.f32 0.0, %v872
  %v874 = vpop.f32.mrb[0].mxu0
  %v875 = vadd.f32 0.0, %v874
  %876 = vdwg.mxu0
  %877 = vmatprep.subr.bf16.mxu0 %v636
  %878 = vmatpush1.bf16.msra.mxu0 %v635
  %879 = vmatprep.subr.bf16.mxu0 %v649
  %880 = vmatpush1.bf16.msra.mxu0 %v648
  %881 = vmatprep.subr.bf16.mxu0 %v662
  %882 = vmatpush1.bf16.msra.mxu0 %v661
  %883 = vmatprep.subr.bf16.mxu0 %v675
  %884 = vmatpush1.bf16.msra.mxu0 %v674
  %885 = vmatprep.subr.bf16.mxu0 %v688
  %886 = vmatpush1.bf16.msra.mxu0 %v687
  %887 = vmatprep.subr.bf16.mxu0 %v701
  %888 = vmatpush1.bf16.msra.mxu0 %v700
  %889 = vmatprep.subr.bf16.mxu0 0
  %890 = vmatpush1.bf16.msra.mxu0 0
  %891 = vmatprep.subr.bf16.mxu0 0
  %892 = vmatpush1.bf16.msra.mxu0 0
  %893 = vmatprep.subr.bf16.mxu0 0
  %894 = vmatpush1.bf16.msra.mxu0 0
  %895 = vmatprep.subr.bf16.mxu0 0
  %896 = vmatpush1.bf16.msra.mxu0 0
  %897 = vmatprep.subr.bf16.mxu0 0
  %898 = vmatpush1.bf16.msra.mxu0 0
  %899 = vmatprep.subr.bf16.mxu0 0
  %900 = vmatpush1.bf16.msra.mxu0 0
  %901 = vmatprep.subr.bf16.mxu0 0
  %902 = vmatpush1.bf16.msra.mxu0 0
  %903 = vmatprep.subr.bf16.mxu0 0
  %904 = vmatpush1.bf16.msra.mxu0 0
  %905 = vmatprep.subr.bf16.mxu0 0
  %906 = vmatpush1.bf16.msra.mxu0 0
  %907 = vmatprep.subr.bf16.mxu0 0
  %908 = vmatpush1.bf16.msra.mxu0 0
  %909 = vmatprep.mubr.bf16.mxu0 0
  %910 = vmatmul.mubr.bf16.gmra.mrb[0].mxu0 %v789
  %v911 = vpop.f32.mrb[0].mxu0
  %v912 = vadd.f32 0.0, %v911
  %v913 = vpop.f32.mrb[0].mxu0
  %v914 = vadd.f32 0.0, %v913
  %v915 = vpop.f32.mrb[0].mxu0
  %v916 = vadd.f32 0.0, %v915
  %v917 = vpop.f32.mrb[0].mxu0
  %v918 = vadd.f32 0.0, %v917
  %919 = vdwg.mxu0
  %920 = vmatprep.subr.bf16.mxu0 %v638
  %921 = vmatpush1.bf16.msra.mxu0 %v637
  %922 = vmatprep.subr.bf16.mxu0 %v651
  %923 = vmatpush1.bf16.msra.mxu0 %v650
  %924 = vmatprep.subr.bf16.mxu0 %v664
  %925 = vmatpush1.bf16.msra.mxu0 %v663
  %926 = vmatprep.subr.bf16.mxu0 %v677
  %927 = vmatpush1.bf16.msra.mxu0 %v676
  %928 = vmatprep.subr.bf16.mxu0 %v690
  %929 = vmatpush1.bf16.msra.mxu0 %v689
  %930 = vmatprep.subr.bf16.mxu0 %v703
  %931 = vmatpush1.bf16.msra.mxu0 %v702
  %932 = vmatprep.subr.bf16.mxu0 0
  %933 = vmatpush1.bf16.msra.mxu0 0
  %934 = vmatprep.subr.bf16.mxu0 0
  %935 = vmatpush1.bf16.msra.mxu0 0
  %936 = vmatprep.subr.bf16.mxu0 0
  %937 = vmatpush1.bf16.msra.mxu0 0
  %938 = vmatprep.subr.bf16.mxu0 0
  %939 = vmatpush1.bf16.msra.mxu0 0
  %940 = vmatprep.subr.bf16.mxu0 0
  %941 = vmatpush1.bf16.msra.mxu0 0
  %942 = vmatprep.subr.bf16.mxu0 0
  %943 = vmatpush1.bf16.msra.mxu0 0
  %944 = vmatprep.subr.bf16.mxu0 0
  %945 = vmatpush1.bf16.msra.mxu0 0
  %946 = vmatprep.subr.bf16.mxu0 0
  %947 = vmatpush1.bf16.msra.mxu0 0
  %948 = vmatprep.subr.bf16.mxu0 0
  %949 = vmatpush1.bf16.msra.mxu0 0
  %950 = vmatprep.subr.bf16.mxu0 0
  %951 = vmatpush1.bf16.msra.mxu0 0
  %952 = vmatprep.mubr.bf16.mxu0 0
  %953 = vmatmul.mubr.bf16.gmra.mrb[0].mxu0 %v789
  %v954 = vpop.f32.mrb[0].mxu0
  %v955 = vadd.f32 0.0, %v954
  %v956 = vpop.f32.mrb[0].mxu0
  %v957 = vadd.f32 0.0, %v956
  %v958 = vpop.f32.mrb[0].mxu0
  %v959 = vadd.f32 0.0, %v958
  %v960 = vpop.f32.mrb[0].mxu0
  %v961 = vadd.f32 0.0, %v960
  %962 = vdwg.mxu0
  %963 = vmatprep.subr.bf16.mxu0 %v640
  %964 = vmatpush1.bf16.msra.mxu0 %v639
  %965 = vmatprep.subr.bf16.mxu0 %v653
  %966 = vmatpush1.bf16.msra.mxu0 %v652
  %967 = vmatprep.subr.bf16.mxu0 %v666
  %968 = vmatpush1.bf16.msra.mxu0 %v665
  %969 = vmatprep.subr.bf16.mxu0 %v679
  %970 = vmatpush1.bf16.msra.mxu0 %v678
  %971 = vmatprep.subr.bf16.mxu0 %v692
  %972 = vmatpush1.bf16.msra.mxu0 %v691
  %973 = vmatprep.subr.bf16.mxu0 %v705
  %974 = vmatpush1.bf16.msra.mxu0 %v704
  %975 = vmatprep.subr.bf16.mxu0 0
  %976 = vmatpush1.bf16.msra.mxu0 0
  %977 = vmatprep.subr.bf16.mxu0 0
  %978 = vmatpush1.bf16.msra.mxu0 0
  %979 = vmatprep.subr.bf16.mxu0 0
  %980 = vmatpush1.bf16.msra.mxu0 0
  %981 = vmatprep.subr.bf16.mxu0 0
  %982 = vmatpush1.bf16.msra.mxu0 0
  %983 = vmatprep.subr.bf16.mxu0 0
  %984 = vmatpush1.bf16.msra.mxu0 0
  %985 = vmatprep.subr.bf16.mxu0 0
  %986 = vmatpush1.bf16.msra.mxu0 0
  %987 = vmatprep.subr.bf16.mxu0 0
  %988 = vmatpush1.bf16.msra.mxu0 0
  %989 = vmatprep.subr.bf16.mxu0 0
  %990 = vmatpush1.bf16.msra.mxu0 0
  %991 = vmatprep.subr.bf16.mxu0 0
  %992 = vmatpush1.bf16.msra.mxu0 0
  %993 = vmatprep.subr.bf16.mxu0 0
  %994 = vmatpush1.bf16.msra.mxu0 0
  %995 = vmatprep.mubr.bf16.mxu0 0
  %996 = vmatmul.mubr.bf16.gmra.mrb[0].mxu0 %v789
  %v997 = vpop.f32.mrb[0].mxu0
  %v998 = vadd.f32 0.0, %v997
  %v999 = vpop.f32.mrb[0].mxu0
  %v1000 = vadd.f32 0.0, %v999
  %v1001 = vpop.f32.mrb[0].mxu0
  %v1002 = vadd.f32 0.0, %v1001
  %v1003 = vpop.f32.mrb[0].mxu0
  %v1004 = vadd.f32 0.0, %v1003
  %1005 = vdwg.mxu0
  %1006 = vmatprep.subr.bf16.mxu0 %v642
  %1007 = vmatpush1.bf16.msra.mxu0 %v641
  %1008 = vmatprep.subr.bf16.mxu0 %v655
  %1009 = vmatpush1.bf16.msra.mxu0 %v654
  %1010 = vmatprep.subr.bf16.mxu0 %v668
  %1011 = vmatpush1.bf16.msra.mxu0 %v667
  %1012 = vmatprep.subr.bf16.mxu0 %v681
  %1013 = vmatpush1.bf16.msra.mxu0 %v680
  %1014 = vmatprep.subr.bf16.mxu0 %v694
  %1015 = vmatpush1.bf16.msra.mxu0 %v693
  %1016 = vmatprep.subr.bf16.mxu0 %v707
  %1017 = vmatpush1.bf16.msra.mxu0 %v706
  %1018 = vmatprep.subr.bf16.mxu0 0
  %1019 = vmatpush1.bf16.msra.mxu0 0
  %1020 = vmatprep.subr.bf16.mxu0 0
  %1021 = vmatpush1.bf16.msra.mxu0 0
  %1022 = vmatprep.subr.bf16.mxu0 0
  %1023 = vmatpush1.bf16.msra.mxu0 0
  %1024 = vmatprep.subr.bf16.mxu0 0
  %1025 = vmatpush1.bf16.msra.mxu0 0
  %1026 = vmatprep.subr.bf16.mxu0 0
  %1027 = vmatpush1.bf16.msra.mxu0 0
  %1028 = vmatprep.subr.bf16.mxu0 0
  %1029 = vmatpush1.bf16.msra.mxu0 0
  %1030 = vmatprep.subr.bf16.mxu0 0
  %1031 = vmatpush1.bf16.msra.mxu0 0
  %1032 = vmatprep.subr.bf16.mxu0 0
  %1033 = vmatpush1.bf16.msra.mxu0 0
  %1034 = vmatprep.subr.bf16.mxu0 0
  %1035 = vmatpush1.bf16.msra.mxu0 0
  %1036 = vmatprep.subr.bf16.mxu0 0
  %1037 = vmatpush1.bf16.msra.mxu0 0
  %1038 = vmatprep.mubr.bf16.mxu0 0
  %1039 = vmatmul.mubr.bf16.gmra.mrb[0].mxu0 %v789
  %v1040 = vpop.f32.mrb[0].mxu0
  %v1041 = vadd.f32 0.0, %v1040
  %v1042 = vpop.f32.mrb[0].mxu0
  %v1043 = vadd.f32 0.0, %v1042
  %v1044 = vpop.f32.mrb[0].mxu0
  %v1045 = vadd.f32 0.0, %v1044
  %v1046 = vpop.f32.mrb[0].mxu0
  %v1047 = vadd.f32 0.0, %v1046
  %1048 = vdwg.mxu0
  %1049 = vmatprep.subr.bf16.mxu0 0
  %1050 = vmatpush1.bf16.msra.mxu0 %v643
  %1051 = vmatprep.subr.bf16.mxu0 0
  %1052 = vmatpush1.bf16.msra.mxu0 %v656
  %1053 = vmatprep.subr.bf16.mxu0 0
  %1054 = vmatpush1.bf16.msra.mxu0 %v669
  %1055 = vmatprep.subr.bf16.mxu0 0
  %1056 = vmatpush1.bf16.msra.mxu0 %v682
  %1057 = vmatprep.subr.bf16.mxu0 0
  %1058 = vmatpush1.bf16.msra.mxu0 %v695
  %1059 = vmatprep.subr.bf16.mxu0 0
  %1060 = vmatpush1.bf16.msra.mxu0 %v708
  %1061 = vmatprep.subr.bf16.mxu0 0
  %1062 = vmatpush1.bf16.msra.mxu0 0
  %1063 = vmatprep.subr.bf16.mxu0 0
  %1064 = vmatpush1.bf16.msra.mxu0 0
  %1065 = vmatprep.subr.bf16.mxu0 0
  %1066 = vmatpush1.bf16.msra.mxu0 0
  %1067 = vmatprep.subr.bf16.mxu0 0
  %1068 = vmatpush1.bf16.msra.mxu0 0
  %1069 = vmatprep.subr.bf16.mxu0 0
  %1070 = vmatpush1.bf16.msra.mxu0 0
  %1071 = vmatprep.subr.bf16.mxu0 0
  %1072 = vmatpush1.bf16.msra.mxu0 0
  %1073 = vmatprep.subr.bf16.mxu0 0
  %1074 = vmatpush1.bf16.msra.mxu0 0
  %1075 = vmatprep.subr.bf16.mxu0 0
  %1076 = vmatpush1.bf16.msra.mxu0 0
  %1077 = vmatprep.subr.bf16.mxu0 0
  %1078 = vmatpush1.bf16.msra.mxu0 0
  %1079 = vmatprep.subr.bf16.mxu0 0
  %1080 = vmatpush1.bf16.msra.mxu0 0
  %1081 = vmatprep.mubr.bf16.mxu0 0
  %1082 = vmatmul.mubr.bf16.gmra.mrb[0].mxu0 %v789
  %v1083 = vpop.f32.mrb[0].mxu0
  %v1084 = vadd.f32 0.0, %v1083
  %v1085 = vpop.f32.mrb[0].mxu0
  %v1086 = vpop.f32.mrb[0].mxu0
  %v1087 = vadd.f32 0.0, %v1086
  %v1088 = vpop.f32.mrb[0].mxu0
  %1089 = vdwg.mxu0
  %v1092 = vunpack.c.l.b16 %v104
  %v1093 = vunpack.c.l.b16 %v105
  %v1094 = vpack.c.b16 %v1093, %v1092
  %v1107 = vunpack.c.l.b16 %v26
  %v1108 = vunpack.c.l.b16 %v33
  %v1109 = vunpack.c.l.b16 %v40
  %v1110 = vunpack.c.l.b16 %v47
  %v1111 = vunpack.c.l.b16 %v54
  %v1112 = vunpack.c.l.b16 %v61
  %v1113 = vunpack.c.l.b16 %v68
  %v1114 = vunpack.c.l.b16 %v75
  %v1115 = vunpack.c.l.b16 %v82
  %v1116 = vunpack.c.l.b16 %v89
  %v1117 = vunpack.c.l.b16 %v96
  %v1118 = vunpack.c.l.b16 %v103
  %v1119 = vpack.c.b16 %v1108, %v1107
  %v1120 = vpack.c.b16 %v1110, %v1109
  %v1121 = vpack.c.b16 %v1112, %v1111
  %v1122 = vpack.c.b16 %v1114, %v1113
  %v1123 = vpack.c.b16 %v1116, %v1115
  %v1124 = vpack.c.b16 %v1118, %v1117
  %v1204 = vsel %vm787, %v1094, 0
  %1206 = vmatprep.subr.bf16.mxu0 %v379
  %1207 = vmatpush1.bf16.msra.mxu0 %v378
  %1208 = vmatprep.subr.bf16.mxu0 %v393
  %1209 = vmatpush1.bf16.msra.mxu0 %v392
  %1210 = vmatprep.subr.bf16.mxu0 %v407
  %1211 = vmatpush1.bf16.msra.mxu0 %v406
  %1212 = vmatprep.subr.bf16.mxu0 %v421
  %1213 = vmatpush1.bf16.msra.mxu0 %v420
  %1214 = vmatprep.subr.bf16.mxu0 %v435
  %1215 = vmatpush1.bf16.msra.mxu0 %v434
  %1216 = vmatprep.subr.bf16.mxu0 %v449
  %1217 = vmatpush1.bf16.msra.mxu0 %v448
  %1218 = vmatprep.subr.bf16.mxu0 0
  %1219 = vmatpush1.bf16.msra.mxu0 0
  %1220 = vmatprep.subr.bf16.mxu0 0
  %1221 = vmatpush1.bf16.msra.mxu0 0
  %1222 = vmatprep.subr.bf16.mxu0 0
  %1223 = vmatpush1.bf16.msra.mxu0 0
  %1224 = vmatprep.subr.bf16.mxu0 0
  %1225 = vmatpush1.bf16.msra.mxu0 0
  %1226 = vmatprep.subr.bf16.mxu0 0
  %1227 = vmatpush1.bf16.msra.mxu0 0
  %1228 = vmatprep.subr.bf16.mxu0 0
  %1229 = vmatpush1.bf16.msra.mxu0 0
  %1230 = vmatprep.subr.bf16.mxu0 0
  %1231 = vmatpush1.bf16.msra.mxu0 0
  %1232 = vmatprep.subr.bf16.mxu0 0
  %1233 = vmatpush1.bf16.msra.mxu0 0
  %1234 = vmatprep.subr.bf16.mxu0 0
  %1235 = vmatpush1.bf16.msra.mxu0 0
  %1236 = vmatprep.subr.bf16.mxu0 0
  %1237 = vmatpush1.bf16.msra.mxu0 0
  %1238 = vmatprep.mubr.bf16.mxu0 0
  %1239 = vmatmul.mubr.bf16.gmra.mrb[0].mxu0 %v1204
  %v1240 = vpop.f32.mrb[0].mxu0
  %v1241 = vadd.f32 %v826, %v1240
  %v1242 = vpop.f32.mrb[0].mxu0
  %v1243 = vadd.f32 %v828, %v1242
  %v1244 = vpop.f32.mrb[0].mxu0
  %v1245 = vadd.f32 %v830, %v1244
  %v1246 = vpop.f32.mrb[0].mxu0
  %v1247 = vadd.f32 %v832, %v1246
  %1248 = vdwg.mxu0
  %1249 = vmatprep.subr.bf16.mxu0 %v381
  %1250 = vmatpush1.bf16.msra.mxu0 %v380
  %1251 = vmatprep.subr.bf16.mxu0 %v395
  %1252 = vmatpush1.bf16.msra.mxu0 %v394
  %1253 = vmatprep.subr.bf16.mxu0 %v409
  %1254 = vmatpush1.bf16.msra.mxu0 %v408
  %1255 = vmatprep.subr.bf16.mxu0 %v423
  %1256 = vmatpush1.bf16.msra.mxu0 %v422
  %1257 = vmatprep.subr.bf16.mxu0 %v437
  %1258 = vmatpush1.bf16.msra.mxu0 %v436
  %1259 = vmatprep.subr.bf16.mxu0 %v451
  %1260 = vmatpush1.bf16.msra.mxu0 %v450
  %1261 = vmatprep.subr.bf16.mxu0 0
  %1262 = vmatpush1.bf16.msra.mxu0 0
  %1263 = vmatprep.subr.bf16.mxu0 0
  %1264 = vmatpush1.bf16.msra.mxu0 0
  %1265 = vmatprep.subr.bf16.mxu0 0
  %1266 = vmatpush1.bf16.msra.mxu0 0
  %1267 = vmatprep.subr.bf16.mxu0 0
  %1268 = vmatpush1.bf16.msra.mxu0 0
  %1269 = vmatprep.subr.bf16.mxu0 0
  %1270 = vmatpush1.bf16.msra.mxu0 0
  %1271 = vmatprep.subr.bf16.mxu0 0
  %1272 = vmatpush1.bf16.msra.mxu0 0
  %1273 = vmatprep.subr.bf16.mxu0 0
  %1274 = vmatpush1.bf16.msra.mxu0 0
  %1275 = vmatprep.subr.bf16.mxu0 0
  %1276 = vmatpush1.bf16.msra.mxu0 0
  %1277 = vmatprep.subr.bf16.mxu0 0
  %1278 = vmatpush1.bf16.msra.mxu0 0
  %1279 = vmatprep.subr.bf16.mxu0 0
  %1280 = vmatpush1.bf16.msra.mxu0 0
  %1281 = vmatprep.mubr.bf16.mxu0 0
  %1282 = vmatmul.mubr.bf16.gmra.mrb[0].mxu0 %v1204
  %v1283 = vpop.f32.mrb[0].mxu0
  %v1284 = vadd.f32 %v869, %v1283
  %v1285 = vpop.f32.mrb[0].mxu0
  %v1286 = vadd.f32 %v871, %v1285
  %v1287 = vpop.f32.mrb[0].mxu0
  %v1288 = vadd.f32 %v873, %v1287
  %v1289 = vpop.f32.mrb[0].mxu0
  %v1290 = vadd.f32 %v875, %v1289
  %1291 = vdwg.mxu0
  %1292 = vmatprep.subr.bf16.mxu0 %v383
  %1293 = vmatpush1.bf16.msra.mxu0 %v382
  %1294 = vmatprep.subr.bf16.mxu0 %v397
  %1295 = vmatpush1.bf16.msra.mxu0 %v396
  %1296 = vmatprep.subr.bf16.mxu0 %v411
  %1297 = vmatpush1.bf16.msra.mxu0 %v410
  %1298 = vmatprep.subr.bf16.mxu0 %v425
  %1299 = vmatpush1.bf16.msra.mxu0 %v424
  %1300 = vmatprep.subr.bf16.mxu0 %v439
  %1301 = vmatpush1.bf16.msra.mxu0 %v438
  %1302 = vmatprep.subr.bf16.mxu0 %v453
  %1303 = vmatpush1.bf16.msra.mxu0 %v452
  %1304 = vmatprep.subr.bf16.mxu0 0
  %1305 = vmatpush1.bf16.msra.mxu0 0
  %1306 = vmatprep.subr.bf16.mxu0 0
  %1307 = vmatpush1.bf16.msra.mxu0 0
  %1308 = vmatprep.subr.bf16.mxu0 0
  %1309 = vmatpush1.bf16.msra.mxu0 0
  %1310 = vmatprep.subr.bf16.mxu0 0
  %1311 = vmatpush1.bf16.msra.mxu0 0
  %1312 = vmatprep.subr.bf16.mxu0 0
  %1313 = vmatpush1.bf16.msra.mxu0 0
  %1314 = vmatprep.subr.bf16.mxu0 0
  %1315 = vmatpush1.bf16.msra.mxu0 0
  %1316 = vmatprep.subr.bf16.mxu0 0
  %1317 = vmatpush1.bf16.msra.mxu0 0
  %1318 = vmatprep.subr.bf16.mxu0 0
  %1319 = vmatpush1.bf16.msra.mxu0 0
  %1320 = vmatprep.subr.bf16.mxu0 0
  %1321 = vmatpush1.bf16.msra.mxu0 0
  %1322 = vmatprep.subr.bf16.mxu0 0
  %1323 = vmatpush1.bf16.msra.mxu0 0
  %1324 = vmatprep.mubr.bf16.mxu0 0
  %1325 = vmatmul.mubr.bf16.gmra.mrb[0].mxu0 %v1204
  %v1326 = vpop.f32.mrb[0].mxu0
  %v1327 = vadd.f32 %v912, %v1326
  %v1328 = vpop.f32.mrb[0].mxu0
  %v1329 = vadd.f32 %v914, %v1328
  %v1330 = vpop.f32.mrb[0].mxu0
  %v1331 = vadd.f32 %v916, %v1330
  %v1332 = vpop.f32.mrb[0].mxu0
  %v1333 = vadd.f32 %v918, %v1332
  %1334 = vdwg.mxu0
  %1335 = vmatprep.subr.bf16.mxu0 %v385
  %1336 = vmatpush1.bf16.msra.mxu0 %v384
  %1337 = vmatprep.subr.bf16.mxu0 %v399
  %1338 = vmatpush1.bf16.msra.mxu0 %v398
  %1339 = vmatprep.subr.bf16.mxu0 %v413
  %1340 = vmatpush1.bf16.msra.mxu0 %v412
  %1341 = vmatprep.subr.bf16.mxu0 %v427
  %1342 = vmatpush1.bf16.msra.mxu0 %v426
  %1343 = vmatprep.subr.bf16.mxu0 %v441
  %1344 = vmatpush1.bf16.msra.mxu0 %v440
  %1345 = vmatprep.subr.bf16.mxu0 %v455
  %1346 = vmatpush1.bf16.msra.mxu0 %v454
  %1347 = vmatprep.subr.bf16.mxu0 0
  %1348 = vmatpush1.bf16.msra.mxu0 0
  %1349 = vmatprep.subr.bf16.mxu0 0
  %1350 = vmatpush1.bf16.msra.mxu0 0
  %1351 = vmatprep.subr.bf16.mxu0 0
  %1352 = vmatpush1.bf16.msra.mxu0 0
  %1353 = vmatprep.subr.bf16.mxu0 0
  %1354 = vmatpush1.bf16.msra.mxu0 0
  %1355 = vmatprep.subr.bf16.mxu0 0
  %1356 = vmatpush1.bf16.msra.mxu0 0
  %1357 = vmatprep.subr.bf16.mxu0 0
  %1358 = vmatpush1.bf16.msra.mxu0 0
  %1359 = vmatprep.subr.bf16.mxu0 0
  %1360 = vmatpush1.bf16.msra.mxu0 0
  %1361 = vmatprep.subr.bf16.mxu0 0
  %1362 = vmatpush1.bf16.msra.mxu0 0
  %1363 = vmatprep.subr.bf16.mxu0 0
  %1364 = vmatpush1.bf16.msra.mxu0 0
  %1365 = vmatprep.subr.bf16.mxu0 0
  %1366 = vmatpush1.bf16.msra.mxu0 0
  %1367 = vmatprep.mubr.bf16.mxu0 0
  %1368 = vmatmul.mubr.bf16.gmra.mrb[0].mxu0 %v1204
  %v1369 = vpop.f32.mrb[0].mxu0
  %v1370 = vadd.f32 %v955, %v1369
  %v1371 = vpop.f32.mrb[0].mxu0
  %v1372 = vadd.f32 %v957, %v1371
  %v1373 = vpop.f32.mrb[0].mxu0
  %v1374 = vadd.f32 %v959, %v1373
  %v1375 = vpop.f32.mrb[0].mxu0
  %v1376 = vadd.f32 %v961, %v1375
  %1377 = vdwg.mxu0
  %1378 = vmatprep.subr.bf16.mxu0 %v387
  %1379 = vmatpush1.bf16.msra.mxu0 %v386
  %1380 = vmatprep.subr.bf16.mxu0 %v401
  %1381 = vmatpush1.bf16.msra.mxu0 %v400
  %1382 = vmatprep.subr.bf16.mxu0 %v415
  %1383 = vmatpush1.bf16.msra.mxu0 %v414
  %1384 = vmatprep.subr.bf16.mxu0 %v429
  %1385 = vmatpush1.bf16.msra.mxu0 %v428
  %1386 = vmatprep.subr.bf16.mxu0 %v443
  %1387 = vmatpush1.bf16.msra.mxu0 %v442
  %1388 = vmatprep.subr.bf16.mxu0 %v457
  %1389 = vmatpush1.bf16.msra.mxu0 %v456
  %1390 = vmatprep.subr.bf16.mxu0 0
  %1391 = vmatpush1.bf16.msra.mxu0 0
  %1392 = vmatprep.subr.bf16.mxu0 0
  %1393 = vmatpush1.bf16.msra.mxu0 0
  %1394 = vmatprep.subr.bf16.mxu0 0
  %1395 = vmatpush1.bf16.msra.mxu0 0
  %1396 = vmatprep.subr.bf16.mxu0 0
  %1397 = vmatpush1.bf16.msra.mxu0 0
  %1398 = vmatprep.subr.bf16.mxu0 0
  %1399 = vmatpush1.bf16.msra.mxu0 0
  %1400 = vmatprep.subr.bf16.mxu0 0
  %1401 = vmatpush1.bf16.msra.mxu0 0
  %1402 = vmatprep.subr.bf16.mxu0 0
  %1403 = vmatpush1.bf16.msra.mxu0 0
  %1404 = vmatprep.subr.bf16.mxu0 0
  %1405 = vmatpush1.bf16.msra.mxu0 0
  %1406 = vmatprep.subr.bf16.mxu0 0
  %1407 = vmatpush1.bf16.msra.mxu0 0
  %1408 = vmatprep.subr.bf16.mxu0 0
  %1409 = vmatpush1.bf16.msra.mxu0 0
  %1410 = vmatprep.mubr.bf16.mxu0 0
  %1411 = vmatmul.mubr.bf16.gmra.mrb[0].mxu0 %v1204
  %v1412 = vpop.f32.mrb[0].mxu0
  %v1413 = vadd.f32 %v998, %v1412
  %v1414 = vpop.f32.mrb[0].mxu0
  %v1415 = vadd.f32 %v1000, %v1414
  %v1416 = vpop.f32.mrb[0].mxu0
  %v1417 = vadd.f32 %v1002, %v1416
  %v1418 = vpop.f32.mrb[0].mxu0
  %v1419 = vadd.f32 %v1004, %v1418
  %1420 = vdwg.mxu0
  %1421 = vmatprep.subr.bf16.mxu0 %v389
  %1422 = vmatpush1.bf16.msra.mxu0 %v388
  %1423 = vmatprep.subr.bf16.mxu0 %v403
  %1424 = vmatpush1.bf16.msra.mxu0 %v402
  %1425 = vmatprep.subr.bf16.mxu0 %v417
  %1426 = vmatpush1.bf16.msra.mxu0 %v416
  %1427 = vmatprep.subr.bf16.mxu0 %v431
  %1428 = vmatpush1.bf16.msra.mxu0 %v430
  %1429 = vmatprep.subr.bf16.mxu0 %v445
  %1430 = vmatpush1.bf16.msra.mxu0 %v444
  %1431 = vmatprep.subr.bf16.mxu0 %v459
  %1432 = vmatpush1.bf16.msra.mxu0 %v458
  %1433 = vmatprep.subr.bf16.mxu0 0
  %1434 = vmatpush1.bf16.msra.mxu0 0
  %1435 = vmatprep.subr.bf16.mxu0 0
  %1436 = vmatpush1.bf16.msra.mxu0 0
  %1437 = vmatprep.subr.bf16.mxu0 0
  %1438 = vmatpush1.bf16.msra.mxu0 0
  %1439 = vmatprep.subr.bf16.mxu0 0
  %1440 = vmatpush1.bf16.msra.mxu0 0
  %1441 = vmatprep.subr.bf16.mxu0 0
  %1442 = vmatpush1.bf16.msra.mxu0 0
  %1443 = vmatprep.subr.bf16.mxu0 0
  %1444 = vmatpush1.bf16.msra.mxu0 0
  %1445 = vmatprep.subr.bf16.mxu0 0
  %1446 = vmatpush1.bf16.msra.mxu0 0
  %1447 = vmatprep.subr.bf16.mxu0 0
  %1448 = vmatpush1.bf16.msra.mxu0 0
  %1449 = vmatprep.subr.bf16.mxu0 0
  %1450 = vmatpush1.bf16.msra.mxu0 0
  %1451 = vmatprep.subr.bf16.mxu0 0
  %1452 = vmatpush1.bf16.msra.mxu0 0
  %1453 = vmatprep.mubr.bf16.mxu0 0
  %1454 = vmatmul.mubr.bf16.gmra.mrb[0].mxu0 %v1204
  %v1455 = vpop.f32.mrb[0].mxu0
  %v1456 = vadd.f32 %v1041, %v1455
  %v1457 = vpop.f32.mrb[0].mxu0
  %v1458 = vadd.f32 %v1043, %v1457
  %v1459 = vpop.f32.mrb[0].mxu0
  %v1460 = vadd.f32 %v1045, %v1459
  %v1461 = vpop.f32.mrb[0].mxu0
  %v1462 = vadd.f32 %v1047, %v1461
  %1463 = vdwg.mxu0
  %1464 = vmatprep.subr.bf16.mxu0 0
  %1465 = vmatpush1.bf16.msra.mxu0 %v1119
  %1466 = vmatprep.subr.bf16.mxu0 0
  %1467 = vmatpush1.bf16.msra.mxu0 %v1120
  %1468 = vmatprep.subr.bf16.mxu0 0
  %1469 = vmatpush1.bf16.msra.mxu0 %v1121
  %1470 = vmatprep.subr.bf16.mxu0 0
  %1471 = vmatpush1.bf16.msra.mxu0 %v1122
  %1472 = vmatprep.subr.bf16.mxu0 0
  %1473 = vmatpush1.bf16.msra.mxu0 %v1123
  %1474 = vmatprep.subr.bf16.mxu0 0
  %1475 = vmatpush1.bf16.msra.mxu0 %v1124
  %1476 = vmatprep.subr.bf16.mxu0 0
  %1477 = vmatpush1.bf16.msra.mxu0 0
  %1478 = vmatprep.subr.bf16.mxu0 0
  %1479 = vmatpush1.bf16.msra.mxu0 0
  %1480 = vmatprep.subr.bf16.mxu0 0
  %1481 = vmatpush1.bf16.msra.mxu0 0
  %1482 = vmatprep.subr.bf16.mxu0 0
  %1483 = vmatpush1.bf16.msra.mxu0 0
  %1484 = vmatprep.subr.bf16.mxu0 0
  %1485 = vmatpush1.bf16.msra.mxu0 0
  %1486 = vmatprep.subr.bf16.mxu0 0
  %1487 = vmatpush1.bf16.msra.mxu0 0
  %1488 = vmatprep.subr.bf16.mxu0 0
  %1489 = vmatpush1.bf16.msra.mxu0 0
  %1490 = vmatprep.subr.bf16.mxu0 0
  %1491 = vmatpush1.bf16.msra.mxu0 0
  %1492 = vmatprep.subr.bf16.mxu0 0
  %1493 = vmatpush1.bf16.msra.mxu0 0
  %1494 = vmatprep.subr.bf16.mxu0 0
  %1495 = vmatpush1.bf16.msra.mxu0 0
  %1496 = vmatprep.mubr.bf16.mxu0 0
  %1497 = vmatmul.mubr.bf16.gmra.mrb[0].mxu0 %v1204
  %v1498 = vpop.f32.mrb[0].mxu0
  %v1499 = vadd.f32 %v1084, %v1498
  %v1500 = vpop.f32.mrb[0].mxu0
  %v1501 = vpop.f32.mrb[0].mxu0
  %v1502 = vadd.f32 %v1087, %v1501
  %v1503 = vpop.f32.mrb[0].mxu0
  %1504 = vdwg.mxu0
  %s1505 = scalar_lea.vmem %s1, 16
  %v1506 = vld [vmem:[%s1505] sm:$0xf]
  %v1507 = vld [vmem:[%s1505 + $0x4] sm:$0x3]
  %v1510 = vunpack.c.l.b16 %v1506
  %v1511 = vunpack.c.l.b16 %v1507
  %v1512 = vpack.c.b16 %v1511, %v1510
  %1513 = vrot.lane.b32.xlu0 %v378, 58
  %v1514 = vpop.permute.xlu0 %1513
  %1515 = vrot.lane.b32.xlu0 %v379, 58
  %v1516 = vpop.permute.xlu0 %1515
  %1517 = vrot.lane.b32.xlu0 %v380, 58
  %v1518 = vpop.permute.xlu0 %1517
  %1519 = vrot.lane.b32.xlu0 %v381, 58
  %v1520 = vpop.permute.xlu0 %1519
  %1521 = vrot.lane.b32.xlu0 %v382, 58
  %v1522 = vpop.permute.xlu0 %1521
  %1523 = vrot.lane.b32.xlu0 %v383, 58
  %v1524 = vpop.permute.xlu0 %1523
  %1525 = vrot.lane.b32.xlu0 %v384, 58
  %v1526 = vpop.permute.xlu0 %1525
  %1527 = vrot.lane.b32.xlu0 %v385, 58
  %v1528 = vpop.permute.xlu0 %1527
  %1529 = vrot.lane.b32.xlu0 %v386, 58
  %v1530 = vpop.permute.xlu0 %1529
  %1531 = vrot.lane.b32.xlu0 %v387, 58
  %v1532 = vpop.permute.xlu0 %1531
  %1533 = vrot.lane.b32.xlu0 %v388, 58
  %v1534 = vpop.permute.xlu0 %1533
  %1535 = vrot.lane.b32.xlu0 %v389, 58
  %v1536 = vpop.permute.xlu0 %1535
  %1537 = vrot.lane.b32.xlu0 %v390, 58
  %v1538 = vpop.permute.xlu0 %1537
  %1539 = vrot.lane.b32.xlu0 %v391, 58
  %v1540 = vpop.permute.xlu0 %1539
  %1541 = vrot.lane.b32.xlu0 %v392, 58
  %v1542 = vpop.permute.xlu0 %1541
  %1543 = vrot.lane.b32.xlu0 %v393, 58
  %v1544 = vpop.permute.xlu0 %1543
  %1545 = vrot.lane.b32.xlu0 %v394, 58
  %v1546 = vpop.permute.xlu0 %1545
  %1547 = vrot.lane.b32.xlu0 %v395, 58
  %v1548 = vpop.permute.xlu0 %1547
  %1549 = vrot.lane.b32.xlu0 %v396, 58
  %v1550 = vpop.permute.xlu0 %1549
  %1551 = vrot.lane.b32.xlu0 %v397, 58
  %v1552 = vpop.permute.xlu0 %1551
  %1553 = vrot.lane.b32.xlu0 %v398, 58
  %v1554 = vpop.permute.xlu0 %1553
  %1555 = vrot.lane.b32.xlu0 %v399, 58
  %v1556 = vpop.permute.xlu0 %1555
  %1557 = vrot.lane.b32.xlu0 %v400, 58
  %v1558 = vpop.permute.xlu0 %1557
  %1559 = vrot.lane.b32.xlu0 %v401, 58
  %v1560 = vpop.permute.xlu0 %1559
  %1561 = vrot.lane.b32.xlu0 %v402, 58
  %v1562 = vpop.permute.xlu0 %1561
  %1563 = vrot.lane.b32.xlu0 %v403, 58
  %v1564 = vpop.permute.xlu0 %1563
  %1565 = vrot.lane.b32.xlu0 %v404, 58
  %v1566 = vpop.permute.xlu0 %1565
  %1567 = vrot.lane.b32.xlu0 %v405, 58
  %v1568 = vpop.permute.xlu0 %1567
  %1569 = vrot.lane.b32.xlu0 %v406, 58
  %v1570 = vpop.permute.xlu0 %1569
  %1571 = vrot.lane.b32.xlu0 %v407, 58
  %v1572 = vpop.permute.xlu0 %1571
  %1573 = vrot.lane.b32.xlu0 %v408, 58
  %v1574 = vpop.permute.xlu0 %1573
  %1575 = vrot.lane.b32.xlu0 %v409, 58
  %v1576 = vpop.permute.xlu0 %1575
  %1577 = vrot.lane.b32.xlu0 %v410, 58
  %v1578 = vpop.permute.xlu0 %1577
  %1579 = vrot.lane.b32.xlu0 %v411, 58
  %v1580 = vpop.permute.xlu0 %1579
  %1581 = vrot.lane.b32.xlu0 %v412, 58
  %v1582 = vpop.permute.xlu0 %1581
  %1583 = vrot.lane.b32.xlu0 %v413, 58
  %v1584 = vpop.permute.xlu0 %1583
  %1585 = vrot.lane.b32.xlu0 %v414, 58
  %v1586 = vpop.permute.xlu0 %1585
  %1587 = vrot.lane.b32.xlu0 %v415, 58
  %v1588 = vpop.permute.xlu0 %1587
  %1589 = vrot.lane.b32.xlu0 %v416, 58
  %v1590 = vpop.permute.xlu0 %1589
  %1591 = vrot.lane.b32.xlu0 %v417, 58
  %v1592 = vpop.permute.xlu0 %1591
  %1593 = vrot.lane.b32.xlu0 %v418, 58
  %v1594 = vpop.permute.xlu0 %1593
  %1595 = vrot.lane.b32.xlu0 %v419, 58
  %v1596 = vpop.permute.xlu0 %1595
  %1597 = vrot.lane.b32.xlu0 %v420, 58
  %v1598 = vpop.permute.xlu0 %1597
  %1599 = vrot.lane.b32.xlu0 %v421, 58
  %v1600 = vpop.permute.xlu0 %1599
  %1601 = vrot.lane.b32.xlu0 %v422, 58
  %v1602 = vpop.permute.xlu0 %1601
  %1603 = vrot.lane.b32.xlu0 %v423, 58
  %v1604 = vpop.permute.xlu0 %1603
  %1605 = vrot.lane.b32.xlu0 %v424, 58
  %v1606 = vpop.permute.xlu0 %1605
  %1607 = vrot.lane.b32.xlu0 %v425, 58
  %v1608 = vpop.permute.xlu0 %1607
  %1609 = vrot.lane.b32.xlu0 %v426, 58
  %v1610 = vpop.permute.xlu0 %1609
  %1611 = vrot.lane.b32.xlu0 %v427, 58
  %v1612 = vpop.permute.xlu0 %1611
  %1613 = vrot.lane.b32.xlu0 %v428, 58
  %v1614 = vpop.permute.xlu0 %1613
  %1615 = vrot.lane.b32.xlu0 %v429, 58
  %v1616 = vpop.permute.xlu0 %1615
  %1617 = vrot.lane.b32.xlu0 %v430, 58
  %v1618 = vpop.permute.xlu0 %1617
  %1619 = vrot.lane.b32.xlu0 %v431, 58
  %v1620 = vpop.permute.xlu0 %1619
  %1621 = vrot.lane.b32.xlu0 %v432, 58
  %v1622 = vpop.permute.xlu0 %1621
  %1623 = vrot.lane.b32.xlu0 %v433, 58
  %v1624 = vpop.permute.xlu0 %1623
  %1625 = vrot.lane.b32.xlu0 %v434, 58
  %v1626 = vpop.permute.xlu0 %1625
  %1627 = vrot.lane.b32.xlu0 %v435, 58
  %v1628 = vpop.permute.xlu0 %1627
  %1629 = vrot.lane.b32.xlu0 %v436, 58
  %v1630 = vpop.permute.xlu0 %1629
  %1631 = vrot.lane.b32.xlu0 %v437, 58
  %v1632 = vpop.permute.xlu0 %1631
  %1633 = vrot.lane.b32.xlu0 %v438, 58
  %v1634 = vpop.permute.xlu0 %1633
  %1635 = vrot.lane.b32.xlu0 %v439, 58
  %v1636 = vpop.permute.xlu0 %1635
  %1637 = vrot.lane.b32.xlu0 %v440, 58
  %v1638 = vpop.permute.xlu0 %1637
  %1639 = vrot.lane.b32.xlu0 %v441, 58
  %v1640 = vpop.permute.xlu0 %1639
  %1641 = vrot.lane.b32.xlu0 %v442, 58
  %v1642 = vpop.permute.xlu0 %1641
  %1643 = vrot.lane.b32.xlu0 %v443, 58
  %v1644 = vpop.permute.xlu0 %1643
  %1645 = vrot.lane.b32.xlu0 %v444, 58
  %v1646 = vpop.permute.xlu0 %1645
  %1647 = vrot.lane.b32.xlu0 %v445, 58
  %v1648 = vpop.permute.xlu0 %1647
  %1649 = vrot.lane.b32.xlu0 %v446, 58
  %v1650 = vpop.permute.xlu0 %1649
  %1651 = vrot.lane.b32.xlu0 %v447, 58
  %v1652 = vpop.permute.xlu0 %1651
  %1653 = vrot.lane.b32.xlu0 %v448, 58
  %v1654 = vpop.permute.xlu0 %1653
  %1655 = vrot.lane.b32.xlu0 %v449, 58
  %v1656 = vpop.permute.xlu0 %1655
  %1657 = vrot.lane.b32.xlu0 %v450, 58
  %v1658 = vpop.permute.xlu0 %1657
  %1659 = vrot.lane.b32.xlu0 %v451, 58
  %v1660 = vpop.permute.xlu0 %1659
  %1661 = vrot.lane.b32.xlu0 %v452, 58
  %v1662 = vpop.permute.xlu0 %1661
  %1663 = vrot.lane.b32.xlu0 %v453, 58
  %v1664 = vpop.permute.xlu0 %1663
  %1665 = vrot.lane.b32.xlu0 %v454, 58
  %v1666 = vpop.permute.xlu0 %1665
  %1667 = vrot.lane.b32.xlu0 %v455, 58
  %v1668 = vpop.permute.xlu0 %1667
  %1669 = vrot.lane.b32.xlu0 %v456, 58
  %v1670 = vpop.permute.xlu0 %1669
  %1671 = vrot.lane.b32.xlu0 %v457, 58
  %v1672 = vpop.permute.xlu0 %1671
  %1673 = vrot.lane.b32.xlu0 %v458, 58
  %v1674 = vpop.permute.xlu0 %1673
  %1675 = vrot.lane.b32.xlu0 %v459, 58
  %v1676 = vpop.permute.xlu0 %1675
  %1677 = vrot.lane.b32.xlu0 %v460, 58
  %v1678 = vpop.permute.xlu0 %1677
  %1679 = vrot.lane.b32.xlu0 %v461, 58
  %v1680 = vpop.permute.xlu0 %1679
  %vm1681 = vcmask 474112
  %v1682 = vsel %vm1681, %v1514, %v1516
  %v1683 = vsel %vm1681, %v1516, %v1518
  %v1684 = vsel %vm1681, %v1518, %v1520
  %v1685 = vsel %vm1681, %v1520, %v1522
  %v1686 = vsel %vm1681, %v1522, %v1524
  %v1687 = vsel %vm1681, %v1524, %v1526
  %v1688 = vsel %vm1681, %v1526, %v1528
  %v1689 = vsel %vm1681, %v1528, %v1530
  %v1690 = vsel %vm1681, %v1530, %v1532
  %v1691 = vsel %vm1681, %v1532, %v1534
  %v1692 = vsel %vm1681, %v1534, %v1536
  %v1693 = vsel %vm1681, %v1536, %v1538
  %v1694 = vsel %vm1681, %v1538, %v1540
  %v1695 = vsel %vm1681, %v1542, %v1544
  %v1696 = vsel %vm1681, %v1544, %v1546
  %v1697 = vsel %vm1681, %v1546, %v1548
  %v1698 = vsel %vm1681, %v1548, %v1550
  %v1699 = vsel %vm1681, %v1550, %v1552
  %v1700 = vsel %vm1681, %v1552, %v1554
  %v1701 = vsel %vm1681, %v1554, %v1556
  %v1702 = vsel %vm1681, %v1556, %v1558
  %v1703 = vsel %vm1681, %v1558, %v1560
  %v1704 = vsel %vm1681, %v1560, %v1562
  %v1705 = vsel %vm1681, %v1562, %v1564
  %v1706 = vsel %vm1681, %v1564, %v1566
  %v1707 = vsel %vm1681, %v1566, %v1568
  %v1708 = vsel %vm1681, %v1570, %v1572
  %v1709 = vsel %vm1681, %v1572, %v1574
  %v1710 = vsel %vm1681, %v1574, %v1576
  %v1711 = vsel %vm1681, %v1576, %v1578
  %v1712 = vsel %vm1681, %v1578, %v1580
  %v1713 = vsel %vm1681, %v1580, %v1582
  %v1714 = vsel %vm1681, %v1582, %v1584
  %v1715 = vsel %vm1681, %v1584, %v1586
  %v1716 = vsel %vm1681, %v1586, %v1588
  %v1717 = vsel %vm1681, %v1588, %v1590
  %v1718 = vsel %vm1681, %v1590, %v1592
  %v1719 = vsel %vm1681, %v1592, %v1594
  %v1720 = vsel %vm1681, %v1594, %v1596
  %v1721 = vsel %vm1681, %v1598, %v1600
  %v1722 = vsel %vm1681, %v1600, %v1602
  %v1723 = vsel %vm1681, %v1602, %v1604
  %v1724 = vsel %vm1681, %v1604, %v1606
  %v1725 = vsel %vm1681, %v1606, %v1608
  %v1726 = vsel %vm1681, %v1608, %v1610
  %v1727 = vsel %vm1681, %v1610, %v1612
  %v1728 = vsel %vm1681, %v1612, %v1614
  %v1729 = vsel %vm1681, %v1614, %v1616
  %v1730 = vsel %vm1681, %v1616, %v1618
  %v1731 = vsel %vm1681, %v1618, %v1620
  %v1732 = vsel %vm1681, %v1620, %v1622
  %v1733 = vsel %vm1681, %v1622, %v1624
  %v1734 = vsel %vm1681, %v1626, %v1628
  %v1735 = vsel %vm1681, %v1628, %v1630
  %v1736 = vsel %vm1681, %v1630, %v1632
  %v1737 = vsel %vm1681, %v1632, %v1634
  %v1738 = vsel %vm1681, %v1634, %v1636
  %v1739 = vsel %vm1681, %v1636, %v1638
  %v1740 = vsel %vm1681, %v1638, %v1640
  %v1741 = vsel %vm1681, %v1640, %v1642
  %v1742 = vsel %vm1681, %v1642, %v1644
  %v1743 = vsel %vm1681, %v1644, %v1646
  %v1744 = vsel %vm1681, %v1646, %v1648
  %v1745 = vsel %vm1681, %v1648, %v1650
  %v1746 = vsel %vm1681, %v1650, %v1652
  %v1747 = vsel %vm1681, %v1654, %v1656
  %v1748 = vsel %vm1681, %v1656, %v1658
  %v1749 = vsel %vm1681, %v1658, %v1660
  %v1750 = vsel %vm1681, %v1660, %v1662
  %v1751 = vsel %vm1681, %v1662, %v1664
  %v1752 = vsel %vm1681, %v1664, %v1666
  %v1753 = vsel %vm1681, %v1666, %v1668
  %v1754 = vsel %vm1681, %v1668, %v1670
  %v1755 = vsel %vm1681, %v1670, %v1672
  %v1756 = vsel %vm1681, %v1672, %v1674
  %v1757 = vsel %vm1681, %v1674, %v1676
  %v1758 = vsel %vm1681, %v1676, %v1678
  %v1759 = vsel %vm1681, %v1678, %v1680
  %v1839 = vsel %vm787, %v1512, 0
  %1841 = vmatprep.subr.bf16.mxu0 %v1683
  %1842 = vmatpush1.bf16.msra.mxu0 %v1682
  %1843 = vmatprep.subr.bf16.mxu0 %v1696
  %1844 = vmatpush1.bf16.msra.mxu0 %v1695
  %1845 = vmatprep.subr.bf16.mxu0 %v1709
  %1846 = vmatpush1.bf16.msra.mxu0 %v1708
  %1847 = vmatprep.subr.bf16.mxu0 %v1722
  %1848 = vmatpush1.bf16.msra.mxu0 %v1721
  %1849 = vmatprep.subr.bf16.mxu0 %v1735
  %1850 = vmatpush1.bf16.msra.mxu0 %v1734
  %1851 = vmatprep.subr.bf16.mxu0 %v1748
  %1852 = vmatpush1.bf16.msra.mxu0 %v1747
  %1853 = vmatprep.subr.bf16.mxu0 0
  %1854 = vmatpush1.bf16.msra.mxu0 0
  %1855 = vmatprep.subr.bf16.mxu0 0
  %1856 = vmatpush1.bf16.msra.mxu0 0
  %1857 = vmatprep.subr.bf16.mxu0 0
  %1858 = vmatpush1.bf16.msra.mxu0 0
  %1859 = vmatprep.subr.bf16.mxu0 0
  %1860 = vmatpush1.bf16.msra.mxu0 0
  %1861 = vmatprep.subr.bf16.mxu0 0
  %1862 = vmatpush1.bf16.msra.mxu0 0
  %1863 = vmatprep.subr.bf16.mxu0 0
  %1864 = vmatpush1.bf16.msra.mxu0 0
  %1865 = vmatprep.subr.bf16.mxu0 0
  %1866 = vmatpush1.bf16.msra.mxu0 0
  %1867 = vmatprep.subr.bf16.mxu0 0
  %1868 = vmatpush1.bf16.msra.mxu0 0
  %1869 = vmatprep.subr.bf16.mxu0 0
  %1870 = vmatpush1.bf16.msra.mxu0 0
  %1871 = vmatprep.subr.bf16.mxu0 0
  %1872 = vmatpush1.bf16.msra.mxu0 0
  %1873 = vmatprep.mubr.bf16.mxu0 0
  %1874 = vmatmul.mubr.bf16.gmra.mrb[0].mxu0 %v1839
  %v1875 = vpop.f32.mrb[0].mxu0
  %v1876 = vadd.f32 0.0, %v1875
  %v1877 = vpop.f32.mrb[0].mxu0
  %v1878 = vadd.f32 0.0, %v1877
  %v1879 = vpop.f32.mrb[0].mxu0
  %v1880 = vadd.f32 0.0, %v1879
  %v1881 = vpop.f32.mrb[0].mxu0
  %v1882 = vadd.f32 0.0, %v1881
  %1883 = vdwg.mxu0
  %1884 = vmatprep.subr.bf16.mxu0 %v1685
  %1885 = vmatpush1.bf16.msra.mxu0 %v1684
  %1886 = vmatprep.subr.bf16.mxu0 %v1698
  %1887 = vmatpush1.bf16.msra.mxu0 %v1697
  %1888 = vmatprep.subr.bf16.mxu0 %v1711
  %1889 = vmatpush1.bf16.msra.mxu0 %v1710
  %1890 = vmatprep.subr.bf16.mxu0 %v1724
  %1891 = vmatpush1.bf16.msra.mxu0 %v1723
  %1892 = vmatprep.subr.bf16.mxu0 %v1737
  %1893 = vmatpush1.bf16.msra.mxu0 %v1736
  %1894 = vmatprep.subr.bf16.mxu0 %v1750
  %1895 = vmatpush1.bf16.msra.mxu0 %v1749
  %1896 = vmatprep.subr.bf16.mxu0 0
  %1897 = vmatpush1.bf16.msra.mxu0 0
  %1898 = vmatprep.subr.bf16.mxu0 0
  %1899 = vmatpush1.bf16.msra.mxu0 0
  %1900 = vmatprep.subr.bf16.mxu0 0
  %1901 = vmatpush1.bf16.msra.mxu0 0
  %1902 = vmatprep.subr.bf16.mxu0 0
  %1903 = vmatpush1.bf16.msra.mxu0 0
  %1904 = vmatprep.subr.bf16.mxu0 0
  %1905 = vmatpush1.bf16.msra.mxu0 0
  %1906 = vmatprep.subr.bf16.mxu0 0
  %1907 = vmatpush1.bf16.msra.mxu0 0
  %1908 = vmatprep.subr.bf16.mxu0 0
  %1909 = vmatpush1.bf16.msra.mxu0 0
  %1910 = vmatprep.subr.bf16.mxu0 0
  %1911 = vmatpush1.bf16.msra.mxu0 0
  %1912 = vmatprep.subr.bf16.mxu0 0
  %1913 = vmatpush1.bf16.msra.mxu0 0
  %1914 = vmatprep.subr.bf16.mxu0 0
  %1915 = vmatpush1.bf16.msra.mxu0 0
  %1916 = vmatprep.mubr.bf16.mxu0 0
  %1917 = vmatmul.mubr.bf16.gmra.mrb[0].mxu0 %v1839
  %v1918 = vpop.f32.mrb[0].mxu0
  %v1919 = vadd.f32 0.0, %v1918
  %v1920 = vpop.f32.mrb[0].mxu0
  %v1921 = vadd.f32 0.0, %v1920
  %v1922 = vpop.f32.mrb[0].mxu0
  %v1923 = vadd.f32 0.0, %v1922
  %v1924 = vpop.f32.mrb[0].mxu0
  %v1925 = vadd.f32 0.0, %v1924
  %1926 = vdwg.mxu0
  %1927 = vmatprep.subr.bf16.mxu0 %v1687
  %1928 = vmatpush1.bf16.msra.mxu0 %v1686
  %1929 = vmatprep.subr.bf16.mxu0 %v1700
  %1930 = vmatpush1.bf16.msra.mxu0 %v1699
  %1931 = vmatprep.subr.bf16.mxu0 %v1713
  %1932 = vmatpush1.bf16.msra.mxu0 %v1712
  %1933 = vmatprep.subr.bf16.mxu0 %v1726
  %1934 = vmatpush1.bf16.msra.mxu0 %v1725
  %1935 = vmatprep.subr.bf16.mxu0 %v1739
  %1936 = vmatpush1.bf16.msra.mxu0 %v1738
  %1937 = vmatprep.subr.bf16.mxu0 %v1752
  %1938 = vmatpush1.bf16.msra.mxu0 %v1751
  %1939 = vmatprep.subr.bf16.mxu0 0
  %1940 = vmatpush1.bf16.msra.mxu0 0
  %1941 = vmatprep.subr.bf16.mxu0 0
  %1942 = vmatpush1.bf16.msra.mxu0 0
  %1943 = vmatprep.subr.bf16.mxu0 0
  %1944 = vmatpush1.bf16.msra.mxu0 0
  %1945 = vmatprep.subr.bf16.mxu0 0
  %1946 = vmatpush1.bf16.msra.mxu0 0
  %1947 = vmatprep.subr.bf16.mxu0 0
  %1948 = vmatpush1.bf16.msra.mxu0 0
  %1949 = vmatprep.subr.bf16.mxu0 0
  %1950 = vmatpush1.bf16.msra.mxu0 0
  %1951 = vmatprep.subr.bf16.mxu0 0
  %1952 = vmatpush1.bf16.msra.mxu0 0
  %1953 = vmatprep.subr.bf16.mxu0 0
  %1954 = vmatpush1.bf16.msra.mxu0 0
  %1955 = vmatprep.subr.bf16.mxu0 0
  %1956 = vmatpush1.bf16.msra.mxu0 0
  %1957 = vmatprep.subr.bf16.mxu0 0
  %1958 = vmatpush1.bf16.msra.mxu0 0
  %1959 = vmatprep.mubr.bf16.mxu0 0
  %1960 = vmatmul.mubr.bf16.gmra.mrb[0].mxu0 %v1839
  %v1961 = vpop.f32.mrb[0].mxu0
  %v1962 = vadd.f32 0.0, %v1961
  %v1963 = vpop.f32.mrb[0].mxu0
  %v1964 = vadd.f32 0.0, %v1963
  %v1965 = vpop.f32.mrb[0].mxu0
  %v1966 = vadd.f32 0.0, %v1965
  %v1967 = vpop.f32.mrb[0].mxu0
  %v1968 = vadd.f32 0.0, %v1967
  %1969 = vdwg.mxu0
  %1970 = vmatprep.subr.bf16.mxu0 %v1689
  %1971 = vmatpush1.bf16.msra.mxu0 %v1688
  %1972 = vmatprep.subr.bf16.mxu0 %v1702
  %1973 = vmatpush1.bf16.msra.mxu0 %v1701
  %1974 = vmatprep.subr.bf16.mxu0 %v1715
  %1975 = vmatpush1.bf16.msra.mxu0 %v1714
  %1976 = vmatprep.subr.bf16.mxu0 %v1728
  %1977 = vmatpush1.bf16.msra.mxu0 %v1727
  %1978 = vmatprep.subr.bf16.mxu0 %v1741
  %1979 = vmatpush1.bf16.msra.mxu0 %v1740
  %1980 = vmatprep.subr.bf16.mxu0 %v1754
  %1981 = vmatpush1.bf16.msra.mxu0 %v1753
  %1982 = vmatprep.subr.bf16.mxu0 0
  %1983 = vmatpush1.bf16.msra.mxu0 0
  %1984 = vmatprep.subr.bf16.mxu0 0
  %1985 = vmatpush1.bf16.msra.mxu0 0
  %1986 = vmatprep.subr.bf16.mxu0 0
  %1987 = vmatpush1.bf16.msra.mxu0 0
  %1988 = vmatprep.subr.bf16.mxu0 0
  %1989 = vmatpush1.bf16.msra.mxu0 0
  %1990 = vmatprep.subr.bf16.mxu0 0
  %1991 = vmatpush1.bf16.msra.mxu0 0
  %1992 = vmatprep.subr.bf16.mxu0 0
  %1993 = vmatpush1.bf16.msra.mxu0 0
  %1994 = vmatprep.subr.bf16.mxu0 0
  %1995 = vmatpush1.bf16.msra.mxu0 0
  %1996 = vmatprep.subr.bf16.mxu0 0
  %1997 = vmatpush1.bf16.msra.mxu0 0
  %1998 = vmatprep.subr.bf16.mxu0 0
  %1999 = vmatpush1.bf16.msra.mxu0 0
  %2000 = vmatprep.subr.bf16.mxu0 0
  %2001 = vmatpush1.bf16.msra.mxu0 0
  %2002 = vmatprep.mubr.bf16.mxu0 0
  %2003 = vmatmul.mubr.bf16.gmra.mrb[0].mxu0 %v1839
  %v2004 = vpop.f32.mrb[0].mxu0
  %v2005 = vadd.f32 0.0, %v2004
  %v2006 = vpop.f32.mrb[0].mxu0
  %v2007 = vadd.f32 0.0, %v2006
  %v2008 = vpop.f32.mrb[0].mxu0
  %v2009 = vadd.f32 0.0, %v2008
  %v2010 = vpop.f32.mrb[0].mxu0
  %v2011 = vadd.f32 0.0, %v2010
  %2012 = vdwg.mxu0
  %2013 = vmatprep.subr.bf16.mxu0 %v1691
  %2014 = vmatpush1.bf16.msra.mxu0 %v1690
  %2015 = vmatprep.subr.bf16.mxu0 %v1704
  %2016 = vmatpush1.bf16.msra.mxu0 %v1703
  %2017 = vmatprep.subr.bf16.mxu0 %v1717
  %2018 = vmatpush1.bf16.msra.mxu0 %v1716
  %2019 = vmatprep.subr.bf16.mxu0 %v1730
  %2020 = vmatpush1.bf16.msra.mxu0 %v1729
  %2021 = vmatprep.subr.bf16.mxu0 %v1743
  %2022 = vmatpush1.bf16.msra.mxu0 %v1742
  %2023 = vmatprep.subr.bf16.mxu0 %v1756
  %2024 = vmatpush1.bf16.msra.mxu0 %v1755
  %2025 = vmatprep.subr.bf16.mxu0 0
  %2026 = vmatpush1.bf16.msra.mxu0 0
  %2027 = vmatprep.subr.bf16.mxu0 0
  %2028 = vmatpush1.bf16.msra.mxu0 0
  %2029 = vmatprep.subr.bf16.mxu0 0
  %2030 = vmatpush1.bf16.msra.mxu0 0
  %2031 = vmatprep.subr.bf16.mxu0 0
  %2032 = vmatpush1.bf16.msra.mxu0 0
  %2033 = vmatprep.subr.bf16.mxu0 0
  %2034 = vmatpush1.bf16.msra.mxu0 0
  %2035 = vmatprep.subr.bf16.mxu0 0
  %2036 = vmatpush1.bf16.msra.mxu0 0
  %2037 = vmatprep.subr.bf16.mxu0 0
  %2038 = vmatpush1.bf16.msra.mxu0 0
  %2039 = vmatprep.subr.bf16.mxu0 0
  %2040 = vmatpush1.bf16.msra.mxu0 0
  %2041 = vmatprep.subr.bf16.mxu0 0
  %2042 = vmatpush1.bf16.msra.mxu0 0
  %2043 = vmatprep.subr.bf16.mxu0 0
  %2044 = vmatpush1.bf16.msra.mxu0 0
  %2045 = vmatprep.mubr.bf16.mxu0 0
  %2046 = vmatmul.mubr.bf16.gmra.mrb[0].mxu0 %v1839
  %v2047 = vpop.f32.mrb[0].mxu0
  %v2048 = vadd.f32 0.0, %v2047
  %v2049 = vpop.f32.mrb[0].mxu0
  %v2050 = vadd.f32 0.0, %v2049
  %v2051 = vpop.f32.mrb[0].mxu0
  %v2052 = vadd.f32 0.0, %v2051
  %v2053 = vpop.f32.mrb[0].mxu0
  %v2054 = vadd.f32 0.0, %v2053
  %2055 = vdwg.mxu0
  %2056 = vmatprep.subr.bf16.mxu0 %v1693
  %2057 = vmatpush1.bf16.msra.mxu0 %v1692
  %2058 = vmatprep.subr.bf16.mxu0 %v1706
  %2059 = vmatpush1.bf16.msra.mxu0 %v1705
  %2060 = vmatprep.subr.bf16.mxu0 %v1719
  %2061 = vmatpush1.bf16.msra.mxu0 %v1718
  %2062 = vmatprep.subr.bf16.mxu0 %v1732
  %2063 = vmatpush1.bf16.msra.mxu0 %v1731
  %2064 = vmatprep.subr.bf16.mxu0 %v1745
  %2065 = vmatpush1.bf16.msra.mxu0 %v1744
  %2066 = vmatprep.subr.bf16.mxu0 %v1758
  %2067 = vmatpush1.bf16.msra.mxu0 %v1757
  %2068 = vmatprep.subr.bf16.mxu0 0
  %2069 = vmatpush1.bf16.msra.mxu0 0
  %2070 = vmatprep.subr.bf16.mxu0 0
  %2071 = vmatpush1.bf16.msra.mxu0 0
  %2072 = vmatprep.subr.bf16.mxu0 0
  %2073 = vmatpush1.bf16.msra.mxu0 0
  %2074 = vmatprep.subr.bf16.mxu0 0
  %2075 = vmatpush1.bf16.msra.mxu0 0
  %2076 = vmatprep.subr.bf16.mxu0 0
  %2077 = vmatpush1.bf16.msra.mxu0 0
  %2078 = vmatprep.subr.bf16.mxu0 0
  %2079 = vmatpush1.bf16.msra.mxu0 0
  %2080 = vmatprep.subr.bf16.mxu0 0
  %2081 = vmatpush1.bf16.msra.mxu0 0
  %2082 = vmatprep.subr.bf16.mxu0 0
  %2083 = vmatpush1.bf16.msra.mxu0 0
  %2084 = vmatprep.subr.bf16.mxu0 0
  %2085 = vmatpush1.bf16.msra.mxu0 0
  %2086 = vmatprep.subr.bf16.mxu0 0
  %2087 = vmatpush1.bf16.msra.mxu0 0
  %2088 = vmatprep.mubr.bf16.mxu0 0
  %2089 = vmatmul.mubr.bf16.gmra.mrb[0].mxu0 %v1839
  %v2090 = vpop.f32.mrb[0].mxu0
  %v2091 = vadd.f32 0.0, %v2090
  %v2092 = vpop.f32.mrb[0].mxu0
  %v2093 = vadd.f32 0.0, %v2092
  %v2094 = vpop.f32.mrb[0].mxu0
  %v2095 = vadd.f32 0.0, %v2094
  %v2096 = vpop.f32.mrb[0].mxu0
  %v2097 = vadd.f32 0.0, %v2096
  %2098 = vdwg.mxu0
  %2099 = vmatprep.subr.bf16.mxu0 0
  %2100 = vmatpush1.bf16.msra.mxu0 %v1694
  %2101 = vmatprep.subr.bf16.mxu0 0
  %2102 = vmatpush1.bf16.msra.mxu0 %v1707
  %2103 = vmatprep.subr.bf16.mxu0 0
  %2104 = vmatpush1.bf16.msra.mxu0 %v1720
  %2105 = vmatprep.subr.bf16.mxu0 0
  %2106 = vmatpush1.bf16.msra.mxu0 %v1733
  %2107 = vmatprep.subr.bf16.mxu0 0
  %2108 = vmatpush1.bf16.msra.mxu0 %v1746
  %2109 = vmatprep.subr.bf16.mxu0 0
  %2110 = vmatpush1.bf16.msra.mxu0 %v1759
  %2111 = vmatprep.subr.bf16.mxu0 0
  %2112 = vmatpush1.bf16.msra.mxu0 0
  %2113 = vmatprep.subr.bf16.mxu0 0
  %2114 = vmatpush1.bf16.msra.mxu0 0
  %2115 = vmatprep.subr.bf16.mxu0 0
  %2116 = vmatpush1.bf16.msra.mxu0 0
  %2117 = vmatprep.subr.bf16.mxu0 0
  %2118 = vmatpush1.bf16.msra.mxu0 0
  %2119 = vmatprep.subr.bf16.mxu0 0
  %2120 = vmatpush1.bf16.msra.mxu0 0
  %2121 = vmatprep.subr.bf16.mxu0 0
  %2122 = vmatpush1.bf16.msra.mxu0 0
  %2123 = vmatprep.subr.bf16.mxu0 0
  %2124 = vmatpush1.bf16.msra.mxu0 0
  %2125 = vmatprep.subr.bf16.mxu0 0
  %2126 = vmatpush1.bf16.msra.mxu0 0
  %2127 = vmatprep.subr.bf16.mxu0 0
  %2128 = vmatpush1.bf16.msra.mxu0 0
  %2129 = vmatprep.subr.bf16.mxu0 0
  %2130 = vmatpush1.bf16.msra.mxu0 0
  %2131 = vmatprep.mubr.bf16.mxu0 0
  %2132 = vmatmul.mubr.bf16.gmra.mrb[0].mxu0 %v1839
  %v2133 = vpop.f32.mrb[0].mxu0
  %v2134 = vadd.f32 0.0, %v2133
  %v2135 = vpop.f32.mrb[0].mxu0
  %v2136 = vpop.f32.mrb[0].mxu0
  %v2137 = vadd.f32 0.0, %v2136
  %v2138 = vpop.f32.mrb[0].mxu0
  %2139 = vdwg.mxu0
  %v2140 = vadd.f32 %v1241, %v1876
  %v2141 = vadd.f32 %v1243, %v1878
  %v2142 = vadd.f32 %v1284, %v1919
  %v2143 = vadd.f32 %v1286, %v1921
  %v2144 = vadd.f32 %v1327, %v1962
  %v2145 = vadd.f32 %v1329, %v1964
  %v2146 = vadd.f32 %v1370, %v2005
  %v2147 = vadd.f32 %v1372, %v2007
  %v2148 = vadd.f32 %v1413, %v2048
  %v2149 = vadd.f32 %v1415, %v2050
  %v2150 = vadd.f32 %v1456, %v2091
  %v2151 = vadd.f32 %v1458, %v2093
  %v2152 = vadd.f32 %v1499, %v2134
  %v2153 = vadd.f32 %v1245, %v1880
  %v2154 = vadd.f32 %v1247, %v1882
  %v2155 = vadd.f32 %v1288, %v1923
  %v2156 = vadd.f32 %v1290, %v1925
  %v2157 = vadd.f32 %v1331, %v1966
  %v2158 = vadd.f32 %v1333, %v1968
  %v2159 = vadd.f32 %v1374, %v2009
  %v2160 = vadd.f32 %v1376, %v2011
  %v2161 = vadd.f32 %v1417, %v2052
  %v2162 = vadd.f32 %v1419, %v2054
  %v2163 = vadd.f32 %v1460, %v2095
  %v2164 = vadd.f32 %v1462, %v2097
  %v2165 = vadd.f32 %v1502, %v2137
  %s2166 = scalar_lea.vmem %s1, 24
  %v2167 = vld [vmem:[%s2166] sm:$0xf]
  %v2168 = vld [vmem:[%s2166 + $0x4] sm:$0x3]
  %v2171 = vunpack.c.l.b16 %v2167
  %v2172 = vunpack.c.l.b16 %v2168
  %v2173 = vpack.c.b16 %v2172, %v2171
  %2174 = vrot.lane.b32.xlu0 %v378, 23
  %v2175 = vpop.permute.xlu0 %2174
  %2176 = vrot.lane.b32.xlu0 %v379, 23
  %v2177 = vpop.permute.xlu0 %2176
  %2178 = vrot.lane.b32.xlu0 %v380, 23
  %v2179 = vpop.permute.xlu0 %2178
  %2180 = vrot.lane.b32.xlu0 %v381, 23
  %v2181 = vpop.permute.xlu0 %2180
  %2182 = vrot.lane.b32.xlu0 %v382, 23
  %v2183 = vpop.permute.xlu0 %2182
  %2184 = vrot.lane.b32.xlu0 %v383, 23
  %v2185 = vpop.permute.xlu0 %2184
  %2186 = vrot.lane.b32.xlu0 %v384, 23
  %v2187 = vpop.permute.xlu0 %2186
  %2188 = vrot.lane.b32.xlu0 %v385, 23
  %v2189 = vpop.permute.xlu0 %2188
  %2190 = vrot.lane.b32.xlu0 %v386, 23
  %v2191 = vpop.permute.xlu0 %2190
  %2192 = vrot.lane.b32.xlu0 %v387, 23
  %v2193 = vpop.permute.xlu0 %2192
  %2194 = vrot.lane.b32.xlu0 %v388, 23
  %v2195 = vpop.permute.xlu0 %2194
  %2196 = vrot.lane.b32.xlu0 %v389, 23
  %v2197 = vpop.permute.xlu0 %2196
  %2198 = vrot.lane.b32.xlu0 %v390, 23
  %v2199 = vpop.permute.xlu0 %2198
  %2200 = vrot.lane.b32.xlu0 %v391, 23
  %v2201 = vpop.permute.xlu0 %2200
  %2202 = vrot.lane.b32.xlu0 %v392, 23
  %v2203 = vpop.permute.xlu0 %2202
  %2204 = vrot.lane.b32.xlu0 %v393, 23
  %v2205 = vpop.permute.xlu0 %2204
  %2206 = vrot.lane.b32.xlu0 %v394, 23
  %v2207 = vpop.permute.xlu0 %2206
  %2208 = vrot.lane.b32.xlu0 %v395, 23
  %v2209 = vpop.permute.xlu0 %2208
  %2210 = vrot.lane.b32.xlu0 %v396, 23
  %v2211 = vpop.permute.xlu0 %2210
  %2212 = vrot.lane.b32.xlu0 %v397, 23
  %v2213 = vpop.permute.xlu0 %2212
  %2214 = vrot.lane.b32.xlu0 %v398, 23
  %v2215 = vpop.permute.xlu0 %2214
  %2216 = vrot.lane.b32.xlu0 %v399, 23
  %v2217 = vpop.permute.xlu0 %2216
  %2218 = vrot.lane.b32.xlu0 %v400, 23
  %v2219 = vpop.permute.xlu0 %2218
  %2220 = vrot.lane.b32.xlu0 %v401, 23
  %v2221 = vpop.permute.xlu0 %2220
  %2222 = vrot.lane.b32.xlu0 %v402, 23
  %v2223 = vpop.permute.xlu0 %2222
  %2224 = vrot.lane.b32.xlu0 %v403, 23
  %v2225 = vpop.permute.xlu0 %2224
  %2226 = vrot.lane.b32.xlu0 %v404, 23
  %v2227 = vpop.permute.xlu0 %2226
  %2228 = vrot.lane.b32.xlu0 %v405, 23
  %v2229 = vpop.permute.xlu0 %2228
  %2230 = vrot.lane.b32.xlu0 %v406, 23
  %v2231 = vpop.permute.xlu0 %2230
  %2232 = vrot.lane.b32.xlu0 %v407, 23
  %v2233 = vpop.permute.xlu0 %2232
  %2234 = vrot.lane.b32.xlu0 %v408, 23
  %v2235 = vpop.permute.xlu0 %2234
  %2236 = vrot.lane.b32.xlu0 %v409, 23
  %v2237 = vpop.permute.xlu0 %2236
  %2238 = vrot.lane.b32.xlu0 %v410, 23
  %v2239 = vpop.permute.xlu0 %2238
  %2240 = vrot.lane.b32.xlu0 %v411, 23
  %v2241 = vpop.permute.xlu0 %2240
  %2242 = vrot.lane.b32.xlu0 %v412, 23
  %v2243 = vpop.permute.xlu0 %2242
  %2244 = vrot.lane.b32.xlu0 %v413, 23
  %v2245 = vpop.permute.xlu0 %2244
  %2246 = vrot.lane.b32.xlu0 %v414, 23
  %v2247 = vpop.permute.xlu0 %2246
  %2248 = vrot.lane.b32.xlu0 %v415, 23
  %v2249 = vpop.permute.xlu0 %2248
  %2250 = vrot.lane.b32.xlu0 %v416, 23
  %v2251 = vpop.permute.xlu0 %2250
  %2252 = vrot.lane.b32.xlu0 %v417, 23
  %v2253 = vpop.permute.xlu0 %2252
  %2254 = vrot.lane.b32.xlu0 %v418, 23
  %v2255 = vpop.permute.xlu0 %2254
  %2256 = vrot.lane.b32.xlu0 %v419, 23
  %v2257 = vpop.permute.xlu0 %2256
  %2258 = vrot.lane.b32.xlu0 %v420, 23
  %v2259 = vpop.permute.xlu0 %2258
  %2260 = vrot.lane.b32.xlu0 %v421, 23
  %v2261 = vpop.permute.xlu0 %2260
  %2262 = vrot.lane.b32.xlu0 %v422, 23
  %v2263 = vpop.permute.xlu0 %2262
  %2264 = vrot.lane.b32.xlu0 %v423, 23
  %v2265 = vpop.permute.xlu0 %2264
  %2266 = vrot.lane.b32.xlu0 %v424, 23
  %v2267 = vpop.permute.xlu0 %2266
  %2268 = vrot.lane.b32.xlu0 %v425, 23
  %v2269 = vpop.permute.xlu0 %2268
  %2270 = vrot.lane.b32.xlu0 %v426, 23
  %v2271 = vpop.permute.xlu0 %2270
  %2272 = vrot.lane.b32.xlu0 %v427, 23
  %v2273 = vpop.permute.xlu0 %2272
  %2274 = vrot.lane.b32.xlu0 %v428, 23
  %v2275 = vpop.permute.xlu0 %2274
  %2276 = vrot.lane.b32.xlu0 %v429, 23
  %v2277 = vpop.permute.xlu0 %2276
  %2278 = vrot.lane.b32.xlu0 %v430, 23
  %v2279 = vpop.permute.xlu0 %2278
  %2280 = vrot.lane.b32.xlu0 %v431, 23
  %v2281 = vpop.permute.xlu0 %2280
  %2282 = vrot.lane.b32.xlu0 %v432, 23
  %v2283 = vpop.permute.xlu0 %2282
  %2284 = vrot.lane.b32.xlu0 %v433, 23
  %v2285 = vpop.permute.xlu0 %2284
  %2286 = vrot.lane.b32.xlu0 %v434, 23
  %v2287 = vpop.permute.xlu0 %2286
  %2288 = vrot.lane.b32.xlu0 %v435, 23
  %v2289 = vpop.permute.xlu0 %2288
  %2290 = vrot.lane.b32.xlu0 %v436, 23
  %v2291 = vpop.permute.xlu0 %2290
  %2292 = vrot.lane.b32.xlu0 %v437, 23
  %v2293 = vpop.permute.xlu0 %2292
  %2294 = vrot.lane.b32.xlu0 %v438, 23
  %v2295 = vpop.permute.xlu0 %2294
  %2296 = vrot.lane.b32.xlu0 %v439, 23
  %v2297 = vpop.permute.xlu0 %2296
  %2298 = vrot.lane.b32.xlu0 %v440, 23
  %v2299 = vpop.permute.xlu0 %2298
  %2300 = vrot.lane.b32.xlu0 %v441, 23
  %v2301 = vpop.permute.xlu0 %2300
  %2302 = vrot.lane.b32.xlu0 %v442, 23
  %v2303 = vpop.permute.xlu0 %2302
  %2304 = vrot.lane.b32.xlu0 %v443, 23
  %v2305 = vpop.permute.xlu0 %2304
  %2306 = vrot.lane.b32.xlu0 %v444, 23
  %v2307 = vpop.permute.xlu0 %2306
  %2308 = vrot.lane.b32.xlu0 %v445, 23
  %v2309 = vpop.permute.xlu0 %2308
  %2310 = vrot.lane.b32.xlu0 %v446, 23
  %v2311 = vpop.permute.xlu0 %2310
  %2312 = vrot.lane.b32.xlu0 %v447, 23
  %v2313 = vpop.permute.xlu0 %2312
  %2314 = vrot.lane.b32.xlu0 %v448, 23
  %v2315 = vpop.permute.xlu0 %2314
  %2316 = vrot.lane.b32.xlu0 %v449, 23
  %v2317 = vpop.permute.xlu0 %2316
  %2318 = vrot.lane.b32.xlu0 %v450, 23
  %v2319 = vpop.permute.xlu0 %2318
  %2320 = vrot.lane.b32.xlu0 %v451, 23
  %v2321 = vpop.permute.xlu0 %2320
  %2322 = vrot.lane.b32.xlu0 %v452, 23
  %v2323 = vpop.permute.xlu0 %2322
  %2324 = vrot.lane.b32.xlu0 %v453, 23
  %v2325 = vpop.permute.xlu0 %2324
  %2326 = vrot.lane.b32.xlu0 %v454, 23
  %v2327 = vpop.permute.xlu0 %2326
  %2328 = vrot.lane.b32.xlu0 %v455, 23
  %v2329 = vpop.permute.xlu0 %2328
  %2330 = vrot.lane.b32.xlu0 %v456, 23
  %v2331 = vpop.permute.xlu0 %2330
  %2332 = vrot.lane.b32.xlu0 %v457, 23
  %v2333 = vpop.permute.xlu0 %2332
  %2334 = vrot.lane.b32.xlu0 %v458, 23
  %v2335 = vpop.permute.xlu0 %2334
  %2336 = vrot.lane.b32.xlu0 %v459, 23
  %v2337 = vpop.permute.xlu0 %2336
  %2338 = vrot.lane.b32.xlu0 %v460, 23
  %v2339 = vpop.permute.xlu0 %2338
  %2340 = vrot.lane.b32.xlu0 %v461, 23
  %v2341 = vpop.permute.xlu0 %2340
  %vm2342 = vcmask 187392
  %v2343 = vsel %vm2342, %v2175, %v2177
  %v2344 = vsel %vm2342, %v2177, %v2179
  %v2345 = vsel %vm2342, %v2179, %v2181
  %v2346 = vsel %vm2342, %v2181, %v2183
  %v2347 = vsel %vm2342, %v2183, %v2185
  %v2348 = vsel %vm2342, %v2185, %v2187
  %v2349 = vsel %vm2342, %v2187, %v2189
  %v2350 = vsel %vm2342, %v2189, %v2191
  %v2351 = vsel %vm2342, %v2191, %v2193
  %v2352 = vsel %vm2342, %v2193, %v2195
  %v2353 = vsel %vm2342, %v2195, %v2197
  %v2354 = vsel %vm2342, %v2197, %v2199
  %v2355 = vsel %vm2342, %v2199, %v2201
  %v2356 = vsel %vm2342, %v2203, %v2205
  %v2357 = vsel %vm2342, %v2205, %v2207
  %v2358 = vsel %vm2342, %v2207, %v2209
  %v2359 = vsel %vm2342, %v2209, %v2211
  %v2360 = vsel %vm2342, %v2211, %v2213
  %v2361 = vsel %vm2342, %v2213, %v2215
  %v2362 = vsel %vm2342, %v2215, %v2217
  %v2363 = vsel %vm2342, %v2217, %v2219
  %v2364 = vsel %vm2342, %v2219, %v2221
  %v2365 = vsel %vm2342, %v2221, %v2223
  %v2366 = vsel %vm2342, %v2223, %v2225
  %v2367 = vsel %vm2342, %v2225, %v2227
  %v2368 = vsel %vm2342, %v2227, %v2229
  %v2369 = vsel %vm2342, %v2231, %v2233
  %v2370 = vsel %vm2342, %v2233, %v2235
  %v2371 = vsel %vm2342, %v2235, %v2237
  %v2372 = vsel %vm2342, %v2237, %v2239
  %v2373 = vsel %vm2342, %v2239, %v2241
  %v2374 = vsel %vm2342, %v2241, %v2243
  %v2375 = vsel %vm2342, %v2243, %v2245
  %v2376 = vsel %vm2342, %v2245, %v2247
  %v2377 = vsel %vm2342, %v2247, %v2249
  %v2378 = vsel %vm2342, %v2249, %v2251
  %v2379 = vsel %vm2342, %v2251, %v2253
  %v2380 = vsel %vm2342, %v2253, %v2255
  %v2381 = vsel %vm2342, %v2255, %v2257
  %v2382 = vsel %vm2342, %v2259, %v2261
  %v2383 = vsel %vm2342, %v2261, %v2263
  %v2384 = vsel %vm2342, %v2263, %v2265
  %v2385 = vsel %vm2342, %v2265, %v2267
  %v2386 = vsel %vm2342, %v2267, %v2269
  %v2387 = vsel %vm2342, %v2269, %v2271
  %v2388 = vsel %vm2342, %v2271, %v2273
  %v2389 = vsel %vm2342, %v2273, %v2275
  %v2390 = vsel %vm2342, %v2275, %v2277
  %v2391 = vsel %vm2342, %v2277, %v2279
  %v2392 = vsel %vm2342, %v2279, %v2281
  %v2393 = vsel %vm2342, %v2281, %v2283
  %v2394 = vsel %vm2342, %v2283, %v2285
  %v2395 = vsel %vm2342, %v2287, %v2289
  %v2396 = vsel %vm2342, %v2289, %v2291
  %v2397 = vsel %vm2342, %v2291, %v2293
  %v2398 = vsel %vm2342, %v2293, %v2295
  %v2399 = vsel %vm2342, %v2295, %v2297
  %v2400 = vsel %vm2342, %v2297, %v2299
  %v2401 = vsel %vm2342, %v2299, %v2301
  %v2402 = vsel %vm2342, %v2301, %v2303
  %v2403 = vsel %vm2342, %v2303, %v2305
  %v2404 = vsel %vm2342, %v2305, %v2307
  %v2405 = vsel %vm2342, %v2307, %v2309
  %v2406 = vsel %vm2342, %v2309, %v2311
  %v2407 = vsel %vm2342, %v2311, %v2313
  %v2408 = vsel %vm2342, %v2315, %v2317
  %v2409 = vsel %vm2342, %v2317, %v2319
  %v2410 = vsel %vm2342, %v2319, %v2321
  %v2411 = vsel %vm2342, %v2321, %v2323
  %v2412 = vsel %vm2342, %v2323, %v2325
  %v2413 = vsel %vm2342, %v2325, %v2327
  %v2414 = vsel %vm2342, %v2327, %v2329
  %v2415 = vsel %vm2342, %v2329, %v2331
  %v2416 = vsel %vm2342, %v2331, %v2333
  %v2417 = vsel %vm2342, %v2333, %v2335
  %v2418 = vsel %vm2342, %v2335, %v2337
  %v2419 = vsel %vm2342, %v2337, %v2339
  %v2420 = vsel %vm2342, %v2339, %v2341
  %v2500 = vsel %vm787, %v2173, 0
  %2502 = vmatprep.subr.bf16.mxu0 %v2344
  %2503 = vmatpush1.bf16.msra.mxu0 %v2343
  %2504 = vmatprep.subr.bf16.mxu0 %v2357
  %2505 = vmatpush1.bf16.msra.mxu0 %v2356
  %2506 = vmatprep.subr.bf16.mxu0 %v2370
  %2507 = vmatpush1.bf16.msra.mxu0 %v2369
  %2508 = vmatprep.subr.bf16.mxu0 %v2383
  %2509 = vmatpush1.bf16.msra.mxu0 %v2382
  %2510 = vmatprep.subr.bf16.mxu0 %v2396
  %2511 = vmatpush1.bf16.msra.mxu0 %v2395
  %2512 = vmatprep.subr.bf16.mxu0 %v2409
  %2513 = vmatpush1.bf16.msra.mxu0 %v2408
  %2514 = vmatprep.subr.bf16.mxu0 0
  %2515 = vmatpush1.bf16.msra.mxu0 0
  %2516 = vmatprep.subr.bf16.mxu0 0
  %2517 = vmatpush1.bf16.msra.mxu0 0
  %2518 = vmatprep.subr.bf16.mxu0 0
  %2519 = vmatpush1.bf16.msra.mxu0 0
  %2520 = vmatprep.subr.bf16.mxu0 0
  %2521 = vmatpush1.bf16.msra.mxu0 0
  %2522 = vmatprep.subr.bf16.mxu0 0
  %2523 = vmatpush1.bf16.msra.mxu0 0
  %2524 = vmatprep.subr.bf16.mxu0 0
  %2525 = vmatpush1.bf16.msra.mxu0 0
  %2526 = vmatprep.subr.bf16.mxu0 0
  %2527 = vmatpush1.bf16.msra.mxu0 0
  %2528 = vmatprep.subr.bf16.mxu0 0
  %2529 = vmatpush1.bf16.msra.mxu0 0
  %2530 = vmatprep.subr.bf16.mxu0 0
  %2531 = vmatpush1.bf16.msra.mxu0 0
  %2532 = vmatprep.subr.bf16.mxu0 0
  %2533 = vmatpush1.bf16.msra.mxu0 0
  %2534 = vmatprep.mubr.bf16.mxu0 0
  %2535 = vmatmul.mubr.bf16.gmra.mrb[0].mxu0 %v2500
  %v2536 = vpop.f32.mrb[0].mxu0
  %v2537 = vadd.f32 0.0, %v2536
  %v2538 = vpop.f32.mrb[0].mxu0
  %v2539 = vadd.f32 0.0, %v2538
  %v2540 = vpop.f32.mrb[0].mxu0
  %v2541 = vadd.f32 0.0, %v2540
  %v2542 = vpop.f32.mrb[0].mxu0
  %v2543 = vadd.f32 0.0, %v2542
  %2544 = vdwg.mxu0
  %2545 = vmatprep.subr.bf16.mxu0 %v2346
  %2546 = vmatpush1.bf16.msra.mxu0 %v2345
  %2547 = vmatprep.subr.bf16.mxu0 %v2359
  %2548 = vmatpush1.bf16.msra.mxu0 %v2358
  %2549 = vmatprep.subr.bf16.mxu0 %v2372
  %2550 = vmatpush1.bf16.msra.mxu0 %v2371
  %2551 = vmatprep.subr.bf16.mxu0 %v2385
  %2552 = vmatpush1.bf16.msra.mxu0 %v2384
  %2553 = vmatprep.subr.bf16.mxu0 %v2398
  %2554 = vmatpush1.bf16.msra.mxu0 %v2397
  %2555 = vmatprep.subr.bf16.mxu0 %v2411
  %2556 = vmatpush1.bf16.msra.mxu0 %v2410
  %2557 = vmatprep.subr.bf16.mxu0 0
  %2558 = vmatpush1.bf16.msra.mxu0 0
  %2559 = vmatprep.subr.bf16.mxu0 0
  %2560 = vmatpush1.bf16.msra.mxu0 0
  %2561 = vmatprep.subr.bf16.mxu0 0
  %2562 = vmatpush1.bf16.msra.mxu0 0
  %2563 = vmatprep.subr.bf16.mxu0 0
  %2564 = vmatpush1.bf16.msra.mxu0 0
  %2565 = vmatprep.subr.bf16.mxu0 0
  %2566 = vmatpush1.bf16.msra.mxu0 0
  %2567 = vmatprep.subr.bf16.mxu0 0
  %2568 = vmatpush1.bf16.msra.mxu0 0
  %2569 = vmatprep.subr.bf16.mxu0 0
  %2570 = vmatpush1.bf16.msra.mxu0 0
  %2571 = vmatprep.subr.bf16.mxu0 0
  %2572 = vmatpush1.bf16.msra.mxu0 0
  %2573 = vmatprep.subr.bf16.mxu0 0
  %2574 = vmatpush1.bf16.msra.mxu0 0
  %2575 = vmatprep.subr.bf16.mxu0 0
  %2576 = vmatpush1.bf16.msra.mxu0 0
  %2577 = vmatprep.mubr.bf16.mxu0 0
  %2578 = vmatmul.mubr.bf16.gmra.mrb[0].mxu0 %v2500
  %v2579 = vpop.f32.mrb[0].mxu0
  %v2580 = vadd.f32 0.0, %v2579
  %v2581 = vpop.f32.mrb[0].mxu0
  %v2582 = vadd.f32 0.0, %v2581
  %v2583 = vpop.f32.mrb[0].mxu0
  %v2584 = vadd.f32 0.0, %v2583
  %v2585 = vpop.f32.mrb[0].mxu0
  %v2586 = vadd.f32 0.0, %v2585
  %2587 = vdwg.mxu0
  %2588 = vmatprep.subr.bf16.mxu0 %v2348
  %2589 = vmatpush1.bf16.msra.mxu0 %v2347
  %2590 = vmatprep.subr.bf16.mxu0 %v2361
  %2591 = vmatpush1.bf16.msra.mxu0 %v2360
  %2592 = vmatprep.subr.bf16.mxu0 %v2374
  %2593 = vmatpush1.bf16.msra.mxu0 %v2373
  %2594 = vmatprep.subr.bf16.mxu0 %v2387
  %2595 = vmatpush1.bf16.msra.mxu0 %v2386
  %2596 = vmatprep.subr.bf16.mxu0 %v2400
  %2597 = vmatpush1.bf16.msra.mxu0 %v2399
  %2598 = vmatprep.subr.bf16.mxu0 %v2413
  %2599 = vmatpush1.bf16.msra.mxu0 %v2412
  %2600 = vmatprep.subr.bf16.mxu0 0
  %2601 = vmatpush1.bf16.msra.mxu0 0
  %2602 = vmatprep.subr.bf16.mxu0 0
  %2603 = vmatpush1.bf16.msra.mxu0 0
  %2604 = vmatprep.subr.bf16.mxu0 0
  %2605 = vmatpush1.bf16.msra.mxu0 0
  %2606 = vmatprep.subr.bf16.mxu0 0
  %2607 = vmatpush1.bf16.msra.mxu0 0
  %2608 = vmatprep.subr.bf16.mxu0 0
  %2609 = vmatpush1.bf16.msra.mxu0 0
  %2610 = vmatprep.subr.bf16.mxu0 0
  %2611 = vmatpush1.bf16.msra.mxu0 0
  %2612 = vmatprep.subr.bf16.mxu0 0
  %2613 = vmatpush1.bf16.msra.mxu0 0
  %2614 = vmatprep.subr.bf16.mxu0 0
  %2615 = vmatpush1.bf16.msra.mxu0 0
  %2616 = vmatprep.subr.bf16.mxu0 0
  %2617 = vmatpush1.bf16.msra.mxu0 0
  %2618 = vmatprep.subr.bf16.mxu0 0
  %2619 = vmatpush1.bf16.msra.mxu0 0
  %2620 = vmatprep.mubr.bf16.mxu0 0
  %2621 = vmatmul.mubr.bf16.gmra.mrb[0].mxu0 %v2500
  %v2622 = vpop.f32.mrb[0].mxu0
  %v2623 = vadd.f32 0.0, %v2622
  %v2624 = vpop.f32.mrb[0].mxu0
  %v2625 = vadd.f32 0.0, %v2624
  %v2626 = vpop.f32.mrb[0].mxu0
  %v2627 = vadd.f32 0.0, %v2626
  %v2628 = vpop.f32.mrb[0].mxu0
  %v2629 = vadd.f32 0.0, %v2628
  %2630 = vdwg.mxu0
  %2631 = vmatprep.subr.bf16.mxu0 %v2350
  %2632 = vmatpush1.bf16.msra.mxu0 %v2349
  %2633 = vmatprep.subr.bf16.mxu0 %v2363
  %2634 = vmatpush1.bf16.msra.mxu0 %v2362
  %2635 = vmatprep.subr.bf16.mxu0 %v2376
  %2636 = vmatpush1.bf16.msra.mxu0 %v2375
  %2637 = vmatprep.subr.bf16.mxu0 %v2389
  %2638 = vmatpush1.bf16.msra.mxu0 %v2388
  %2639 = vmatprep.subr.bf16.mxu0 %v2402
  %2640 = vmatpush1.bf16.msra.mxu0 %v2401
  %2641 = vmatprep.subr.bf16.mxu0 %v2415
  %2642 = vmatpush1.bf16.msra.mxu0 %v2414
  %2643 = vmatprep.subr.bf16.mxu0 0
  %2644 = vmatpush1.bf16.msra.mxu0 0
  %2645 = vmatprep.subr.bf16.mxu0 0
  %2646 = vmatpush1.bf16.msra.mxu0 0
  %2647 = vmatprep.subr.bf16.mxu0 0
  %2648 = vmatpush1.bf16.msra.mxu0 0
  %2649 = vmatprep.subr.bf16.mxu0 0
  %2650 = vmatpush1.bf16.msra.mxu0 0
  %2651 = vmatprep.subr.bf16.mxu0 0
  %2652 = vmatpush1.bf16.msra.mxu0 0
  %2653 = vmatprep.subr.bf16.mxu0 0
  %2654 = vmatpush1.bf16.msra.mxu0 0
  %2655 = vmatprep.subr.bf16.mxu0 0
  %2656 = vmatpush1.bf16.msra.mxu0 0
  %2657 = vmatprep.subr.bf16.mxu0 0
  %2658 = vmatpush1.bf16.msra.mxu0 0
  %2659 = vmatprep.subr.bf16.mxu0 0
  %2660 = vmatpush1.bf16.msra.mxu0 0
  %2661 = vmatprep.subr.bf16.mxu0 0
  %2662 = vmatpush1.bf16.msra.mxu0 0
  %2663 = vmatprep.mubr.bf16.mxu0 0
  %2664 = vmatmul.mubr.bf16.gmra.mrb[0].mxu0 %v2500
  %v2665 = vpop.f32.mrb[0].mxu0
  %v2666 = vadd.f32 0.0, %v2665
  %v2667 = vpop.f32.mrb[0].mxu0
  %v2668 = vadd.f32 0.0, %v2667
  %v2669 = vpop.f32.mrb[0].mxu0
  %v2670 = vadd.f32 0.0, %v2669
  %v2671 = vpop.f32.mrb[0].mxu0
  %v2672 = vadd.f32 0.0, %v2671
  %2673 = vdwg.mxu0
  %2674 = vmatprep.subr.bf16.mxu0 %v2352
  %2675 = vmatpush1.bf16.msra.mxu0 %v2351
  %2676 = vmatprep.subr.bf16.mxu0 %v2365
  %2677 = vmatpush1.bf16.msra.mxu0 %v2364
  %2678 = vmatprep.subr.bf16.mxu0 %v2378
  %2679 = vmatpush1.bf16.msra.mxu0 %v2377
  %2680 = vmatprep.subr.bf16.mxu0 %v2391
  %2681 = vmatpush1.bf16.msra.mxu0 %v2390
  %2682 = vmatprep.subr.bf16.mxu0 %v2404
  %2683 = vmatpush1.bf16.msra.mxu0 %v2403
  %2684 = vmatprep.subr.bf16.mxu0 %v2417
  %2685 = vmatpush1.bf16.msra.mxu0 %v2416
  %2686 = vmatprep.subr.bf16.mxu0 0
  %2687 = vmatpush1.bf16.msra.mxu0 0
  %2688 = vmatprep.subr.bf16.mxu0 0
  %2689 = vmatpush1.bf16.msra.mxu0 0
  %2690 = vmatprep.subr.bf16.mxu0 0
  %2691 = vmatpush1.bf16.msra.mxu0 0
  %2692 = vmatprep.subr.bf16.mxu0 0
  %2693 = vmatpush1.bf16.msra.mxu0 0
  %2694 = vmatprep.subr.bf16.mxu0 0
  %2695 = vmatpush1.bf16.msra.mxu0 0
  %2696 = vmatprep.subr.bf16.mxu0 0
  %2697 = vmatpush1.bf16.msra.mxu0 0
  %2698 = vmatprep.subr.bf16.mxu0 0
  %2699 = vmatpush1.bf16.msra.mxu0 0
  %2700 = vmatprep.subr.bf16.mxu0 0
  %2701 = vmatpush1.bf16.msra.mxu0 0
  %2702 = vmatprep.subr.bf16.mxu0 0
  %2703 = vmatpush1.bf16.msra.mxu0 0
  %2704 = vmatprep.subr.bf16.mxu0 0
  %2705 = vmatpush1.bf16.msra.mxu0 0
  %2706 = vmatprep.mubr.bf16.mxu0 0
  %2707 = vmatmul.mubr.bf16.gmra.mrb[0].mxu0 %v2500
  %v2708 = vpop.f32.mrb[0].mxu0
  %v2709 = vadd.f32 0.0, %v2708
  %v2710 = vpop.f32.mrb[0].mxu0
  %v2711 = vadd.f32 0.0, %v2710
  %v2712 = vpop.f32.mrb[0].mxu0
  %v2713 = vadd.f32 0.0, %v2712
  %v2714 = vpop.f32.mrb[0].mxu0
  %v2715 = vadd.f32 0.0, %v2714
  %2716 = vdwg.mxu0
  %2717 = vmatprep.subr.bf16.mxu0 %v2354
  %2718 = vmatpush1.bf16.msra.mxu0 %v2353
  %2719 = vmatprep.subr.bf16.mxu0 %v2367
  %2720 = vmatpush1.bf16.msra.mxu0 %v2366
  %2721 = vmatprep.subr.bf16.mxu0 %v2380
  %2722 = vmatpush1.bf16.msra.mxu0 %v2379
  %2723 = vmatprep.subr.bf16.mxu0 %v2393
  %2724 = vmatpush1.bf16.msra.mxu0 %v2392
  %2725 = vmatprep.subr.bf16.mxu0 %v2406
  %2726 = vmatpush1.bf16.msra.mxu0 %v2405
  %2727 = vmatprep.subr.bf16.mxu0 %v2419
  %2728 = vmatpush1.bf16.msra.mxu0 %v2418
  %2729 = vmatprep.subr.bf16.mxu0 0
  %2730 = vmatpush1.bf16.msra.mxu0 0
  %2731 = vmatprep.subr.bf16.mxu0 0
  %2732 = vmatpush1.bf16.msra.mxu0 0
  %2733 = vmatprep.subr.bf16.mxu0 0
  %2734 = vmatpush1.bf16.msra.mxu0 0
  %2735 = vmatprep.subr.bf16.mxu0 0
  %2736 = vmatpush1.bf16.msra.mxu0 0
  %2737 = vmatprep.subr.bf16.mxu0 0
  %2738 = vmatpush1.bf16.msra.mxu0 0
  %2739 = vmatprep.subr.bf16.mxu0 0
  %2740 = vmatpush1.bf16.msra.mxu0 0
  %2741 = vmatprep.subr.bf16.mxu0 0
  %2742 = vmatpush1.bf16.msra.mxu0 0
  %2743 = vmatprep.subr.bf16.mxu0 0
  %2744 = vmatpush1.bf16.msra.mxu0 0
  %2745 = vmatprep.subr.bf16.mxu0 0
  %2746 = vmatpush1.bf16.msra.mxu0 0
  %2747 = vmatprep.subr.bf16.mxu0 0
  %2748 = vmatpush1.bf16.msra.mxu0 0
  %2749 = vmatprep.mubr.bf16.mxu0 0
  %2750 = vmatmul.mubr.bf16.gmra.mrb[0].mxu0 %v2500
  %v2751 = vpop.f32.mrb[0].mxu0
  %v2752 = vadd.f32 0.0, %v2751
  %v2753 = vpop.f32.mrb[0].mxu0
  %v2754 = vadd.f32 0.0, %v2753
  %v2755 = vpop.f32.mrb[0].mxu0
  %v2756 = vadd.f32 0.0, %v2755
  %v2757 = vpop.f32.mrb[0].mxu0
  %v2758 = vadd.f32 0.0, %v2757
  %2759 = vdwg.mxu0
  %2760 = vmatprep.subr.bf16.mxu0 0
  %2761 = vmatpush1.bf16.msra.mxu0 %v2355
  %2762 = vmatprep.subr.bf16.mxu0 0
  %2763 = vmatpush1.bf16.msra.mxu0 %v2368
  %2764 = vmatprep.subr.bf16.mxu0 0
  %2765 = vmatpush1.bf16.msra.mxu0 %v2381
  %2766 = vmatprep.subr.bf16.mxu0 0
  %2767 = vmatpush1.bf16.msra.mxu0 %v2394
  %2768 = vmatprep.subr.bf16.mxu0 0
  %2769 = vmatpush1.bf16.msra.mxu0 %v2407
  %2770 = vmatprep.subr.bf16.mxu0 0
  %2771 = vmatpush1.bf16.msra.mxu0 %v2420
  %2772 = vmatprep.subr.bf16.mxu0 0
  %2773 = vmatpush1.bf16.msra.mxu0 0
  %2774 = vmatprep.subr.bf16.mxu0 0
  %2775 = vmatpush1.bf16.msra.mxu0 0
  %2776 = vmatprep.subr.bf16.mxu0 0
  %2777 = vmatpush1.bf16.msra.mxu0 0
  %2778 = vmatprep.subr.bf16.mxu0 0
  %2779 = vmatpush1.bf16.msra.mxu0 0
  %2780 = vmatprep.subr.bf16.mxu0 0
  %2781 = vmatpush1.bf16.msra.mxu0 0
  %2782 = vmatprep.subr.bf16.mxu0 0
  %2783 = vmatpush1.bf16.msra.mxu0 0
  %2784 = vmatprep.subr.bf16.mxu0 0
  %2785 = vmatpush1.bf16.msra.mxu0 0
  %2786 = vmatprep.subr.bf16.mxu0 0
  %2787 = vmatpush1.bf16.msra.mxu0 0
  %2788 = vmatprep.subr.bf16.mxu0 0
  %2789 = vmatpush1.bf16.msra.mxu0 0
  %2790 = vmatprep.subr.bf16.mxu0 0
  %2791 = vmatpush1.bf16.msra.mxu0 0
  %2792 = vmatprep.mubr.bf16.mxu0 0
  %2793 = vmatmul.mubr.bf16.gmra.mrb[0].mxu0 %v2500
  %v2794 = vpop.f32.mrb[0].mxu0
  %v2795 = vadd.f32 0.0, %v2794
  %v2796 = vpop.f32.mrb[0].mxu0
  %v2797 = vpop.f32.mrb[0].mxu0
  %v2798 = vadd.f32 0.0, %v2797
  %v2799 = vpop.f32.mrb[0].mxu0
  %2800 = vdwg.mxu0
  %v2801 = vadd.f32 %v2140, %v2537
  %v2802 = vadd.f32 %v2141, %v2539
  %v2803 = vadd.f32 %v2142, %v2580
  %v2804 = vadd.f32 %v2143, %v2582
  %v2805 = vadd.f32 %v2144, %v2623
  %v2806 = vadd.f32 %v2145, %v2625
  %v2807 = vadd.f32 %v2146, %v2666
  %v2808 = vadd.f32 %v2147, %v2668
  %v2809 = vadd.f32 %v2148, %v2709
  %v2810 = vadd.f32 %v2149, %v2711
  %v2811 = vadd.f32 %v2150, %v2752
  %v2812 = vadd.f32 %v2151, %v2754
  %v2813 = vadd.f32 %v2152, %v2795
  %v2814 = vadd.f32 %v2153, %v2541
  %v2815 = vadd.f32 %v2154, %v2543
  %v2816 = vadd.f32 %v2155, %v2584
  %v2817 = vadd.f32 %v2156, %v2586
  %v2818 = vadd.f32 %v2157, %v2627
  %v2819 = vadd.f32 %v2158, %v2629
  %v2820 = vadd.f32 %v2159, %v2670
  %v2821 = vadd.f32 %v2160, %v2672
  %v2822 = vadd.f32 %v2161, %v2713
  %v2823 = vadd.f32 %v2162, %v2715
  %v2824 = vadd.f32 %v2163, %v2756
  %v2825 = vadd.f32 %v2164, %v2758
  %v2826 = vadd.f32 %v2165, %v2798
  %v2827 = vld [vmem:[%s0 + $0x4] sm:$0xff]
  %v2828 = vld [vmem:[%s0 + $0xc] sm:$0xff]
  %v2829 = vld [vmem:[%s0 + $0x14] sm:$0xff]
  %v2830 = vld [vmem:[%s0 + $0x1c] sm:$0xff]
  %v2831 = vld [vmem:[%s0 + $0x24] sm:$0xff]
  %v2832 = vld [vmem:[%s0 + $0x2c] sm:$0xff]
  %v2833 = vld [vmem:[%s0 + $0x34] sm:$0xff]
  %v2834 = vld [vmem:[%s0 + $0x40] sm:$0xff]
  %v2835 = vld [vmem:[%s0 + $0x48] sm:$0xff]
  %v2836 = vld [vmem:[%s0 + $0x50] sm:$0xff]
  %v2837 = vld [vmem:[%s0 + $0x58] sm:$0xff]
  %v2838 = vld [vmem:[%s0 + $0x60] sm:$0xff]
  %v2839 = vld [vmem:[%s0 + $0x68] sm:$0xff]
  %v2840 = vld [vmem:[%s0 + $0x70] sm:$0xff]
  %v2841 = vld [vmem:[%s0 + $0x7c] sm:$0xff]
  %v2842 = vld [vmem:[%s0 + $0x84] sm:$0xff]
  %v2843 = vld [vmem:[%s0 + $0x8c] sm:$0xff]
  %v2844 = vld [vmem:[%s0 + $0x94] sm:$0xff]
  %v2845 = vld [vmem:[%s0 + $0x9c] sm:$0xff]
  %v2846 = vld [vmem:[%s0 + $0xa4] sm:$0xff]
  %v2847 = vld [vmem:[%s0 + $0xac] sm:$0xff]
  %v2848 = vld [vmem:[%s0 + $0xb8] sm:$0xff]
  %v2849 = vld [vmem:[%s0 + $0xc0] sm:$0xff]
  %v2850 = vld [vmem:[%s0 + $0xc8] sm:$0xff]
  %v2851 = vld [vmem:[%s0 + $0xd0] sm:$0xff]
  %v2852 = vld [vmem:[%s0 + $0xd8] sm:$0xff]
  %v2853 = vld [vmem:[%s0 + $0xe0] sm:$0xff]
  %v2854 = vld [vmem:[%s0 + $0xe8] sm:$0xff]
  %v2855 = vld [vmem:[%s0 + $0xf4] sm:$0xff]
  %v2856 = vld [vmem:[%s0 + $0xfc] sm:$0xff]
  %v2857 = vld [vmem:[%s0 + $0x104] sm:$0xff]
  %v2858 = vld [vmem:[%s0 + $0x10c] sm:$0xff]
  %v2859 = vld [vmem:[%s0 + $0x114] sm:$0xff]
  %v2860 = vld [vmem:[%s0 + $0x11c] sm:$0xff]
  %v2861 = vld [vmem:[%s0 + $0x124] sm:$0xff]
  %v2862 = vld [vmem:[%s0 + $0x130] sm:$0xff]
  %v2863 = vld [vmem:[%s0 + $0x138] sm:$0xff]
  %v2864 = vld [vmem:[%s0 + $0x140] sm:$0xff]
  %v2865 = vld [vmem:[%s0 + $0x148] sm:$0xff]
  %v2866 = vld [vmem:[%s0 + $0x150] sm:$0xff]
  %v2867 = vld [vmem:[%s0 + $0x158] sm:$0xff]
  %v2868 = vld [vmem:[%s0 + $0x160] sm:$0xff]
  %v2869 = vld [vmem:[%s0 + $0x16c] sm:$0xff]
  %v2870 = vld [vmem:[%s0 + $0x174] sm:$0xff]
  %v2871 = vld [vmem:[%s0 + $0x17c] sm:$0xff]
  %v2872 = vld [vmem:[%s0 + $0x184] sm:$0xff]
  %v2873 = vld [vmem:[%s0 + $0x18c] sm:$0xff]
  %v2874 = vld [vmem:[%s0 + $0x194] sm:$0xff]
  %v2875 = vld [vmem:[%s0 + $0x19c] sm:$0xff]
  %v2876 = vld [vmem:[%s0 + $0x1a8] sm:$0xff]
  %v2877 = vld [vmem:[%s0 + $0x1b0] sm:$0xff]
  %v2878 = vld [vmem:[%s0 + $0x1b8] sm:$0xff]
  %v2879 = vld [vmem:[%s0 + $0x1c0] sm:$0xff]
  %v2880 = vld [vmem:[%s0 + $0x1c8] sm:$0xff]
  %v2881 = vld [vmem:[%s0 + $0x1d0] sm:$0xff]
  %v2882 = vld [vmem:[%s0 + $0x1d8] sm:$0xff]
  %v2883 = vld [vmem:[%s0 + $0x1e4] sm:$0xff]
  %v2884 = vld [vmem:[%s0 + $0x1ec] sm:$0xff]
  %v2885 = vld [vmem:[%s0 + $0x1f4] sm:$0xff]
  %v2886 = vld [vmem:[%s0 + $0x1fc] sm:$0xff]
  %v2887 = vld [vmem:[%s0 + $0x204] sm:$0xff]
  %v2888 = vld [vmem:[%s0 + $0x20c] sm:$0xff]
  %v2889 = vld [vmem:[%s0 + $0x214] sm:$0xff]
  %v2890 = vld [vmem:[%s0 + $0x220] sm:$0xff]
  %v2891 = vld [vmem:[%s0 + $0x228] sm:$0xff]
  %v2892 = vld [vmem:[%s0 + $0x230] sm:$0xff]
  %v2893 = vld [vmem:[%s0 + $0x238] sm:$0xff]
  %v2894 = vld [vmem:[%s0 + $0x240] sm:$0xff]
  %v2895 = vld [vmem:[%s0 + $0x248] sm:$0xff]
  %v2896 = vld [vmem:[%s0 + $0x250] sm:$0xff]
  %v2897 = vld [vmem:[%s0 + $0x25c] sm:$0xff]
  %v2898 = vld [vmem:[%s0 + $0x264] sm:$0xff]
  %v2899 = vld [vmem:[%s0 + $0x26c] sm:$0xff]
  %v2900 = vld [vmem:[%s0 + $0x274] sm:$0xff]
  %v2901 = vld [vmem:[%s0 + $0x27c] sm:$0xff]
  %v2902 = vld [vmem:[%s0 + $0x284] sm:$0xff]
  %v2903 = vld [vmem:[%s0 + $0x28c] sm:$0xff]
  %v2904 = vld [vmem:[%s0 + $0x298] sm:$0xff]
  %v2905 = vld [vmem:[%s0 + $0x2a0] sm:$0xff]
  %v2906 = vld [vmem:[%s0 + $0x2a8] sm:$0xff]
  %v2907 = vld [vmem:[%s0 + $0x2b0] sm:$0xff]
  %v2908 = vld [vmem:[%s0 + $0x2b8] sm:$0xff]
  %v2909 = vld [vmem:[%s0 + $0x2c0] sm:$0xff]
  %v2910 = vld [vmem:[%s0 + $0x2c8] sm:$0xff]
  %s2911 = scalar_lea.vmem %s1, 32
  %v2912 = vld [vmem:[%s2911] sm:$0xf]
  %v2913 = vld [vmem:[%s2911 + $0x4] sm:$0x3]
  %v2916 = vunpack.c.l.b16 %v2912
  %v2917 = vunpack.c.l.b16 %v2913
  %v2918 = vpack.c.b16 %v2917, %v2916
  %v3003 = vunpack.c.l.b16 %v2827
  %v3004 = vunpack.c.h.b16 %v2827
  %v3005 = vunpack.c.l.b16 %v2828
  %v3006 = vunpack.c.h.b16 %v2828
  %v3007 = vunpack.c.l.b16 %v2829
  %v3008 = vunpack.c.h.b16 %v2829
  %v3009 = vunpack.c.l.b16 %v2830
  %v3010 = vunpack.c.h.b16 %v2830
  %v3011 = vunpack.c.l.b16 %v2831
  %v3012 = vunpack.c.h.b16 %v2831
  %v3013 = vunpack.c.l.b16 %v2832
  %v3014 = vunpack.c.h.b16 %v2832
  %v3015 = vunpack.c.l.b16 %v2833
  %v3016 = vunpack.c.h.b16 %v2833
  %v3017 = vunpack.c.l.b16 %v2834
  %v3018 = vunpack.c.h.b16 %v2834
  %v3019 = vunpack.c.l.b16 %v2835
  %v3020 = vunpack.c.h.b16 %v2835
  %v3021 = vunpack.c.l.b16 %v2836
  %v3022 = vunpack.c.h.b16 %v2836
  %v3023 = vunpack.c.l.b16 %v2837
  %v3024 = vunpack.c.h.b16 %v2837
  %v3025 = vunpack.c.l.b16 %v2838
  %v3026 = vunpack.c.h.b16 %v2838
  %v3027 = vunpack.c.l.b16 %v2839
  %v3028 = vunpack.c.h.b16 %v2839
  %v3029 = vunpack.c.l.b16 %v2840
  %v3030 = vunpack.c.h.b16 %v2840
  %v3031 = vunpack.c.l.b16 %v2841
  %v3032 = vunpack.c.h.b16 %v2841
  %v3033 = vunpack.c.l.b16 %v2842
  %v3034 = vunpack.c.h.b16 %v2842
  %v3035 = vunpack.c.l.b16 %v2843
  %v3036 = vunpack.c.h.b16 %v2843
  %v3037 = vunpack.c.l.b16 %v2844
  %v3038 = vunpack.c.h.b16 %v2844
  %v3039 = vunpack.c.l.b16 %v2845
  %v3040 = vunpack.c.h.b16 %v2845
  %v3041 = vunpack.c.l.b16 %v2846
  %v3042 = vunpack.c.h.b16 %v2846
  %v3043 = vunpack.c.l.b16 %v2847
  %v3044 = vunpack.c.h.b16 %v2847
  %v3045 = vunpack.c.l.b16 %v2848
  %v3046 = vunpack.c.h.b16 %v2848
  %v3047 = vunpack.c.l.b16 %v2849
  %v3048 = vunpack.c.h.b16 %v2849
  %v3049 = vunpack.c.l.b16 %v2850
  %v3050 = vunpack.c.h.b16 %v2850
  %v3051 = vunpack.c.l.b16 %v2851
  %v3052 = vunpack.c.h.b16 %v2851
  %v3053 = vunpack.c.l.b16 %v2852
  %v3054 = vunpack.c.h.b16 %v2852
  %v3055 = vunpack.c.l.b16 %v2853
  %v3056 = vunpack.c.h.b16 %v2853
  %v3057 = vunpack.c.l.b16 %v2854
  %v3058 = vunpack.c.h.b16 %v2854
  %v3059 = vunpack.c.l.b16 %v2855
  %v3060 = vunpack.c.h.b16 %v2855
  %v3061 = vunpack.c.l.b16 %v2856
  %v3062 = vunpack.c.h.b16 %v2856
  %v3063 = vunpack.c.l.b16 %v2857
  %v3064 = vunpack.c.h.b16 %v2857
  %v3065 = vunpack.c.l.b16 %v2858
  %v3066 = vunpack.c.h.b16 %v2858
  %v3067 = vunpack.c.l.b16 %v2859
  %v3068 = vunpack.c.h.b16 %v2859
  %v3069 = vunpack.c.l.b16 %v2860
  %v3070 = vunpack.c.h.b16 %v2860
  %v3071 = vunpack.c.l.b16 %v2861
  %v3072 = vunpack.c.h.b16 %v2861
  %v3073 = vunpack.c.l.b16 %v2862
  %v3074 = vunpack.c.h.b16 %v2862
  %v3075 = vunpack.c.l.b16 %v2863
  %v3076 = vunpack.c.h.b16 %v2863
  %v3077 = vunpack.c.l.b16 %v2864
  %v3078 = vunpack.c.h.b16 %v2864
  %v3079 = vunpack.c.l.b16 %v2865
  %v3080 = vunpack.c.h.b16 %v2865
  %v3081 = vunpack.c.l.b16 %v2866
  %v3082 = vunpack.c.h.b16 %v2866
  %v3083 = vunpack.c.l.b16 %v2867
  %v3084 = vunpack.c.h.b16 %v2867
  %v3085 = vunpack.c.l.b16 %v2868
  %v3086 = vunpack.c.h.b16 %v2868
  %v3087 = vunpack.c.l.b16 %v2869
  %v3088 = vunpack.c.h.b16 %v2869
  %v3089 = vunpack.c.l.b16 %v2870
  %v3090 = vunpack.c.h.b16 %v2870
  %v3091 = vunpack.c.l.b16 %v2871
  %v3092 = vunpack.c.h.b16 %v2871
  %v3093 = vunpack.c.l.b16 %v2872
  %v3094 = vunpack.c.h.b16 %v2872
  %v3095 = vunpack.c.l.b16 %v2873
  %v3096 = vunpack.c.h.b16 %v2873
  %v3097 = vunpack.c.l.b16 %v2874
  %v3098 = vunpack.c.h.b16 %v2874
  %v3099 = vunpack.c.l.b16 %v2875
  %v3100 = vunpack.c.h.b16 %v2875
  %v3101 = vunpack.c.l.b16 %v2876
  %v3102 = vunpack.c.h.b16 %v2876
  %v3103 = vunpack.c.l.b16 %v2877
  %v3104 = vunpack.c.h.b16 %v2877
  %v3105 = vunpack.c.l.b16 %v2878
  %v3106 = vunpack.c.h.b16 %v2878
  %v3107 = vunpack.c.l.b16 %v2879
  %v3108 = vunpack.c.h.b16 %v2879
  %v3109 = vunpack.c.l.b16 %v2880
  %v3110 = vunpack.c.h.b16 %v2880
  %v3111 = vunpack.c.l.b16 %v2881
  %v3112 = vunpack.c.h.b16 %v2881
  %v3113 = vunpack.c.l.b16 %v2882
  %v3114 = vunpack.c.h.b16 %v2882
  %v3115 = vunpack.c.l.b16 %v2883
  %v3116 = vunpack.c.h.b16 %v2883
  %v3117 = vunpack.c.l.b16 %v2884
  %v3118 = vunpack.c.h.b16 %v2884
  %v3119 = vunpack.c.l.b16 %v2885
  %v3120 = vunpack.c.h.b16 %v2885
  %v3121 = vunpack.c.l.b16 %v2886
  %v3122 = vunpack.c.h.b16 %v2886
  %v3123 = vunpack.c.l.b16 %v2887
  %v3124 = vunpack.c.h.b16 %v2887
  %v3125 = vunpack.c.l.b16 %v2888
  %v3126 = vunpack.c.h.b16 %v2888
  %v3127 = vunpack.c.l.b16 %v2889
  %v3128 = vunpack.c.h.b16 %v2889
  %v3129 = vunpack.c.l.b16 %v2890
  %v3130 = vunpack.c.h.b16 %v2890
  %v3131 = vunpack.c.l.b16 %v2891
  %v3132 = vunpack.c.h.b16 %v2891
  %v3133 = vunpack.c.l.b16 %v2892
  %v3134 = vunpack.c.h.b16 %v2892
  %v3135 = vunpack.c.l.b16 %v2893
  %v3136 = vunpack.c.h.b16 %v2893
  %v3137 = vunpack.c.l.b16 %v2894
  %v3138 = vunpack.c.h.b16 %v2894
  %v3139 = vunpack.c.l.b16 %v2895
  %v3140 = vunpack.c.h.b16 %v2895
  %v3141 = vunpack.c.l.b16 %v2896
  %v3142 = vunpack.c.h.b16 %v2896
  %v3143 = vunpack.c.l.b16 %v2897
  %v3144 = vunpack.c.h.b16 %v2897
  %v3145 = vunpack.c.l.b16 %v2898
  %v3146 = vunpack.c.h.b16 %v2898
  %v3147 = vunpack.c.l.b16 %v2899
  %v3148 = vunpack.c.h.b16 %v2899
  %v3149 = vunpack.c.l.b16 %v2900
  %v3150 = vunpack.c.h.b16 %v2900
  %v3151 = vunpack.c.l.b16 %v2901
  %v3152 = vunpack.c.h.b16 %v2901
  %v3153 = vunpack.c.l.b16 %v2902
  %v3154 = vunpack.c.h.b16 %v2902
  %v3155 = vunpack.c.l.b16 %v2903
  %v3156 = vunpack.c.h.b16 %v2903
  %v3157 = vunpack.c.l.b16 %v2904
  %v3158 = vunpack.c.h.b16 %v2904
  %v3159 = vunpack.c.l.b16 %v2905
  %v3160 = vunpack.c.h.b16 %v2905
  %v3161 = vunpack.c.l.b16 %v2906
  %v3162 = vunpack.c.h.b16 %v2906
  %v3163 = vunpack.c.l.b16 %v2907
  %v3164 = vunpack.c.h.b16 %v2907
  %v3165 = vunpack.c.l.b16 %v2908
  %v3166 = vunpack.c.h.b16 %v2908
  %v3167 = vunpack.c.l.b16 %v2909
  %v3168 = vunpack.c.h.b16 %v2909
  %v3169 = vunpack.c.l.b16 %v2910
  %v3170 = vunpack.c.h.b16 %v2910
  %v3171 = vpack.c.b16 %v3017, %v3003
  %v3172 = vpack.c.b16 %v3018, %v3004
  %v3173 = vpack.c.b16 %v3019, %v3005
  %v3174 = vpack.c.b16 %v3020, %v3006
  %v3175 = vpack.c.b16 %v3021, %v3007
  %v3176 = vpack.c.b16 %v3022, %v3008
  %v3177 = vpack.c.b16 %v3023, %v3009
  %v3178 = vpack.c.b16 %v3024, %v3010
  %v3179 = vpack.c.b16 %v3025, %v3011
  %v3180 = vpack.c.b16 %v3026, %v3012
  %v3181 = vpack.c.b16 %v3027, %v3013
  %v3182 = vpack.c.b16 %v3028, %v3014
  %v3183 = vpack.c.b16 %v3029, %v3015
  %v3184 = vpack.c.b16 %v3030, %v3016
  %v3185 = vpack.c.b16 %v3045, %v3031
  %v3186 = vpack.c.b16 %v3046, %v3032
  %v3187 = vpack.c.b16 %v3047, %v3033
  %v3188 = vpack.c.b16 %v3048, %v3034
  %v3189 = vpack.c.b16 %v3049, %v3035
  %v3190 = vpack.c.b16 %v3050, %v3036
  %v3191 = vpack.c.b16 %v3051, %v3037
  %v3192 = vpack.c.b16 %v3052, %v3038
  %v3193 = vpack.c.b16 %v3053, %v3039
  %v3194 = vpack.c.b16 %v3054, %v3040
  %v3195 = vpack.c.b16 %v3055, %v3041
  %v3196 = vpack.c.b16 %v3056, %v3042
  %v3197 = vpack.c.b16 %v3057, %v3043
  %v3198 = vpack.c.b16 %v3058, %v3044
  %v3199 = vpack.c.b16 %v3073, %v3059
  %v3200 = vpack.c.b16 %v3074, %v3060
  %v3201 = vpack.c.b16 %v3075, %v3061
  %v3202 = vpack.c.b16 %v3076, %v3062
  %v3203 = vpack.c.b16 %v3077, %v3063
  %v3204 = vpack.c.b16 %v3078, %v3064
  %v3205 = vpack.c.b16 %v3079, %v3065
  %v3206 = vpack.c.b16 %v3080, %v3066
  %v3207 = vpack.c.b16 %v3081, %v3067
  %v3208 = vpack.c.b16 %v3082, %v3068
  %v3209 = vpack.c.b16 %v3083, %v3069
  %v3210 = vpack.c.b16 %v3084, %v3070
  %v3211 = vpack.c.b16 %v3085, %v3071
  %v3212 = vpack.c.b16 %v3086, %v3072
  %v3213 = vpack.c.b16 %v3101, %v3087
  %v3214 = vpack.c.b16 %v3102, %v3088
  %v3215 = vpack.c.b16 %v3103, %v3089
  %v3216 = vpack.c.b16 %v3104, %v3090
  %v3217 = vpack.c.b16 %v3105, %v3091
  %v3218 = vpack.c.b16 %v3106, %v3092
  %v3219 = vpack.c.b16 %v3107, %v3093
  %v3220 = vpack.c.b16 %v3108, %v3094
  %v3221 = vpack.c.b16 %v3109, %v3095
  %v3222 = vpack.c.b16 %v3110, %v3096
  %v3223 = vpack.c.b16 %v3111, %v3097
  %v3224 = vpack.c.b16 %v3112, %v3098
  %v3225 = vpack.c.b16 %v3113, %v3099
  %v3226 = vpack.c.b16 %v3114, %v3100
  %v3227 = vpack.c.b16 %v3129, %v3115
  %v3228 = vpack.c.b16 %v3130, %v3116
  %v3229 = vpack.c.b16 %v3131, %v3117
  %v3230 = vpack.c.b16 %v3132, %v3118
  %v3231 = vpack.c.b16 %v3133, %v3119
  %v3232 = vpack.c.b16 %v3134, %v3120
  %v3233 = vpack.c.b16 %v3135, %v3121
  %v3234 = vpack.c.b16 %v3136, %v3122
  %v3235 = vpack.c.b16 %v3137, %v3123
  %v3236 = vpack.c.b16 %v3138, %v3124
  %v3237 = vpack.c.b16 %v3139, %v3125
  %v3238 = vpack.c.b16 %v3140, %v3126
  %v3239 = vpack.c.b16 %v3141, %v3127
  %v3240 = vpack.c.b16 %v3142, %v3128
  %v3241 = vpack.c.b16 %v3157, %v3143
  %v3242 = vpack.c.b16 %v3158, %v3144
  %v3243 = vpack.c.b16 %v3159, %v3145
  %v3244 = vpack.c.b16 %v3160, %v3146
  %v3245 = vpack.c.b16 %v3161, %v3147
  %v3246 = vpack.c.b16 %v3162, %v3148
  %v3247 = vpack.c.b16 %v3163, %v3149
  %v3248 = vpack.c.b16 %v3164, %v3150
  %v3249 = vpack.c.b16 %v3165, %v3151
  %v3250 = vpack.c.b16 %v3166, %v3152
  %v3251 = vpack.c.b16 %v3167, %v3153
  %v3252 = vpack.c.b16 %v3168, %v3154
  %v3253 = vpack.c.b16 %v3169, %v3155
  %v3254 = vpack.c.b16 %v3170, %v3156
  %3255 = vrot.lane.b32.xlu0 %v3171, 116
  %v3256 = vpop.permute.xlu0 %3255
  %3257 = vrot.lane.b32.xlu0 %v3172, 116
  %v3258 = vpop.permute.xlu0 %3257
  %3259 = vrot.lane.b32.xlu0 %v3173, 116
  %v3260 = vpop.permute.xlu0 %3259
  %3261 = vrot.lane.b32.xlu0 %v3174, 116
  %v3262 = vpop.permute.xlu0 %3261
  %3263 = vrot.lane.b32.xlu0 %v3175, 116
  %v3264 = vpop.permute.xlu0 %3263
  %3265 = vrot.lane.b32.xlu0 %v3176, 116
  %v3266 = vpop.permute.xlu0 %3265
  %3267 = vrot.lane.b32.xlu0 %v3177, 116
  %v3268 = vpop.permute.xlu0 %3267
  %3269 = vrot.lane.b32.xlu0 %v3178, 116
  %v3270 = vpop.permute.xlu0 %3269
  %3271 = vrot.lane.b32.xlu0 %v3179, 116
  %v3272 = vpop.permute.xlu0 %3271
  %3273 = vrot.lane.b32.xlu0 %v3180, 116
  %v3274 = vpop.permute.xlu0 %3273
  %3275 = vrot.lane.b32.xlu0 %v3181, 116
  %v3276 = vpop.permute.xlu0 %3275
  %3277 = vrot.lane.b32.xlu0 %v3182, 116
  %v3278 = vpop.permute.xlu0 %3277
  %3279 = vrot.lane.b32.xlu0 %v3183, 116
  %v3280 = vpop.permute.xlu0 %3279
  %3281 = vrot.lane.b32.xlu0 %v3184, 116
  %v3282 = vpop.permute.xlu0 %3281
  %3283 = vrot.lane.b32.xlu0 %v3185, 116
  %v3284 = vpop.permute.xlu0 %3283
  %3285 = vrot.lane.b32.xlu0 %v3186, 116
  %v3286 = vpop.permute.xlu0 %3285
  %3287 = vrot.lane.b32.xlu0 %v3187, 116
  %v3288 = vpop.permute.xlu0 %3287
  %3289 = vrot.lane.b32.xlu0 %v3188, 116
  %v3290 = vpop.permute.xlu0 %3289
  %3291 = vrot.lane.b32.xlu0 %v3189, 116
  %v3292 = vpop.permute.xlu0 %3291
  %3293 = vrot.lane.b32.xlu0 %v3190, 116
  %v3294 = vpop.permute.xlu0 %3293
  %3295 = vrot.lane.b32.xlu0 %v3191, 116
  %v3296 = vpop.permute.xlu0 %3295
  %3297 = vrot.lane.b32.xlu0 %v3192, 116
  %v3298 = vpop.permute.xlu0 %3297
  %3299 = vrot.lane.b32.xlu0 %v3193, 116
  %v3300 = vpop.permute.xlu0 %3299
  %3301 = vrot.lane.b32.xlu0 %v3194, 116
  %v3302 = vpop.permute.xlu0 %3301
  %3303 = vrot.lane.b32.xlu0 %v3195, 116
  %v3304 = vpop.permute.xlu0 %3303
  %3305 = vrot.lane.b32.xlu0 %v3196, 116
  %v3306 = vpop.permute.xlu0 %3305
  %3307 = vrot.lane.b32.xlu0 %v3197, 116
  %v3308 = vpop.permute.xlu0 %3307
  %3309 = vrot.lane.b32.xlu0 %v3198, 116
  %v3310 = vpop.permute.xlu0 %3309
  %3311 = vrot.lane.b32.xlu0 %v3199, 116
  %v3312 = vpop.permute.xlu0 %3311
  %3313 = vrot.lane.b32.xlu0 %v3200, 116
  %v3314 = vpop.permute.xlu0 %3313
  %3315 = vrot.lane.b32.xlu0 %v3201, 116
  %v3316 = vpop.permute.xlu0 %3315
  %3317 = vrot.lane.b32.xlu0 %v3202, 116
  %v3318 = vpop.permute.xlu0 %3317
  %3319 = vrot.lane.b32.xlu0 %v3203, 116
  %v3320 = vpop.permute.xlu0 %3319
  %3321 = vrot.lane.b32.xlu0 %v3204, 116
  %v3322 = vpop.permute.xlu0 %3321
  %3323 = vrot.lane.b32.xlu0 %v3205, 116
  %v3324 = vpop.permute.xlu0 %3323
  %3325 = vrot.lane.b32.xlu0 %v3206, 116
  %v3326 = vpop.permute.xlu0 %3325
  %3327 = vrot.lane.b32.xlu0 %v3207, 116
  %v3328 = vpop.permute.xlu0 %3327
  %3329 = vrot.lane.b32.xlu0 %v3208, 116
  %v3330 = vpop.permute.xlu0 %3329
  %3331 = vrot.lane.b32.xlu0 %v3209, 116
  %v3332 = vpop.permute.xlu0 %3331
  %3333 = vrot.lane.b32.xlu0 %v3210, 116
  %v3334 = vpop.permute.xlu0 %3333
  %3335 = vrot.lane.b32.xlu0 %v3211, 116
  %v3336 = vpop.permute.xlu0 %3335
  %3337 = vrot.lane.b32.xlu0 %v3212, 116
  %v3338 = vpop.permute.xlu0 %3337
  %3339 = vrot.lane.b32.xlu0 %v3213, 116
  %v3340 = vpop.permute.xlu0 %3339
  %3341 = vrot.lane.b32.xlu0 %v3214, 116
  %v3342 = vpop.permute.xlu0 %3341
  %3343 = vrot.lane.b32.xlu0 %v3215, 116
  %v3344 = vpop.permute.xlu0 %3343
  %3345 = vrot.lane.b32.xlu0 %v3216, 116
  %v3346 = vpop.permute.xlu0 %3345
  %3347 = vrot.lane.b32.xlu0 %v3217, 116
  %v3348 = vpop.permute.xlu0 %3347
  %3349 = vrot.lane.b32.xlu0 %v3218, 116
  %v3350 = vpop.permute.xlu0 %3349
  %3351 = vrot.lane.b32.xlu0 %v3219, 116
  %v3352 = vpop.permute.xlu0 %3351
  %3353 = vrot.lane.b32.xlu0 %v3220, 116
  %v3354 = vpop.permute.xlu0 %3353
  %3355 = vrot.lane.b32.xlu0 %v3221, 116
  %v3356 = vpop.permute.xlu0 %3355
  %3357 = vrot.lane.b32.xlu0 %v3222, 116
  %v3358 = vpop.permute.xlu0 %3357
  %3359 = vrot.lane.b32.xlu0 %v3223, 116
  %v3360 = vpop.permute.xlu0 %3359
  %3361 = vrot.lane.b32.xlu0 %v3224, 116
  %v3362 = vpop.permute.xlu0 %3361
  %3363 = vrot.lane.b32.xlu0 %v3225, 116
  %v3364 = vpop.permute.xlu0 %3363
  %3365 = vrot.lane.b32.xlu0 %v3226, 116
  %v3366 = vpop.permute.xlu0 %3365
  %3367 = vrot.lane.b32.xlu0 %v3227, 116
  %v3368 = vpop.permute.xlu0 %3367
  %3369 = vrot.lane.b32.xlu0 %v3228, 116
  %v3370 = vpop.permute.xlu0 %3369
  %3371 = vrot.lane.b32.xlu0 %v3229, 116
  %v3372 = vpop.permute.xlu0 %3371
  %3373 = vrot.lane.b32.xlu0 %v3230, 116
  %v3374 = vpop.permute.xlu0 %3373
  %3375 = vrot.lane.b32.xlu0 %v3231, 116
  %v3376 = vpop.permute.xlu0 %3375
  %3377 = vrot.lane.b32.xlu0 %v3232, 116
  %v3378 = vpop.permute.xlu0 %3377
  %3379 = vrot.lane.b32.xlu0 %v3233, 116
  %v3380 = vpop.permute.xlu0 %3379
  %3381 = vrot.lane.b32.xlu0 %v3234, 116
  %v3382 = vpop.permute.xlu0 %3381
  %3383 = vrot.lane.b32.xlu0 %v3235, 116
  %v3384 = vpop.permute.xlu0 %3383
  %3385 = vrot.lane.b32.xlu0 %v3236, 116
  %v3386 = vpop.permute.xlu0 %3385
  %3387 = vrot.lane.b32.xlu0 %v3237, 116
  %v3388 = vpop.permute.xlu0 %3387
  %3389 = vrot.lane.b32.xlu0 %v3238, 116
  %v3390 = vpop.permute.xlu0 %3389
  %3391 = vrot.lane.b32.xlu0 %v3239, 116
  %v3392 = vpop.permute.xlu0 %3391
  %3393 = vrot.lane.b32.xlu0 %v3240, 116
  %v3394 = vpop.permute.xlu0 %3393
  %3395 = vrot.lane.b32.xlu0 %v3241, 116
  %v3396 = vpop.permute.xlu0 %3395
  %3397 = vrot.lane.b32.xlu0 %v3242, 116
  %v3398 = vpop.permute.xlu0 %3397
  %3399 = vrot.lane.b32.xlu0 %v3243, 116
  %v3400 = vpop.permute.xlu0 %3399
  %3401 = vrot.lane.b32.xlu0 %v3244, 116
  %v3402 = vpop.permute.xlu0 %3401
  %3403 = vrot.lane.b32.xlu0 %v3245, 116
  %v3404 = vpop.permute.xlu0 %3403
  %3405 = vrot.lane.b32.xlu0 %v3246, 116
  %v3406 = vpop.permute.xlu0 %3405
  %3407 = vrot.lane.b32.xlu0 %v3247, 116
  %v3408 = vpop.permute.xlu0 %3407
  %3409 = vrot.lane.b32.xlu0 %v3248, 116
  %v3410 = vpop.permute.xlu0 %3409
  %3411 = vrot.lane.b32.xlu0 %v3249, 116
  %v3412 = vpop.permute.xlu0 %3411
  %3413 = vrot.lane.b32.xlu0 %v3250, 116
  %v3414 = vpop.permute.xlu0 %3413
  %3415 = vrot.lane.b32.xlu0 %v3251, 116
  %v3416 = vpop.permute.xlu0 %3415
  %3417 = vrot.lane.b32.xlu0 %v3252, 116
  %v3418 = vpop.permute.xlu0 %3417
  %3419 = vrot.lane.b32.xlu0 %v3253, 116
  %v3420 = vpop.permute.xlu0 %3419
  %3421 = vrot.lane.b32.xlu0 %v3254, 116
  %v3422 = vpop.permute.xlu0 %3421
  %vm3423 = vcmask 949248
  %v3424 = vsel %vm3423, %v3256, %v3258
  %v3425 = vsel %vm3423, %v3258, %v3260
  %v3426 = vsel %vm3423, %v3260, %v3262
  %v3427 = vsel %vm3423, %v3262, %v3264
  %v3428 = vsel %vm3423, %v3264, %v3266
  %v3429 = vsel %vm3423, %v3266, %v3268
  %v3430 = vsel %vm3423, %v3268, %v3270
  %v3431 = vsel %vm3423, %v3270, %v3272
  %v3432 = vsel %vm3423, %v3272, %v3274
  %v3433 = vsel %vm3423, %v3274, %v3276
  %v3434 = vsel %vm3423, %v3276, %v3278
  %v3435 = vsel %vm3423, %v3278, %v3280
  %v3436 = vsel %vm3423, %v3280, %v3282
  %v3437 = vsel %vm3423, %v3284, %v3286
  %v3438 = vsel %vm3423, %v3286, %v3288
  %v3439 = vsel %vm3423, %v3288, %v3290
  %v3440 = vsel %vm3423, %v3290, %v3292
  %v3441 = vsel %vm3423, %v3292, %v3294
  %v3442 = vsel %vm3423, %v3294, %v3296
  %v3443 = vsel %vm3423, %v3296, %v3298
  %v3444 = vsel %vm3423, %v3298, %v3300
  %v3445 = vsel %vm3423, %v3300, %v3302
  %v3446 = vsel %vm3423, %v3302, %v3304
  %v3447 = vsel %vm3423, %v3304, %v3306
  %v3448 = vsel %vm3423, %v3306, %v3308
  %v3449 = vsel %vm3423, %v3308, %v3310
  %v3450 = vsel %vm3423, %v3312, %v3314
  %v3451 = vsel %vm3423, %v3314, %v3316
  %v3452 = vsel %vm3423, %v3316, %v3318
  %v3453 = vsel %vm3423, %v3318, %v3320
  %v3454 = vsel %vm3423, %v3320, %v3322
  %v3455 = vsel %vm3423, %v3322, %v3324
  %v3456 = vsel %vm3423, %v3324, %v3326
  %v3457 = vsel %vm3423, %v3326, %v3328
  %v3458 = vsel %vm3423, %v3328, %v3330
  %v3459 = vsel %vm3423, %v3330, %v3332
  %v3460 = vsel %vm3423, %v3332, %v3334
  %v3461 = vsel %vm3423, %v3334, %v3336
  %v3462 = vsel %vm3423, %v3336, %v3338
  %v3463 = vsel %vm3423, %v3340, %v3342
  %v3464 = vsel %vm3423, %v3342, %v3344
  %v3465 = vsel %vm3423, %v3344, %v3346
  %v3466 = vsel %vm3423, %v3346, %v3348
  %v3467 = vsel %vm3423, %v3348, %v3350
  %v3468 = vsel %vm3423, %v3350, %v3352
  %v3469 = vsel %vm3423, %v3352, %v3354
  %v3470 = vsel %vm3423, %v3354, %v3356
  %v3471 = vsel %vm3423, %v3356, %v3358
  %v3472 = vsel %vm3423, %v3358, %v3360
  %v3473 = vsel %vm3423, %v3360, %v3362
  %v3474 = vsel %vm3423, %v3362, %v3364
  %v3475 = vsel %vm3423, %v3364, %v3366
  %v3476 = vsel %vm3423, %v3368, %v3370
  %v3477 = vsel %vm3423, %v3370, %v3372
  %v3478 = vsel %vm3423, %v3372, %v3374
  %v3479 = vsel %vm3423, %v3374, %v3376
  %v3480 = vsel %vm3423, %v3376, %v3378
  %v3481 = vsel %vm3423, %v3378, %v3380
  %v3482 = vsel %vm3423, %v3380, %v3382
  %v3483 = vsel %vm3423, %v3382, %v3384
  %v3484 = vsel %vm3423, %v3384, %v3386
  %v3485 = vsel %vm3423, %v3386, %v3388
  %v3486 = vsel %vm3423, %v3388, %v3390
  %v3487 = vsel %vm3423, %v3390, %v3392
  %v3488 = vsel %vm3423, %v3392, %v3394
  %v3489 = vsel %vm3423, %v3396, %v3398
  %v3490 = vsel %vm3423, %v3398, %v3400
  %v3491 = vsel %vm3423, %v3400, %v3402
  %v3492 = vsel %vm3423, %v3402, %v3404
  %v3493 = vsel %vm3423, %v3404, %v3406
  %v3494 = vsel %vm3423, %v3406, %v3408
  %v3495 = vsel %vm3423, %v3408, %v3410
  %v3496 = vsel %vm3423, %v3410, %v3412
  %v3497 = vsel %vm3423, %v3412, %v3414
  %v3498 = vsel %vm3423, %v3414, %v3416
  %v3499 = vsel %vm3423, %v3416, %v3418
  %v3500 = vsel %vm3423, %v3418, %v3420
  %v3501 = vsel %vm3423, %v3420, %v3422
  %v3581 = vsel %vm787, %v2918, 0
  %3583 = vmatprep.subr.bf16.mxu0 %v3425
  %3584 = vmatpush1.bf16.msra.mxu0 %v3424
  %3585 = vmatprep.subr.bf16.mxu0 %v3438
  %3586 = vmatpush1.bf16.msra.mxu0 %v3437
  %3587 = vmatprep.subr.bf16.mxu0 %v3451
  %3588 = vmatpush1.bf16.msra.mxu0 %v3450
  %3589 = vmatprep.subr.bf16.mxu0 %v3464
  %3590 = vmatpush1.bf16.msra.mxu0 %v3463
  %3591 = vmatprep.subr.bf16.mxu0 %v3477
  %3592 = vmatpush1.bf16.msra.mxu0 %v3476
  %3593 = vmatprep.subr.bf16.mxu0 %v3490
  %3594 = vmatpush1.bf16.msra.mxu0 %v3489
  %3595 = vmatprep.subr.bf16.mxu0 0
  %3596 = vmatpush1.bf16.msra.mxu0 0
  %3597 = vmatprep.subr.bf16.mxu0 0
  %3598 = vmatpush1.bf16.msra.mxu0 0
  %3599 = vmatprep.subr.bf16.mxu0 0
  %3600 = vmatpush1.bf16.msra.mxu0 0
  %3601 = vmatprep.subr.bf16.mxu0 0
  %3602 = vmatpush1.bf16.msra.mxu0 0
  %3603 = vmatprep.subr.bf16.mxu0 0
  %3604 = vmatpush1.bf16.msra.mxu0 0
  %3605 = vmatprep.subr.bf16.mxu0 0
  %3606 = vmatpush1.bf16.msra.mxu0 0
  %3607 = vmatprep.subr.bf16.mxu0 0
  %3608 = vmatpush1.bf16.msra.mxu0 0
  %3609 = vmatprep.subr.bf16.mxu0 0
  %3610 = vmatpush1.bf16.msra.mxu0 0
  %3611 = vmatprep.subr.bf16.mxu0 0
  %3612 = vmatpush1.bf16.msra.mxu0 0
  %3613 = vmatprep.subr.bf16.mxu0 0
  %3614 = vmatpush1.bf16.msra.mxu0 0
  %3615 = vmatprep.mubr.bf16.mxu0 0
  %3616 = vmatmul.mubr.bf16.gmra.mrb[0].mxu0 %v3581
  %v3617 = vpop.f32.mrb[0].mxu0
  %v3618 = vadd.f32 0.0, %v3617
  %v3619 = vpop.f32.mrb[0].mxu0
  %v3620 = vadd.f32 0.0, %v3619
  %v3621 = vpop.f32.mrb[0].mxu0
  %v3622 = vadd.f32 0.0, %v3621
  %v3623 = vpop.f32.mrb[0].mxu0
  %v3624 = vadd.f32 0.0, %v3623
  %3625 = vdwg.mxu0
  %3626 = vmatprep.subr.bf16.mxu0 %v3427
  %3627 = vmatpush1.bf16.msra.mxu0 %v3426
  %3628 = vmatprep.subr.bf16.mxu0 %v3440
  %3629 = vmatpush1.bf16.msra.mxu0 %v3439
  %3630 = vmatprep.subr.bf16.mxu0 %v3453
  %3631 = vmatpush1.bf16.msra.mxu0 %v3452
  %3632 = vmatprep.subr.bf16.mxu0 %v3466
  %3633 = vmatpush1.bf16.msra.mxu0 %v3465
  %3634 = vmatprep.subr.bf16.mxu0 %v3479
  %3635 = vmatpush1.bf16.msra.mxu0 %v3478
  %3636 = vmatprep.subr.bf16.mxu0 %v3492
  %3637 = vmatpush1.bf16.msra.mxu0 %v3491
  %3638 = vmatprep.subr.bf16.mxu0 0
  %3639 = vmatpush1.bf16.msra.mxu0 0
  %3640 = vmatprep.subr.bf16.mxu0 0
  %3641 = vmatpush1.bf16.msra.mxu0 0
  %3642 = vmatprep.subr.bf16.mxu0 0
  %3643 = vmatpush1.bf16.msra.mxu0 0
  %3644 = vmatprep.subr.bf16.mxu0 0
  %3645 = vmatpush1.bf16.msra.mxu0 0
  %3646 = vmatprep.subr.bf16.mxu0 0
  %3647 = vmatpush1.bf16.msra.mxu0 0
  %3648 = vmatprep.subr.bf16.mxu0 0
  %3649 = vmatpush1.bf16.msra.mxu0 0
  %3650 = vmatprep.subr.bf16.mxu0 0
  %3651 = vmatpush1.bf16.msra.mxu0 0
  %3652 = vmatprep.subr.bf16.mxu0 0
  %3653 = vmatpush1.bf16.msra.mxu0 0
  %3654 = vmatprep.subr.bf16.mxu0 0
  %3655 = vmatpush1.bf16.msra.mxu0 0
  %3656 = vmatprep.subr.bf16.mxu0 0
  %3657 = vmatpush1.bf16.msra.mxu0 0
  %3658 = vmatprep.mubr.bf16.mxu0 0
  %3659 = vmatmul.mubr.bf16.gmra.mrb[0].mxu0 %v3581
  %v3660 = vpop.f32.mrb[0].mxu0
  %v3661 = vadd.f32 0.0, %v3660
  %v3662 = vpop.f32.mrb[0].mxu0
  %v3663 = vadd.f32 0.0, %v3662
  %v3664 = vpop.f32.mrb[0].mxu0
  %v3665 = vadd.f32 0.0, %v3664
  %v3666 = vpop.f32.mrb[0].mxu0
  %v3667 = vadd.f32 0.0, %v3666
  %3668 = vdwg.mxu0
  %3669 = vmatprep.subr.bf16.mxu0 %v3429
  %3670 = vmatpush1.bf16.msra.mxu0 %v3428
  %3671 = vmatprep.subr.bf16.mxu0 %v3442
  %3672 = vmatpush1.bf16.msra.mxu0 %v3441
  %3673 = vmatprep.subr.bf16.mxu0 %v3455
  %3674 = vmatpush1.bf16.msra.mxu0 %v3454
  %3675 = vmatprep.subr.bf16.mxu0 %v3468
  %3676 = vmatpush1.bf16.msra.mxu0 %v3467
  %3677 = vmatprep.subr.bf16.mxu0 %v3481
  %3678 = vmatpush1.bf16.msra.mxu0 %v3480
  %3679 = vmatprep.subr.bf16.mxu0 %v3494
  %3680 = vmatpush1.bf16.msra.mxu0 %v3493
  %3681 = vmatprep.subr.bf16.mxu0 0
  %3682 = vmatpush1.bf16.msra.mxu0 0
  %3683 = vmatprep.subr.bf16.mxu0 0
  %3684 = vmatpush1.bf16.msra.mxu0 0
  %3685 = vmatprep.subr.bf16.mxu0 0
  %3686 = vmatpush1.bf16.msra.mxu0 0
  %3687 = vmatprep.subr.bf16.mxu0 0
  %3688 = vmatpush1.bf16.msra.mxu0 0
  %3689 = vmatprep.subr.bf16.mxu0 0
  %3690 = vmatpush1.bf16.msra.mxu0 0
  %3691 = vmatprep.subr.bf16.mxu0 0
  %3692 = vmatpush1.bf16.msra.mxu0 0
  %3693 = vmatprep.subr.bf16.mxu0 0
  %3694 = vmatpush1.bf16.msra.mxu0 0
  %3695 = vmatprep.subr.bf16.mxu0 0
  %3696 = vmatpush1.bf16.msra.mxu0 0
  %3697 = vmatprep.subr.bf16.mxu0 0
  %3698 = vmatpush1.bf16.msra.mxu0 0
  %3699 = vmatprep.subr.bf16.mxu0 0
  %3700 = vmatpush1.bf16.msra.mxu0 0
  %3701 = vmatprep.mubr.bf16.mxu0 0
  %3702 = vmatmul.mubr.bf16.gmra.mrb[0].mxu0 %v3581
  %v3703 = vpop.f32.mrb[0].mxu0
  %v3704 = vadd.f32 0.0, %v3703
  %v3705 = vpop.f32.mrb[0].mxu0
  %v3706 = vadd.f32 0.0, %v3705
  %v3707 = vpop.f32.mrb[0].mxu0
  %v3708 = vadd.f32 0.0, %v3707
  %v3709 = vpop.f32.mrb[0].mxu0
  %v3710 = vadd.f32 0.0, %v3709
  %3711 = vdwg.mxu0
  %3712 = vmatprep.subr.bf16.mxu0 %v3431
  %3713 = vmatpush1.bf16.msra.mxu0 %v3430
  %3714 = vmatprep.subr.bf16.mxu0 %v3444
  %3715 = vmatpush1.bf16.msra.mxu0 %v3443
  %3716 = vmatprep.subr.bf16.mxu0 %v3457
  %3717 = vmatpush1.bf16.msra.mxu0 %v3456
  %3718 = vmatprep.subr.bf16.mxu0 %v3470
  %3719 = vmatpush1.bf16.msra.mxu0 %v3469
  %3720 = vmatprep.subr.bf16.mxu0 %v3483
  %3721 = vmatpush1.bf16.msra.mxu0 %v3482
  %3722 = vmatprep.subr.bf16.mxu0 %v3496
  %3723 = vmatpush1.bf16.msra.mxu0 %v3495
  %3724 = vmatprep.subr.bf16.mxu0 0
  %3725 = vmatpush1.bf16.msra.mxu0 0
  %3726 = vmatprep.subr.bf16.mxu0 0
  %3727 = vmatpush1.bf16.msra.mxu0 0
  %3728 = vmatprep.subr.bf16.mxu0 0
  %3729 = vmatpush1.bf16.msra.mxu0 0
  %3730 = vmatprep.subr.bf16.mxu0 0
  %3731 = vmatpush1.bf16.msra.mxu0 0
  %3732 = vmatprep.subr.bf16.mxu0 0
  %3733 = vmatpush1.bf16.msra.mxu0 0
  %3734 = vmatprep.subr.bf16.mxu0 0
  %3735 = vmatpush1.bf16.msra.mxu0 0
  %3736 = vmatprep.subr.bf16.mxu0 0
  %3737 = vmatpush1.bf16.msra.mxu0 0
  %3738 = vmatprep.subr.bf16.mxu0 0
  %3739 = vmatpush1.bf16.msra.mxu0 0
  %3740 = vmatprep.subr.bf16.mxu0 0
  %3741 = vmatpush1.bf16.msra.mxu0 0
  %3742 = vmatprep.subr.bf16.mxu0 0
  %3743 = vmatpush1.bf16.msra.mxu0 0
  %3744 = vmatprep.mubr.bf16.mxu0 0
  %3745 = vmatmul.mubr.bf16.gmra.mrb[0].mxu0 %v3581
  %v3746 = vpop.f32.mrb[0].mxu0
  %v3747 = vadd.f32 0.0, %v3746
  %v3748 = vpop.f32.mrb[0].mxu0
  %v3749 = vadd.f32 0.0, %v3748
  %v3750 = vpop.f32.mrb[0].mxu0
  %v3751 = vadd.f32 0.0, %v3750
  %v3752 = vpop.f32.mrb[0].mxu0
  %v3753 = vadd.f32 0.0, %v3752
  %3754 = vdwg.mxu0
  %3755 = vmatprep.subr.bf16.mxu0 %v3433
  %3756 = vmatpush1.bf16.msra.mxu0 %v3432
  %3757 = vmatprep.subr.bf16.mxu0 %v3446
  %3758 = vmatpush1.bf16.msra.mxu0 %v3445
  %3759 = vmatprep.subr.bf16.mxu0 %v3459
  %3760 = vmatpush1.bf16.msra.mxu0 %v3458
  %3761 = vmatprep.subr.bf16.mxu0 %v3472
  %3762 = vmatpush1.bf16.msra.mxu0 %v3471
  %3763 = vmatprep.subr.bf16.mxu0 %v3485
  %3764 = vmatpush1.bf16.msra.mxu0 %v3484
  %3765 = vmatprep.subr.bf16.mxu0 %v3498
  %3766 = vmatpush1.bf16.msra.mxu0 %v3497
  %3767 = vmatprep.subr.bf16.mxu0 0
  %3768 = vmatpush1.bf16.msra.mxu0 0
  %3769 = vmatprep.subr.bf16.mxu0 0
  %3770 = vmatpush1.bf16.msra.mxu0 0
  %3771 = vmatprep.subr.bf16.mxu0 0
  %3772 = vmatpush1.bf16.msra.mxu0 0
  %3773 = vmatprep.subr.bf16.mxu0 0
  %3774 = vmatpush1.bf16.msra.mxu0 0
  %3775 = vmatprep.subr.bf16.mxu0 0
  %3776 = vmatpush1.bf16.msra.mxu0 0
  %3777 = vmatprep.subr.bf16.mxu0 0
  %3778 = vmatpush1.bf16.msra.mxu0 0
  %3779 = vmatprep.subr.bf16.mxu0 0
  %3780 = vmatpush1.bf16.msra.mxu0 0
  %3781 = vmatprep.subr.bf16.mxu0 0
  %3782 = vmatpush1.bf16.msra.mxu0 0
  %3783 = vmatprep.subr.bf16.mxu0 0
  %3784 = vmatpush1.bf16.msra.mxu0 0
  %3785 = vmatprep.subr.bf16.mxu0 0
  %3786 = vmatpush1.bf16.msra.mxu0 0
  %3787 = vmatprep.mubr.bf16.mxu0 0
  %3788 = vmatmul.mubr.bf16.gmra.mrb[0].mxu0 %v3581
  %v3789 = vpop.f32.mrb[0].mxu0
  %v3790 = vadd.f32 0.0, %v3789
  %v3791 = vpop.f32.mrb[0].mxu0
  %v3792 = vadd.f32 0.0, %v3791
  %v3793 = vpop.f32.mrb[0].mxu0
  %v3794 = vadd.f32 0.0, %v3793
  %v3795 = vpop.f32.mrb[0].mxu0
  %v3796 = vadd.f32 0.0, %v3795
  %3797 = vdwg.mxu0
  %3798 = vmatprep.subr.bf16.mxu0 %v3435
  %3799 = vmatpush1.bf16.msra.mxu0 %v3434
  %3800 = vmatprep.subr.bf16.mxu0 %v3448
  %3801 = vmatpush1.bf16.msra.mxu0 %v3447
  %3802 = vmatprep.subr.bf16.mxu0 %v3461
  %3803 = vmatpush1.bf16.msra.mxu0 %v3460
  %3804 = vmatprep.subr.bf16.mxu0 %v3474
  %3805 = vmatpush1.bf16.msra.mxu0 %v3473
  %3806 = vmatprep.subr.bf16.mxu0 %v3487
  %3807 = vmatpush1.bf16.msra.mxu0 %v3486
  %3808 = vmatprep.subr.bf16.mxu0 %v3500
  %3809 = vmatpush1.bf16.msra.mxu0 %v3499
  %3810 = vmatprep.subr.bf16.mxu0 0
  %3811 = vmatpush1.bf16.msra.mxu0 0
  %3812 = vmatprep.subr.bf16.mxu0 0
  %3813 = vmatpush1.bf16.msra.mxu0 0
  %3814 = vmatprep.subr.bf16.mxu0 0
  %3815 = vmatpush1.bf16.msra.mxu0 0
  %3816 = vmatprep.subr.bf16.mxu0 0
  %3817 = vmatpush1.bf16.msra.mxu0 0
  %3818 = vmatprep.subr.bf16.mxu0 0
  %3819 = vmatpush1.bf16.msra.mxu0 0
  %3820 = vmatprep.subr.bf16.mxu0 0
  %3821 = vmatpush1.bf16.msra.mxu0 0
  %3822 = vmatprep.subr.bf16.mxu0 0
  %3823 = vmatpush1.bf16.msra.mxu0 0
  %3824 = vmatprep.subr.bf16.mxu0 0
  %3825 = vmatpush1.bf16.msra.mxu0 0
  %3826 = vmatprep.subr.bf16.mxu0 0
  %3827 = vmatpush1.bf16.msra.mxu0 0
  %3828 = vmatprep.subr.bf16.mxu0 0
  %3829 = vmatpush1.bf16.msra.mxu0 0
  %3830 = vmatprep.mubr.bf16.mxu0 0
  %3831 = vmatmul.mubr.bf16.gmra.mrb[0].mxu0 %v3581
  %v3832 = vpop.f32.mrb[0].mxu0
  %v3833 = vadd.f32 0.0, %v3832
  %v3834 = vpop.f32.mrb[0].mxu0
  %v3835 = vadd.f32 0.0, %v3834
  %v3836 = vpop.f32.mrb[0].mxu0
  %v3837 = vadd.f32 0.0, %v3836
  %v3838 = vpop.f32.mrb[0].mxu0
  %v3839 = vadd.f32 0.0, %v3838
  %3840 = vdwg.mxu0
  %3841 = vmatprep.subr.bf16.mxu0 0
  %3842 = vmatpush1.bf16.msra.mxu0 %v3436
  %3843 = vmatprep.subr.bf16.mxu0 0
  %3844 = vmatpush1.bf16.msra.mxu0 %v3449
  %3845 = vmatprep.subr.bf16.mxu0 0
  %3846 = vmatpush1.bf16.msra.mxu0 %v3462
  %3847 = vmatprep.subr.bf16.mxu0 0
  %3848 = vmatpush1.bf16.msra.mxu0 %v3475
  %3849 = vmatprep.subr.bf16.mxu0 0
  %3850 = vmatpush1.bf16.msra.mxu0 %v3488
  %3851 = vmatprep.subr.bf16.mxu0 0
  %3852 = vmatpush1.bf16.msra.mxu0 %v3501
  %3853 = vmatprep.subr.bf16.mxu0 0
  %3854 = vmatpush1.bf16.msra.mxu0 0
  %3855 = vmatprep.subr.bf16.mxu0 0
  %3856 = vmatpush1.bf16.msra.mxu0 0
  %3857 = vmatprep.subr.bf16.mxu0 0
  %3858 = vmatpush1.bf16.msra.mxu0 0
  %3859 = vmatprep.subr.bf16.mxu0 0
  %3860 = vmatpush1.bf16.msra.mxu0 0
  %3861 = vmatprep.subr.bf16.mxu0 0
  %3862 = vmatpush1.bf16.msra.mxu0 0
  %3863 = vmatprep.subr.bf16.mxu0 0
  %3864 = vmatpush1.bf16.msra.mxu0 0
  %3865 = vmatprep.subr.bf16.mxu0 0
  %3866 = vmatpush1.bf16.msra.mxu0 0
  %3867 = vmatprep.subr.bf16.mxu0 0
  %3868 = vmatpush1.bf16.msra.mxu0 0
  %3869 = vmatprep.subr.bf16.mxu0 0
  %3870 = vmatpush1.bf16.msra.mxu0 0
  %3871 = vmatprep.subr.bf16.mxu0 0
  %3872 = vmatpush1.bf16.msra.mxu0 0
  %3873 = vmatprep.mubr.bf16.mxu0 0
  %3874 = vmatmul.mubr.bf16.gmra.mrb[0].mxu0 %v3581
  %v3875 = vpop.f32.mrb[0].mxu0
  %v3876 = vadd.f32 0.0, %v3875
  %v3877 = vpop.f32.mrb[0].mxu0
  %v3878 = vpop.f32.mrb[0].mxu0
  %v3879 = vadd.f32 0.0, %v3878
  %v3880 = vpop.f32.mrb[0].mxu0
  %3881 = vdwg.mxu0
  %v3882 = vadd.f32 %v2801, %v3618
  %v3883 = vadd.f32 %v2802, %v3620
  %v3884 = vadd.f32 %v2803, %v3661
  %v3885 = vadd.f32 %v2804, %v3663
  %v3886 = vadd.f32 %v2805, %v3704
  %v3887 = vadd.f32 %v2806, %v3706
  %v3888 = vadd.f32 %v2807, %v3747
  %v3889 = vadd.f32 %v2808, %v3749
  %v3890 = vadd.f32 %v2809, %v3790
  %v3891 = vadd.f32 %v2810, %v3792
  %v3892 = vadd.f32 %v2811, %v3833
  %v3893 = vadd.f32 %v2812, %v3835
  %v3894 = vadd.f32 %v2813, %v3876
  %v3895 = vadd.f32 %v2814, %v3622
  %v3896 = vadd.f32 %v2815, %v3624
  %v3897 = vadd.f32 %v2816, %v3665
  %v3898 = vadd.f32 %v2817, %v3667
  %v3899 = vadd.f32 %v2818, %v3708
  %v3900 = vadd.f32 %v2819, %v3710
  %v3901 = vadd.f32 %v2820, %v3751
  %v3902 = vadd.f32 %v2821, %v3753
  %v3903 = vadd.f32 %v2822, %v3794
  %v3904 = vadd.f32 %v2823, %v3796
  %v3905 = vadd.f32 %v2824, %v3837
  %v3906 = vadd.f32 %v2825, %v3839
  %v3907 = vadd.f32 %v2826, %v3879
  %v3908 = vld [vmem:[%s2] sm:$0xff]
  %v3909 = vld [vmem:[%s2 + $0x8] sm:$0xf]
  %3911 = vset.pattern.permute.xlu0 0
  %3912 = vperm.xlu0 %3911, %v3908
  %v3913 = vpop.permute.xlu0 %3912
  %3916 = vset.pattern.permute.xlu0 0
  %3917 = vperm.xlu0 %3916, %v3909
  %v3918 = vpop.permute.xlu0 %3917
  %v3920 = vadd.f32 %v3882, %v3913
  %v3921 = vadd.f32 %v3883, %v3913
  %v3922 = vadd.f32 %v3884, %v3913
  %v3923 = vadd.f32 %v3885, %v3913
  %v3924 = vadd.f32 %v3886, %v3913
  %v3925 = vadd.f32 %v3887, %v3913
  %v3926 = vadd.f32 %v3888, %v3913
  %v3927 = vadd.f32 %v3889, %v3913
  %v3928 = vadd.f32 %v3890, %v3913
  %v3929 = vadd.f32 %v3891, %v3913
  %v3930 = vadd.f32 %v3892, %v3913
  %v3931 = vadd.f32 %v3893, %v3913
  %v3932 = vadd.f32 %v3894, %v3913
  %v3933 = vadd.f32 %v3895, %v3918
  %v3934 = vadd.f32 %v3896, %v3918
  %v3935 = vadd.f32 %v3897, %v3918
  %v3936 = vadd.f32 %v3898, %v3918
  %v3937 = vadd.f32 %v3899, %v3918
  %v3938 = vadd.f32 %v3900, %v3918
  %v3939 = vadd.f32 %v3901, %v3918
  %v3940 = vadd.f32 %v3902, %v3918
  %v3941 = vadd.f32 %v3903, %v3918
  %v3942 = vadd.f32 %v3904, %v3918
  %v3943 = vadd.f32 %v3905, %v3918
  %v3944 = vadd.f32 %v3906, %v3918
  %v3945 = vadd.f32 %v3907, %v3918
  %vm3946 = vcmp.gt.f32.partialorder %v3920, 0.0
  %vm3947 = vcmp.gt.f32.partialorder %v3921, 0.0
  %vm3948 = vcmp.gt.f32.partialorder %v3922, 0.0
  %vm3949 = vcmp.gt.f32.partialorder %v3923, 0.0
  %vm3950 = vcmp.gt.f32.partialorder %v3924, 0.0
  %vm3951 = vcmp.gt.f32.partialorder %v3925, 0.0
  %vm3952 = vcmp.gt.f32.partialorder %v3926, 0.0
  %vm3953 = vcmp.gt.f32.partialorder %v3927, 0.0
  %vm3954 = vcmp.gt.f32.partialorder %v3928, 0.0
  %vm3955 = vcmp.gt.f32.partialorder %v3929, 0.0
  %vm3956 = vcmp.gt.f32.partialorder %v3930, 0.0
  %vm3957 = vcmp.gt.f32.partialorder %v3931, 0.0
  %vm3958 = vcmp.gt.f32.partialorder %v3932, 0.0
  %vm3959 = vcmp.gt.f32.partialorder %v3933, 0.0
  %vm3960 = vcmp.gt.f32.partialorder %v3934, 0.0
  %vm3961 = vcmp.gt.f32.partialorder %v3935, 0.0
  %vm3962 = vcmp.gt.f32.partialorder %v3936, 0.0
  %vm3963 = vcmp.gt.f32.partialorder %v3937, 0.0
  %vm3964 = vcmp.gt.f32.partialorder %v3938, 0.0
  %vm3965 = vcmp.gt.f32.partialorder %v3939, 0.0
  %vm3966 = vcmp.gt.f32.partialorder %v3940, 0.0
  %vm3967 = vcmp.gt.f32.partialorder %v3941, 0.0
  %vm3968 = vcmp.gt.f32.partialorder %v3942, 0.0
  %vm3969 = vcmp.gt.f32.partialorder %v3943, 0.0
  %vm3970 = vcmp.gt.f32.partialorder %v3944, 0.0
  %vm3971 = vcmp.gt.f32.partialorder %v3945, 0.0
  %v3972 = vmul.f32 %v3920, -0.9
  %v3973 = vmul.f32 %v3921, -0.9
  %v3974 = vmul.f32 %v3922, -0.9
  %v3975 = vmul.f32 %v3923, -0.9
  %v3976 = vmul.f32 %v3924, -0.9
  %v3977 = vmul.f32 %v3925, -0.9
  %v3978 = vmul.f32 %v3926, -0.9
  %v3979 = vmul.f32 %v3927, -0.9
  %v3980 = vmul.f32 %v3928, -0.9
  %v3981 = vmul.f32 %v3929, -0.9
  %v3982 = vmul.f32 %v3930, -0.9
  %v3983 = vmul.f32 %v3931, -0.9
  %v3984 = vmul.f32 %v3932, -0.9
  %v3985 = vmul.f32 %v3933, -0.9
  %v3986 = vmul.f32 %v3934, -0.9
  %v3987 = vmul.f32 %v3935, -0.9
  %v3988 = vmul.f32 %v3936, -0.9
  %v3989 = vmul.f32 %v3937, -0.9
  %v3990 = vmul.f32 %v3938, -0.9
  %v3991 = vmul.f32 %v3939, -0.9
  %v3992 = vmul.f32 %v3940, -0.9
  %v3993 = vmul.f32 %v3941, -0.9
  %v3994 = vmul.f32 %v3942, -0.9
  %v3995 = vmul.f32 %v3943, -0.9
  %v3996 = vmul.f32 %v3944, -0.9
  %v3997 = vmul.f32 %v3945, -0.9
  %v3998 = vsel %vm3946, %v3920, %v3972
  %v3999 = vsel %vm3947, %v3921, %v3973
  %v4000 = vsel %vm3948, %v3922, %v3974
  %v4001 = vsel %vm3949, %v3923, %v3975
  %v4002 = vsel %vm3950, %v3924, %v3976
  %v4003 = vsel %vm3951, %v3925, %v3977
  %v4004 = vsel %vm3952, %v3926, %v3978
  %v4005 = vsel %vm3953, %v3927, %v3979
  %v4006 = vsel %vm3954, %v3928, %v3980
  %v4007 = vsel %vm3955, %v3929, %v3981
  %v4008 = vsel %vm3956, %v3930, %v3982
  %v4009 = vsel %vm3957, %v3931, %v3983
  %v4010 = vsel %vm3958, %v3932, %v3984
  %v4011 = vsel %vm3959, %v3933, %v3985
  %v4012 = vsel %vm3960, %v3934, %v3986
  %v4013 = vsel %vm3961, %v3935, %v3987
  %v4014 = vsel %vm3962, %v3936, %v3988
  %v4015 = vsel %vm3963, %v3937, %v3989
  %v4016 = vsel %vm3964, %v3938, %v3990
  %v4017 = vsel %vm3965, %v3939, %v3991
  %v4018 = vsel %vm3966, %v3940, %v3992
  %v4019 = vsel %vm3967, %v3941, %v3993
  %v4020 = vsel %vm3968, %v3942, %v3994
  %v4021 = vsel %vm3969, %v3943, %v3995
  %v4022 = vsel %vm3970, %v3944, %v3996
  %v4023 = vsel %vm3971, %v3945, %v3997
  %vm4024 = vcmp.gt.f32.partialorder %v3998, 0.0
  %vm4025 = vcmp.gt.f32.partialorder %v3999, 0.0
  %vm4026 = vcmp.gt.f32.partialorder %v4000, 0.0
  %vm4027 = vcmp.gt.f32.partialorder %v4001, 0.0
  %vm4028 = vcmp.gt.f32.partialorder %v4002, 0.0
  %vm4029 = vcmp.gt.f32.partialorder %v4003, 0.0
  %vm4030 = vcmp.gt.f32.partialorder %v4004, 0.0
  %vm4031 = vcmp.gt.f32.partialorder %v4005, 0.0
  %vm4032 = vcmp.gt.f32.partialorder %v4006, 0.0
  %vm4033 = vcmp.gt.f32.partialorder %v4007, 0.0
  %vm4034 = vcmp.gt.f32.partialorder %v4008, 0.0
  %vm4035 = vcmp.gt.f32.partialorder %v4009, 0.0
  %vm4036 = vcmp.gt.f32.partialorder %v4010, 0.0
  %vm4037 = vcmp.gt.f32.partialorder %v4011, 0.0
  %vm4038 = vcmp.gt.f32.partialorder %v4012, 0.0
  %vm4039 = vcmp.gt.f32.partialorder %v4013, 0.0
  %vm4040 = vcmp.gt.f32.partialorder %v4014, 0.0
  %vm4041 = vcmp.gt.f32.partialorder %v4015, 0.0
  %vm4042 = vcmp.gt.f32.partialorder %v4016, 0.0
  %vm4043 = vcmp.gt.f32.partialorder %v4017, 0.0
  %vm4044 = vcmp.gt.f32.partialorder %v4018, 0.0
  %vm4045 = vcmp.gt.f32.partialorder %v4019, 0.0
  %vm4046 = vcmp.gt.f32.partialorder %v4020, 0.0
  %vm4047 = vcmp.gt.f32.partialorder %v4021, 0.0
  %vm4048 = vcmp.gt.f32.partialorder %v4022, 0.0
  %vm4049 = vcmp.gt.f32.partialorder %v4023, 0.0
  %v4050 = vsel %vm4024, %v3998, 0.0
  %v4051 = vsel %vm4025, %v3999, 0.0
  %v4052 = vsel %vm4026, %v4000, 0.0
  %v4053 = vsel %vm4027, %v4001, 0.0
  %v4054 = vsel %vm4028, %v4002, 0.0
  %v4055 = vsel %vm4029, %v4003, 0.0
  %v4056 = vsel %vm4030, %v4004, 0.0
  %v4057 = vsel %vm4031, %v4005, 0.0
  %v4058 = vsel %vm4032, %v4006, 0.0
  %v4059 = vsel %vm4033, %v4007, 0.0
  %v4060 = vsel %vm4034, %v4008, 0.0
  %v4061 = vsel %vm4035, %v4009, 0.0
  %v4062 = vsel %vm4036, %v4010, 0.0
  %v4063 = vsel %vm4037, %v4011, 0.0
  %v4064 = vsel %vm4038, %v4012, 0.0
  %v4065 = vsel %vm4039, %v4013, 0.0
  %v4066 = vsel %vm4040, %v4014, 0.0
  %v4067 = vsel %vm4041, %v4015, 0.0
  %v4068 = vsel %vm4042, %v4016, 0.0
  %v4069 = vsel %vm4043, %v4017, 0.0
  %v4070 = vsel %vm4044, %v4018, 0.0
  %v4071 = vsel %vm4045, %v4019, 0.0
  %v4072 = vsel %vm4046, %v4020, 0.0
  %v4073 = vsel %vm4047, %v4021, 0.0
  %v4074 = vsel %vm4048, %v4022, 0.0
  %v4075 = vsel %vm4049, %v4023, 0.0
  %v4078 = vlaneseq
  %v4079 = vshrl.u32 %v4078, 7
  %v4080 = vsub.s32 0, %v4079
  %v4081 = vrot.slane %v18, %v4080
  %v4082 = vlaneseq
  %v4083 = vshrl.u32 %v4082, 7
  %v4084 = vsub.s32 1, %v4083
  %v4085 = vrot.slane %v18, %v4084
  %v4086 = vlaneseq
  %v4087 = vshrl.u32 %v4086, 7
  %v4088 = vsub.s32 2, %v4087
  %v4089 = vrot.slane %v18, %v4088
  %v4090 = vlaneseq
  %v4091 = vshrl.u32 %v4090, 7
  %v4092 = vsub.s32 3, %v4091
  %v4093 = vrot.slane %v18, %v4092
  %v4094 = vlaneseq
  %v4095 = vshrl.u32 %v4094, 7
  %v4096 = vsub.s32 4, %v4095
  %v4097 = vrot.slane %v18, %v4096
  %v4098 = vlaneseq
  %v4099 = vshrl.u32 %v4098, 7
  %v4100 = vsub.s32 5, %v4099
  %v4101 = vrot.slane %v18, %v4100
  %v4102 = vlaneseq
  %v4103 = vshrl.u32 %v4102, 7
  %v4104 = vsub.s32 6, %v4103
  %v4105 = vrot.slane %v18, %v4104
  %v4106 = vlaneseq
  %v4107 = vshrl.u32 %v4106, 7
  %v4108 = vsub.s32 7, %v4107
  %v4109 = vrot.slane %v18, %v4108
  %v4110 = vlaneseq
  %v4111 = vshrl.u32 %v4110, 7
  %v4112 = vsub.s32 0, %v4111
  %v4113 = vrot.slane %v19, %v4112
  %v4114 = vlaneseq
  %v4115 = vshrl.u32 %v4114, 7
  %v4116 = vsub.s32 1, %v4115
  %v4117 = vrot.slane %v19, %v4116
  %v4118 = vlaneseq
  %v4119 = vshrl.u32 %v4118, 7
  %v4120 = vsub.s32 2, %v4119
  %v4121 = vrot.slane %v19, %v4120
  %v4122 = vlaneseq
  %v4123 = vshrl.u32 %v4122, 7
  %v4124 = vsub.s32 3, %v4123
  %v4125 = vrot.slane %v19, %v4124
  %v4126 = vlaneseq
  %v4127 = vshrl.u32 %v4126, 7
  %v4128 = vsub.s32 4, %v4127
  %v4129 = vrot.slane %v19, %v4128
  %v4143 = vmul.f32 %v4050, %v4081
  %v4144 = vmul.f32 %v4051, %v4085
  %v4145 = vmul.f32 %v4052, %v4089
  %v4146 = vmul.f32 %v4053, %v4093
  %v4147 = vmul.f32 %v4054, %v4097
  %v4148 = vmul.f32 %v4055, %v4101
  %v4149 = vmul.f32 %v4056, %v4105
  %v4150 = vmul.f32 %v4057, %v4109
  %v4151 = vmul.f32 %v4058, %v4113
  %v4152 = vmul.f32 %v4059, %v4117
  %v4153 = vmul.f32 %v4060, %v4121
  %v4154 = vmul.f32 %v4061, %v4125
  %v4155 = vmul.f32 %v4062, %v4129
  %v4156 = vmul.f32 %v4063, %v4081
  %v4157 = vmul.f32 %v4064, %v4085
  %v4158 = vmul.f32 %v4065, %v4089
  %v4159 = vmul.f32 %v4066, %v4093
  %v4160 = vmul.f32 %v4067, %v4097
  %v4161 = vmul.f32 %v4068, %v4101
  %v4162 = vmul.f32 %v4069, %v4105
  %v4163 = vmul.f32 %v4070, %v4109
  %v4164 = vmul.f32 %v4071, %v4113
  %v4165 = vmul.f32 %v4072, %v4117
  %v4166 = vmul.f32 %v4073, %v4121
  %v4167 = vmul.f32 %v4074, %v4125
  %v4168 = vmul.f32 %v4075, %v4129
  %v4169 = vadd.f32 %v4143, %v4144
  %v4170 = vadd.f32 %v4169, %v4145
  %v4171 = vadd.f32 %v4170, %v4146
  %v4172 = vadd.f32 %v4171, %v4147
  %v4173 = vadd.f32 %v4172, %v4148
  %v4174 = vadd.f32 %v4173, %v4149
  %v4175 = vadd.f32 %v4174, %v4150
  %v4176 = vadd.f32 %v4175, %v4151
  %v4177 = vadd.f32 %v4176, %v4152
  %v4178 = vadd.f32 %v4177, %v4153
  %v4179 = vadd.f32 %v4178, %v4154
  %v4180 = vadd.f32 %v4179, %v4155
  %4181 = vadd.xlane.f32.xlu0 %v4180
  %v4182 = vpop.xlane.xlu0 %4181
  %vm4183 = vcmask 1043456
  %v4184 = vsel %vm4183, %v4156, 0.0
  %v4185 = vsel %vm4183, %v4157, 0.0
  %v4186 = vadd.f32 %v4184, %v4185
  %v4187 = vsel %vm4183, %v4158, 0.0
  %v4188 = vadd.f32 %v4186, %v4187
  %v4189 = vsel %vm4183, %v4159, 0.0
  %v4190 = vadd.f32 %v4188, %v4189
  %v4191 = vsel %vm4183, %v4160, 0.0
  %v4192 = vadd.f32 %v4190, %v4191
  %v4193 = vsel %vm4183, %v4161, 0.0
  %v4194 = vadd.f32 %v4192, %v4193
  %v4195 = vsel %vm4183, %v4162, 0.0
  %v4196 = vadd.f32 %v4194, %v4195
  %v4197 = vsel %vm4183, %v4163, 0.0
  %v4198 = vadd.f32 %v4196, %v4197
  %v4199 = vsel %vm4183, %v4164, 0.0
  %v4200 = vadd.f32 %v4198, %v4199
  %v4201 = vsel %vm4183, %v4165, 0.0
  %v4202 = vadd.f32 %v4200, %v4201
  %v4203 = vsel %vm4183, %v4166, 0.0
  %v4204 = vadd.f32 %v4202, %v4203
  %v4205 = vsel %vm4183, %v4167, 0.0
  %v4206 = vadd.f32 %v4204, %v4205
  %v4207 = vsel %vm4183, %v4168, 0.0
  %v4208 = vadd.f32 %v4206, %v4207
  %4209 = vadd.xlane.f32.xlu0 %v4208
  %v4210 = vpop.xlane.xlu0 %4209
  %v4211 = vsel %vm4024, 0.0, %v4081
  %v4212 = vsel %vm4025, 0.0, %v4085
  %v4213 = vsel %vm4026, 0.0, %v4089
  %v4214 = vsel %vm4027, 0.0, %v4093
  %v4215 = vsel %vm4028, 0.0, %v4097
  %v4216 = vsel %vm4029, 0.0, %v4101
  %v4217 = vsel %vm4030, 0.0, %v4105
  %v4218 = vsel %vm4031, 0.0, %v4109
  %v4219 = vsel %vm4032, 0.0, %v4113
  %v4220 = vsel %vm4033, 0.0, %v4117
  %v4221 = vsel %vm4034, 0.0, %v4121
  %v4222 = vsel %vm4035, 0.0, %v4125
  %v4223 = vsel %vm4036, 0.0, %v4129
  %v4224 = vsel %vm4037, 0.0, %v4081
  %v4225 = vsel %vm4038, 0.0, %v4085
  %v4226 = vsel %vm4039, 0.0, %v4089
  %v4227 = vsel %vm4040, 0.0, %v4093
  %v4228 = vsel %vm4041, 0.0, %v4097
  %v4229 = vsel %vm4042, 0.0, %v4101
  %v4230 = vsel %vm4043, 0.0, %v4105
  %v4231 = vsel %vm4044, 0.0, %v4109
  %v4232 = vsel %vm4045, 0.0, %v4113
  %v4233 = vsel %vm4046, 0.0, %v4117
  %v4234 = vsel %vm4047, 0.0, %v4121
  %v4235 = vsel %vm4048, 0.0, %v4125
  %v4236 = vsel %vm4049, 0.0, %v4129
  %v4237 = vadd.f32 %v4211, %v4212
  %v4238 = vadd.f32 %v4237, %v4213
  %v4239 = vadd.f32 %v4238, %v4214
  %v4240 = vadd.f32 %v4239, %v4215
  %v4241 = vadd.f32 %v4240, %v4216
  %v4242 = vadd.f32 %v4241, %v4217
  %v4243 = vadd.f32 %v4242, %v4218
  %v4244 = vadd.f32 %v4243, %v4219
  %v4245 = vadd.f32 %v4244, %v4220
  %v4246 = vadd.f32 %v4245, %v4221
  %v4247 = vadd.f32 %v4246, %v4222
  %v4248 = vadd.f32 %v4247, %v4223
  %4249 = vadd.xlane.f32.xlu0 %v4248
  %v4250 = vpop.xlane.xlu0 %4249
  %v4251 = vsel %vm4183, %v4224, 0.0
  %v4252 = vsel %vm4183, %v4225, 0.0
  %v4253 = vadd.f32 %v4251, %v4252
  %v4254 = vsel %vm4183, %v4226, 0.0
  %v4255 = vadd.f32 %v4253, %v4254
  %v4256 = vsel %vm4183, %v4227, 0.0
  %v4257 = vadd.f32 %v4255, %v4256
  %v4258 = vsel %vm4183, %v4228, 0.0
  %v4259 = vadd.f32 %v4257, %v4258
  %v4260 = vsel %vm4183, %v4229, 0.0
  %v4261 = vadd.f32 %v4259, %v4260
  %v4262 = vsel %vm4183, %v4230, 0.0
  %v4263 = vadd.f32 %v4261, %v4262
  %v4264 = vsel %vm4183, %v4231, 0.0
  %v4265 = vadd.f32 %v4263, %v4264
  %v4266 = vsel %vm4183, %v4232, 0.0
  %v4267 = vadd.f32 %v4265, %v4266
  %v4268 = vsel %vm4183, %v4233, 0.0
  %v4269 = vadd.f32 %v4267, %v4268
  %v4270 = vsel %vm4183, %v4234, 0.0
  %v4271 = vadd.f32 %v4269, %v4270
  %v4272 = vsel %vm4183, %v4235, 0.0
  %v4273 = vadd.f32 %v4271, %v4272
  %v4274 = vsel %vm4183, %v4236, 0.0
  %v4275 = vadd.f32 %v4273, %v4274
  %4276 = vadd.xlane.f32.xlu0 %v4275
  %v4277 = vpop.xlane.xlu0 %4276
  %v4278 = vmul.f32 %v3998, %v4081
  %v4279 = vmul.f32 %v3999, %v4085
  %v4280 = vmul.f32 %v4000, %v4089
  %v4281 = vmul.f32 %v4001, %v4093
  %v4282 = vmul.f32 %v4002, %v4097
  %v4283 = vmul.f32 %v4003, %v4101
  %v4284 = vmul.f32 %v4004, %v4105
  %v4285 = vmul.f32 %v4005, %v4109
  %v4286 = vmul.f32 %v4006, %v4113
  %v4287 = vmul.f32 %v4007, %v4117
  %v4288 = vmul.f32 %v4008, %v4121
  %v4289 = vmul.f32 %v4009, %v4125
  %v4290 = vmul.f32 %v4010, %v4129
  %v4291 = vmul.f32 %v4011, %v4081
  %v4292 = vmul.f32 %v4012, %v4085
  %v4293 = vmul.f32 %v4013, %v4089
  %v4294 = vmul.f32 %v4014, %v4093
  %v4295 = vmul.f32 %v4015, %v4097
  %v4296 = vmul.f32 %v4016, %v4101
  %v4297 = vmul.f32 %v4017, %v4105
  %v4298 = vmul.f32 %v4018, %v4109
  %v4299 = vmul.f32 %v4019, %v4113
  %v4300 = vmul.f32 %v4020, %v4117
  %v4301 = vmul.f32 %v4021, %v4121
  %v4302 = vmul.f32 %v4022, %v4125
  %v4303 = vmul.f32 %v4023, %v4129
  %v4304 = vadd.f32 %v4278, %v4279
  %v4305 = vadd.f32 %v4304, %v4280
  %v4306 = vadd.f32 %v4305, %v4281
  %v4307 = vadd.f32 %v4306, %v4282
  %v4308 = vadd.f32 %v4307, %v4283
  %v4309 = vadd.f32 %v4308, %v4284
  %v4310 = vadd.f32 %v4309, %v4285
  %v4311 = vadd.f32 %v4310, %v4286
  %v4312 = vadd.f32 %v4311, %v4287
  %v4313 = vadd.f32 %v4312, %v4288
  %v4314 = vadd.f32 %v4313, %v4289
  %v4315 = vadd.f32 %v4314, %v4290
  %v4316 = vsel %vm4183, %v4291, 0.0
  %v4317 = vadd.f32 %v4315, %v4316
  %v4318 = vsel %vm4183, %v4292, 0.0
  %v4319 = vadd.f32 %v4317, %v4318
  %v4320 = vsel %vm4183, %v4293, 0.0
  %v4321 = vadd.f32 %v4319, %v4320
  %v4322 = vsel %vm4183, %v4294, 0.0
  %v4323 = vadd.f32 %v4321, %v4322
  %v4324 = vsel %vm4183, %v4295, 0.0
  %v4325 = vadd.f32 %v4323, %v4324
  %v4326 = vsel %vm4183, %v4296, 0.0
  %v4327 = vadd.f32 %v4325, %v4326
  %v4328 = vsel %vm4183, %v4297, 0.0
  %v4329 = vadd.f32 %v4327, %v4328
  %v4330 = vsel %vm4183, %v4298, 0.0
  %v4331 = vadd.f32 %v4329, %v4330
  %v4332 = vsel %vm4183, %v4299, 0.0
  %v4333 = vadd.f32 %v4331, %v4332
  %v4334 = vsel %vm4183, %v4300, 0.0
  %v4335 = vadd.f32 %v4333, %v4334
  %v4336 = vsel %vm4183, %v4301, 0.0
  %v4337 = vadd.f32 %v4335, %v4336
  %v4338 = vsel %vm4183, %v4302, 0.0
  %v4339 = vadd.f32 %v4337, %v4338
  %v4340 = vsel %vm4183, %v4303, 0.0
  %v4341 = vadd.f32 %v4339, %v4340
  %4342 = vadd.xlane.f32.xlu0 %v4341
  %v4343 = vpop.xlane.xlu0 %4342
  %v4344 = vrot.slane %v4343, 4
  %v4345 = vadd.f32 %v4343, %v4344
  %v4346 = vrot.slane %v4345, 2
  %v4347 = vadd.f32 %v4345, %v4346
  %v4348 = vrot.slane %v4347, 1
  %v4349 = vadd.f32 %v4347, %v4348
  %s4350 = vtos %v4349
  %v4351 = vstv %s4350
  %s4352 = scalar_lea.vmem %s0, 720
  %v4353 = vld [vmem:[%s4352] sm:$0xff]
  %v4354 = vld [vmem:[%s4352 + $0x8] sm:$0xff]
  %v4355 = vld [vmem:[%s4352 + $0x10] sm:$0xff]
  %v4356 = vld [vmem:[%s4352 + $0x18] sm:$0xff]
  %v4357 = vld [vmem:[%s4352 + $0x20] sm:$0xff]
  %v4358 = vld [vmem:[%s4352 + $0x28] sm:$0xff]
  %v4359 = vld [vmem:[%s4352 + $0x30] sm:$0xf]
  %v4360 = vld [vmem:[%s4352 + $0x3c] sm:$0xff]
  %v4361 = vld [vmem:[%s4352 + $0x44] sm:$0xff]
  %v4362 = vld [vmem:[%s4352 + $0x4c] sm:$0xff]
  %v4363 = vld [vmem:[%s4352 + $0x54] sm:$0xff]
  %v4364 = vld [vmem:[%s4352 + $0x5c] sm:$0xff]
  %v4365 = vld [vmem:[%s4352 + $0x64] sm:$0xff]
  %v4366 = vld [vmem:[%s4352 + $0x6c] sm:$0xf]
  %v4367 = vld [vmem:[%s4352 + $0x78] sm:$0xff]
  %v4368 = vld [vmem:[%s4352 + $0x80] sm:$0xff]
  %v4369 = vld [vmem:[%s4352 + $0x88] sm:$0xff]
  %v4370 = vld [vmem:[%s4352 + $0x90] sm:$0xff]
  %v4371 = vld [vmem:[%s4352 + $0x98] sm:$0xff]
  %v4372 = vld [vmem:[%s4352 + $0xa0] sm:$0xff]
  %v4373 = vld [vmem:[%s4352 + $0xa8] sm:$0xf]
  %v4374 = vld [vmem:[%s4352 + $0xb4] sm:$0xff]
  %v4375 = vld [vmem:[%s4352 + $0xbc] sm:$0xff]
  %v4376 = vld [vmem:[%s4352 + $0xc4] sm:$0xff]
  %v4377 = vld [vmem:[%s4352 + $0xcc] sm:$0xff]
  %v4378 = vld [vmem:[%s4352 + $0xd4] sm:$0xff]
  %v4379 = vld [vmem:[%s4352 + $0xdc] sm:$0xff]
  %v4380 = vld [vmem:[%s4352 + $0xe4] sm:$0xf]
  %v4381 = vld [vmem:[%s4352 + $0xf0] sm:$0xff]
  %v4382 = vld [vmem:[%s4352 + $0xf8] sm:$0xff]
  %v4383 = vld [vmem:[%s4352 + $0x100] sm:$0xff]
  %v4384 = vld [vmem:[%s4352 + $0x108] sm:$0xff]
  %v4385 = vld [vmem:[%s4352 + $0x110] sm:$0xff]
  %v4386 = vld [vmem:[%s4352 + $0x118] sm:$0xff]
  %v4387 = vld [vmem:[%s4352 + $0x120] sm:$0xf]
  %v4388 = vld [vmem:[%s4352 + $0x12c] sm:$0xff]
  %v4389 = vld [vmem:[%s4352 + $0x134] sm:$0xff]
  %v4390 = vld [vmem:[%s4352 + $0x13c] sm:$0xff]
  %v4391 = vld [vmem:[%s4352 + $0x144] sm:$0xff]
  %v4392 = vld [vmem:[%s4352 + $0x14c] sm:$0xff]
  %v4393 = vld [vmem:[%s4352 + $0x154] sm:$0xff]
  %v4394 = vld [vmem:[%s4352 + $0x15c] sm:$0xf]
  %v4395 = vld [vmem:[%s4352 + $0x168] sm:$0xff]
  %v4396 = vld [vmem:[%s4352 + $0x170] sm:$0xff]
  %v4397 = vld [vmem:[%s4352 + $0x178] sm:$0xff]
  %v4398 = vld [vmem:[%s4352 + $0x180] sm:$0xff]
  %v4399 = vld [vmem:[%s4352 + $0x188] sm:$0xff]
  %v4400 = vld [vmem:[%s4352 + $0x190] sm:$0xff]
  %v4401 = vld [vmem:[%s4352 + $0x198] sm:$0xf]
  %v4402 = vld [vmem:[%s4352 + $0x1a4] sm:$0xff]
  %v4403 = vld [vmem:[%s4352 + $0x1ac] sm:$0xff]
  %v4404 = vld [vmem:[%s4352 + $0x1b4] sm:$0xff]
  %v4405 = vld [vmem:[%s4352 + $0x1bc] sm:$0xff]
  %v4406 = vld [vmem:[%s4352 + $0x1c4] sm:$0xff]
  %v4407 = vld [vmem:[%s4352 + $0x1cc] sm:$0xff]
  %v4408 = vld [vmem:[%s4352 + $0x1d4] sm:$0xf]
  %v4409 = vld [vmem:[%s4352 + $0x1e0] sm:$0xff]
  %v4410 = vld [vmem:[%s4352 + $0x1e8] sm:$0xff]
  %v4411 = vld [vmem:[%s4352 + $0x1f0] sm:$0xff]
  %v4412 = vld [vmem:[%s4352 + $0x1f8] sm:$0xff]
  %v4413 = vld [vmem:[%s4352 + $0x200] sm:$0xff]
  %v4414 = vld [vmem:[%s4352 + $0x208] sm:$0xff]
  %v4415 = vld [vmem:[%s4352 + $0x210] sm:$0xf]
  %v4416 = vld [vmem:[%s4352 + $0x21c] sm:$0xff]
  %v4417 = vld [vmem:[%s4352 + $0x224] sm:$0xff]
  %v4418 = vld [vmem:[%s4352 + $0x22c] sm:$0xff]
  %v4419 = vld [vmem:[%s4352 + $0x234] sm:$0xff]
  %v4420 = vld [vmem:[%s4352 + $0x23c] sm:$0xff]
  %v4421 = vld [vmem:[%s4352 + $0x244] sm:$0xff]
  %v4422 = vld [vmem:[%s4352 + $0x24c] sm:$0xf]
  %v4423 = vld [vmem:[%s4352 + $0x258] sm:$0xff]
  %v4424 = vld [vmem:[%s4352 + $0x260] sm:$0xff]
  %v4425 = vld [vmem:[%s4352 + $0x268] sm:$0xff]
  %v4426 = vld [vmem:[%s4352 + $0x270] sm:$0xff]
  %v4427 = vld [vmem:[%s4352 + $0x278] sm:$0xff]
  %v4428 = vld [vmem:[%s4352 + $0x280] sm:$0xff]
  %v4429 = vld [vmem:[%s4352 + $0x288] sm:$0xf]
  %v4430 = vld [vmem:[%s4352 + $0x294] sm:$0xff]
  %v4431 = vld [vmem:[%s4352 + $0x29c] sm:$0xff]
  %v4432 = vld [vmem:[%s4352 + $0x2a4] sm:$0xff]
  %v4433 = vld [vmem:[%s4352 + $0x2ac] sm:$0xff]
  %v4434 = vld [vmem:[%s4352 + $0x2b4] sm:$0xff]
  %v4435 = vld [vmem:[%s4352 + $0x2bc] sm:$0xff]
  %v4436 = vld [vmem:[%s4352 + $0x2c4] sm:$0xf]
  %v4437 = vld [vmem:[%s4352 + $0x30] sm:$0xff]
  %v4438 = vld [vmem:[%s4352 + $0x6c] sm:$0xff]
  %v4439 = vld [vmem:[%s4352 + $0xa8] sm:$0xff]
  %v4440 = vld [vmem:[%s4352 + $0xe4] sm:$0xff]
  %v4441 = vld [vmem:[%s4352 + $0x120] sm:$0xff]
  %v4442 = vld [vmem:[%s4352 + $0x15c] sm:$0xff]
  %v4443 = vld [vmem:[%s4352 + $0x198] sm:$0xff]
  %v4444 = vld [vmem:[%s4352 + $0x1d4] sm:$0xff]
  %v4445 = vld [vmem:[%s4352 + $0x210] sm:$0xff]
  %v4446 = vld [vmem:[%s4352 + $0x24c] sm:$0xff]
  %v4447 = vld [vmem:[%s4352 + $0x288] sm:$0xff]
  %v4448 = vld [vmem:[%s4352 + $0x2c4] sm:$0xff]
  %v4533 = vunpack.c.l.b16 %v4353
  %v4534 = vunpack.c.h.b16 %v4353
  %v4535 = vunpack.c.l.b16 %v4354
  %v4536 = vunpack.c.h.b16 %v4354
  %v4537 = vunpack.c.l.b16 %v4355
  %v4538 = vunpack.c.h.b16 %v4355
  %v4539 = vunpack.c.l.b16 %v4356
  %v4540 = vunpack.c.h.b16 %v4356
  %v4541 = vunpack.c.l.b16 %v4357
  %v4542 = vunpack.c.h.b16 %v4357
  %v4543 = vunpack.c.l.b16 %v4358
  %v4544 = vunpack.c.h.b16 %v4358
  %v4545 = vunpack.c.l.b16 %v4437
  %v4546 = vunpack.c.h.b16 %v4437
  %v4547 = vunpack.c.l.b16 %v4360
  %v4548 = vunpack.c.h.b16 %v4360
  %v4549 = vunpack.c.l.b16 %v4361
  %v4550 = vunpack.c.h.b16 %v4361
  %v4551 = vunpack.c.l.b16 %v4362
  %v4552 = vunpack.c.h.b16 %v4362
  %v4553 = vunpack.c.l.b16 %v4363
  %v4554 = vunpack.c.h.b16 %v4363
  %v4555 = vunpack.c.l.b16 %v4364
  %v4556 = vunpack.c.h.b16 %v4364
  %v4557 = vunpack.c.l.b16 %v4365
  %v4558 = vunpack.c.h.b16 %v4365
  %v4559 = vunpack.c.l.b16 %v4438
  %v4560 = vunpack.c.h.b16 %v4438
  %v4561 = vunpack.c.l.b16 %v4367
  %v4562 = vunpack.c.h.b16 %v4367
  %v4563 = vunpack.c.l.b16 %v4368
  %v4564 = vunpack.c.h.b16 %v4368
  %v4565 = vunpack.c.l.b16 %v4369
  %v4566 = vunpack.c.h.b16 %v4369
  %v4567 = vunpack.c.l.b16 %v4370
  %v4568 = vunpack.c.h.b16 %v4370
  %v4569 = vunpack.c.l.b16 %v4371
  %v4570 = vunpack.c.h.b16 %v4371
  %v4571 = vunpack.c.l.b16 %v4372
  %v4572 = vunpack.c.h.b16 %v4372
  %v4573 = vunpack.c.l.b16 %v4439
  %v4574 = vunpack.c.h.b16 %v4439
  %v4575 = vunpack.c.l.b16 %v4374
  %v4576 = vunpack.c.h.b16 %v4374
  %v4577 = vunpack.c.l.b16 %v4375
  %v4578 = vunpack.c.h.b16 %v4375
  %v4579 = vunpack.c.l.b16 %v4376
  %v4580 = vunpack.c.h.b16 %v4376
  %v4581 = vunpack.c.l.b16 %v4377
  %v4582 = vunpack.c.h.b16 %v4377
  %v4583 = vunpack.c.l.b16 %v4378
  %v4584 = vunpack.c.h.b16 %v4378
  %v4585 = vunpack.c.l.b16 %v4379
  %v4586 = vunpack.c.h.b16 %v4379
  %v4587 = vunpack.c.l.b16 %v4440
  %v4588 = vunpack.c.h.b16 %v4440
  %v4589 = vunpack.c.l.b16 %v4381
  %v4590 = vunpack.c.h.b16 %v4381
  %v4591 = vunpack.c.l.b16 %v4382
  %v4592 = vunpack.c.h.b16 %v4382
  %v4593 = vunpack.c.l.b16 %v4383
  %v4594 = vunpack.c.h.b16 %v4383
  %v4595 = vunpack.c.l.b16 %v4384
  %v4596 = vunpack.c.h.b16 %v4384
  %v4597 = vunpack.c.l.b16 %v4385
  %v4598 = vunpack.c.h.b16 %v4385
  %v4599 = vunpack.c.l.b16 %v4386
  %v4600 = vunpack.c.h.b16 %v4386
  %v4601 = vunpack.c.l.b16 %v4441
  %v4602 = vunpack.c.h.b16 %v4441
  %v4603 = vunpack.c.l.b16 %v4388
  %v4604 = vunpack.c.h.b16 %v4388
  %v4605 = vunpack.c.l.b16 %v4389
  %v4606 = vunpack.c.h.b16 %v4389
  %v4607 = vunpack.c.l.b16 %v4390
  %v4608 = vunpack.c.h.b16 %v4390
  %v4609 = vunpack.c.l.b16 %v4391
  %v4610 = vunpack.c.h.b16 %v4391
  %v4611 = vunpack.c.l.b16 %v4392
  %v4612 = vunpack.c.h.b16 %v4392
  %v4613 = vunpack.c.l.b16 %v4393
  %v4614 = vunpack.c.h.b16 %v4393
  %v4615 = vunpack.c.l.b16 %v4442
  %v4616 = vunpack.c.h.b16 %v4442
  %v4617 = vunpack.c.l.b16 %v4395
  %v4618 = vunpack.c.h.b16 %v4395
  %v4619 = vunpack.c.l.b16 %v4396
  %v4620 = vunpack.c.h.b16 %v4396
  %v4621 = vunpack.c.l.b16 %v4397
  %v4622 = vunpack.c.h.b16 %v4397
  %v4623 = vunpack.c.l.b16 %v4398
  %v4624 = vunpack.c.h.b16 %v4398
  %v4625 = vunpack.c.l.b16 %v4399
  %v4626 = vunpack.c.h.b16 %v4399
  %v4627 = vunpack.c.l.b16 %v4400
  %v4628 = vunpack.c.h.b16 %v4400
  %v4629 = vunpack.c.l.b16 %v4443
  %v4630 = vunpack.c.h.b16 %v4443
  %v4631 = vunpack.c.l.b16 %v4402
  %v4632 = vunpack.c.h.b16 %v4402
  %v4633 = vunpack.c.l.b16 %v4403
  %v4634 = vunpack.c.h.b16 %v4403
  %v4635 = vunpack.c.l.b16 %v4404
  %v4636 = vunpack.c.h.b16 %v4404
  %v4637 = vunpack.c.l.b16 %v4405
  %v4638 = vunpack.c.h.b16 %v4405
  %v4639 = vunpack.c.l.b16 %v4406
  %v4640 = vunpack.c.h.b16 %v4406
  %v4641 = vunpack.c.l.b16 %v4407
  %v4642 = vunpack.c.h.b16 %v4407
  %v4643 = vunpack.c.l.b16 %v4444
  %v4644 = vunpack.c.h.b16 %v4444
  %v4645 = vunpack.c.l.b16 %v4409
  %v4646 = vunpack.c.h.b16 %v4409
  %v4647 = vunpack.c.l.b16 %v4410
  %v4648 = vunpack.c.h.b16 %v4410
  %v4649 = vunpack.c.l.b16 %v4411
  %v4650 = vunpack.c.h.b16 %v4411
  %v4651 = vunpack.c.l.b16 %v4412
  %v4652 = vunpack.c.h.b16 %v4412
  %v4653 = vunpack.c.l.b16 %v4413
  %v4654 = vunpack.c.h.b16 %v4413
  %v4655 = vunpack.c.l.b16 %v4414
  %v4656 = vunpack.c.h.b16 %v4414
  %v4657 = vunpack.c.l.b16 %v4445
  %v4658 = vunpack.c.h.b16 %v4445
  %v4659 = vunpack.c.l.b16 %v4416
  %v4660 = vunpack.c.h.b16 %v4416
  %v4661 = vunpack.c.l.b16 %v4417
  %v4662 = vunpack.c.h.b16 %v4417
  %v4663 = vunpack.c.l.b16 %v4418
  %v4664 = vunpack.c.h.b16 %v4418
  %v4665 = vunpack.c.l.b16 %v4419
  %v4666 = vunpack.c.h.b16 %v4419
  %v4667 = vunpack.c.l.b16 %v4420
  %v4668 = vunpack.c.h.b16 %v4420
  %v4669 = vunpack.c.l.b16 %v4421
  %v4670 = vunpack.c.h.b16 %v4421
  %v4671 = vunpack.c.l.b16 %v4446
  %v4672 = vunpack.c.h.b16 %v4446
  %v4673 = vunpack.c.l.b16 %v4423
  %v4674 = vunpack.c.h.b16 %v4423
  %v4675 = vunpack.c.l.b16 %v4424
  %v4676 = vunpack.c.h.b16 %v4424
  %v4677 = vunpack.c.l.b16 %v4425
  %v4678 = vunpack.c.h.b16 %v4425
  %v4679 = vunpack.c.l.b16 %v4426
  %v4680 = vunpack.c.h.b16 %v4426
  %v4681 = vunpack.c.l.b16 %v4427
  %v4682 = vunpack.c.h.b16 %v4427
  %v4683 = vunpack.c.l.b16 %v4428
  %v4684 = vunpack.c.h.b16 %v4428
  %v4685 = vunpack.c.l.b16 %v4447
  %v4686 = vunpack.c.h.b16 %v4447
  %v4687 = vunpack.c.l.b16 %v4430
  %v4688 = vunpack.c.h.b16 %v4430
  %v4689 = vunpack.c.l.b16 %v4431
  %v4690 = vunpack.c.h.b16 %v4431
  %v4691 = vunpack.c.l.b16 %v4432
  %v4692 = vunpack.c.h.b16 %v4432
  %v4693 = vunpack.c.l.b16 %v4433
  %v4694 = vunpack.c.h.b16 %v4433
  %v4695 = vunpack.c.l.b16 %v4434
  %v4696 = vunpack.c.h.b16 %v4434
  %v4697 = vunpack.c.l.b16 %v4435
  %v4698 = vunpack.c.h.b16 %v4435
  %v4699 = vunpack.c.l.b16 %v4448
  %v4700 = vunpack.c.h.b16 %v4448
  %v4701 = vpack.c.b16 %v4547, %v4533
  %v4702 = vpack.c.b16 %v4548, %v4534
  %v4703 = vpack.c.b16 %v4549, %v4535
  %v4704 = vpack.c.b16 %v4550, %v4536
  %v4705 = vpack.c.b16 %v4551, %v4537
  %v4706 = vpack.c.b16 %v4552, %v4538
  %v4707 = vpack.c.b16 %v4553, %v4539
  %v4708 = vpack.c.b16 %v4554, %v4540
  %v4709 = vpack.c.b16 %v4555, %v4541
  %v4710 = vpack.c.b16 %v4556, %v4542
  %v4711 = vpack.c.b16 %v4557, %v4543
  %v4712 = vpack.c.b16 %v4558, %v4544
  %v4713 = vpack.c.b16 %v4559, %v4545
  %v4714 = vpack.c.b16 %v4560, %v4546
  %v4715 = vpack.c.b16 %v4575, %v4561
  %v4716 = vpack.c.b16 %v4576, %v4562
  %v4717 = vpack.c.b16 %v4577, %v4563
  %v4718 = vpack.c.b16 %v4578, %v4564
  %v4719 = vpack.c.b16 %v4579, %v4565
  %v4720 = vpack.c.b16 %v4580, %v4566
  %v4721 = vpack.c.b16 %v4581, %v4567
  %v4722 = vpack.c.b16 %v4582, %v4568
  %v4723 = vpack.c.b16 %v4583, %v4569
  %v4724 = vpack.c.b16 %v4584, %v4570
  %v4725 = vpack.c.b16 %v4585, %v4571
  %v4726 = vpack.c.b16 %v4586, %v4572
  %v4727 = vpack.c.b16 %v4587, %v4573
  %v4728 = vpack.c.b16 %v4588, %v4574
  %v4729 = vpack.c.b16 %v4603, %v4589
  %v4730 = vpack.c.b16 %v4604, %v4590
  %v4731 = vpack.c.b16 %v4605, %v4591
  %v4732 = vpack.c.b16 %v4606, %v4592
  %v4733 = vpack.c.b16 %v4607, %v4593
  %v4734 = vpack.c.b16 %v4608, %v4594
  %v4735 = vpack.c.b16 %v4609, %v4595
  %v4736 = vpack.c.b16 %v4610, %v4596
  %v4737 = vpack.c.b16 %v4611, %v4597
  %v4738 = vpack.c.b16 %v4612, %v4598
  %v4739 = vpack.c.b16 %v4613, %v4599
  %v4740 = vpack.c.b16 %v4614, %v4600
  %v4741 = vpack.c.b16 %v4615, %v4601
  %v4742 = vpack.c.b16 %v4616, %v4602
  %v4743 = vpack.c.b16 %v4631, %v4617
  %v4744 = vpack.c.b16 %v4632, %v4618
  %v4745 = vpack.c.b16 %v4633, %v4619
  %v4746 = vpack.c.b16 %v4634, %v4620
  %v4747 = vpack.c.b16 %v4635, %v4621
  %v4748 = vpack.c.b16 %v4636, %v4622
  %v4749 = vpack.c.b16 %v4637, %v4623
  %v4750 = vpack.c.b16 %v4638, %v4624
  %v4751 = vpack.c.b16 %v4639, %v4625
  %v4752 = vpack.c.b16 %v4640, %v4626
  %v4753 = vpack.c.b16 %v4641, %v4627
  %v4754 = vpack.c.b16 %v4642, %v4628
  %v4755 = vpack.c.b16 %v4643, %v4629
  %v4756 = vpack.c.b16 %v4644, %v4630
  %v4757 = vpack.c.b16 %v4659, %v4645
  %v4758 = vpack.c.b16 %v4660, %v4646
  %v4759 = vpack.c.b16 %v4661, %v4647
  %v4760 = vpack.c.b16 %v4662, %v4648
  %v4761 = vpack.c.b16 %v4663, %v4649
  %v4762 = vpack.c.b16 %v4664, %v4650
  %v4763 = vpack.c.b16 %v4665, %v4651
  %v4764 = vpack.c.b16 %v4666, %v4652
  %v4765 = vpack.c.b16 %v4667, %v4653
  %v4766 = vpack.c.b16 %v4668, %v4654
  %v4767 = vpack.c.b16 %v4669, %v4655
  %v4768 = vpack.c.b16 %v4670, %v4656
  %v4769 = vpack.c.b16 %v4671, %v4657
  %v4770 = vpack.c.b16 %v4672, %v4658
  %v4771 = vpack.c.b16 %v4687, %v4673
  %v4772 = vpack.c.b16 %v4688, %v4674
  %v4773 = vpack.c.b16 %v4689, %v4675
  %v4774 = vpack.c.b16 %v4690, %v4676
  %v4775 = vpack.c.b16 %v4691, %v4677
  %v4776 = vpack.c.b16 %v4692, %v4678
  %v4777 = vpack.c.b16 %v4693, %v4679
  %v4778 = vpack.c.b16 %v4694, %v4680
  %v4779 = vpack.c.b16 %v4695, %v4681
  %v4780 = vpack.c.b16 %v4696, %v4682
  %v4781 = vpack.c.b16 %v4697, %v4683
  %v4782 = vpack.c.b16 %v4698, %v4684
  %v4783 = vpack.c.b16 %v4699, %v4685
  %v4784 = vpack.c.b16 %v4700, %v4686
  %4785 = vrot.lane.b32.xlu0 %v4701, 93
  %v4786 = vpop.permute.xlu0 %4785
  %4787 = vrot.lane.b32.xlu0 %v4702, 93
  %v4788 = vpop.permute.xlu0 %4787
  %4789 = vrot.lane.b32.xlu0 %v4703, 93
  %v4790 = vpop.permute.xlu0 %4789
  %4791 = vrot.lane.b32.xlu0 %v4704, 93
  %v4792 = vpop.permute.xlu0 %4791
  %4793 = vrot.lane.b32.xlu0 %v4705, 93
  %v4794 = vpop.permute.xlu0 %4793
  %4795 = vrot.lane.b32.xlu0 %v4706, 93
  %v4796 = vpop.permute.xlu0 %4795
  %4797 = vrot.lane.b32.xlu0 %v4707, 93
  %v4798 = vpop.permute.xlu0 %4797
  %4799 = vrot.lane.b32.xlu0 %v4708, 93
  %v4800 = vpop.permute.xlu0 %4799
  %4801 = vrot.lane.b32.xlu0 %v4709, 93
  %v4802 = vpop.permute.xlu0 %4801
  %4803 = vrot.lane.b32.xlu0 %v4710, 93
  %v4804 = vpop.permute.xlu0 %4803
  %4805 = vrot.lane.b32.xlu0 %v4711, 93
  %v4806 = vpop.permute.xlu0 %4805
  %4807 = vrot.lane.b32.xlu0 %v4712, 93
  %v4808 = vpop.permute.xlu0 %4807
  %4809 = vrot.lane.b32.xlu0 %v4713, 93
  %v4810 = vpop.permute.xlu0 %4809
  %4811 = vrot.lane.b32.xlu0 %v4714, 93
  %v4812 = vpop.permute.xlu0 %4811
  %4813 = vrot.lane.b32.xlu0 %v4715, 93
  %v4814 = vpop.permute.xlu0 %4813
  %4815 = vrot.lane.b32.xlu0 %v4716, 93
  %v4816 = vpop.permute.xlu0 %4815
  %4817 = vrot.lane.b32.xlu0 %v4717, 93
  %v4818 = vpop.permute.xlu0 %4817
  %4819 = vrot.lane.b32.xlu0 %v4718, 93
  %v4820 = vpop.permute.xlu0 %4819
  %4821 = vrot.lane.b32.xlu0 %v4719, 93
  %v4822 = vpop.permute.xlu0 %4821
  %4823 = vrot.lane.b32.xlu0 %v4720, 93
  %v4824 = vpop.permute.xlu0 %4823
  %4825 = vrot.lane.b32.xlu0 %v4721, 93
  %v4826 = vpop.permute.xlu0 %4825
  %4827 = vrot.lane.b32.xlu0 %v4722, 93
  %v4828 = vpop.permute.xlu0 %4827
  %4829 = vrot.lane.b32.xlu0 %v4723, 93
  %v4830 = vpop.permute.xlu0 %4829
  %4831 = vrot.lane.b32.xlu0 %v4724, 93
  %v4832 = vpop.permute.xlu0 %4831
  %4833 = vrot.lane.b32.xlu0 %v4725, 93
  %v4834 = vpop.permute.xlu0 %4833
  %4835 = vrot.lane.b32.xlu0 %v4726, 93
  %v4836 = vpop.permute.xlu0 %4835
  %4837 = vrot.lane.b32.xlu0 %v4727, 93
  %v4838 = vpop.permute.xlu0 %4837
  %4839 = vrot.lane.b32.xlu0 %v4728, 93
  %v4840 = vpop.permute.xlu0 %4839
  %4841 = vrot.lane.b32.xlu0 %v4729, 93
  %v4842 = vpop.permute.xlu0 %4841
  %4843 = vrot.lane.b32.xlu0 %v4730, 93
  %v4844 = vpop.permute.xlu0 %4843
  %4845 = vrot.lane.b32.xlu0 %v4731, 93
  %v4846 = vpop.permute.xlu0 %4845
  %4847 = vrot.lane.b32.xlu0 %v4732, 93
  %v4848 = vpop.permute.xlu0 %4847
  %4849 = vrot.lane.b32.xlu0 %v4733, 93
  %v4850 = vpop.permute.xlu0 %4849
  %4851 = vrot.lane.b32.xlu0 %v4734, 93
  %v4852 = vpop.permute.xlu0 %4851
  %4853 = vrot.lane.b32.xlu0 %v4735, 93
  %v4854 = vpop.permute.xlu0 %4853
  %4855 = vrot.lane.b32.xlu0 %v4736, 93
  %v4856 = vpop.permute.xlu0 %4855
  %4857 = vrot.lane.b32.xlu0 %v4737, 93
  %v4858 = vpop.permute.xlu0 %4857
  %4859 = vrot.lane.b32.xlu0 %v4738, 93
  %v4860 = vpop.permute.xlu0 %4859
  %4861 = vrot.lane.b32.xlu0 %v4739, 93
  %v4862 = vpop.permute.xlu0 %4861
  %4863 = vrot.lane.b32.xlu0 %v4740, 93
  %v4864 = vpop.permute.xlu0 %4863
  %4865 = vrot.lane.b32.xlu0 %v4741, 93
  %v4866 = vpop.permute.xlu0 %4865
  %4867 = vrot.lane.b32.xlu0 %v4742, 93
  %v4868 = vpop.permute.xlu0 %4867
  %4869 = vrot.lane.b32.xlu0 %v4743, 93
  %v4870 = vpop.permute.xlu0 %4869
  %4871 = vrot.lane.b32.xlu0 %v4744, 93
  %v4872 = vpop.permute.xlu0 %4871
  %4873 = vrot.lane.b32.xlu0 %v4745, 93
  %v4874 = vpop.permute.xlu0 %4873
  %4875 = vrot.lane.b32.xlu0 %v4746, 93
  %v4876 = vpop.permute.xlu0 %4875
  %4877 = vrot.lane.b32.xlu0 %v4747, 93
  %v4878 = vpop.permute.xlu0 %4877
  %4879 = vrot.lane.b32.xlu0 %v4748, 93
  %v4880 = vpop.permute.xlu0 %4879
  %4881 = vrot.lane.b32.xlu0 %v4749, 93
  %v4882 = vpop.permute.xlu0 %4881
  %4883 = vrot.lane.b32.xlu0 %v4750, 93
  %v4884 = vpop.permute.xlu0 %4883
  %4885 = vrot.lane.b32.xlu0 %v4751, 93
  %v4886 = vpop.permute.xlu0 %4885
  %4887 = vrot.lane.b32.xlu0 %v4752, 93
  %v4888 = vpop.permute.xlu0 %4887
  %4889 = vrot.lane.b32.xlu0 %v4753, 93
  %v4890 = vpop.permute.xlu0 %4889
  %4891 = vrot.lane.b32.xlu0 %v4754, 93
  %v4892 = vpop.permute.xlu0 %4891
  %4893 = vrot.lane.b32.xlu0 %v4755, 93
  %v4894 = vpop.permute.xlu0 %4893
  %4895 = vrot.lane.b32.xlu0 %v4756, 93
  %v4896 = vpop.permute.xlu0 %4895
  %4897 = vrot.lane.b32.xlu0 %v4757, 93
  %v4898 = vpop.permute.xlu0 %4897
  %4899 = vrot.lane.b32.xlu0 %v4758, 93
  %v4900 = vpop.permute.xlu0 %4899
  %4901 = vrot.lane.b32.xlu0 %v4759, 93
  %v4902 = vpop.permute.xlu0 %4901
  %4903 = vrot.lane.b32.xlu0 %v4760, 93
  %v4904 = vpop.permute.xlu0 %4903
  %4905 = vrot.lane.b32.xlu0 %v4761, 93
  %v4906 = vpop.permute.xlu0 %4905
  %4907 = vrot.lane.b32.xlu0 %v4762, 93
  %v4908 = vpop.permute.xlu0 %4907
  %4909 = vrot.lane.b32.xlu0 %v4763, 93
  %v4910 = vpop.permute.xlu0 %4909
  %4911 = vrot.lane.b32.xlu0 %v4764, 93
  %v4912 = vpop.permute.xlu0 %4911
  %4913 = vrot.lane.b32.xlu0 %v4765, 93
  %v4914 = vpop.permute.xlu0 %4913
  %4915 = vrot.lane.b32.xlu0 %v4766, 93
  %v4916 = vpop.permute.xlu0 %4915
  %4917 = vrot.lane.b32.xlu0 %v4767, 93
  %v4918 = vpop.permute.xlu0 %4917
  %4919 = vrot.lane.b32.xlu0 %v4768, 93
  %v4920 = vpop.permute.xlu0 %4919
  %4921 = vrot.lane.b32.xlu0 %v4769, 93
  %v4922 = vpop.permute.xlu0 %4921
  %4923 = vrot.lane.b32.xlu0 %v4770, 93
  %v4924 = vpop.permute.xlu0 %4923
  %4925 = vrot.lane.b32.xlu0 %v4771, 93
  %v4926 = vpop.permute.xlu0 %4925
  %4927 = vrot.lane.b32.xlu0 %v4772, 93
  %v4928 = vpop.permute.xlu0 %4927
  %4929 = vrot.lane.b32.xlu0 %v4773, 93
  %v4930 = vpop.permute.xlu0 %4929
  %4931 = vrot.lane.b32.xlu0 %v4774, 93
  %v4932 = vpop.permute.xlu0 %4931
  %4933 = vrot.lane.b32.xlu0 %v4775, 93
  %v4934 = vpop.permute.xlu0 %4933
  %4935 = vrot.lane.b32.xlu0 %v4776, 93
  %v4936 = vpop.permute.xlu0 %4935
  %4937 = vrot.lane.b32.xlu0 %v4777, 93
  %v4938 = vpop.permute.xlu0 %4937
  %4939 = vrot.lane.b32.xlu0 %v4778, 93
  %v4940 = vpop.permute.xlu0 %4939
  %4941 = vrot.lane.b32.xlu0 %v4779, 93
  %v4942 = vpop.permute.xlu0 %4941
  %4943 = vrot.lane.b32.xlu0 %v4780, 93
  %v4944 = vpop.permute.xlu0 %4943
  %4945 = vrot.lane.b32.xlu0 %v4781, 93
  %v4946 = vpop.permute.xlu0 %4945
  %4947 = vrot.lane.b32.xlu0 %v4782, 93
  %v4948 = vpop.permute.xlu0 %4947
  %4949 = vrot.lane.b32.xlu0 %v4783, 93
  %v4950 = vpop.permute.xlu0 %4949
  %4951 = vrot.lane.b32.xlu0 %v4784, 93
  %v4952 = vpop.permute.xlu0 %4951
  %v4953 = vsel %vm630, %v4786, %v4788
  %v4954 = vsel %vm630, %v4788, %v4790
  %v4955 = vsel %vm630, %v4790, %v4792
  %v4956 = vsel %vm630, %v4792, %v4794
  %v4957 = vsel %vm630, %v4794, %v4796
  %v4958 = vsel %vm630, %v4796, %v4798
  %v4959 = vsel %vm630, %v4798, %v4800
  %v4960 = vsel %vm630, %v4800, %v4802
  %v4961 = vsel %vm630, %v4802, %v4804
  %v4962 = vsel %vm630, %v4804, %v4806
  %v4963 = vsel %vm630, %v4806, %v4808
  %v4964 = vsel %vm630, %v4808, %v4810
  %v4965 = vsel %vm630, %v4810, %v4812
  %v4966 = vsel %vm630, %v4814, %v4816
  %v4967 = vsel %vm630, %v4816, %v4818
  %v4968 = vsel %vm630, %v4818, %v4820
  %v4969 = vsel %vm630, %v4820, %v4822
  %v4970 = vsel %vm630, %v4822, %v4824
  %v4971 = vsel %vm630, %v4824, %v4826
  %v4972 = vsel %vm630, %v4826, %v4828
  %v4973 = vsel %vm630, %v4828, %v4830
  %v4974 = vsel %vm630, %v4830, %v4832
  %v4975 = vsel %vm630, %v4832, %v4834
  %v4976 = vsel %vm630, %v4834, %v4836
  %v4977 = vsel %vm630, %v4836, %v4838
  %v4978 = vsel %vm630, %v4838, %v4840
  %v4979 = vsel %vm630, %v4842, %v4844
  %v4980 = vsel %vm630, %v4844, %v4846
  %v4981 = vsel %vm630, %v4846, %v4848
  %v4982 = vsel %vm630, %v4848, %v4850
  %v4983 = vsel %vm630, %v4850, %v4852
  %v4984 = vsel %vm630, %v4852, %v4854
  %v4985 = vsel %vm630, %v4854, %v4856
  %v4986 = vsel %vm630, %v4856, %v4858
  %v4987 = vsel %vm630, %v4858, %v4860
  %v4988 = vsel %vm630, %v4860, %v4862
  %v4989 = vsel %vm630, %v4862, %v4864
  %v4990 = vsel %vm630, %v4864, %v4866
  %v4991 = vsel %vm630, %v4866, %v4868
  %v4992 = vsel %vm630, %v4870, %v4872
  %v4993 = vsel %vm630, %v4872, %v4874
  %v4994 = vsel %vm630, %v4874, %v4876
  %v4995 = vsel %vm630, %v4876, %v4878
  %v4996 = vsel %vm630, %v4878, %v4880
  %v4997 = vsel %vm630, %v4880, %v4882
  %v4998 = vsel %vm630, %v4882, %v4884
  %v4999 = vsel %vm630, %v4884, %v4886
  %v5000 = vsel %vm630, %v4886, %v4888
  %v5001 = vsel %vm630, %v4888, %v4890
  %v5002 = vsel %vm630, %v4890, %v4892
  %v5003 = vsel %vm630, %v4892, %v4894
  %v5004 = vsel %vm630, %v4894, %v4896
  %v5005 = vsel %vm630, %v4898, %v4900
  %v5006 = vsel %vm630, %v4900, %v4902
  %v5007 = vsel %vm630, %v4902, %v4904
  %v5008 = vsel %vm630, %v4904, %v4906
  %v5009 = vsel %vm630, %v4906, %v4908
  %v5010 = vsel %vm630, %v4908, %v4910
  %v5011 = vsel %vm630, %v4910, %v4912
  %v5012 = vsel %vm630, %v4912, %v4914
  %v5013 = vsel %vm630, %v4914, %v4916
  %v5014 = vsel %vm630, %v4916, %v4918
  %v5015 = vsel %vm630, %v4918, %v4920
  %v5016 = vsel %vm630, %v4920, %v4922
  %v5017 = vsel %vm630, %v4922, %v4924
  %v5018 = vsel %vm630, %v4926, %v4928
  %v5019 = vsel %vm630, %v4928, %v4930
  %v5020 = vsel %vm630, %v4930, %v4932
  %v5021 = vsel %vm630, %v4932, %v4934
  %v5022 = vsel %vm630, %v4934, %v4936
  %v5023 = vsel %vm630, %v4936, %v4938
  %v5024 = vsel %vm630, %v4938, %v4940
  %v5025 = vsel %vm630, %v4940, %v4942
  %v5026 = vsel %vm630, %v4942, %v4944
  %v5027 = vsel %vm630, %v4944, %v4946
  %v5028 = vsel %vm630, %v4946, %v4948
  %v5029 = vsel %vm630, %v4948, %v4950
  %v5030 = vsel %vm630, %v4950, %v4952
  %5109 = vmatprep.subr.bf16.mxu0 %v4954
  %5110 = vmatpush1.bf16.msra.mxu0 %v4953
  %5111 = vmatprep.subr.bf16.mxu0 %v4967
  %5112 = vmatpush1.bf16.msra.mxu0 %v4966
  %5113 = vmatprep.subr.bf16.mxu0 %v4980
  %5114 = vmatpush1.bf16.msra.mxu0 %v4979
  %5115 = vmatprep.subr.bf16.mxu0 %v4993
  %5116 = vmatpush1.bf16.msra.mxu0 %v4992
  %5117 = vmatprep.subr.bf16.mxu0 %v5006
  %5118 = vmatpush1.bf16.msra.mxu0 %v5005
  %5119 = vmatprep.subr.bf16.mxu0 %v5019
  %5120 = vmatpush1.bf16.msra.mxu0 %v5018
  %5121 = vmatprep.subr.bf16.mxu0 0
  %5122 = vmatpush1.bf16.msra.mxu0 0
  %5123 = vmatprep.subr.bf16.mxu0 0
  %5124 = vmatpush1.bf16.msra.mxu0 0
  %5125 = vmatprep.subr.bf16.mxu0 0
  %5126 = vmatpush1.bf16.msra.mxu0 0
  %5127 = vmatprep.subr.bf16.mxu0 0
  %5128 = vmatpush1.bf16.msra.mxu0 0
  %5129 = vmatprep.subr.bf16.mxu0 0
  %5130 = vmatpush1.bf16.msra.mxu0 0
  %5131 = vmatprep.subr.bf16.mxu0 0
  %5132 = vmatpush1.bf16.msra.mxu0 0
  %5133 = vmatprep.subr.bf16.mxu0 0
  %5134 = vmatpush1.bf16.msra.mxu0 0
  %5135 = vmatprep.subr.bf16.mxu0 0
  %5136 = vmatpush1.bf16.msra.mxu0 0
  %5137 = vmatprep.subr.bf16.mxu0 0
  %5138 = vmatpush1.bf16.msra.mxu0 0
  %5139 = vmatprep.subr.bf16.mxu0 0
  %5140 = vmatpush1.bf16.msra.mxu0 0
  %5141 = vmatprep.mubr.bf16.mxu0 0
  %5142 = vmatmul.mubr.bf16.gmra.mrb[0].mxu0 %v789
  %v5143 = vpop.f32.mrb[0].mxu0
  %v5144 = vadd.f32 0.0, %v5143
  %v5145 = vpop.f32.mrb[0].mxu0
  %v5146 = vadd.f32 0.0, %v5145
  %v5147 = vpop.f32.mrb[0].mxu0
  %v5148 = vadd.f32 0.0, %v5147
  %v5149 = vpop.f32.mrb[0].mxu0
  %v5150 = vadd.f32 0.0, %v5149
  %5151 = vdwg.mxu0
  %5152 = vmatprep.subr.bf16.mxu0 %v4956
  %5153 = vmatpush1.bf16.msra.mxu0 %v4955
  %5154 = vmatprep.subr.bf16.mxu0 %v4969
  %5155 = vmatpush1.bf16.msra.mxu0 %v4968
  %5156 = vmatprep.subr.bf16.mxu0 %v4982
  %5157 = vmatpush1.bf16.msra.mxu0 %v4981
  %5158 = vmatprep.subr.bf16.mxu0 %v4995
  %5159 = vmatpush1.bf16.msra.mxu0 %v4994
  %5160 = vmatprep.subr.bf16.mxu0 %v5008
  %5161 = vmatpush1.bf16.msra.mxu0 %v5007
  %5162 = vmatprep.subr.bf16.mxu0 %v5021
  %5163 = vmatpush1.bf16.msra.mxu0 %v5020
  %5164 = vmatprep.subr.bf16.mxu0 0
  %5165 = vmatpush1.bf16.msra.mxu0 0
  %5166 = vmatprep.subr.bf16.mxu0 0
  %5167 = vmatpush1.bf16.msra.mxu0 0
  %5168 = vmatprep.subr.bf16.mxu0 0
  %5169 = vmatpush1.bf16.msra.mxu0 0
  %5170 = vmatprep.subr.bf16.mxu0 0
  %5171 = vmatpush1.bf16.msra.mxu0 0
  %5172 = vmatprep.subr.bf16.mxu0 0
  %5173 = vmatpush1.bf16.msra.mxu0 0
  %5174 = vmatprep.subr.bf16.mxu0 0
  %5175 = vmatpush1.bf16.msra.mxu0 0
  %5176 = vmatprep.subr.bf16.mxu0 0
  %5177 = vmatpush1.bf16.msra.mxu0 0
  %5178 = vmatprep.subr.bf16.mxu0 0
  %5179 = vmatpush1.bf16.msra.mxu0 0
  %5180 = vmatprep.subr.bf16.mxu0 0
  %5181 = vmatpush1.bf16.msra.mxu0 0
  %5182 = vmatprep.subr.bf16.mxu0 0
  %5183 = vmatpush1.bf16.msra.mxu0 0
  %5184 = vmatprep.mubr.bf16.mxu0 0
  %5185 = vmatmul.mubr.bf16.gmra.mrb[0].mxu0 %v789
  %v5186 = vpop.f32.mrb[0].mxu0
  %v5187 = vadd.f32 0.0, %v5186
  %v5188 = vpop.f32.mrb[0].mxu0
  %v5189 = vadd.f32 0.0, %v5188
  %v5190 = vpop.f32.mrb[0].mxu0
  %v5191 = vadd.f32 0.0, %v5190
  %v5192 = vpop.f32.mrb[0].mxu0
  %v5193 = vadd.f32 0.0, %v5192
  %5194 = vdwg.mxu0
  %5195 = vmatprep.subr.bf16.mxu0 %v4958
  %5196 = vmatpush1.bf16.msra.mxu0 %v4957
  %5197 = vmatprep.subr.bf16.mxu0 %v4971
  %5198 = vmatpush1.bf16.msra.mxu0 %v4970
  %5199 = vmatprep.subr.bf16.mxu0 %v4984
  %5200 = vmatpush1.bf16.msra.mxu0 %v4983
  %5201 = vmatprep.subr.bf16.mxu0 %v4997
  %5202 = vmatpush1.bf16.msra.mxu0 %v4996
  %5203 = vmatprep.subr.bf16.mxu0 %v5010
  %5204 = vmatpush1.bf16.msra.mxu0 %v5009
  %5205 = vmatprep.subr.bf16.mxu0 %v5023
  %5206 = vmatpush1.bf16.msra.mxu0 %v5022
  %5207 = vmatprep.subr.bf16.mxu0 0
  %5208 = vmatpush1.bf16.msra.mxu0 0
  %5209 = vmatprep.subr.bf16.mxu0 0
  %5210 = vmatpush1.bf16.msra.mxu0 0
  %5211 = vmatprep.subr.bf16.mxu0 0
  %5212 = vmatpush1.bf16.msra.mxu0 0
  %5213 = vmatprep.subr.bf16.mxu0 0
  %5214 = vmatpush1.bf16.msra.mxu0 0
  %5215 = vmatprep.subr.bf16.mxu0 0
  %5216 = vmatpush1.bf16.msra.mxu0 0
  %5217 = vmatprep.subr.bf16.mxu0 0
  %5218 = vmatpush1.bf16.msra.mxu0 0
  %5219 = vmatprep.subr.bf16.mxu0 0
  %5220 = vmatpush1.bf16.msra.mxu0 0
  %5221 = vmatprep.subr.bf16.mxu0 0
  %5222 = vmatpush1.bf16.msra.mxu0 0
  %5223 = vmatprep.subr.bf16.mxu0 0
  %5224 = vmatpush1.bf16.msra.mxu0 0
  %5225 = vmatprep.subr.bf16.mxu0 0
  %5226 = vmatpush1.bf16.msra.mxu0 0
  %5227 = vmatprep.mubr.bf16.mxu0 0
  %5228 = vmatmul.mubr.bf16.gmra.mrb[0].mxu0 %v789
  %v5229 = vpop.f32.mrb[0].mxu0
  %v5230 = vadd.f32 0.0, %v5229
  %v5231 = vpop.f32.mrb[0].mxu0
  %v5232 = vadd.f32 0.0, %v5231
  %v5233 = vpop.f32.mrb[0].mxu0
  %v5234 = vadd.f32 0.0, %v5233
  %v5235 = vpop.f32.mrb[0].mxu0
  %v5236 = vadd.f32 0.0, %v5235
  %5237 = vdwg.mxu0
  %5238 = vmatprep.subr.bf16.mxu0 %v4960
  %5239 = vmatpush1.bf16.msra.mxu0 %v4959
  %5240 = vmatprep.subr.bf16.mxu0 %v4973
  %5241 = vmatpush1.bf16.msra.mxu0 %v4972
  %5242 = vmatprep.subr.bf16.mxu0 %v4986
  %5243 = vmatpush1.bf16.msra.mxu0 %v4985
  %5244 = vmatprep.subr.bf16.mxu0 %v4999
  %5245 = vmatpush1.bf16.msra.mxu0 %v4998
  %5246 = vmatprep.subr.bf16.mxu0 %v5012
  %5247 = vmatpush1.bf16.msra.mxu0 %v5011
  %5248 = vmatprep.subr.bf16.mxu0 %v5025
  %5249 = vmatpush1.bf16.msra.mxu0 %v5024
  %5250 = vmatprep.subr.bf16.mxu0 0
  %5251 = vmatpush1.bf16.msra.mxu0 0
  %5252 = vmatprep.subr.bf16.mxu0 0
  %5253 = vmatpush1.bf16.msra.mxu0 0
  %5254 = vmatprep.subr.bf16.mxu0 0
  %5255 = vmatpush1.bf16.msra.mxu0 0
  %5256 = vmatprep.subr.bf16.mxu0 0
  %5257 = vmatpush1.bf16.msra.mxu0 0
  %5258 = vmatprep.subr.bf16.mxu0 0
  %5259 = vmatpush1.bf16.msra.mxu0 0
  %5260 = vmatprep.subr.bf16.mxu0 0
  %5261 = vmatpush1.bf16.msra.mxu0 0
  %5262 = vmatprep.subr.bf16.mxu0 0
  %5263 = vmatpush1.bf16.msra.mxu0 0
  %5264 = vmatprep.subr.bf16.mxu0 0
  %5265 = vmatpush1.bf16.msra.mxu0 0
  %5266 = vmatprep.subr.bf16.mxu0 0
  %5267 = vmatpush1.bf16.msra.mxu0 0
  %5268 = vmatprep.subr.bf16.mxu0 0
  %5269 = vmatpush1.bf16.msra.mxu0 0
  %5270 = vmatprep.mubr.bf16.mxu0 0
  %5271 = vmatmul.mubr.bf16.gmra.mrb[0].mxu0 %v789
  %v5272 = vpop.f32.mrb[0].mxu0
  %v5273 = vadd.f32 0.0, %v5272
  %v5274 = vpop.f32.mrb[0].mxu0
  %v5275 = vadd.f32 0.0, %v5274
  %v5276 = vpop.f32.mrb[0].mxu0
  %v5277 = vadd.f32 0.0, %v5276
  %v5278 = vpop.f32.mrb[0].mxu0
  %v5279 = vadd.f32 0.0, %v5278
  %5280 = vdwg.mxu0
  %5281 = vmatprep.subr.bf16.mxu0 %v4962
  %5282 = vmatpush1.bf16.msra.mxu0 %v4961
  %5283 = vmatprep.subr.bf16.mxu0 %v4975
  %5284 = vmatpush1.bf16.msra.mxu0 %v4974
  %5285 = vmatprep.subr.bf16.mxu0 %v4988
  %5286 = vmatpush1.bf16.msra.mxu0 %v4987
  %5287 = vmatprep.subr.bf16.mxu0 %v5001
  %5288 = vmatpush1.bf16.msra.mxu0 %v5000
  %5289 = vmatprep.subr.bf16.mxu0 %v5014
  %5290 = vmatpush1.bf16.msra.mxu0 %v5013
  %5291 = vmatprep.subr.bf16.mxu0 %v5027
  %5292 = vmatpush1.bf16.msra.mxu0 %v5026
  %5293 = vmatprep.subr.bf16.mxu0 0
  %5294 = vmatpush1.bf16.msra.mxu0 0
  %5295 = vmatprep.subr.bf16.mxu0 0
  %5296 = vmatpush1.bf16.msra.mxu0 0
  %5297 = vmatprep.subr.bf16.mxu0 0
  %5298 = vmatpush1.bf16.msra.mxu0 0
  %5299 = vmatprep.subr.bf16.mxu0 0
  %5300 = vmatpush1.bf16.msra.mxu0 0
  %5301 = vmatprep.subr.bf16.mxu0 0
  %5302 = vmatpush1.bf16.msra.mxu0 0
  %5303 = vmatprep.subr.bf16.mxu0 0
  %5304 = vmatpush1.bf16.msra.mxu0 0
  %5305 = vmatprep.subr.bf16.mxu0 0
  %5306 = vmatpush1.bf16.msra.mxu0 0
  %5307 = vmatprep.subr.bf16.mxu0 0
  %5308 = vmatpush1.bf16.msra.mxu0 0
  %5309 = vmatprep.subr.bf16.mxu0 0
  %5310 = vmatpush1.bf16.msra.mxu0 0
  %5311 = vmatprep.subr.bf16.mxu0 0
  %5312 = vmatpush1.bf16.msra.mxu0 0
  %5313 = vmatprep.mubr.bf16.mxu0 0
  %5314 = vmatmul.mubr.bf16.gmra.mrb[0].mxu0 %v789
  %v5315 = vpop.f32.mrb[0].mxu0
  %v5316 = vadd.f32 0.0, %v5315
  %v5317 = vpop.f32.mrb[0].mxu0
  %v5318 = vadd.f32 0.0, %v5317
  %v5319 = vpop.f32.mrb[0].mxu0
  %v5320 = vadd.f32 0.0, %v5319
  %v5321 = vpop.f32.mrb[0].mxu0
  %v5322 = vadd.f32 0.0, %v5321
  %5323 = vdwg.mxu0
  %5324 = vmatprep.subr.bf16.mxu0 %v4964
  %5325 = vmatpush1.bf16.msra.mxu0 %v4963
  %5326 = vmatprep.subr.bf16.mxu0 %v4977
  %5327 = vmatpush1.bf16.msra.mxu0 %v4976
  %5328 = vmatprep.subr.bf16.mxu0 %v4990
  %5329 = vmatpush1.bf16.msra.mxu0 %v4989
  %5330 = vmatprep.subr.bf16.mxu0 %v5003
  %5331 = vmatpush1.bf16.msra.mxu0 %v5002
  %5332 = vmatprep.subr.bf16.mxu0 %v5016
  %5333 = vmatpush1.bf16.msra.mxu0 %v5015
  %5334 = vmatprep.subr.bf16.mxu0 %v5029
  %5335 = vmatpush1.bf16.msra.mxu0 %v5028
  %5336 = vmatprep.subr.bf16.mxu0 0
  %5337 = vmatpush1.bf16.msra.mxu0 0
  %5338 = vmatprep.subr.bf16.mxu0 0
  %5339 = vmatpush1.bf16.msra.mxu0 0
  %5340 = vmatprep.subr.bf16.mxu0 0
  %5341 = vmatpush1.bf16.msra.mxu0 0
  %5342 = vmatprep.subr.bf16.mxu0 0
  %5343 = vmatpush1.bf16.msra.mxu0 0
  %5344 = vmatprep.subr.bf16.mxu0 0
  %5345 = vmatpush1.bf16.msra.mxu0 0
  %5346 = vmatprep.subr.bf16.mxu0 0
  %5347 = vmatpush1.bf16.msra.mxu0 0
  %5348 = vmatprep.subr.bf16.mxu0 0
  %5349 = vmatpush1.bf16.msra.mxu0 0
  %5350 = vmatprep.subr.bf16.mxu0 0
  %5351 = vmatpush1.bf16.msra.mxu0 0
  %5352 = vmatprep.subr.bf16.mxu0 0
  %5353 = vmatpush1.bf16.msra.mxu0 0
  %5354 = vmatprep.subr.bf16.mxu0 0
  %5355 = vmatpush1.bf16.msra.mxu0 0
  %5356 = vmatprep.mubr.bf16.mxu0 0
  %5357 = vmatmul.mubr.bf16.gmra.mrb[0].mxu0 %v789
  %v5358 = vpop.f32.mrb[0].mxu0
  %v5359 = vadd.f32 0.0, %v5358
  %v5360 = vpop.f32.mrb[0].mxu0
  %v5361 = vadd.f32 0.0, %v5360
  %v5362 = vpop.f32.mrb[0].mxu0
  %v5363 = vadd.f32 0.0, %v5362
  %v5364 = vpop.f32.mrb[0].mxu0
  %v5365 = vadd.f32 0.0, %v5364
  %5366 = vdwg.mxu0
  %5367 = vmatprep.subr.bf16.mxu0 0
  %5368 = vmatpush1.bf16.msra.mxu0 %v4965
  %5369 = vmatprep.subr.bf16.mxu0 0
  %5370 = vmatpush1.bf16.msra.mxu0 %v4978
  %5371 = vmatprep.subr.bf16.mxu0 0
  %5372 = vmatpush1.bf16.msra.mxu0 %v4991
  %5373 = vmatprep.subr.bf16.mxu0 0
  %5374 = vmatpush1.bf16.msra.mxu0 %v5004
  %5375 = vmatprep.subr.bf16.mxu0 0
  %5376 = vmatpush1.bf16.msra.mxu0 %v5017
  %5377 = vmatprep.subr.bf16.mxu0 0
  %5378 = vmatpush1.bf16.msra.mxu0 %v5030
  %5379 = vmatprep.subr.bf16.mxu0 0
  %5380 = vmatpush1.bf16.msra.mxu0 0
  %5381 = vmatprep.subr.bf16.mxu0 0
  %5382 = vmatpush1.bf16.msra.mxu0 0
  %5383 = vmatprep.subr.bf16.mxu0 0
  %5384 = vmatpush1.bf16.msra.mxu0 0
  %5385 = vmatprep.subr.bf16.mxu0 0
  %5386 = vmatpush1.bf16.msra.mxu0 0
  %5387 = vmatprep.subr.bf16.mxu0 0
  %5388 = vmatpush1.bf16.msra.mxu0 0
  %5389 = vmatprep.subr.bf16.mxu0 0
  %5390 = vmatpush1.bf16.msra.mxu0 0
  %5391 = vmatprep.subr.bf16.mxu0 0
  %5392 = vmatpush1.bf16.msra.mxu0 0
  %5393 = vmatprep.subr.bf16.mxu0 0
  %5394 = vmatpush1.bf16.msra.mxu0 0
  %5395 = vmatprep.subr.bf16.mxu0 0
  %5396 = vmatpush1.bf16.msra.mxu0 0
  %5397 = vmatprep.subr.bf16.mxu0 0
  %5398 = vmatpush1.bf16.msra.mxu0 0
  %5399 = vmatprep.mubr.bf16.mxu0 0
  %5400 = vmatmul.mubr.bf16.gmra.mrb[0].mxu0 %v789
  %v5401 = vpop.f32.mrb[0].mxu0
  %v5402 = vadd.f32 0.0, %v5401
  %v5403 = vpop.f32.mrb[0].mxu0
  %v5404 = vpop.f32.mrb[0].mxu0
  %v5405 = vadd.f32 0.0, %v5404
  %v5406 = vpop.f32.mrb[0].mxu0
  %5407 = vdwg.mxu0
  %v5420 = vunpack.c.l.b16 %v4359
  %v5421 = vunpack.c.l.b16 %v4366
  %v5422 = vunpack.c.l.b16 %v4373
  %v5423 = vunpack.c.l.b16 %v4380
  %v5424 = vunpack.c.l.b16 %v4387
  %v5425 = vunpack.c.l.b16 %v4394
  %v5426 = vunpack.c.l.b16 %v4401
  %v5427 = vunpack.c.l.b16 %v4408
  %v5428 = vunpack.c.l.b16 %v4415
  %v5429 = vunpack.c.l.b16 %v4422
  %v5430 = vunpack.c.l.b16 %v4429
  %v5431 = vunpack.c.l.b16 %v4436
  %v5432 = vpack.c.b16 %v5421, %v5420
  %v5433 = vpack.c.b16 %v5423, %v5422
  %v5434 = vpack.c.b16 %v5425, %v5424
  %v5435 = vpack.c.b16 %v5427, %v5426
  %v5436 = vpack.c.b16 %v5429, %v5428
  %v5437 = vpack.c.b16 %v5431, %v5430
  %5516 = vmatprep.subr.bf16.mxu0 %v4702
  %5517 = vmatpush1.bf16.msra.mxu0 %v4701
  %5518 = vmatprep.subr.bf16.mxu0 %v4716
  %5519 = vmatpush1.bf16.msra.mxu0 %v4715
  %5520 = vmatprep.subr.bf16.mxu0 %v4730
  %5521 = vmatpush1.bf16.msra.mxu0 %v4729
  %5522 = vmatprep.subr.bf16.mxu0 %v4744
  %5523 = vmatpush1.bf16.msra.mxu0 %v4743
  %5524 = vmatprep.subr.bf16.mxu0 %v4758
  %5525 = vmatpush1.bf16.msra.mxu0 %v4757
  %5526 = vmatprep.subr.bf16.mxu0 %v4772
  %5527 = vmatpush1.bf16.msra.mxu0 %v4771
  %5528 = vmatprep.subr.bf16.mxu0 0
  %5529 = vmatpush1.bf16.msra.mxu0 0
  %5530 = vmatprep.subr.bf16.mxu0 0
  %5531 = vmatpush1.bf16.msra.mxu0 0
  %5532 = vmatprep.subr.bf16.mxu0 0
  %5533 = vmatpush1.bf16.msra.mxu0 0
  %5534 = vmatprep.subr.bf16.mxu0 0
  %5535 = vmatpush1.bf16.msra.mxu0 0
  %5536 = vmatprep.subr.bf16.mxu0 0
  %5537 = vmatpush1.bf16.msra.mxu0 0
  %5538 = vmatprep.subr.bf16.mxu0 0
  %5539 = vmatpush1.bf16.msra.mxu0 0
  %5540 = vmatprep.subr.bf16.mxu0 0
  %5541 = vmatpush1.bf16.msra.mxu0 0
  %5542 = vmatprep.subr.bf16.mxu0 0
  %5543 = vmatpush1.bf16.msra.mxu0 0
  %5544 = vmatprep.subr.bf16.mxu0 0
  %5545 = vmatpush1.bf16.msra.mxu0 0
  %5546 = vmatprep.subr.bf16.mxu0 0
  %5547 = vmatpush1.bf16.msra.mxu0 0
  %5548 = vmatprep.mubr.bf16.mxu0 0
  %5549 = vmatmul.mubr.bf16.gmra.mrb[0].mxu0 %v1204
  %v5550 = vpop.f32.mrb[0].mxu0
  %v5551 = vadd.f32 %v5144, %v5550
  %v5552 = vpop.f32.mrb[0].mxu0
  %v5553 = vadd.f32 %v5146, %v5552
  %v5554 = vpop.f32.mrb[0].mxu0
  %v5555 = vadd.f32 %v5148, %v5554
  %v5556 = vpop.f32.mrb[0].mxu0
  %v5557 = vadd.f32 %v5150, %v5556
  %5558 = vdwg.mxu0
  %5559 = vmatprep.subr.bf16.mxu0 %v4704
  %5560 = vmatpush1.bf16.msra.mxu0 %v4703
  %5561 = vmatprep.subr.bf16.mxu0 %v4718
  %5562 = vmatpush1.bf16.msra.mxu0 %v4717
  %5563 = vmatprep.subr.bf16.mxu0 %v4732
  %5564 = vmatpush1.bf16.msra.mxu0 %v4731
  %5565 = vmatprep.subr.bf16.mxu0 %v4746
  %5566 = vmatpush1.bf16.msra.mxu0 %v4745
  %5567 = vmatprep.subr.bf16.mxu0 %v4760
  %5568 = vmatpush1.bf16.msra.mxu0 %v4759
  %5569 = vmatprep.subr.bf16.mxu0 %v4774
  %5570 = vmatpush1.bf16.msra.mxu0 %v4773
  %5571 = vmatprep.subr.bf16.mxu0 0
  %5572 = vmatpush1.bf16.msra.mxu0 0
  %5573 = vmatprep.subr.bf16.mxu0 0
  %5574 = vmatpush1.bf16.msra.mxu0 0
  %5575 = vmatprep.subr.bf16.mxu0 0
  %5576 = vmatpush1.bf16.msra.mxu0 0
  %5577 = vmatprep.subr.bf16.mxu0 0
  %5578 = vmatpush1.bf16.msra.mxu0 0
  %5579 = vmatprep.subr.bf16.mxu0 0
  %5580 = vmatpush1.bf16.msra.mxu0 0
  %5581 = vmatprep.subr.bf16.mxu0 0
  %5582 = vmatpush1.bf16.msra.mxu0 0
  %5583 = vmatprep.subr.bf16.mxu0 0
  %5584 = vmatpush1.bf16.msra.mxu0 0
  %5585 = vmatprep.subr.bf16.mxu0 0
  %5586 = vmatpush1.bf16.msra.mxu0 0
  %5587 = vmatprep.subr.bf16.mxu0 0
  %5588 = vmatpush1.bf16.msra.mxu0 0
  %5589 = vmatprep.subr.bf16.mxu0 0
  %5590 = vmatpush1.bf16.msra.mxu0 0
  %5591 = vmatprep.mubr.bf16.mxu0 0
  %5592 = vmatmul.mubr.bf16.gmra.mrb[0].mxu0 %v1204
  %v5593 = vpop.f32.mrb[0].mxu0
  %v5594 = vadd.f32 %v5187, %v5593
  %v5595 = vpop.f32.mrb[0].mxu0
  %v5596 = vadd.f32 %v5189, %v5595
  %v5597 = vpop.f32.mrb[0].mxu0
  %v5598 = vadd.f32 %v5191, %v5597
  %v5599 = vpop.f32.mrb[0].mxu0
  %v5600 = vadd.f32 %v5193, %v5599
  %5601 = vdwg.mxu0
  %5602 = vmatprep.subr.bf16.mxu0 %v4706
  %5603 = vmatpush1.bf16.msra.mxu0 %v4705
  %5604 = vmatprep.subr.bf16.mxu0 %v4720
  %5605 = vmatpush1.bf16.msra.mxu0 %v4719
  %5606 = vmatprep.subr.bf16.mxu0 %v4734
  %5607 = vmatpush1.bf16.msra.mxu0 %v4733
  %5608 = vmatprep.subr.bf16.mxu0 %v4748
  %5609 = vmatpush1.bf16.msra.mxu0 %v4747
  %5610 = vmatprep.subr.bf16.mxu0 %v4762
  %5611 = vmatpush1.bf16.msra.mxu0 %v4761
  %5612 = vmatprep.subr.bf16.mxu0 %v4776
  %5613 = vmatpush1.bf16.msra.mxu0 %v4775
  %5614 = vmatprep.subr.bf16.mxu0 0
  %5615 = vmatpush1.bf16.msra.mxu0 0
  %5616 = vmatprep.subr.bf16.mxu0 0
  %5617 = vmatpush1.bf16.msra.mxu0 0
  %5618 = vmatprep.subr.bf16.mxu0 0
  %5619 = vmatpush1.bf16.msra.mxu0 0
  %5620 = vmatprep.subr.bf16.mxu0 0
  %5621 = vmatpush1.bf16.msra.mxu0 0
  %5622 = vmatprep.subr.bf16.mxu0 0
  %5623 = vmatpush1.bf16.msra.mxu0 0
  %5624 = vmatprep.subr.bf16.mxu0 0
  %5625 = vmatpush1.bf16.msra.mxu0 0
  %5626 = vmatprep.subr.bf16.mxu0 0
  %5627 = vmatpush1.bf16.msra.mxu0 0
  %5628 = vmatprep.subr.bf16.mxu0 0
  %5629 = vmatpush1.bf16.msra.mxu0 0
  %5630 = vmatprep.subr.bf16.mxu0 0
  %5631 = vmatpush1.bf16.msra.mxu0 0
  %5632 = vmatprep.subr.bf16.mxu0 0
  %5633 = vmatpush1.bf16.msra.mxu0 0
  %5634 = vmatprep.mubr.bf16.mxu0 0
  %5635 = vmatmul.mubr.bf16.gmra.mrb[0].mxu0 %v1204
  %v5636 = vpop.f32.mrb[0].mxu0
  %v5637 = vadd.f32 %v5230, %v5636
  %v5638 = vpop.f32.mrb[0].mxu0
  %v5639 = vadd.f32 %v5232, %v5638
  %v5640 = vpop.f32.mrb[0].mxu0
  %v5641 = vadd.f32 %v5234, %v5640
  %v5642 = vpop.f32.mrb[0].mxu0
  %v5643 = vadd.f32 %v5236, %v5642
  %5644 = vdwg.mxu0
  %5645 = vmatprep.subr.bf16.mxu0 %v4708
  %5646 = vmatpush1.bf16.msra.mxu0 %v4707
  %5647 = vmatprep.subr.bf16.mxu0 %v4722
  %5648 = vmatpush1.bf16.msra.mxu0 %v4721
  %5649 = vmatprep.subr.bf16.mxu0 %v4736
  %5650 = vmatpush1.bf16.msra.mxu0 %v4735
  %5651 = vmatprep.subr.bf16.mxu0 %v4750
  %5652 = vmatpush1.bf16.msra.mxu0 %v4749
  %5653 = vmatprep.subr.bf16.mxu0 %v4764
  %5654 = vmatpush1.bf16.msra.mxu0 %v4763
  %5655 = vmatprep.subr.bf16.mxu0 %v4778
  %5656 = vmatpush1.bf16.msra.mxu0 %v4777
  %5657 = vmatprep.subr.bf16.mxu0 0
  %5658 = vmatpush1.bf16.msra.mxu0 0
  %5659 = vmatprep.subr.bf16.mxu0 0
  %5660 = vmatpush1.bf16.msra.mxu0 0
  %5661 = vmatprep.subr.bf16.mxu0 0
  %5662 = vmatpush1.bf16.msra.mxu0 0
  %5663 = vmatprep.subr.bf16.mxu0 0
  %5664 = vmatpush1.bf16.msra.mxu0 0
  %5665 = vmatprep.subr.bf16.mxu0 0
  %5666 = vmatpush1.bf16.msra.mxu0 0
  %5667 = vmatprep.subr.bf16.mxu0 0
  %5668 = vmatpush1.bf16.msra.mxu0 0
  %5669 = vmatprep.subr.bf16.mxu0 0
  %5670 = vmatpush1.bf16.msra.mxu0 0
  %5671 = vmatprep.subr.bf16.mxu0 0
  %5672 = vmatpush1.bf16.msra.mxu0 0
  %5673 = vmatprep.subr.bf16.mxu0 0
  %5674 = vmatpush1.bf16.msra.mxu0 0
  %5675 = vmatprep.subr.bf16.mxu0 0
  %5676 = vmatpush1.bf16.msra.mxu0 0
  %5677 = vmatprep.mubr.bf16.mxu0 0
  %5678 = vmatmul.mubr.bf16.gmra.mrb[0].mxu0 %v1204
  %v5679 = vpop.f32.mrb[0].mxu0
  %v5680 = vadd.f32 %v5273, %v5679
  %v5681 = vpop.f32.mrb[0].mxu0
  %v5682 = vadd.f32 %v5275, %v5681
  %v5683 = vpop.f32.mrb[0].mxu0
  %v5684 = vadd.f32 %v5277, %v5683
  %v5685 = vpop.f32.mrb[0].mxu0
  %v5686 = vadd.f32 %v5279, %v5685
  %5687 = vdwg.mxu0
  %5688 = vmatprep.subr.bf16.mxu0 %v4710
  %5689 = vmatpush1.bf16.msra.mxu0 %v4709
  %5690 = vmatprep.subr.bf16.mxu0 %v4724
  %5691 = vmatpush1.bf16.msra.mxu0 %v4723
  %5692 = vmatprep.subr.bf16.mxu0 %v4738
  %5693 = vmatpush1.bf16.msra.mxu0 %v4737
  %5694 = vmatprep.subr.bf16.mxu0 %v4752
  %5695 = vmatpush1.bf16.msra.mxu0 %v4751
  %5696 = vmatprep.subr.bf16.mxu0 %v4766
  %5697 = vmatpush1.bf16.msra.mxu0 %v4765
  %5698 = vmatprep.subr.bf16.mxu0 %v4780
  %5699 = vmatpush1.bf16.msra.mxu0 %v4779
  %5700 = vmatprep.subr.bf16.mxu0 0
  %5701 = vmatpush1.bf16.msra.mxu0 0
  %5702 = vmatprep.subr.bf16.mxu0 0
  %5703 = vmatpush1.bf16.msra.mxu0 0
  %5704 = vmatprep.subr.bf16.mxu0 0
  %5705 = vmatpush1.bf16.msra.mxu0 0
  %5706 = vmatprep.subr.bf16.mxu0 0
  %5707 = vmatpush1.bf16.msra.mxu0 0
  %5708 = vmatprep.subr.bf16.mxu0 0
  %5709 = vmatpush1.bf16.msra.mxu0 0
  %5710 = vmatprep.subr.bf16.mxu0 0
  %5711 = vmatpush1.bf16.msra.mxu0 0
  %5712 = vmatprep.subr.bf16.mxu0 0
  %5713 = vmatpush1.bf16.msra.mxu0 0
  %5714 = vmatprep.subr.bf16.mxu0 0
  %5715 = vmatpush1.bf16.msra.mxu0 0
  %5716 = vmatprep.subr.bf16.mxu0 0
  %5717 = vmatpush1.bf16.msra.mxu0 0
  %5718 = vmatprep.subr.bf16.mxu0 0
  %5719 = vmatpush1.bf16.msra.mxu0 0
  %5720 = vmatprep.mubr.bf16.mxu0 0
  %5721 = vmatmul.mubr.bf16.gmra.mrb[0].mxu0 %v1204
  %v5722 = vpop.f32.mrb[0].mxu0
  %v5723 = vadd.f32 %v5316, %v5722
  %v5724 = vpop.f32.mrb[0].mxu0
  %v5725 = vadd.f32 %v5318, %v5724
  %v5726 = vpop.f32.mrb[0].mxu0
  %v5727 = vadd.f32 %v5320, %v5726
  %v5728 = vpop.f32.mrb[0].mxu0
  %v5729 = vadd.f32 %v5322, %v5728
  %5730 = vdwg.mxu0
  %5731 = vmatprep.subr.bf16.mxu0 %v4712
  %5732 = vmatpush1.bf16.msra.mxu0 %v4711
  %5733 = vmatprep.subr.bf16.mxu0 %v4726
  %5734 = vmatpush1.bf16.msra.mxu0 %v4725
  %5735 = vmatprep.subr.bf16.mxu0 %v4740
  %5736 = vmatpush1.bf16.msra.mxu0 %v4739
  %5737 = vmatprep.subr.bf16.mxu0 %v4754
  %5738 = vmatpush1.bf16.msra.mxu0 %v4753
  %5739 = vmatprep.subr.bf16.mxu0 %v4768
  %5740 = vmatpush1.bf16.msra.mxu0 %v4767
  %5741 = vmatprep.subr.bf16.mxu0 %v4782
  %5742 = vmatpush1.bf16.msra.mxu0 %v4781
  %5743 = vmatprep.subr.bf16.mxu0 0
  %5744 = vmatpush1.bf16.msra.mxu0 0
  %5745 = vmatprep.subr.bf16.mxu0 0
  %5746 = vmatpush1.bf16.msra.mxu0 0
  %5747 = vmatprep.subr.bf16.mxu0 0
  %5748 = vmatpush1.bf16.msra.mxu0 0
  %5749 = vmatprep.subr.bf16.mxu0 0
  %5750 = vmatpush1.bf16.msra.mxu0 0
  %5751 = vmatprep.subr.bf16.mxu0 0
  %5752 = vmatpush1.bf16.msra.mxu0 0
  %5753 = vmatprep.subr.bf16.mxu0 0
  %5754 = vmatpush1.bf16.msra.mxu0 0
  %5755 = vmatprep.subr.bf16.mxu0 0
  %5756 = vmatpush1.bf16.msra.mxu0 0
  %5757 = vmatprep.subr.bf16.mxu0 0
  %5758 = vmatpush1.bf16.msra.mxu0 0
  %5759 = vmatprep.subr.bf16.mxu0 0
  %5760 = vmatpush1.bf16.msra.mxu0 0
  %5761 = vmatprep.subr.bf16.mxu0 0
  %5762 = vmatpush1.bf16.msra.mxu0 0
  %5763 = vmatprep.mubr.bf16.mxu0 0
  %5764 = vmatmul.mubr.bf16.gmra.mrb[0].mxu0 %v1204
  %v5765 = vpop.f32.mrb[0].mxu0
  %v5766 = vadd.f32 %v5359, %v5765
  %v5767 = vpop.f32.mrb[0].mxu0
  %v5768 = vadd.f32 %v5361, %v5767
  %v5769 = vpop.f32.mrb[0].mxu0
  %v5770 = vadd.f32 %v5363, %v5769
  %v5771 = vpop.f32.mrb[0].mxu0
  %v5772 = vadd.f32 %v5365, %v5771
  %5773 = vdwg.mxu0
  %5774 = vmatprep.subr.bf16.mxu0 0
  %5775 = vmatpush1.bf16.msra.mxu0 %v5432
  %5776 = vmatprep.subr.bf16.mxu0 0
  %5777 = vmatpush1.bf16.msra.mxu0 %v5433
  %5778 = vmatprep.subr.bf16.mxu0 0
  %5779 = vmatpush1.bf16.msra.mxu0 %v5434
  %5780 = vmatprep.subr.bf16.mxu0 0
  %5781 = vmatpush1.bf16.msra.mxu0 %v5435
  %5782 = vmatprep.subr.bf16.mxu0 0
  %5783 = vmatpush1.bf16.msra.mxu0 %v5436
  %5784 = vmatprep.subr.bf16.mxu0 0
  %5785 = vmatpush1.bf16.msra.mxu0 %v5437
  %5786 = vmatprep.subr.bf16.mxu0 0
  %5787 = vmatpush1.bf16.msra.mxu0 0
  %5788 = vmatprep.subr.bf16.mxu0 0
  %5789 = vmatpush1.bf16.msra.mxu0 0
  %5790 = vmatprep.subr.bf16.mxu0 0
  %5791 = vmatpush1.bf16.msra.mxu0 0
  %5792 = vmatprep.subr.bf16.mxu0 0
  %5793 = vmatpush1.bf16.msra.mxu0 0
  %5794 = vmatprep.subr.bf16.mxu0 0
  %5795 = vmatpush1.bf16.msra.mxu0 0
  %5796 = vmatprep.subr.bf16.mxu0 0
  %5797 = vmatpush1.bf16.msra.mxu0 0
  %5798 = vmatprep.subr.bf16.mxu0 0
  %5799 = vmatpush1.bf16.msra.mxu0 0
  %5800 = vmatprep.subr.bf16.mxu0 0
  %5801 = vmatpush1.bf16.msra.mxu0 0
  %5802 = vmatprep.subr.bf16.mxu0 0
  %5803 = vmatpush1.bf16.msra.mxu0 0
  %5804 = vmatprep.subr.bf16.mxu0 0
  %5805 = vmatpush1.bf16.msra.mxu0 0
  %5806 = vmatprep.mubr.bf16.mxu0 0
  %5807 = vmatmul.mubr.bf16.gmra.mrb[0].mxu0 %v1204
  %v5808 = vpop.f32.mrb[0].mxu0
  %v5809 = vadd.f32 %v5402, %v5808
  %v5810 = vpop.f32.mrb[0].mxu0
  %v5811 = vpop.f32.mrb[0].mxu0
  %v5812 = vadd.f32 %v5405, %v5811
  %v5813 = vpop.f32.mrb[0].mxu0
  %5814 = vdwg.mxu0
  %5815 = vrot.lane.b32.xlu0 %v4701, 58
  %v5816 = vpop.permute.xlu0 %5815
  %5817 = vrot.lane.b32.xlu0 %v4702, 58
  %v5818 = vpop.permute.xlu0 %5817
  %5819 = vrot.lane.b32.xlu0 %v4703, 58
  %v5820 = vpop.permute.xlu0 %5819
  %5821 = vrot.lane.b32.xlu0 %v4704, 58
  %v5822 = vpop.permute.xlu0 %5821
  %5823 = vrot.lane.b32.xlu0 %v4705, 58
  %v5824 = vpop.permute.xlu0 %5823
  %5825 = vrot.lane.b32.xlu0 %v4706, 58
  %v5826 = vpop.permute.xlu0 %5825
  %5827 = vrot.lane.b32.xlu0 %v4707, 58
  %v5828 = vpop.permute.xlu0 %5827
  %5829 = vrot.lane.b32.xlu0 %v4708, 58
  %v5830 = vpop.permute.xlu0 %5829
  %5831 = vrot.lane.b32.xlu0 %v4709, 58
  %v5832 = vpop.permute.xlu0 %5831
  %5833 = vrot.lane.b32.xlu0 %v4710, 58
  %v5834 = vpop.permute.xlu0 %5833
  %5835 = vrot.lane.b32.xlu0 %v4711, 58
  %v5836 = vpop.permute.xlu0 %5835
  %5837 = vrot.lane.b32.xlu0 %v4712, 58
  %v5838 = vpop.permute.xlu0 %5837
  %5839 = vrot.lane.b32.xlu0 %v4713, 58
  %v5840 = vpop.permute.xlu0 %5839
  %5841 = vrot.lane.b32.xlu0 %v4714, 58
  %v5842 = vpop.permute.xlu0 %5841
  %5843 = vrot.lane.b32.xlu0 %v4715, 58
  %v5844 = vpop.permute.xlu0 %5843
  %5845 = vrot.lane.b32.xlu0 %v4716, 58
  %v5846 = vpop.permute.xlu0 %5845
  %5847 = vrot.lane.b32.xlu0 %v4717, 58
  %v5848 = vpop.permute.xlu0 %5847
  %5849 = vrot.lane.b32.xlu0 %v4718, 58
  %v5850 = vpop.permute.xlu0 %5849
  %5851 = vrot.lane.b32.xlu0 %v4719, 58
  %v5852 = vpop.permute.xlu0 %5851
  %5853 = vrot.lane.b32.xlu0 %v4720, 58
  %v5854 = vpop.permute.xlu0 %5853
  %5855 = vrot.lane.b32.xlu0 %v4721, 58
  %v5856 = vpop.permute.xlu0 %5855
  %5857 = vrot.lane.b32.xlu0 %v4722, 58
  %v5858 = vpop.permute.xlu0 %5857
  %5859 = vrot.lane.b32.xlu0 %v4723, 58
  %v5860 = vpop.permute.xlu0 %5859
  %5861 = vrot.lane.b32.xlu0 %v4724, 58
  %v5862 = vpop.permute.xlu0 %5861
  %5863 = vrot.lane.b32.xlu0 %v4725, 58
  %v5864 = vpop.permute.xlu0 %5863
  %5865 = vrot.lane.b32.xlu0 %v4726, 58
  %v5866 = vpop.permute.xlu0 %5865
  %5867 = vrot.lane.b32.xlu0 %v4727, 58
  %v5868 = vpop.permute.xlu0 %5867
  %5869 = vrot.lane.b32.xlu0 %v4728, 58
  %v5870 = vpop.permute.xlu0 %5869
  %5871 = vrot.lane.b32.xlu0 %v4729, 58
  %v5872 = vpop.permute.xlu0 %5871
  %5873 = vrot.lane.b32.xlu0 %v4730, 58
  %v5874 = vpop.permute.xlu0 %5873
  %5875 = vrot.lane.b32.xlu0 %v4731, 58
  %v5876 = vpop.permute.xlu0 %5875
  %5877 = vrot.lane.b32.xlu0 %v4732, 58
  %v5878 = vpop.permute.xlu0 %5877
  %5879 = vrot.lane.b32.xlu0 %v4733, 58
  %v5880 = vpop.permute.xlu0 %5879
  %5881 = vrot.lane.b32.xlu0 %v4734, 58
  %v5882 = vpop.permute.xlu0 %5881
  %5883 = vrot.lane.b32.xlu0 %v4735, 58
  %v5884 = vpop.permute.xlu0 %5883
  %5885 = vrot.lane.b32.xlu0 %v4736, 58
  %v5886 = vpop.permute.xlu0 %5885
  %5887 = vrot.lane.b32.xlu0 %v4737, 58
  %v5888 = vpop.permute.xlu0 %5887
  %5889 = vrot.lane.b32.xlu0 %v4738, 58
  %v5890 = vpop.permute.xlu0 %5889
  %5891 = vrot.lane.b32.xlu0 %v4739, 58
  %v5892 = vpop.permute.xlu0 %5891
  %5893 = vrot.lane.b32.xlu0 %v4740, 58
  %v5894 = vpop.permute.xlu0 %5893
  %5895 = vrot.lane.b32.xlu0 %v4741, 58
  %v5896 = vpop.permute.xlu0 %5895
  %5897 = vrot.lane.b32.xlu0 %v4742, 58
  %v5898 = vpop.permute.xlu0 %5897
  %5899 = vrot.lane.b32.xlu0 %v4743, 58
  %v5900 = vpop.permute.xlu0 %5899
  %5901 = vrot.lane.b32.xlu0 %v4744, 58
  %v5902 = vpop.permute.xlu0 %5901
  %5903 = vrot.lane.b32.xlu0 %v4745, 58
  %v5904 = vpop.permute.xlu0 %5903
  %5905 = vrot.lane.b32.xlu0 %v4746, 58
  %v5906 = vpop.permute.xlu0 %5905
  %5907 = vrot.lane.b32.xlu0 %v4747, 58
  %v5908 = vpop.permute.xlu0 %5907
  %5909 = vrot.lane.b32.xlu0 %v4748, 58
  %v5910 = vpop.permute.xlu0 %5909
  %5911 = vrot.lane.b32.xlu0 %v4749, 58
  %v5912 = vpop.permute.xlu0 %5911
  %5913 = vrot.lane.b32.xlu0 %v4750, 58
  %v5914 = vpop.permute.xlu0 %5913
  %5915 = vrot.lane.b32.xlu0 %v4751, 58
  %v5916 = vpop.permute.xlu0 %5915
  %5917 = vrot.lane.b32.xlu0 %v4752, 58
  %v5918 = vpop.permute.xlu0 %5917
  %5919 = vrot.lane.b32.xlu0 %v4753, 58
  %v5920 = vpop.permute.xlu0 %5919
  %5921 = vrot.lane.b32.xlu0 %v4754, 58
  %v5922 = vpop.permute.xlu0 %5921
  %5923 = vrot.lane.b32.xlu0 %v4755, 58
  %v5924 = vpop.permute.xlu0 %5923
  %5925 = vrot.lane.b32.xlu0 %v4756, 58
  %v5926 = vpop.permute.xlu0 %5925
  %5927 = vrot.lane.b32.xlu0 %v4757, 58
  %v5928 = vpop.permute.xlu0 %5927
  %5929 = vrot.lane.b32.xlu0 %v4758, 58
  %v5930 = vpop.permute.xlu0 %5929
  %5931 = vrot.lane.b32.xlu0 %v4759, 58
  %v5932 = vpop.permute.xlu0 %5931
  %5933 = vrot.lane.b32.xlu0 %v4760, 58
  %v5934 = vpop.permute.xlu0 %5933
  %5935 = vrot.lane.b32.xlu0 %v4761, 58
  %v5936 = vpop.permute.xlu0 %5935
  %5937 = vrot.lane.b32.xlu0 %v4762, 58
  %v5938 = vpop.permute.xlu0 %5937
  %5939 = vrot.lane.b32.xlu0 %v4763, 58
  %v5940 = vpop.permute.xlu0 %5939
  %5941 = vrot.lane.b32.xlu0 %v4764, 58
  %v5942 = vpop.permute.xlu0 %5941
  %5943 = vrot.lane.b32.xlu0 %v4765, 58
  %v5944 = vpop.permute.xlu0 %5943
  %5945 = vrot.lane.b32.xlu0 %v4766, 58
  %v5946 = vpop.permute.xlu0 %5945
  %5947 = vrot.lane.b32.xlu0 %v4767, 58
  %v5948 = vpop.permute.xlu0 %5947
  %5949 = vrot.lane.b32.xlu0 %v4768, 58
  %v5950 = vpop.permute.xlu0 %5949
  %5951 = vrot.lane.b32.xlu0 %v4769, 58
  %v5952 = vpop.permute.xlu0 %5951
  %5953 = vrot.lane.b32.xlu0 %v4770, 58
  %v5954 = vpop.permute.xlu0 %5953
  %5955 = vrot.lane.b32.xlu0 %v4771, 58
  %v5956 = vpop.permute.xlu0 %5955
  %5957 = vrot.lane.b32.xlu0 %v4772, 58
  %v5958 = vpop.permute.xlu0 %5957
  %5959 = vrot.lane.b32.xlu0 %v4773, 58
  %v5960 = vpop.permute.xlu0 %5959
  %5961 = vrot.lane.b32.xlu0 %v4774, 58
  %v5962 = vpop.permute.xlu0 %5961
  %5963 = vrot.lane.b32.xlu0 %v4775, 58
  %v5964 = vpop.permute.xlu0 %5963
  %5965 = vrot.lane.b32.xlu0 %v4776, 58
  %v5966 = vpop.permute.xlu0 %5965
  %5967 = vrot.lane.b32.xlu0 %v4777, 58
  %v5968 = vpop.permute.xlu0 %5967
  %5969 = vrot.lane.b32.xlu0 %v4778, 58
  %v5970 = vpop.permute.xlu0 %5969
  %5971 = vrot.lane.b32.xlu0 %v4779, 58
  %v5972 = vpop.permute.xlu0 %5971
  %5973 = vrot.lane.b32.xlu0 %v4780, 58
  %v5974 = vpop.permute.xlu0 %5973
  %5975 = vrot.lane.b32.xlu0 %v4781, 58
  %v5976 = vpop.permute.xlu0 %5975
  %5977 = vrot.lane.b32.xlu0 %v4782, 58
  %v5978 = vpop.permute.xlu0 %5977
  %5979 = vrot.lane.b32.xlu0 %v4783, 58
  %v5980 = vpop.permute.xlu0 %5979
  %5981 = vrot.lane.b32.xlu0 %v4784, 58
  %v5982 = vpop.permute.xlu0 %5981
  %v5983 = vsel %vm1681, %v5816, %v5818
  %v5984 = vsel %vm1681, %v5818, %v5820
  %v5985 = vsel %vm1681, %v5820, %v5822
  %v5986 = vsel %vm1681, %v5822, %v5824
  %v5987 = vsel %vm1681, %v5824, %v5826
  %v5988 = vsel %vm1681, %v5826, %v5828
  %v5989 = vsel %vm1681, %v5828, %v5830
  %v5990 = vsel %vm1681, %v5830, %v5832
  %v5991 = vsel %vm1681, %v5832, %v5834
  %v5992 = vsel %vm1681, %v5834, %v5836
  %v5993 = vsel %vm1681, %v5836, %v5838
  %v5994 = vsel %vm1681, %v5838, %v5840
  %v5995 = vsel %vm1681, %v5840, %v5842
  %v5996 = vsel %vm1681, %v5844, %v5846
  %v5997 = vsel %vm1681, %v5846, %v5848
  %v5998 = vsel %vm1681, %v5848, %v5850
  %v5999 = vsel %vm1681, %v5850, %v5852
  %v6000 = vsel %vm1681, %v5852, %v5854
  %v6001 = vsel %vm1681, %v5854, %v5856
  %v6002 = vsel %vm1681, %v5856, %v5858
  %v6003 = vsel %vm1681, %v5858, %v5860
  %v6004 = vsel %vm1681, %v5860, %v5862
  %v6005 = vsel %vm1681, %v5862, %v5864
  %v6006 = vsel %vm1681, %v5864, %v5866
  %v6007 = vsel %vm1681, %v5866, %v5868
  %v6008 = vsel %vm1681, %v5868, %v5870
  %v6009 = vsel %vm1681, %v5872, %v5874
  %v6010 = vsel %vm1681, %v5874, %v5876
  %v6011 = vsel %vm1681, %v5876, %v5878
  %v6012 = vsel %vm1681, %v5878, %v5880
  %v6013 = vsel %vm1681, %v5880, %v5882
  %v6014 = vsel %vm1681, %v5882, %v5884
  %v6015 = vsel %vm1681, %v5884, %v5886
  %v6016 = vsel %vm1681, %v5886, %v5888
  %v6017 = vsel %vm1681, %v5888, %v5890
  %v6018 = vsel %vm1681, %v5890, %v5892
  %v6019 = vsel %vm1681, %v5892, %v5894
  %v6020 = vsel %vm1681, %v5894, %v5896
  %v6021 = vsel %vm1681, %v5896, %v5898
  %v6022 = vsel %vm1681, %v5900, %v5902
  %v6023 = vsel %vm1681, %v5902, %v5904
  %v6024 = vsel %vm1681, %v5904, %v5906
  %v6025 = vsel %vm1681, %v5906, %v5908
  %v6026 = vsel %vm1681, %v5908, %v5910
  %v6027 = vsel %vm1681, %v5910, %v5912
  %v6028 = vsel %vm1681, %v5912, %v5914
  %v6029 = vsel %vm1681, %v5914, %v5916
  %v6030 = vsel %vm1681, %v5916, %v5918
  %v6031 = vsel %vm1681, %v5918, %v5920
  %v6032 = vsel %vm1681, %v5920, %v5922
  %v6033 = vsel %vm1681, %v5922, %v5924
  %v6034 = vsel %vm1681, %v5924, %v5926
  %v6035 = vsel %vm1681, %v5928, %v5930
  %v6036 = vsel %vm1681, %v5930, %v5932
  %v6037 = vsel %vm1681, %v5932, %v5934
  %v6038 = vsel %vm1681, %v5934, %v5936
  %v6039 = vsel %vm1681, %v5936, %v5938
  %v6040 = vsel %vm1681, %v5938, %v5940
  %v6041 = vsel %vm1681, %v5940, %v5942
  %v6042 = vsel %vm1681, %v5942, %v5944
  %v6043 = vsel %vm1681, %v5944, %v5946
  %v6044 = vsel %vm1681, %v5946, %v5948
  %v6045 = vsel %vm1681, %v5948, %v5950
  %v6046 = vsel %vm1681, %v5950, %v5952
  %v6047 = vsel %vm1681, %v5952, %v5954
  %v6048 = vsel %vm1681, %v5956, %v5958
  %v6049 = vsel %vm1681, %v5958, %v5960
  %v6050 = vsel %vm1681, %v5960, %v5962
  %v6051 = vsel %vm1681, %v5962, %v5964
  %v6052 = vsel %vm1681, %v5964, %v5966
  %v6053 = vsel %vm1681, %v5966, %v5968
  %v6054 = vsel %vm1681, %v5968, %v5970
  %v6055 = vsel %vm1681, %v5970, %v5972
  %v6056 = vsel %vm1681, %v5972, %v5974
  %v6057 = vsel %vm1681, %v5974, %v5976
  %v6058 = vsel %vm1681, %v5976, %v5978
  %v6059 = vsel %vm1681, %v5978, %v5980
  %v6060 = vsel %vm1681, %v5980, %v5982
  %6139 = vmatprep.subr.bf16.mxu0 %v5984
  %6140 = vmatpush1.bf16.msra.mxu0 %v5983
  %6141 = vmatprep.subr.bf16.mxu0 %v5997
  %6142 = vmatpush1.bf16.msra.mxu0 %v5996
  %6143 = vmatprep.subr.bf16.mxu0 %v6010
  %6144 = vmatpush1.bf16.msra.mxu0 %v6009
  %6145 = vmatprep.subr.bf16.mxu0 %v6023
  %6146 = vmatpush1.bf16.msra.mxu0 %v6022
  %6147 = vmatprep.subr.bf16.mxu0 %v6036
  %6148 = vmatpush1.bf16.msra.mxu0 %v6035
  %6149 = vmatprep.subr.bf16.mxu0 %v6049
  %6150 = vmatpush1.bf16.msra.mxu0 %v6048
  %6151 = vmatprep.subr.bf16.mxu0 0
  %6152 = vmatpush1.bf16.msra.mxu0 0
  %6153 = vmatprep.subr.bf16.mxu0 0
  %6154 = vmatpush1.bf16.msra.mxu0 0
  %6155 = vmatprep.subr.bf16.mxu0 0
  %6156 = vmatpush1.bf16.msra.mxu0 0
  %6157 = vmatprep.subr.bf16.mxu0 0
  %6158 = vmatpush1.bf16.msra.mxu0 0
  %6159 = vmatprep.subr.bf16.mxu0 0
  %6160 = vmatpush1.bf16.msra.mxu0 0
  %6161 = vmatprep.subr.bf16.mxu0 0
  %6162 = vmatpush1.bf16.msra.mxu0 0
  %6163 = vmatprep.subr.bf16.mxu0 0
  %6164 = vmatpush1.bf16.msra.mxu0 0
  %6165 = vmatprep.subr.bf16.mxu0 0
  %6166 = vmatpush1.bf16.msra.mxu0 0
  %6167 = vmatprep.subr.bf16.mxu0 0
  %6168 = vmatpush1.bf16.msra.mxu0 0
  %6169 = vmatprep.subr.bf16.mxu0 0
  %6170 = vmatpush1.bf16.msra.mxu0 0
  %6171 = vmatprep.mubr.bf16.mxu0 0
  %6172 = vmatmul.mubr.bf16.gmra.mrb[0].mxu0 %v1839
  %v6173 = vpop.f32.mrb[0].mxu0
  %v6174 = vadd.f32 0.0, %v6173
  %v6175 = vpop.f32.mrb[0].mxu0
  %v6176 = vadd.f32 0.0, %v6175
  %v6177 = vpop.f32.mrb[0].mxu0
  %v6178 = vadd.f32 0.0, %v6177
  %v6179 = vpop.f32.mrb[0].mxu0
  %v6180 = vadd.f32 0.0, %v6179
  %6181 = vdwg.mxu0
  %6182 = vmatprep.subr.bf16.mxu0 %v5986
  %6183 = vmatpush1.bf16.msra.mxu0 %v5985
  %6184 = vmatprep.subr.bf16.mxu0 %v5999
  %6185 = vmatpush1.bf16.msra.mxu0 %v5998
  %6186 = vmatprep.subr.bf16.mxu0 %v6012
  %6187 = vmatpush1.bf16.msra.mxu0 %v6011
  %6188 = vmatprep.subr.bf16.mxu0 %v6025
  %6189 = vmatpush1.bf16.msra.mxu0 %v6024
  %6190 = vmatprep.subr.bf16.mxu0 %v6038
  %6191 = vmatpush1.bf16.msra.mxu0 %v6037
  %6192 = vmatprep.subr.bf16.mxu0 %v6051
  %6193 = vmatpush1.bf16.msra.mxu0 %v6050
  %6194 = vmatprep.subr.bf16.mxu0 0
  %6195 = vmatpush1.bf16.msra.mxu0 0
  %6196 = vmatprep.subr.bf16.mxu0 0
  %6197 = vmatpush1.bf16.msra.mxu0 0
  %6198 = vmatprep.subr.bf16.mxu0 0
  %6199 = vmatpush1.bf16.msra.mxu0 0
  %6200 = vmatprep.subr.bf16.mxu0 0
  %6201 = vmatpush1.bf16.msra.mxu0 0
  %6202 = vmatprep.subr.bf16.mxu0 0
  %6203 = vmatpush1.bf16.msra.mxu0 0
  %6204 = vmatprep.subr.bf16.mxu0 0
  %6205 = vmatpush1.bf16.msra.mxu0 0
  %6206 = vmatprep.subr.bf16.mxu0 0
  %6207 = vmatpush1.bf16.msra.mxu0 0
  %6208 = vmatprep.subr.bf16.mxu0 0
  %6209 = vmatpush1.bf16.msra.mxu0 0
  %6210 = vmatprep.subr.bf16.mxu0 0
  %6211 = vmatpush1.bf16.msra.mxu0 0
  %6212 = vmatprep.subr.bf16.mxu0 0
  %6213 = vmatpush1.bf16.msra.mxu0 0
  %6214 = vmatprep.mubr.bf16.mxu0 0
  %6215 = vmatmul.mubr.bf16.gmra.mrb[0].mxu0 %v1839
  %v6216 = vpop.f32.mrb[0].mxu0
  %v6217 = vadd.f32 0.0, %v6216
  %v6218 = vpop.f32.mrb[0].mxu0
  %v6219 = vadd.f32 0.0, %v6218
  %v6220 = vpop.f32.mrb[0].mxu0
  %v6221 = vadd.f32 0.0, %v6220
  %v6222 = vpop.f32.mrb[0].mxu0
  %v6223 = vadd.f32 0.0, %v6222
  %6224 = vdwg.mxu0
  %6225 = vmatprep.subr.bf16.mxu0 %v5988
  %6226 = vmatpush1.bf16.msra.mxu0 %v5987
  %6227 = vmatprep.subr.bf16.mxu0 %v6001
  %6228 = vmatpush1.bf16.msra.mxu0 %v6000
  %6229 = vmatprep.subr.bf16.mxu0 %v6014
  %6230 = vmatpush1.bf16.msra.mxu0 %v6013
  %6231 = vmatprep.subr.bf16.mxu0 %v6027
  %6232 = vmatpush1.bf16.msra.mxu0 %v6026
  %6233 = vmatprep.subr.bf16.mxu0 %v6040
  %6234 = vmatpush1.bf16.msra.mxu0 %v6039
  %6235 = vmatprep.subr.bf16.mxu0 %v6053
  %6236 = vmatpush1.bf16.msra.mxu0 %v6052
  %6237 = vmatprep.subr.bf16.mxu0 0
  %6238 = vmatpush1.bf16.msra.mxu0 0
  %6239 = vmatprep.subr.bf16.mxu0 0
  %6240 = vmatpush1.bf16.msra.mxu0 0
  %6241 = vmatprep.subr.bf16.mxu0 0
  %6242 = vmatpush1.bf16.msra.mxu0 0
  %6243 = vmatprep.subr.bf16.mxu0 0
  %6244 = vmatpush1.bf16.msra.mxu0 0
  %6245 = vmatprep.subr.bf16.mxu0 0
  %6246 = vmatpush1.bf16.msra.mxu0 0
  %6247 = vmatprep.subr.bf16.mxu0 0
  %6248 = vmatpush1.bf16.msra.mxu0 0
  %6249 = vmatprep.subr.bf16.mxu0 0
  %6250 = vmatpush1.bf16.msra.mxu0 0
  %6251 = vmatprep.subr.bf16.mxu0 0
  %6252 = vmatpush1.bf16.msra.mxu0 0
  %6253 = vmatprep.subr.bf16.mxu0 0
  %6254 = vmatpush1.bf16.msra.mxu0 0
  %6255 = vmatprep.subr.bf16.mxu0 0
  %6256 = vmatpush1.bf16.msra.mxu0 0
  %6257 = vmatprep.mubr.bf16.mxu0 0
  %6258 = vmatmul.mubr.bf16.gmra.mrb[0].mxu0 %v1839
  %v6259 = vpop.f32.mrb[0].mxu0
  %v6260 = vadd.f32 0.0, %v6259
  %v6261 = vpop.f32.mrb[0].mxu0
  %v6262 = vadd.f32 0.0, %v6261
  %v6263 = vpop.f32.mrb[0].mxu0
  %v6264 = vadd.f32 0.0, %v6263
  %v6265 = vpop.f32.mrb[0].mxu0
  %v6266 = vadd.f32 0.0, %v6265
  %6267 = vdwg.mxu0
  %6268 = vmatprep.subr.bf16.mxu0 %v5990
  %6269 = vmatpush1.bf16.msra.mxu0 %v5989
  %6270 = vmatprep.subr.bf16.mxu0 %v6003
  %6271 = vmatpush1.bf16.msra.mxu0 %v6002
  %6272 = vmatprep.subr.bf16.mxu0 %v6016
  %6273 = vmatpush1.bf16.msra.mxu0 %v6015
  %6274 = vmatprep.subr.bf16.mxu0 %v6029
  %6275 = vmatpush1.bf16.msra.mxu0 %v6028
  %6276 = vmatprep.subr.bf16.mxu0 %v6042
  %6277 = vmatpush1.bf16.msra.mxu0 %v6041
  %6278 = vmatprep.subr.bf16.mxu0 %v6055
  %6279 = vmatpush1.bf16.msra.mxu0 %v6054
  %6280 = vmatprep.subr.bf16.mxu0 0
  %6281 = vmatpush1.bf16.msra.mxu0 0
  %6282 = vmatprep.subr.bf16.mxu0 0
  %6283 = vmatpush1.bf16.msra.mxu0 0
  %6284 = vmatprep.subr.bf16.mxu0 0
  %6285 = vmatpush1.bf16.msra.mxu0 0
  %6286 = vmatprep.subr.bf16.mxu0 0
  %6287 = vmatpush1.bf16.msra.mxu0 0
  %6288 = vmatprep.subr.bf16.mxu0 0
  %6289 = vmatpush1.bf16.msra.mxu0 0
  %6290 = vmatprep.subr.bf16.mxu0 0
  %6291 = vmatpush1.bf16.msra.mxu0 0
  %6292 = vmatprep.subr.bf16.mxu0 0
  %6293 = vmatpush1.bf16.msra.mxu0 0
  %6294 = vmatprep.subr.bf16.mxu0 0
  %6295 = vmatpush1.bf16.msra.mxu0 0
  %6296 = vmatprep.subr.bf16.mxu0 0
  %6297 = vmatpush1.bf16.msra.mxu0 0
  %6298 = vmatprep.subr.bf16.mxu0 0
  %6299 = vmatpush1.bf16.msra.mxu0 0
  %6300 = vmatprep.mubr.bf16.mxu0 0
  %6301 = vmatmul.mubr.bf16.gmra.mrb[0].mxu0 %v1839
  %v6302 = vpop.f32.mrb[0].mxu0
  %v6303 = vadd.f32 0.0, %v6302
  %v6304 = vpop.f32.mrb[0].mxu0
  %v6305 = vadd.f32 0.0, %v6304
  %v6306 = vpop.f32.mrb[0].mxu0
  %v6307 = vadd.f32 0.0, %v6306
  %v6308 = vpop.f32.mrb[0].mxu0
  %v6309 = vadd.f32 0.0, %v6308
  %6310 = vdwg.mxu0
  %6311 = vmatprep.subr.bf16.mxu0 %v5992
  %6312 = vmatpush1.bf16.msra.mxu0 %v5991
  %6313 = vmatprep.subr.bf16.mxu0 %v6005
  %6314 = vmatpush1.bf16.msra.mxu0 %v6004
  %6315 = vmatprep.subr.bf16.mxu0 %v6018
  %6316 = vmatpush1.bf16.msra.mxu0 %v6017
  %6317 = vmatprep.subr.bf16.mxu0 %v6031
  %6318 = vmatpush1.bf16.msra.mxu0 %v6030
  %6319 = vmatprep.subr.bf16.mxu0 %v6044
  %6320 = vmatpush1.bf16.msra.mxu0 %v6043
  %6321 = vmatprep.subr.bf16.mxu0 %v6057
  %6322 = vmatpush1.bf16.msra.mxu0 %v6056
  %6323 = vmatprep.subr.bf16.mxu0 0
  %6324 = vmatpush1.bf16.msra.mxu0 0
  %6325 = vmatprep.subr.bf16.mxu0 0
  %6326 = vmatpush1.bf16.msra.mxu0 0
  %6327 = vmatprep.subr.bf16.mxu0 0
  %6328 = vmatpush1.bf16.msra.mxu0 0
  %6329 = vmatprep.subr.bf16.mxu0 0
  %6330 = vmatpush1.bf16.msra.mxu0 0
  %6331 = vmatprep.subr.bf16.mxu0 0
  %6332 = vmatpush1.bf16.msra.mxu0 0
  %6333 = vmatprep.subr.bf16.mxu0 0
  %6334 = vmatpush1.bf16.msra.mxu0 0
  %6335 = vmatprep.subr.bf16.mxu0 0
  %6336 = vmatpush1.bf16.msra.mxu0 0
  %6337 = vmatprep.subr.bf16.mxu0 0
  %6338 = vmatpush1.bf16.msra.mxu0 0
  %6339 = vmatprep.subr.bf16.mxu0 0
  %6340 = vmatpush1.bf16.msra.mxu0 0
  %6341 = vmatprep.subr.bf16.mxu0 0
  %6342 = vmatpush1.bf16.msra.mxu0 0
  %6343 = vmatprep.mubr.bf16.mxu0 0
  %6344 = vmatmul.mubr.bf16.gmra.mrb[0].mxu0 %v1839
  %v6345 = vpop.f32.mrb[0].mxu0
  %v6346 = vadd.f32 0.0, %v6345
  %v6347 = vpop.f32.mrb[0].mxu0
  %v6348 = vadd.f32 0.0, %v6347
  %v6349 = vpop.f32.mrb[0].mxu0
  %v6350 = vadd.f32 0.0, %v6349
  %v6351 = vpop.f32.mrb[0].mxu0
  %v6352 = vadd.f32 0.0, %v6351
  %6353 = vdwg.mxu0
  %6354 = vmatprep.subr.bf16.mxu0 %v5994
  %6355 = vmatpush1.bf16.msra.mxu0 %v5993
  %6356 = vmatprep.subr.bf16.mxu0 %v6007
  %6357 = vmatpush1.bf16.msra.mxu0 %v6006
  %6358 = vmatprep.subr.bf16.mxu0 %v6020
  %6359 = vmatpush1.bf16.msra.mxu0 %v6019
  %6360 = vmatprep.subr.bf16.mxu0 %v6033
  %6361 = vmatpush1.bf16.msra.mxu0 %v6032
  %6362 = vmatprep.subr.bf16.mxu0 %v6046
  %6363 = vmatpush1.bf16.msra.mxu0 %v6045
  %6364 = vmatprep.subr.bf16.mxu0 %v6059
  %6365 = vmatpush1.bf16.msra.mxu0 %v6058
  %6366 = vmatprep.subr.bf16.mxu0 0
  %6367 = vmatpush1.bf16.msra.mxu0 0
  %6368 = vmatprep.subr.bf16.mxu0 0
  %6369 = vmatpush1.bf16.msra.mxu0 0
  %6370 = vmatprep.subr.bf16.mxu0 0
  %6371 = vmatpush1.bf16.msra.mxu0 0
  %6372 = vmatprep.subr.bf16.mxu0 0
  %6373 = vmatpush1.bf16.msra.mxu0 0
  %6374 = vmatprep.subr.bf16.mxu0 0
  %6375 = vmatpush1.bf16.msra.mxu0 0
  %6376 = vmatprep.subr.bf16.mxu0 0
  %6377 = vmatpush1.bf16.msra.mxu0 0
  %6378 = vmatprep.subr.bf16.mxu0 0
  %6379 = vmatpush1.bf16.msra.mxu0 0
  %6380 = vmatprep.subr.bf16.mxu0 0
  %6381 = vmatpush1.bf16.msra.mxu0 0
  %6382 = vmatprep.subr.bf16.mxu0 0
  %6383 = vmatpush1.bf16.msra.mxu0 0
  %6384 = vmatprep.subr.bf16.mxu0 0
  %6385 = vmatpush1.bf16.msra.mxu0 0
  %6386 = vmatprep.mubr.bf16.mxu0 0
  %6387 = vmatmul.mubr.bf16.gmra.mrb[0].mxu0 %v1839
  %v6388 = vpop.f32.mrb[0].mxu0
  %v6389 = vadd.f32 0.0, %v6388
  %v6390 = vpop.f32.mrb[0].mxu0
  %v6391 = vadd.f32 0.0, %v6390
  %v6392 = vpop.f32.mrb[0].mxu0
  %v6393 = vadd.f32 0.0, %v6392
  %v6394 = vpop.f32.mrb[0].mxu0
  %v6395 = vadd.f32 0.0, %v6394
  %6396 = vdwg.mxu0
  %6397 = vmatprep.subr.bf16.mxu0 0
  %6398 = vmatpush1.bf16.msra.mxu0 %v5995
  %6399 = vmatprep.subr.bf16.mxu0 0
  %6400 = vmatpush1.bf16.msra.mxu0 %v6008
  %6401 = vmatprep.subr.bf16.mxu0 0
  %6402 = vmatpush1.bf16.msra.mxu0 %v6021
  %6403 = vmatprep.subr.bf16.mxu0 0
  %6404 = vmatpush1.bf16.msra.mxu0 %v6034
  %6405 = vmatprep.subr.bf16.mxu0 0
  %6406 = vmatpush1.bf16.msra.mxu0 %v6047
  %6407 = vmatprep.subr.bf16.mxu0 0
  %6408 = vmatpush1.bf16.msra.mxu0 %v6060
  %6409 = vmatprep.subr.bf16.mxu0 0
  %6410 = vmatpush1.bf16.msra.mxu0 0
  %6411 = vmatprep.subr.bf16.mxu0 0
  %6412 = vmatpush1.bf16.msra.mxu0 0
  %6413 = vmatprep.subr.bf16.mxu0 0
  %6414 = vmatpush1.bf16.msra.mxu0 0
  %6415 = vmatprep.subr.bf16.mxu0 0
  %6416 = vmatpush1.bf16.msra.mxu0 0
  %6417 = vmatprep.subr.bf16.mxu0 0
  %6418 = vmatpush1.bf16.msra.mxu0 0
  %6419 = vmatprep.subr.bf16.mxu0 0
  %6420 = vmatpush1.bf16.msra.mxu0 0
  %6421 = vmatprep.subr.bf16.mxu0 0
  %6422 = vmatpush1.bf16.msra.mxu0 0
  %6423 = vmatprep.subr.bf16.mxu0 0
  %6424 = vmatpush1.bf16.msra.mxu0 0
  %6425 = vmatprep.subr.bf16.mxu0 0
  %6426 = vmatpush1.bf16.msra.mxu0 0
  %6427 = vmatprep.subr.bf16.mxu0 0
  %6428 = vmatpush1.bf16.msra.mxu0 0
  %6429 = vmatprep.mubr.bf16.mxu0 0
  %6430 = vmatmul.mubr.bf16.gmra.mrb[0].mxu0 %v1839
  %v6431 = vpop.f32.mrb[0].mxu0
  %v6432 = vadd.f32 0.0, %v6431
  %v6433 = vpop.f32.mrb[0].mxu0
  %v6434 = vpop.f32.mrb[0].mxu0
  %v6435 = vadd.f32 0.0, %v6434
  %v6436 = vpop.f32.mrb[0].mxu0
  %6437 = vdwg.mxu0
  %v6438 = vadd.f32 %v5551, %v6174
  %v6439 = vadd.f32 %v5553, %v6176
  %v6440 = vadd.f32 %v5594, %v6217
  %v6441 = vadd.f32 %v5596, %v6219
  %v6442 = vadd.f32 %v5637, %v6260
  %v6443 = vadd.f32 %v5639, %v6262
  %v6444 = vadd.f32 %v5680, %v6303
  %v6445 = vadd.f32 %v5682, %v6305
  %v6446 = vadd.f32 %v5723, %v6346
  %v6447 = vadd.f32 %v5725, %v6348
  %v6448 = vadd.f32 %v5766, %v6389
  %v6449 = vadd.f32 %v5768, %v6391
  %v6450 = vadd.f32 %v5809, %v6432
  %v6451 = vadd.f32 %v5555, %v6178
  %v6452 = vadd.f32 %v5557, %v6180
  %v6453 = vadd.f32 %v5598, %v6221
  %v6454 = vadd.f32 %v5600, %v6223
  %v6455 = vadd.f32 %v5641, %v6264
  %v6456 = vadd.f32 %v5643, %v6266
  %v6457 = vadd.f32 %v5684, %v6307
  %v6458 = vadd.f32 %v5686, %v6309
  %v6459 = vadd.f32 %v5727, %v6350
  %v6460 = vadd.f32 %v5729, %v6352
  %v6461 = vadd.f32 %v5770, %v6393
  %v6462 = vadd.f32 %v5772, %v6395
  %v6463 = vadd.f32 %v5812, %v6435
  %6464 = vrot.lane.b32.xlu0 %v4701, 23
  %v6465 = vpop.permute.xlu0 %6464
  %6466 = vrot.lane.b32.xlu0 %v4702, 23
  %v6467 = vpop.permute.xlu0 %6466
  %6468 = vrot.lane.b32.xlu0 %v4703, 23
  %v6469 = vpop.permute.xlu0 %6468
  %6470 = vrot.lane.b32.xlu0 %v4704, 23
  %v6471 = vpop.permute.xlu0 %6470
  %6472 = vrot.lane.b32.xlu0 %v4705, 23
  %v6473 = vpop.permute.xlu0 %6472
  %6474 = vrot.lane.b32.xlu0 %v4706, 23
  %v6475 = vpop.permute.xlu0 %6474
  %6476 = vrot.lane.b32.xlu0 %v4707, 23
  %v6477 = vpop.permute.xlu0 %6476
  %6478 = vrot.lane.b32.xlu0 %v4708, 23
  %v6479 = vpop.permute.xlu0 %6478
  %6480 = vrot.lane.b32.xlu0 %v4709, 23
  %v6481 = vpop.permute.xlu0 %6480
  %6482 = vrot.lane.b32.xlu0 %v4710, 23
  %v6483 = vpop.permute.xlu0 %6482
  %6484 = vrot.lane.b32.xlu0 %v4711, 23
  %v6485 = vpop.permute.xlu0 %6484
  %6486 = vrot.lane.b32.xlu0 %v4712, 23
  %v6487 = vpop.permute.xlu0 %6486
  %6488 = vrot.lane.b32.xlu0 %v4713, 23
  %v6489 = vpop.permute.xlu0 %6488
  %6490 = vrot.lane.b32.xlu0 %v4714, 23
  %v6491 = vpop.permute.xlu0 %6490
  %6492 = vrot.lane.b32.xlu0 %v4715, 23
  %v6493 = vpop.permute.xlu0 %6492
  %6494 = vrot.lane.b32.xlu0 %v4716, 23
  %v6495 = vpop.permute.xlu0 %6494
  %6496 = vrot.lane.b32.xlu0 %v4717, 23
  %v6497 = vpop.permute.xlu0 %6496
  %6498 = vrot.lane.b32.xlu0 %v4718, 23
  %v6499 = vpop.permute.xlu0 %6498
  %6500 = vrot.lane.b32.xlu0 %v4719, 23
  %v6501 = vpop.permute.xlu0 %6500
  %6502 = vrot.lane.b32.xlu0 %v4720, 23
  %v6503 = vpop.permute.xlu0 %6502
  %6504 = vrot.lane.b32.xlu0 %v4721, 23
  %v6505 = vpop.permute.xlu0 %6504
  %6506 = vrot.lane.b32.xlu0 %v4722, 23
  %v6507 = vpop.permute.xlu0 %6506
  %6508 = vrot.lane.b32.xlu0 %v4723, 23
  %v6509 = vpop.permute.xlu0 %6508
  %6510 = vrot.lane.b32.xlu0 %v4724, 23
  %v6511 = vpop.permute.xlu0 %6510
  %6512 = vrot.lane.b32.xlu0 %v4725, 23
  %v6513 = vpop.permute.xlu0 %6512
  %6514 = vrot.lane.b32.xlu0 %v4726, 23
  %v6515 = vpop.permute.xlu0 %6514
  %6516 = vrot.lane.b32.xlu0 %v4727, 23
  %v6517 = vpop.permute.xlu0 %6516
  %6518 = vrot.lane.b32.xlu0 %v4728, 23
  %v6519 = vpop.permute.xlu0 %6518
  %6520 = vrot.lane.b32.xlu0 %v4729, 23
  %v6521 = vpop.permute.xlu0 %6520
  %6522 = vrot.lane.b32.xlu0 %v4730, 23
  %v6523 = vpop.permute.xlu0 %6522
  %6524 = vrot.lane.b32.xlu0 %v4731, 23
  %v6525 = vpop.permute.xlu0 %6524
  %6526 = vrot.lane.b32.xlu0 %v4732, 23
  %v6527 = vpop.permute.xlu0 %6526
  %6528 = vrot.lane.b32.xlu0 %v4733, 23
  %v6529 = vpop.permute.xlu0 %6528
  %6530 = vrot.lane.b32.xlu0 %v4734, 23
  %v6531 = vpop.permute.xlu0 %6530
  %6532 = vrot.lane.b32.xlu0 %v4735, 23
  %v6533 = vpop.permute.xlu0 %6532
  %6534 = vrot.lane.b32.xlu0 %v4736, 23
  %v6535 = vpop.permute.xlu0 %6534
  %6536 = vrot.lane.b32.xlu0 %v4737, 23
  %v6537 = vpop.permute.xlu0 %6536
  %6538 = vrot.lane.b32.xlu0 %v4738, 23
  %v6539 = vpop.permute.xlu0 %6538
  %6540 = vrot.lane.b32.xlu0 %v4739, 23
  %v6541 = vpop.permute.xlu0 %6540
  %6542 = vrot.lane.b32.xlu0 %v4740, 23
  %v6543 = vpop.permute.xlu0 %6542
  %6544 = vrot.lane.b32.xlu0 %v4741, 23
  %v6545 = vpop.permute.xlu0 %6544
  %6546 = vrot.lane.b32.xlu0 %v4742, 23
  %v6547 = vpop.permute.xlu0 %6546
  %6548 = vrot.lane.b32.xlu0 %v4743, 23
  %v6549 = vpop.permute.xlu0 %6548
  %6550 = vrot.lane.b32.xlu0 %v4744, 23
  %v6551 = vpop.permute.xlu0 %6550
  %6552 = vrot.lane.b32.xlu0 %v4745, 23
  %v6553 = vpop.permute.xlu0 %6552
  %6554 = vrot.lane.b32.xlu0 %v4746, 23
  %v6555 = vpop.permute.xlu0 %6554
  %6556 = vrot.lane.b32.xlu0 %v4747, 23
  %v6557 = vpop.permute.xlu0 %6556
  %6558 = vrot.lane.b32.xlu0 %v4748, 23
  %v6559 = vpop.permute.xlu0 %6558
  %6560 = vrot.lane.b32.xlu0 %v4749, 23
  %v6561 = vpop.permute.xlu0 %6560
  %6562 = vrot.lane.b32.xlu0 %v4750, 23
  %v6563 = vpop.permute.xlu0 %6562
  %6564 = vrot.lane.b32.xlu0 %v4751, 23
  %v6565 = vpop.permute.xlu0 %6564
  %6566 = vrot.lane.b32.xlu0 %v4752, 23
  %v6567 = vpop.permute.xlu0 %6566
  %6568 = vrot.lane.b32.xlu0 %v4753, 23
  %v6569 = vpop.permute.xlu0 %6568
  %6570 = vrot.lane.b32.xlu0 %v4754, 23
  %v6571 = vpop.permute.xlu0 %6570
  %6572 = vrot.lane.b32.xlu0 %v4755, 23
  %v6573 = vpop.permute.xlu0 %6572
  %6574 = vrot.lane.b32.xlu0 %v4756, 23
  %v6575 = vpop.permute.xlu0 %6574
  %6576 = vrot.lane.b32.xlu0 %v4757, 23
  %v6577 = vpop.permute.xlu0 %6576
  %6578 = vrot.lane.b32.xlu0 %v4758, 23
  %v6579 = vpop.permute.xlu0 %6578
  %6580 = vrot.lane.b32.xlu0 %v4759, 23
  %v6581 = vpop.permute.xlu0 %6580
  %6582 = vrot.lane.b32.xlu0 %v4760, 23
  %v6583 = vpop.permute.xlu0 %6582
  %6584 = vrot.lane.b32.xlu0 %v4761, 23
  %v6585 = vpop.permute.xlu0 %6584
  %6586 = vrot.lane.b32.xlu0 %v4762, 23
  %v6587 = vpop.permute.xlu0 %6586
  %6588 = vrot.lane.b32.xlu0 %v4763, 23
  %v6589 = vpop.permute.xlu0 %6588
  %6590 = vrot.lane.b32.xlu0 %v4764, 23
  %v6591 = vpop.permute.xlu0 %6590
  %6592 = vrot.lane.b32.xlu0 %v4765, 23
  %v6593 = vpop.permute.xlu0 %6592
  %6594 = vrot.lane.b32.xlu0 %v4766, 23
  %v6595 = vpop.permute.xlu0 %6594
  %6596 = vrot.lane.b32.xlu0 %v4767, 23
  %v6597 = vpop.permute.xlu0 %6596
  %6598 = vrot.lane.b32.xlu0 %v4768, 23
  %v6599 = vpop.permute.xlu0 %6598
  %6600 = vrot.lane.b32.xlu0 %v4769, 23
  %v6601 = vpop.permute.xlu0 %6600
  %6602 = vrot.lane.b32.xlu0 %v4770, 23
  %v6603 = vpop.permute.xlu0 %6602
  %6604 = vrot.lane.b32.xlu0 %v4771, 23
  %v6605 = vpop.permute.xlu0 %6604
  %6606 = vrot.lane.b32.xlu0 %v4772, 23
  %v6607 = vpop.permute.xlu0 %6606
  %6608 = vrot.lane.b32.xlu0 %v4773, 23
  %v6609 = vpop.permute.xlu0 %6608
  %6610 = vrot.lane.b32.xlu0 %v4774, 23
  %v6611 = vpop.permute.xlu0 %6610
  %6612 = vrot.lane.b32.xlu0 %v4775, 23
  %v6613 = vpop.permute.xlu0 %6612
  %6614 = vrot.lane.b32.xlu0 %v4776, 23
  %v6615 = vpop.permute.xlu0 %6614
  %6616 = vrot.lane.b32.xlu0 %v4777, 23
  %v6617 = vpop.permute.xlu0 %6616
  %6618 = vrot.lane.b32.xlu0 %v4778, 23
  %v6619 = vpop.permute.xlu0 %6618
  %6620 = vrot.lane.b32.xlu0 %v4779, 23
  %v6621 = vpop.permute.xlu0 %6620
  %6622 = vrot.lane.b32.xlu0 %v4780, 23
  %v6623 = vpop.permute.xlu0 %6622
  %6624 = vrot.lane.b32.xlu0 %v4781, 23
  %v6625 = vpop.permute.xlu0 %6624
  %6626 = vrot.lane.b32.xlu0 %v4782, 23
  %v6627 = vpop.permute.xlu0 %6626
  %6628 = vrot.lane.b32.xlu0 %v4783, 23
  %v6629 = vpop.permute.xlu0 %6628
  %6630 = vrot.lane.b32.xlu0 %v4784, 23
  %v6631 = vpop.permute.xlu0 %6630
  %v6632 = vsel %vm2342, %v6465, %v6467
  %v6633 = vsel %vm2342, %v6467, %v6469
  %v6634 = vsel %vm2342, %v6469, %v6471
  %v6635 = vsel %vm2342, %v6471, %v6473
  %v6636 = vsel %vm2342, %v6473, %v6475
  %v6637 = vsel %vm2342, %v6475, %v6477
  %v6638 = vsel %vm2342, %v6477, %v6479
  %v6639 = vsel %vm2342, %v6479, %v6481
  %v6640 = vsel %vm2342, %v6481, %v6483
  %v6641 = vsel %vm2342, %v6483, %v6485
  %v6642 = vsel %vm2342, %v6485, %v6487
  %v6643 = vsel %vm2342, %v6487, %v6489
  %v6644 = vsel %vm2342, %v6489, %v6491
  %v6645 = vsel %vm2342, %v6493, %v6495
  %v6646 = vsel %vm2342, %v6495, %v6497
  %v6647 = vsel %vm2342, %v6497, %v6499
  %v6648 = vsel %vm2342, %v6499, %v6501
  %v6649 = vsel %vm2342, %v6501, %v6503
  %v6650 = vsel %vm2342, %v6503, %v6505
  %v6651 = vsel %vm2342, %v6505, %v6507
  %v6652 = vsel %vm2342, %v6507, %v6509
  %v6653 = vsel %vm2342, %v6509, %v6511
  %v6654 = vsel %vm2342, %v6511, %v6513
  %v6655 = vsel %vm2342, %v6513, %v6515
  %v6656 = vsel %vm2342, %v6515, %v6517
  %v6657 = vsel %vm2342, %v6517, %v6519
  %v6658 = vsel %vm2342, %v6521, %v6523
  %v6659 = vsel %vm2342, %v6523, %v6525
  %v6660 = vsel %vm2342, %v6525, %v6527
  %v6661 = vsel %vm2342, %v6527, %v6529
  %v6662 = vsel %vm2342, %v6529, %v6531
  %v6663 = vsel %vm2342, %v6531, %v6533
  %v6664 = vsel %vm2342, %v6533, %v6535
  %v6665 = vsel %vm2342, %v6535, %v6537
  %v6666 = vsel %vm2342, %v6537, %v6539
  %v6667 = vsel %vm2342, %v6539, %v6541
  %v6668 = vsel %vm2342, %v6541, %v6543
  %v6669 = vsel %vm2342, %v6543, %v6545
  %v6670 = vsel %vm2342, %v6545, %v6547
  %v6671 = vsel %vm2342, %v6549, %v6551
  %v6672 = vsel %vm2342, %v6551, %v6553
  %v6673 = vsel %vm2342, %v6553, %v6555
  %v6674 = vsel %vm2342, %v6555, %v6557
  %v6675 = vsel %vm2342, %v6557, %v6559
  %v6676 = vsel %vm2342, %v6559, %v6561
  %v6677 = vsel %vm2342, %v6561, %v6563
  %v6678 = vsel %vm2342, %v6563, %v6565
  %v6679 = vsel %vm2342, %v6565, %v6567
  %v6680 = vsel %vm2342, %v6567, %v6569
  %v6681 = vsel %vm2342, %v6569, %v6571
  %v6682 = vsel %vm2342, %v6571, %v6573
  %v6683 = vsel %vm2342, %v6573, %v6575
  %v6684 = vsel %vm2342, %v6577, %v6579
  %v6685 = vsel %vm2342, %v6579, %v6581
  %v6686 = vsel %vm2342, %v6581, %v6583
  %v6687 = vsel %vm2342, %v6583, %v6585
  %v6688 = vsel %vm2342, %v6585, %v6587
  %v6689 = vsel %vm2342, %v6587, %v6589
  %v6690 = vsel %vm2342, %v6589, %v6591
  %v6691 = vsel %vm2342, %v6591, %v6593
  %v6692 = vsel %vm2342, %v6593, %v6595
  %v6693 = vsel %vm2342, %v6595, %v6597
  %v6694 = vsel %vm2342, %v6597, %v6599
  %v6695 = vsel %vm2342, %v6599, %v6601
  %v6696 = vsel %vm2342, %v6601, %v6603
  %v6697 = vsel %vm2342, %v6605, %v6607
  %v6698 = vsel %vm2342, %v6607, %v6609
  %v6699 = vsel %vm2342, %v6609, %v6611
  %v6700 = vsel %vm2342, %v6611, %v6613
  %v6701 = vsel %vm2342, %v6613, %v6615
  %v6702 = vsel %vm2342, %v6615, %v6617
  %v6703 = vsel %vm2342, %v6617, %v6619
  %v6704 = vsel %vm2342, %v6619, %v6621
  %v6705 = vsel %vm2342, %v6621, %v6623
  %v6706 = vsel %vm2342, %v6623, %v6625
  %v6707 = vsel %vm2342, %v6625, %v6627
  %v6708 = vsel %vm2342, %v6627, %v6629
  %v6709 = vsel %vm2342, %v6629, %v6631
  %6788 = vmatprep.subr.bf16.mxu0 %v6633
  %6789 = vmatpush1.bf16.msra.mxu0 %v6632
  %6790 = vmatprep.subr.bf16.mxu0 %v6646
  %6791 = vmatpush1.bf16.msra.mxu0 %v6645
  %6792 = vmatprep.subr.bf16.mxu0 %v6659
  %6793 = vmatpush1.bf16.msra.mxu0 %v6658
  %6794 = vmatprep.subr.bf16.mxu0 %v6672
  %6795 = vmatpush1.bf16.msra.mxu0 %v6671
  %6796 = vmatprep.subr.bf16.mxu0 %v6685
  %6797 = vmatpush1.bf16.msra.mxu0 %v6684
  %6798 = vmatprep.subr.bf16.mxu0 %v6698
  %6799 = vmatpush1.bf16.msra.mxu0 %v6697
  %6800 = vmatprep.subr.bf16.mxu0 0
  %6801 = vmatpush1.bf16.msra.mxu0 0
  %6802 = vmatprep.subr.bf16.mxu0 0
  %6803 = vmatpush1.bf16.msra.mxu0 0
  %6804 = vmatprep.subr.bf16.mxu0 0
  %6805 = vmatpush1.bf16.msra.mxu0 0
  %6806 = vmatprep.subr.bf16.mxu0 0
  %6807 = vmatpush1.bf16.msra.mxu0 0
  %6808 = vmatprep.subr.bf16.mxu0 0
  %6809 = vmatpush1.bf16.msra.mxu0 0
  %6810 = vmatprep.subr.bf16.mxu0 0
  %6811 = vmatpush1.bf16.msra.mxu0 0
  %6812 = vmatprep.subr.bf16.mxu0 0
  %6813 = vmatpush1.bf16.msra.mxu0 0
  %6814 = vmatprep.subr.bf16.mxu0 0
  %6815 = vmatpush1.bf16.msra.mxu0 0
  %6816 = vmatprep.subr.bf16.mxu0 0
  %6817 = vmatpush1.bf16.msra.mxu0 0
  %6818 = vmatprep.subr.bf16.mxu0 0
  %6819 = vmatpush1.bf16.msra.mxu0 0
  %6820 = vmatprep.mubr.bf16.mxu0 0
  %6821 = vmatmul.mubr.bf16.gmra.mrb[0].mxu0 %v2500
  %v6822 = vpop.f32.mrb[0].mxu0
  %v6823 = vadd.f32 0.0, %v6822
  %v6824 = vpop.f32.mrb[0].mxu0
  %v6825 = vadd.f32 0.0, %v6824
  %v6826 = vpop.f32.mrb[0].mxu0
  %v6827 = vadd.f32 0.0, %v6826
  %v6828 = vpop.f32.mrb[0].mxu0
  %v6829 = vadd.f32 0.0, %v6828
  %6830 = vdwg.mxu0
  %6831 = vmatprep.subr.bf16.mxu0 %v6635
  %6832 = vmatpush1.bf16.msra.mxu0 %v6634
  %6833 = vmatprep.subr.bf16.mxu0 %v6648
  %6834 = vmatpush1.bf16.msra.mxu0 %v6647
  %6835 = vmatprep.subr.bf16.mxu0 %v6661
  %6836 = vmatpush1.bf16.msra.mxu0 %v6660
  %6837 = vmatprep.subr.bf16.mxu0 %v6674
  %6838 = vmatpush1.bf16.msra.mxu0 %v6673
  %6839 = vmatprep.subr.bf16.mxu0 %v6687
  %6840 = vmatpush1.bf16.msra.mxu0 %v6686
  %6841 = vmatprep.subr.bf16.mxu0 %v6700
  %6842 = vmatpush1.bf16.msra.mxu0 %v6699
  %6843 = vmatprep.subr.bf16.mxu0 0
  %6844 = vmatpush1.bf16.msra.mxu0 0
  %6845 = vmatprep.subr.bf16.mxu0 0
  %6846 = vmatpush1.bf16.msra.mxu0 0
  %6847 = vmatprep.subr.bf16.mxu0 0
  %6848 = vmatpush1.bf16.msra.mxu0 0
  %6849 = vmatprep.subr.bf16.mxu0 0
  %6850 = vmatpush1.bf16.msra.mxu0 0
  %6851 = vmatprep.subr.bf16.mxu0 0
  %6852 = vmatpush1.bf16.msra.mxu0 0
  %6853 = vmatprep.subr.bf16.mxu0 0
  %6854 = vmatpush1.bf16.msra.mxu0 0
  %6855 = vmatprep.subr.bf16.mxu0 0
  %6856 = vmatpush1.bf16.msra.mxu0 0
  %6857 = vmatprep.subr.bf16.mxu0 0
  %6858 = vmatpush1.bf16.msra.mxu0 0
  %6859 = vmatprep.subr.bf16.mxu0 0
  %6860 = vmatpush1.bf16.msra.mxu0 0
  %6861 = vmatprep.subr.bf16.mxu0 0
  %6862 = vmatpush1.bf16.msra.mxu0 0
  %6863 = vmatprep.mubr.bf16.mxu0 0
  %6864 = vmatmul.mubr.bf16.gmra.mrb[0].mxu0 %v2500
  %v6865 = vpop.f32.mrb[0].mxu0
  %v6866 = vadd.f32 0.0, %v6865
  %v6867 = vpop.f32.mrb[0].mxu0
  %v6868 = vadd.f32 0.0, %v6867
  %v6869 = vpop.f32.mrb[0].mxu0
  %v6870 = vadd.f32 0.0, %v6869
  %v6871 = vpop.f32.mrb[0].mxu0
  %v6872 = vadd.f32 0.0, %v6871
  %6873 = vdwg.mxu0
  %6874 = vmatprep.subr.bf16.mxu0 %v6637
  %6875 = vmatpush1.bf16.msra.mxu0 %v6636
  %6876 = vmatprep.subr.bf16.mxu0 %v6650
  %6877 = vmatpush1.bf16.msra.mxu0 %v6649
  %6878 = vmatprep.subr.bf16.mxu0 %v6663
  %6879 = vmatpush1.bf16.msra.mxu0 %v6662
  %6880 = vmatprep.subr.bf16.mxu0 %v6676
  %6881 = vmatpush1.bf16.msra.mxu0 %v6675
  %6882 = vmatprep.subr.bf16.mxu0 %v6689
  %6883 = vmatpush1.bf16.msra.mxu0 %v6688
  %6884 = vmatprep.subr.bf16.mxu0 %v6702
  %6885 = vmatpush1.bf16.msra.mxu0 %v6701
  %6886 = vmatprep.subr.bf16.mxu0 0
  %6887 = vmatpush1.bf16.msra.mxu0 0
  %6888 = vmatprep.subr.bf16.mxu0 0
  %6889 = vmatpush1.bf16.msra.mxu0 0
  %6890 = vmatprep.subr.bf16.mxu0 0
  %6891 = vmatpush1.bf16.msra.mxu0 0
  %6892 = vmatprep.subr.bf16.mxu0 0
  %6893 = vmatpush1.bf16.msra.mxu0 0
  %6894 = vmatprep.subr.bf16.mxu0 0
  %6895 = vmatpush1.bf16.msra.mxu0 0
  %6896 = vmatprep.subr.bf16.mxu0 0
  %6897 = vmatpush1.bf16.msra.mxu0 0
  %6898 = vmatprep.subr.bf16.mxu0 0
  %6899 = vmatpush1.bf16.msra.mxu0 0
  %6900 = vmatprep.subr.bf16.mxu0 0
  %6901 = vmatpush1.bf16.msra.mxu0 0
  %6902 = vmatprep.subr.bf16.mxu0 0
  %6903 = vmatpush1.bf16.msra.mxu0 0
  %6904 = vmatprep.subr.bf16.mxu0 0
  %6905 = vmatpush1.bf16.msra.mxu0 0
  %6906 = vmatprep.mubr.bf16.mxu0 0
  %6907 = vmatmul.mubr.bf16.gmra.mrb[0].mxu0 %v2500
  %v6908 = vpop.f32.mrb[0].mxu0
  %v6909 = vadd.f32 0.0, %v6908
  %v6910 = vpop.f32.mrb[0].mxu0
  %v6911 = vadd.f32 0.0, %v6910
  %v6912 = vpop.f32.mrb[0].mxu0
  %v6913 = vadd.f32 0.0, %v6912
  %v6914 = vpop.f32.mrb[0].mxu0
  %v6915 = vadd.f32 0.0, %v6914
  %6916 = vdwg.mxu0
  %6917 = vmatprep.subr.bf16.mxu0 %v6639
  %6918 = vmatpush1.bf16.msra.mxu0 %v6638
  %6919 = vmatprep.subr.bf16.mxu0 %v6652
  %6920 = vmatpush1.bf16.msra.mxu0 %v6651
  %6921 = vmatprep.subr.bf16.mxu0 %v6665
  %6922 = vmatpush1.bf16.msra.mxu0 %v6664
  %6923 = vmatprep.subr.bf16.mxu0 %v6678
  %6924 = vmatpush1.bf16.msra.mxu0 %v6677
  %6925 = vmatprep.subr.bf16.mxu0 %v6691
  %6926 = vmatpush1.bf16.msra.mxu0 %v6690
  %6927 = vmatprep.subr.bf16.mxu0 %v6704
  %6928 = vmatpush1.bf16.msra.mxu0 %v6703
  %6929 = vmatprep.subr.bf16.mxu0 0
  %6930 = vmatpush1.bf16.msra.mxu0 0
  %6931 = vmatprep.subr.bf16.mxu0 0
  %6932 = vmatpush1.bf16.msra.mxu0 0
  %6933 = vmatprep.subr.bf16.mxu0 0
  %6934 = vmatpush1.bf16.msra.mxu0 0
  %6935 = vmatprep.subr.bf16.mxu0 0
  %6936 = vmatpush1.bf16.msra.mxu0 0
  %6937 = vmatprep.subr.bf16.mxu0 0
  %6938 = vmatpush1.bf16.msra.mxu0 0
  %6939 = vmatprep.subr.bf16.mxu0 0
  %6940 = vmatpush1.bf16.msra.mxu0 0
  %6941 = vmatprep.subr.bf16.mxu0 0
  %6942 = vmatpush1.bf16.msra.mxu0 0
  %6943 = vmatprep.subr.bf16.mxu0 0
  %6944 = vmatpush1.bf16.msra.mxu0 0
  %6945 = vmatprep.subr.bf16.mxu0 0
  %6946 = vmatpush1.bf16.msra.mxu0 0
  %6947 = vmatprep.subr.bf16.mxu0 0
  %6948 = vmatpush1.bf16.msra.mxu0 0
  %6949 = vmatprep.mubr.bf16.mxu0 0
  %6950 = vmatmul.mubr.bf16.gmra.mrb[0].mxu0 %v2500
  %v6951 = vpop.f32.mrb[0].mxu0
  %v6952 = vadd.f32 0.0, %v6951
  %v6953 = vpop.f32.mrb[0].mxu0
  %v6954 = vadd.f32 0.0, %v6953
  %v6955 = vpop.f32.mrb[0].mxu0
  %v6956 = vadd.f32 0.0, %v6955
  %v6957 = vpop.f32.mrb[0].mxu0
  %v6958 = vadd.f32 0.0, %v6957
  %6959 = vdwg.mxu0
  %6960 = vmatprep.subr.bf16.mxu0 %v6641
  %6961 = vmatpush1.bf16.msra.mxu0 %v6640
  %6962 = vmatprep.subr.bf16.mxu0 %v6654
  %6963 = vmatpush1.bf16.msra.mxu0 %v6653
  %6964 = vmatprep.subr.bf16.mxu0 %v6667
  %6965 = vmatpush1.bf16.msra.mxu0 %v6666
  %6966 = vmatprep.subr.bf16.mxu0 %v6680
  %6967 = vmatpush1.bf16.msra.mxu0 %v6679
  %6968 = vmatprep.subr.bf16.mxu0 %v6693
  %6969 = vmatpush1.bf16.msra.mxu0 %v6692
  %6970 = vmatprep.subr.bf16.mxu0 %v6706
  %6971 = vmatpush1.bf16.msra.mxu0 %v6705
  %6972 = vmatprep.subr.bf16.mxu0 0
  %6973 = vmatpush1.bf16.msra.mxu0 0
  %6974 = vmatprep.subr.bf16.mxu0 0
  %6975 = vmatpush1.bf16.msra.mxu0 0
  %6976 = vmatprep.subr.bf16.mxu0 0
  %6977 = vmatpush1.bf16.msra.mxu0 0
  %6978 = vmatprep.subr.bf16.mxu0 0
  %6979 = vmatpush1.bf16.msra.mxu0 0
  %6980 = vmatprep.subr.bf16.mxu0 0
  %6981 = vmatpush1.bf16.msra.mxu0 0
  %6982 = vmatprep.subr.bf16.mxu0 0
  %6983 = vmatpush1.bf16.msra.mxu0 0
  %6984 = vmatprep.subr.bf16.mxu0 0
  %6985 = vmatpush1.bf16.msra.mxu0 0
  %6986 = vmatprep.subr.bf16.mxu0 0
  %6987 = vmatpush1.bf16.msra.mxu0 0
  %6988 = vmatprep.subr.bf16.mxu0 0
  %6989 = vmatpush1.bf16.msra.mxu0 0
  %6990 = vmatprep.subr.bf16.mxu0 0
  %6991 = vmatpush1.bf16.msra.mxu0 0
  %6992 = vmatprep.mubr.bf16.mxu0 0
  %6993 = vmatmul.mubr.bf16.gmra.mrb[0].mxu0 %v2500
  %v6994 = vpop.f32.mrb[0].mxu0
  %v6995 = vadd.f32 0.0, %v6994
  %v6996 = vpop.f32.mrb[0].mxu0
  %v6997 = vadd.f32 0.0, %v6996
  %v6998 = vpop.f32.mrb[0].mxu0
  %v6999 = vadd.f32 0.0, %v6998
  %v7000 = vpop.f32.mrb[0].mxu0
  %v7001 = vadd.f32 0.0, %v7000
  %7002 = vdwg.mxu0
  %7003 = vmatprep.subr.bf16.mxu0 %v6643
  %7004 = vmatpush1.bf16.msra.mxu0 %v6642
  %7005 = vmatprep.subr.bf16.mxu0 %v6656
  %7006 = vmatpush1.bf16.msra.mxu0 %v6655
  %7007 = vmatprep.subr.bf16.mxu0 %v6669
  %7008 = vmatpush1.bf16.msra.mxu0 %v6668
  %7009 = vmatprep.subr.bf16.mxu0 %v6682
  %7010 = vmatpush1.bf16.msra.mxu0 %v6681
  %7011 = vmatprep.subr.bf16.mxu0 %v6695
  %7012 = vmatpush1.bf16.msra.mxu0 %v6694
  %7013 = vmatprep.subr.bf16.mxu0 %v6708
  %7014 = vmatpush1.bf16.msra.mxu0 %v6707
  %7015 = vmatprep.subr.bf16.mxu0 0
  %7016 = vmatpush1.bf16.msra.mxu0 0
  %7017 = vmatprep.subr.bf16.mxu0 0
  %7018 = vmatpush1.bf16.msra.mxu0 0
  %7019 = vmatprep.subr.bf16.mxu0 0
  %7020 = vmatpush1.bf16.msra.mxu0 0
  %7021 = vmatprep.subr.bf16.mxu0 0
  %7022 = vmatpush1.bf16.msra.mxu0 0
  %7023 = vmatprep.subr.bf16.mxu0 0
  %7024 = vmatpush1.bf16.msra.mxu0 0
  %7025 = vmatprep.subr.bf16.mxu0 0
  %7026 = vmatpush1.bf16.msra.mxu0 0
  %7027 = vmatprep.subr.bf16.mxu0 0
  %7028 = vmatpush1.bf16.msra.mxu0 0
  %7029 = vmatprep.subr.bf16.mxu0 0
  %7030 = vmatpush1.bf16.msra.mxu0 0
  %7031 = vmatprep.subr.bf16.mxu0 0
  %7032 = vmatpush1.bf16.msra.mxu0 0
  %7033 = vmatprep.subr.bf16.mxu0 0
  %7034 = vmatpush1.bf16.msra.mxu0 0
  %7035 = vmatprep.mubr.bf16.mxu0 0
  %7036 = vmatmul.mubr.bf16.gmra.mrb[0].mxu0 %v2500
  %v7037 = vpop.f32.mrb[0].mxu0
  %v7038 = vadd.f32 0.0, %v7037
  %v7039 = vpop.f32.mrb[0].mxu0
  %v7040 = vadd.f32 0.0, %v7039
  %v7041 = vpop.f32.mrb[0].mxu0
  %v7042 = vadd.f32 0.0, %v7041
  %v7043 = vpop.f32.mrb[0].mxu0
  %v7044 = vadd.f32 0.0, %v7043
  %7045 = vdwg.mxu0
  %7046 = vmatprep.subr.bf16.mxu0 0
  %7047 = vmatpush1.bf16.msra.mxu0 %v6644
  %7048 = vmatprep.subr.bf16.mxu0 0
  %7049 = vmatpush1.bf16.msra.mxu0 %v6657
  %7050 = vmatprep.subr.bf16.mxu0 0
  %7051 = vmatpush1.bf16.msra.mxu0 %v6670
  %7052 = vmatprep.subr.bf16.mxu0 0
  %7053 = vmatpush1.bf16.msra.mxu0 %v6683
  %7054 = vmatprep.subr.bf16.mxu0 0
  %7055 = vmatpush1.bf16.msra.mxu0 %v6696
  %7056 = vmatprep.subr.bf16.mxu0 0
  %7057 = vmatpush1.bf16.msra.mxu0 %v6709
  %7058 = vmatprep.subr.bf16.mxu0 0
  %7059 = vmatpush1.bf16.msra.mxu0 0
  %7060 = vmatprep.subr.bf16.mxu0 0
  %7061 = vmatpush1.bf16.msra.mxu0 0
  %7062 = vmatprep.subr.bf16.mxu0 0
  %7063 = vmatpush1.bf16.msra.mxu0 0
  %7064 = vmatprep.subr.bf16.mxu0 0
  %7065 = vmatpush1.bf16.msra.mxu0 0
  %7066 = vmatprep.subr.bf16.mxu0 0
  %7067 = vmatpush1.bf16.msra.mxu0 0
  %7068 = vmatprep.subr.bf16.mxu0 0
  %7069 = vmatpush1.bf16.msra.mxu0 0
  %7070 = vmatprep.subr.bf16.mxu0 0
  %7071 = vmatpush1.bf16.msra.mxu0 0
  %7072 = vmatprep.subr.bf16.mxu0 0
  %7073 = vmatpush1.bf16.msra.mxu0 0
  %7074 = vmatprep.subr.bf16.mxu0 0
  %7075 = vmatpush1.bf16.msra.mxu0 0
  %7076 = vmatprep.subr.bf16.mxu0 0
  %7077 = vmatpush1.bf16.msra.mxu0 0
  %7078 = vmatprep.mubr.bf16.mxu0 0
  %7079 = vmatmul.mubr.bf16.gmra.mrb[0].mxu0 %v2500
  %v7080 = vpop.f32.mrb[0].mxu0
  %v7081 = vadd.f32 0.0, %v7080
  %v7082 = vpop.f32.mrb[0].mxu0
  %v7083 = vpop.f32.mrb[0].mxu0
  %v7084 = vadd.f32 0.0, %v7083
  %v7085 = vpop.f32.mrb[0].mxu0
  %7086 = vdwg.mxu0
  %v7087 = vadd.f32 %v6438, %v6823
  %v7088 = vadd.f32 %v6439, %v6825
  %v7089 = vadd.f32 %v6440, %v6866
  %v7090 = vadd.f32 %v6441, %v6868
  %v7091 = vadd.f32 %v6442, %v6909
  %v7092 = vadd.f32 %v6443, %v6911
  %v7093 = vadd.f32 %v6444, %v6952
  %v7094 = vadd.f32 %v6445, %v6954
  %v7095 = vadd.f32 %v6446, %v6995
  %v7096 = vadd.f32 %v6447, %v6997
  %v7097 = vadd.f32 %v6448, %v7038
  %v7098 = vadd.f32 %v6449, %v7040
  %v7099 = vadd.f32 %v6450, %v7081
  %v7100 = vadd.f32 %v6451, %v6827
  %v7101 = vadd.f32 %v6452, %v6829
  %v7102 = vadd.f32 %v6453, %v6870
  %v7103 = vadd.f32 %v6454, %v6872
  %v7104 = vadd.f32 %v6455, %v6913
  %v7105 = vadd.f32 %v6456, %v6915
  %v7106 = vadd.f32 %v6457, %v6956
  %v7107 = vadd.f32 %v6458, %v6958
  %v7108 = vadd.f32 %v6459, %v6999
  %v7109 = vadd.f32 %v6460, %v7001
  %v7110 = vadd.f32 %v6461, %v7042
  %v7111 = vadd.f32 %v6462, %v7044
  %v7112 = vadd.f32 %v6463, %v7084
  %v7113 = vld [vmem:[%s4352 + $0x4] sm:$0xff]
  %v7114 = vld [vmem:[%s4352 + $0xc] sm:$0xff]
  %v7115 = vld [vmem:[%s4352 + $0x14] sm:$0xff]
  %v7116 = vld [vmem:[%s4352 + $0x1c] sm:$0xff]
  %v7117 = vld [vmem:[%s4352 + $0x24] sm:$0xff]
  %v7118 = vld [vmem:[%s4352 + $0x2c] sm:$0xff]
  %v7119 = vld [vmem:[%s4352 + $0x34] sm:$0xff]
  %v7120 = vld [vmem:[%s4352 + $0x40] sm:$0xff]
  %v7121 = vld [vmem:[%s4352 + $0x48] sm:$0xff]
  %v7122 = vld [vmem:[%s4352 + $0x50] sm:$0xff]
  %v7123 = vld [vmem:[%s4352 + $0x58] sm:$0xff]
  %v7124 = vld [vmem:[%s4352 + $0x60] sm:$0xff]
  %v7125 = vld [vmem:[%s4352 + $0x68] sm:$0xff]
  %v7126 = vld [vmem:[%s4352 + $0x70] sm:$0xff]
  %v7127 = vld [vmem:[%s4352 + $0x7c] sm:$0xff]
  %v7128 = vld [vmem:[%s4352 + $0x84] sm:$0xff]
  %v7129 = vld [vmem:[%s4352 + $0x8c] sm:$0xff]
  %v7130 = vld [vmem:[%s4352 + $0x94] sm:$0xff]
  %v7131 = vld [vmem:[%s4352 + $0x9c] sm:$0xff]
  %v7132 = vld [vmem:[%s4352 + $0xa4] sm:$0xff]
  %v7133 = vld [vmem:[%s4352 + $0xac] sm:$0xff]
  %v7134 = vld [vmem:[%s4352 + $0xb8] sm:$0xff]
  %v7135 = vld [vmem:[%s4352 + $0xc0] sm:$0xff]
  %v7136 = vld [vmem:[%s4352 + $0xc8] sm:$0xff]
  %v7137 = vld [vmem:[%s4352 + $0xd0] sm:$0xff]
  %v7138 = vld [vmem:[%s4352 + $0xd8] sm:$0xff]
  %v7139 = vld [vmem:[%s4352 + $0xe0] sm:$0xff]
  %v7140 = vld [vmem:[%s4352 + $0xe8] sm:$0xff]
  %v7141 = vld [vmem:[%s4352 + $0xf4] sm:$0xff]
  %v7142 = vld [vmem:[%s4352 + $0xfc] sm:$0xff]
  %v7143 = vld [vmem:[%s4352 + $0x104] sm:$0xff]
  %v7144 = vld [vmem:[%s4352 + $0x10c] sm:$0xff]
  %v7145 = vld [vmem:[%s4352 + $0x114] sm:$0xff]
  %v7146 = vld [vmem:[%s4352 + $0x11c] sm:$0xff]
  %v7147 = vld [vmem:[%s4352 + $0x124] sm:$0xff]
  %v7148 = vld [vmem:[%s4352 + $0x130] sm:$0xff]
  %v7149 = vld [vmem:[%s4352 + $0x138] sm:$0xff]
  %v7150 = vld [vmem:[%s4352 + $0x140] sm:$0xff]
  %v7151 = vld [vmem:[%s4352 + $0x148] sm:$0xff]
  %v7152 = vld [vmem:[%s4352 + $0x150] sm:$0xff]
  %v7153 = vld [vmem:[%s4352 + $0x158] sm:$0xff]
  %v7154 = vld [vmem:[%s4352 + $0x160] sm:$0xff]
  %v7155 = vld [vmem:[%s4352 + $0x16c] sm:$0xff]
  %v7156 = vld [vmem:[%s4352 + $0x174] sm:$0xff]
  %v7157 = vld [vmem:[%s4352 + $0x17c] sm:$0xff]
  %v7158 = vld [vmem:[%s4352 + $0x184] sm:$0xff]
  %v7159 = vld [vmem:[%s4352 + $0x18c] sm:$0xff]
  %v7160 = vld [vmem:[%s4352 + $0x194] sm:$0xff]
  %v7161 = vld [vmem:[%s4352 + $0x19c] sm:$0xff]
  %v7162 = vld [vmem:[%s4352 + $0x1a8] sm:$0xff]
  %v7163 = vld [vmem:[%s4352 + $0x1b0] sm:$0xff]
  %v7164 = vld [vmem:[%s4352 + $0x1b8] sm:$0xff]
  %v7165 = vld [vmem:[%s4352 + $0x1c0] sm:$0xff]
  %v7166 = vld [vmem:[%s4352 + $0x1c8] sm:$0xff]
  %v7167 = vld [vmem:[%s4352 + $0x1d0] sm:$0xff]
  %v7168 = vld [vmem:[%s4352 + $0x1d8] sm:$0xff]
  %v7169 = vld [vmem:[%s4352 + $0x1e4] sm:$0xff]
  %v7170 = vld [vmem:[%s4352 + $0x1ec] sm:$0xff]
  %v7171 = vld [vmem:[%s4352 + $0x1f4] sm:$0xff]
  %v7172 = vld [vmem:[%s4352 + $0x1fc] sm:$0xff]
  %v7173 = vld [vmem:[%s4352 + $0x204] sm:$0xff]
  %v7174 = vld [vmem:[%s4352 + $0x20c] sm:$0xff]
  %v7175 = vld [vmem:[%s4352 + $0x214] sm:$0xff]
  %v7176 = vld [vmem:[%s4352 + $0x220] sm:$0xff]
  %v7177 = vld [vmem:[%s4352 + $0x228] sm:$0xff]
  %v7178 = vld [vmem:[%s4352 + $0x230] sm:$0xff]
  %v7179 = vld [vmem:[%s4352 + $0x238] sm:$0xff]
  %v7180 = vld [vmem:[%s4352 + $0x240] sm:$0xff]
  %v7181 = vld [vmem:[%s4352 + $0x248] sm:$0xff]
  %v7182 = vld [vmem:[%s4352 + $0x250] sm:$0xff]
  %v7183 = vld [vmem:[%s4352 + $0x25c] sm:$0xff]
  %v7184 = vld [vmem:[%s4352 + $0x264] sm:$0xff]
  %v7185 = vld [vmem:[%s4352 + $0x26c] sm:$0xff]
  %v7186 = vld [vmem:[%s4352 + $0x274] sm:$0xff]
  %v7187 = vld [vmem:[%s4352 + $0x27c] sm:$0xff]
  %v7188 = vld [vmem:[%s4352 + $0x284] sm:$0xff]
  %v7189 = vld [vmem:[%s4352 + $0x28c] sm:$0xff]
  %v7190 = vld [vmem:[%s4352 + $0x298] sm:$0xff]
  %v7191 = vld [vmem:[%s4352 + $0x2a0] sm:$0xff]
  %v7192 = vld [vmem:[%s4352 + $0x2a8] sm:$0xff]
  %v7193 = vld [vmem:[%s4352 + $0x2b0] sm:$0xff]
  %v7194 = vld [vmem:[%s4352 + $0x2b8] sm:$0xff]
  %v7195 = vld [vmem:[%s4352 + $0x2c0] sm:$0xff]
  %v7196 = vld [vmem:[%s4352 + $0x2c8] sm:$0xff]
  %v7281 = vunpack.c.l.b16 %v7113
  %v7282 = vunpack.c.h.b16 %v7113
  %v7283 = vunpack.c.l.b16 %v7114
  %v7284 = vunpack.c.h.b16 %v7114
  %v7285 = vunpack.c.l.b16 %v7115
  %v7286 = vunpack.c.h.b16 %v7115
  %v7287 = vunpack.c.l.b16 %v7116
  %v7288 = vunpack.c.h.b16 %v7116
  %v7289 = vunpack.c.l.b16 %v7117
  %v7290 = vunpack.c.h.b16 %v7117
  %v7291 = vunpack.c.l.b16 %v7118
  %v7292 = vunpack.c.h.b16 %v7118
  %v7293 = vunpack.c.l.b16 %v7119
  %v7294 = vunpack.c.h.b16 %v7119
  %v7295 = vunpack.c.l.b16 %v7120
  %v7296 = vunpack.c.h.b16 %v7120
  %v7297 = vunpack.c.l.b16 %v7121
  %v7298 = vunpack.c.h.b16 %v7121
  %v7299 = vunpack.c.l.b16 %v7122
  %v7300 = vunpack.c.h.b16 %v7122
  %v7301 = vunpack.c.l.b16 %v7123
  %v7302 = vunpack.c.h.b16 %v7123
  %v7303 = vunpack.c.l.b16 %v7124
  %v7304 = vunpack.c.h.b16 %v7124
  %v7305 = vunpack.c.l.b16 %v7125
  %v7306 = vunpack.c.h.b16 %v7125
  %v7307 = vunpack.c.l.b16 %v7126
  %v7308 = vunpack.c.h.b16 %v7126
  %v7309 = vunpack.c.l.b16 %v7127
  %v7310 = vunpack.c.h.b16 %v7127
  %v7311 = vunpack.c.l.b16 %v7128
  %v7312 = vunpack.c.h.b16 %v7128
  %v7313 = vunpack.c.l.b16 %v7129
  %v7314 = vunpack.c.h.b16 %v7129
  %v7315 = vunpack.c.l.b16 %v7130
  %v7316 = vunpack.c.h.b16 %v7130
  %v7317 = vunpack.c.l.b16 %v7131
  %v7318 = vunpack.c.h.b16 %v7131
  %v7319 = vunpack.c.l.b16 %v7132
  %v7320 = vunpack.c.h.b16 %v7132
  %v7321 = vunpack.c.l.b16 %v7133
  %v7322 = vunpack.c.h.b16 %v7133
  %v7323 = vunpack.c.l.b16 %v7134
  %v7324 = vunpack.c.h.b16 %v7134
  %v7325 = vunpack.c.l.b16 %v7135
  %v7326 = vunpack.c.h.b16 %v7135
  %v7327 = vunpack.c.l.b16 %v7136
  %v7328 = vunpack.c.h.b16 %v7136
  %v7329 = vunpack.c.l.b16 %v7137
  %v7330 = vunpack.c.h.b16 %v7137
  %v7331 = vunpack.c.l.b16 %v7138
  %v7332 = vunpack.c.h.b16 %v7138
  %v7333 = vunpack.c.l.b16 %v7139
  %v7334 = vunpack.c.h.b16 %v7139
  %v7335 = vunpack.c.l.b16 %v7140
  %v7336 = vunpack.c.h.b16 %v7140
  %v7337 = vunpack.c.l.b16 %v7141
  %v7338 = vunpack.c.h.b16 %v7141
  %v7339 = vunpack.c.l.b16 %v7142
  %v7340 = vunpack.c.h.b16 %v7142
  %v7341 = vunpack.c.l.b16 %v7143
  %v7342 = vunpack.c.h.b16 %v7143
  %v7343 = vunpack.c.l.b16 %v7144
  %v7344 = vunpack.c.h.b16 %v7144
  %v7345 = vunpack.c.l.b16 %v7145
  %v7346 = vunpack.c.h.b16 %v7145
  %v7347 = vunpack.c.l.b16 %v7146
  %v7348 = vunpack.c.h.b16 %v7146
  %v7349 = vunpack.c.l.b16 %v7147
  %v7350 = vunpack.c.h.b16 %v7147
  %v7351 = vunpack.c.l.b16 %v7148
  %v7352 = vunpack.c.h.b16 %v7148
  %v7353 = vunpack.c.l.b16 %v7149
  %v7354 = vunpack.c.h.b16 %v7149
  %v7355 = vunpack.c.l.b16 %v7150
  %v7356 = vunpack.c.h.b16 %v7150
  %v7357 = vunpack.c.l.b16 %v7151
  %v7358 = vunpack.c.h.b16 %v7151
  %v7359 = vunpack.c.l.b16 %v7152
  %v7360 = vunpack.c.h.b16 %v7152
  %v7361 = vunpack.c.l.b16 %v7153
  %v7362 = vunpack.c.h.b16 %v7153
  %v7363 = vunpack.c.l.b16 %v7154
  %v7364 = vunpack.c.h.b16 %v7154
  %v7365 = vunpack.c.l.b16 %v7155
  %v7366 = vunpack.c.h.b16 %v7155
  %v7367 = vunpack.c.l.b16 %v7156
  %v7368 = vunpack.c.h.b16 %v7156
  %v7369 = vunpack.c.l.b16 %v7157
  %v7370 = vunpack.c.h.b16 %v7157
  %v7371 = vunpack.c.l.b16 %v7158
  %v7372 = vunpack.c.h.b16 %v7158
  %v7373 = vunpack.c.l.b16 %v7159
  %v7374 = vunpack.c.h.b16 %v7159
  %v7375 = vunpack.c.l.b16 %v7160
  %v7376 = vunpack.c.h.b16 %v7160
  %v7377 = vunpack.c.l.b16 %v7161
  %v7378 = vunpack.c.h.b16 %v7161
  %v7379 = vunpack.c.l.b16 %v7162
  %v7380 = vunpack.c.h.b16 %v7162
  %v7381 = vunpack.c.l.b16 %v7163
  %v7382 = vunpack.c.h.b16 %v7163
  %v7383 = vunpack.c.l.b16 %v7164
  %v7384 = vunpack.c.h.b16 %v7164
  %v7385 = vunpack.c.l.b16 %v7165
  %v7386 = vunpack.c.h.b16 %v7165
  %v7387 = vunpack.c.l.b16 %v7166
  %v7388 = vunpack.c.h.b16 %v7166
  %v7389 = vunpack.c.l.b16 %v7167
  %v7390 = vunpack.c.h.b16 %v7167
  %v7391 = vunpack.c.l.b16 %v7168
  %v7392 = vunpack.c.h.b16 %v7168
  %v7393 = vunpack.c.l.b16 %v7169
  %v7394 = vunpack.c.h.b16 %v7169
  %v7395 = vunpack.c.l.b16 %v7170
  %v7396 = vunpack.c.h.b16 %v7170
  %v7397 = vunpack.c.l.b16 %v7171
  %v7398 = vunpack.c.h.b16 %v7171
  %v7399 = vunpack.c.l.b16 %v7172
  %v7400 = vunpack.c.h.b16 %v7172
  %v7401 = vunpack.c.l.b16 %v7173
  %v7402 = vunpack.c.h.b16 %v7173
  %v7403 = vunpack.c.l.b16 %v7174
  %v7404 = vunpack.c.h.b16 %v7174
  %v7405 = vunpack.c.l.b16 %v7175
  %v7406 = vunpack.c.h.b16 %v7175
  %v7407 = vunpack.c.l.b16 %v7176
  %v7408 = vunpack.c.h.b16 %v7176
  %v7409 = vunpack.c.l.b16 %v7177
  %v7410 = vunpack.c.h.b16 %v7177
  %v7411 = vunpack.c.l.b16 %v7178
  %v7412 = vunpack.c.h.b16 %v7178
  %v7413 = vunpack.c.l.b16 %v7179
  %v7414 = vunpack.c.h.b16 %v7179
  %v7415 = vunpack.c.l.b16 %v7180
  %v7416 = vunpack.c.h.b16 %v7180
  %v7417 = vunpack.c.l.b16 %v7181
  %v7418 = vunpack.c.h.b16 %v7181
  %v7419 = vunpack.c.l.b16 %v7182
  %v7420 = vunpack.c.h.b16 %v7182
  %v7421 = vunpack.c.l.b16 %v7183
  %v7422 = vunpack.c.h.b16 %v7183
  %v7423 = vunpack.c.l.b16 %v7184
  %v7424 = vunpack.c.h.b16 %v7184
  %v7425 = vunpack.c.l.b16 %v7185
  %v7426 = vunpack.c.h.b16 %v7185
  %v7427 = vunpack.c.l.b16 %v7186
  %v7428 = vunpack.c.h.b16 %v7186
  %v7429 = vunpack.c.l.b16 %v7187
  %v7430 = vunpack.c.h.b16 %v7187
  %v7431 = vunpack.c.l.b16 %v7188
  %v7432 = vunpack.c.h.b16 %v7188
  %v7433 = vunpack.c.l.b16 %v7189
  %v7434 = vunpack.c.h.b16 %v7189
  %v7435 = vunpack.c.l.b16 %v7190
  %v7436 = vunpack.c.h.b16 %v7190
  %v7437 = vunpack.c.l.b16 %v7191
  %v7438 = vunpack.c.h.b16 %v7191
  %v7439 = vunpack.c.l.b16 %v7192
  %v7440 = vunpack.c.h.b16 %v7192
  %v7441 = vunpack.c.l.b16 %v7193
  %v7442 = vunpack.c.h.b16 %v7193
  %v7443 = vunpack.c.l.b16 %v7194
  %v7444 = vunpack.c.h.b16 %v7194
  %v7445 = vunpack.c.l.b16 %v7195
  %v7446 = vunpack.c.h.b16 %v7195
  %v7447 = vunpack.c.l.b16 %v7196
  %v7448 = vunpack.c.h.b16 %v7196
  %v7449 = vpack.c.b16 %v7295, %v7281
  %v7450 = vpack.c.b16 %v7296, %v7282
  %v7451 = vpack.c.b16 %v7297, %v7283
  %v7452 = vpack.c.b16 %v7298, %v7284
  %v7453 = vpack.c.b16 %v7299, %v7285
  %v7454 = vpack.c.b16 %v7300, %v7286
  %v7455 = vpack.c.b16 %v7301, %v7287
  %v7456 = vpack.c.b16 %v7302, %v7288
  %v7457 = vpack.c.b16 %v7303, %v7289
  %v7458 = vpack.c.b16 %v7304, %v7290
  %v7459 = vpack.c.b16 %v7305, %v7291
  %v7460 = vpack.c.b16 %v7306, %v7292
  %v7461 = vpack.c.b16 %v7307, %v7293
  %v7462 = vpack.c.b16 %v7308, %v7294
  %v7463 = vpack.c.b16 %v7323, %v7309
  %v7464 = vpack.c.b16 %v7324, %v7310
  %v7465 = vpack.c.b16 %v7325, %v7311
  %v7466 = vpack.c.b16 %v7326, %v7312
  %v7467 = vpack.c.b16 %v7327, %v7313
  %v7468 = vpack.c.b16 %v7328, %v7314
  %v7469 = vpack.c.b16 %v7329, %v7315
  %v7470 = vpack.c.b16 %v7330, %v7316
  %v7471 = vpack.c.b16 %v7331, %v7317
  %v7472 = vpack.c.b16 %v7332, %v7318
  %v7473 = vpack.c.b16 %v7333, %v7319
  %v7474 = vpack.c.b16 %v7334, %v7320
  %v7475 = vpack.c.b16 %v7335, %v7321
  %v7476 = vpack.c.b16 %v7336, %v7322
  %v7477 = vpack.c.b16 %v7351, %v7337
  %v7478 = vpack.c.b16 %v7352, %v7338
  %v7479 = vpack.c.b16 %v7353, %v7339
  %v7480 = vpack.c.b16 %v7354, %v7340
  %v7481 = vpack.c.b16 %v7355, %v7341
  %v7482 = vpack.c.b16 %v7356, %v7342
  %v7483 = vpack.c.b16 %v7357, %v7343
  %v7484 = vpack.c.b16 %v7358, %v7344
  %v7485 = vpack.c.b16 %v7359, %v7345
  %v7486 = vpack.c.b16 %v7360, %v7346
  %v7487 = vpack.c.b16 %v7361, %v7347
  %v7488 = vpack.c.b16 %v7362, %v7348
  %v7489 = vpack.c.b16 %v7363, %v7349
  %v7490 = vpack.c.b16 %v7364, %v7350
  %v7491 = vpack.c.b16 %v7379, %v7365
  %v7492 = vpack.c.b16 %v7380, %v7366
  %v7493 = vpack.c.b16 %v7381, %v7367
  %v7494 = vpack.c.b16 %v7382, %v7368
  %v7495 = vpack.c.b16 %v7383, %v7369
  %v7496 = vpack.c.b16 %v7384, %v7370
  %v7497 = vpack.c.b16 %v7385, %v7371
  %v7498 = vpack.c.b16 %v7386, %v7372
  %v7499 = vpack.c.b16 %v7387, %v7373
  %v7500 = vpack.c.b16 %v7388, %v7374
  %v7501 = vpack.c.b16 %v7389, %v7375
  %v7502 = vpack.c.b16 %v7390, %v7376
  %v7503 = vpack.c.b16 %v7391, %v7377
  %v7504 = vpack.c.b16 %v7392, %v7378
  %v7505 = vpack.c.b16 %v7407, %v7393
  %v7506 = vpack.c.b16 %v7408, %v7394
  %v7507 = vpack.c.b16 %v7409, %v7395
  %v7508 = vpack.c.b16 %v7410, %v7396
  %v7509 = vpack.c.b16 %v7411, %v7397
  %v7510 = vpack.c.b16 %v7412, %v7398
  %v7511 = vpack.c.b16 %v7413, %v7399
  %v7512 = vpack.c.b16 %v7414, %v7400
  %v7513 = vpack.c.b16 %v7415, %v7401
  %v7514 = vpack.c.b16 %v7416, %v7402
  %v7515 = vpack.c.b16 %v7417, %v7403
  %v7516 = vpack.c.b16 %v7418, %v7404
  %v7517 = vpack.c.b16 %v7419, %v7405
  %v7518 = vpack.c.b16 %v7420, %v7406
  %v7519 = vpack.c.b16 %v7435, %v7421
  %v7520 = vpack.c.b16 %v7436, %v7422
  %v7521 = vpack.c.b16 %v7437, %v7423
  %v7522 = vpack.c.b16 %v7438, %v7424
  %v7523 = vpack.c.b16 %v7439, %v7425
  %v7524 = vpack.c.b16 %v7440, %v7426
  %v7525 = vpack.c.b16 %v7441, %v7427
  %v7526 = vpack.c.b16 %v7442, %v7428
  %v7527 = vpack.c.b16 %v7443, %v7429
  %v7528 = vpack.c.b16 %v7444, %v7430
  %v7529 = vpack.c.b16 %v7445, %v7431
  %v7530 = vpack.c.b16 %v7446, %v7432
  %v7531 = vpack.c.b16 %v7447, %v7433
  %v7532 = vpack.c.b16 %v7448, %v7434
  %7533 = vrot.lane.b32.xlu0 %v7449, 116
  %v7534 = vpop.permute.xlu0 %7533
  %7535 = vrot.lane.b32.xlu0 %v7450, 116
  %v7536 = vpop.permute.xlu0 %7535
  %7537 = vrot.lane.b32.xlu0 %v7451, 116
  %v7538 = vpop.permute.xlu0 %7537
  %7539 = vrot.lane.b32.xlu0 %v7452, 116
  %v7540 = vpop.permute.xlu0 %7539
  %7541 = vrot.lane.b32.xlu0 %v7453, 116
  %v7542 = vpop.permute.xlu0 %7541
  %7543 = vrot.lane.b32.xlu0 %v7454, 116
  %v7544 = vpop.permute.xlu0 %7543
  %7545 = vrot.lane.b32.xlu0 %v7455, 116
  %v7546 = vpop.permute.xlu0 %7545
  %7547 = vrot.lane.b32.xlu0 %v7456, 116
  %v7548 = vpop.permute.xlu0 %7547
  %7549 = vrot.lane.b32.xlu0 %v7457, 116
  %v7550 = vpop.permute.xlu0 %7549
  %7551 = vrot.lane.b32.xlu0 %v7458, 116
  %v7552 = vpop.permute.xlu0 %7551
  %7553 = vrot.lane.b32.xlu0 %v7459, 116
  %v7554 = vpop.permute.xlu0 %7553
  %7555 = vrot.lane.b32.xlu0 %v7460, 116
  %v7556 = vpop.permute.xlu0 %7555
  %7557 = vrot.lane.b32.xlu0 %v7461, 116
  %v7558 = vpop.permute.xlu0 %7557
  %7559 = vrot.lane.b32.xlu0 %v7462, 116
  %v7560 = vpop.permute.xlu0 %7559
  %7561 = vrot.lane.b32.xlu0 %v7463, 116
  %v7562 = vpop.permute.xlu0 %7561
  %7563 = vrot.lane.b32.xlu0 %v7464, 116
  %v7564 = vpop.permute.xlu0 %7563
  %7565 = vrot.lane.b32.xlu0 %v7465, 116
  %v7566 = vpop.permute.xlu0 %7565
  %7567 = vrot.lane.b32.xlu0 %v7466, 116
  %v7568 = vpop.permute.xlu0 %7567
  %7569 = vrot.lane.b32.xlu0 %v7467, 116
  %v7570 = vpop.permute.xlu0 %7569
  %7571 = vrot.lane.b32.xlu0 %v7468, 116
  %v7572 = vpop.permute.xlu0 %7571
  %7573 = vrot.lane.b32.xlu0 %v7469, 116
  %v7574 = vpop.permute.xlu0 %7573
  %7575 = vrot.lane.b32.xlu0 %v7470, 116
  %v7576 = vpop.permute.xlu0 %7575
  %7577 = vrot.lane.b32.xlu0 %v7471, 116
  %v7578 = vpop.permute.xlu0 %7577
  %7579 = vrot.lane.b32.xlu0 %v7472, 116
  %v7580 = vpop.permute.xlu0 %7579
  %7581 = vrot.lane.b32.xlu0 %v7473, 116
  %v7582 = vpop.permute.xlu0 %7581
  %7583 = vrot.lane.b32.xlu0 %v7474, 116
  %v7584 = vpop.permute.xlu0 %7583
  %7585 = vrot.lane.b32.xlu0 %v7475, 116
  %v7586 = vpop.permute.xlu0 %7585
  %7587 = vrot.lane.b32.xlu0 %v7476, 116
  %v7588 = vpop.permute.xlu0 %7587
  %7589 = vrot.lane.b32.xlu0 %v7477, 116
  %v7590 = vpop.permute.xlu0 %7589
  %7591 = vrot.lane.b32.xlu0 %v7478, 116
  %v7592 = vpop.permute.xlu0 %7591
  %7593 = vrot.lane.b32.xlu0 %v7479, 116
  %v7594 = vpop.permute.xlu0 %7593
  %7595 = vrot.lane.b32.xlu0 %v7480, 116
  %v7596 = vpop.permute.xlu0 %7595
  %7597 = vrot.lane.b32.xlu0 %v7481, 116
  %v7598 = vpop.permute.xlu0 %7597
  %7599 = vrot.lane.b32.xlu0 %v7482, 116
  %v7600 = vpop.permute.xlu0 %7599
  %7601 = vrot.lane.b32.xlu0 %v7483, 116
  %v7602 = vpop.permute.xlu0 %7601
  %7603 = vrot.lane.b32.xlu0 %v7484, 116
  %v7604 = vpop.permute.xlu0 %7603
  %7605 = vrot.lane.b32.xlu0 %v7485, 116
  %v7606 = vpop.permute.xlu0 %7605
  %7607 = vrot.lane.b32.xlu0 %v7486, 116
  %v7608 = vpop.permute.xlu0 %7607
  %7609 = vrot.lane.b32.xlu0 %v7487, 116
  %v7610 = vpop.permute.xlu0 %7609
  %7611 = vrot.lane.b32.xlu0 %v7488, 116
  %v7612 = vpop.permute.xlu0 %7611
  %7613 = vrot.lane.b32.xlu0 %v7489, 116
  %v7614 = vpop.permute.xlu0 %7613
  %7615 = vrot.lane.b32.xlu0 %v7490, 116
  %v7616 = vpop.permute.xlu0 %7615
  %7617 = vrot.lane.b32.xlu0 %v7491, 116
  %v7618 = vpop.permute.xlu0 %7617
  %7619 = vrot.lane.b32.xlu0 %v7492, 116
  %v7620 = vpop.permute.xlu0 %7619
  %7621 = vrot.lane.b32.xlu0 %v7493, 116
  %v7622 = vpop.permute.xlu0 %7621
  %7623 = vrot.lane.b32.xlu0 %v7494, 116
  %v7624 = vpop.permute.xlu0 %7623
  %7625 = vrot.lane.b32.xlu0 %v7495, 116
  %v7626 = vpop.permute.xlu0 %7625
  %7627 = vrot.lane.b32.xlu0 %v7496, 116
  %v7628 = vpop.permute.xlu0 %7627
  %7629 = vrot.lane.b32.xlu0 %v7497, 116
  %v7630 = vpop.permute.xlu0 %7629
  %7631 = vrot.lane.b32.xlu0 %v7498, 116
  %v7632 = vpop.permute.xlu0 %7631
  %7633 = vrot.lane.b32.xlu0 %v7499, 116
  %v7634 = vpop.permute.xlu0 %7633
  %7635 = vrot.lane.b32.xlu0 %v7500, 116
  %v7636 = vpop.permute.xlu0 %7635
  %7637 = vrot.lane.b32.xlu0 %v7501, 116
  %v7638 = vpop.permute.xlu0 %7637
  %7639 = vrot.lane.b32.xlu0 %v7502, 116
  %v7640 = vpop.permute.xlu0 %7639
  %7641 = vrot.lane.b32.xlu0 %v7503, 116
  %v7642 = vpop.permute.xlu0 %7641
  %7643 = vrot.lane.b32.xlu0 %v7504, 116
  %v7644 = vpop.permute.xlu0 %7643
  %7645 = vrot.lane.b32.xlu0 %v7505, 116
  %v7646 = vpop.permute.xlu0 %7645
  %7647 = vrot.lane.b32.xlu0 %v7506, 116
  %v7648 = vpop.permute.xlu0 %7647
  %7649 = vrot.lane.b32.xlu0 %v7507, 116
  %v7650 = vpop.permute.xlu0 %7649
  %7651 = vrot.lane.b32.xlu0 %v7508, 116
  %v7652 = vpop.permute.xlu0 %7651
  %7653 = vrot.lane.b32.xlu0 %v7509, 116
  %v7654 = vpop.permute.xlu0 %7653
  %7655 = vrot.lane.b32.xlu0 %v7510, 116
  %v7656 = vpop.permute.xlu0 %7655
  %7657 = vrot.lane.b32.xlu0 %v7511, 116
  %v7658 = vpop.permute.xlu0 %7657
  %7659 = vrot.lane.b32.xlu0 %v7512, 116
  %v7660 = vpop.permute.xlu0 %7659
  %7661 = vrot.lane.b32.xlu0 %v7513, 116
  %v7662 = vpop.permute.xlu0 %7661
  %7663 = vrot.lane.b32.xlu0 %v7514, 116
  %v7664 = vpop.permute.xlu0 %7663
  %7665 = vrot.lane.b32.xlu0 %v7515, 116
  %v7666 = vpop.permute.xlu0 %7665
  %7667 = vrot.lane.b32.xlu0 %v7516, 116
  %v7668 = vpop.permute.xlu0 %7667
  %7669 = vrot.lane.b32.xlu0 %v7517, 116
  %v7670 = vpop.permute.xlu0 %7669
  %7671 = vrot.lane.b32.xlu0 %v7518, 116
  %v7672 = vpop.permute.xlu0 %7671
  %7673 = vrot.lane.b32.xlu0 %v7519, 116
  %v7674 = vpop.permute.xlu0 %7673
  %7675 = vrot.lane.b32.xlu0 %v7520, 116
  %v7676 = vpop.permute.xlu0 %7675
  %7677 = vrot.lane.b32.xlu0 %v7521, 116
  %v7678 = vpop.permute.xlu0 %7677
  %7679 = vrot.lane.b32.xlu0 %v7522, 116
  %v7680 = vpop.permute.xlu0 %7679
  %7681 = vrot.lane.b32.xlu0 %v7523, 116
  %v7682 = vpop.permute.xlu0 %7681
  %7683 = vrot.lane.b32.xlu0 %v7524, 116
  %v7684 = vpop.permute.xlu0 %7683
  %7685 = vrot.lane.b32.xlu0 %v7525, 116
  %v7686 = vpop.permute.xlu0 %7685
  %7687 = vrot.lane.b32.xlu0 %v7526, 116
  %v7688 = vpop.permute.xlu0 %7687
  %7689 = vrot.lane.b32.xlu0 %v7527, 116
  %v7690 = vpop.permute.xlu0 %7689
  %7691 = vrot.lane.b32.xlu0 %v7528, 116
  %v7692 = vpop.permute.xlu0 %7691
  %7693 = vrot.lane.b32.xlu0 %v7529, 116
  %v7694 = vpop.permute.xlu0 %7693
  %7695 = vrot.lane.b32.xlu0 %v7530, 116
  %v7696 = vpop.permute.xlu0 %7695
  %7697 = vrot.lane.b32.xlu0 %v7531, 116
  %v7698 = vpop.permute.xlu0 %7697
  %7699 = vrot.lane.b32.xlu0 %v7532, 116
  %v7700 = vpop.permute.xlu0 %7699
  %v7701 = vsel %vm3423, %v7534, %v7536
  %v7702 = vsel %vm3423, %v7536, %v7538
  %v7703 = vsel %vm3423, %v7538, %v7540
  %v7704 = vsel %vm3423, %v7540, %v7542
  %v7705 = vsel %vm3423, %v7542, %v7544
  %v7706 = vsel %vm3423, %v7544, %v7546
  %v7707 = vsel %vm3423, %v7546, %v7548
  %v7708 = vsel %vm3423, %v7548, %v7550
  %v7709 = vsel %vm3423, %v7550, %v7552
  %v7710 = vsel %vm3423, %v7552, %v7554
  %v7711 = vsel %vm3423, %v7554, %v7556
  %v7712 = vsel %vm3423, %v7556, %v7558
  %v7713 = vsel %vm3423, %v7558, %v7560
  %v7714 = vsel %vm3423, %v7562, %v7564
  %v7715 = vsel %vm3423, %v7564, %v7566
  %v7716 = vsel %vm3423, %v7566, %v7568
  %v7717 = vsel %vm3423, %v7568, %v7570
  %v7718 = vsel %vm3423, %v7570, %v7572
  %v7719 = vsel %vm3423, %v7572, %v7574
  %v7720 = vsel %vm3423, %v7574, %v7576
  %v7721 = vsel %vm3423, %v7576, %v7578
  %v7722 = vsel %vm3423, %v7578, %v7580
  %v7723 = vsel %vm3423, %v7580, %v7582
  %v7724 = vsel %vm3423, %v7582, %v7584
  %v7725 = vsel %vm3423, %v7584, %v7586
  %v7726 = vsel %vm3423, %v7586, %v7588
  %v7727 = vsel %vm3423, %v7590, %v7592
  %v7728 = vsel %vm3423, %v7592, %v7594
  %v7729 = vsel %vm3423, %v7594, %v7596
  %v7730 = vsel %vm3423, %v7596, %v7598
  %v7731 = vsel %vm3423, %v7598, %v7600
  %v7732 = vsel %vm3423, %v7600, %v7602
  %v7733 = vsel %vm3423, %v7602, %v7604
  %v7734 = vsel %vm3423, %v7604, %v7606
  %v7735 = vsel %vm3423, %v7606, %v7608
  %v7736 = vsel %vm3423, %v7608, %v7610
  %v7737 = vsel %vm3423, %v7610, %v7612
  %v7738 = vsel %vm3423, %v7612, %v7614
  %v7739 = vsel %vm3423, %v7614, %v7616
  %v7740 = vsel %vm3423, %v7618, %v7620
  %v7741 = vsel %vm3423, %v7620, %v7622
  %v7742 = vsel %vm3423, %v7622, %v7624
  %v7743 = vsel %vm3423, %v7624, %v7626
  %v7744 = vsel %vm3423, %v7626, %v7628
  %v7745 = vsel %vm3423, %v7628, %v7630
  %v7746 = vsel %vm3423, %v7630, %v7632
  %v7747 = vsel %vm3423, %v7632, %v7634
  %v7748 = vsel %vm3423, %v7634, %v7636
  %v7749 = vsel %vm3423, %v7636, %v7638
  %v7750 = vsel %vm3423, %v7638, %v7640
  %v7751 = vsel %vm3423, %v7640, %v7642
  %v7752 = vsel %vm3423, %v7642, %v7644
  %v7753 = vsel %vm3423, %v7646, %v7648
  %v7754 = vsel %vm3423, %v7648, %v7650
  %v7755 = vsel %vm3423, %v7650, %v7652
  %v7756 = vsel %vm3423, %v7652, %v7654
  %v7757 = vsel %vm3423, %v7654, %v7656
  %v7758 = vsel %vm3423, %v7656, %v7658
  %v7759 = vsel %vm3423, %v7658, %v7660
  %v7760 = vsel %vm3423, %v7660, %v7662
  %v7761 = vsel %vm3423, %v7662, %v7664
  %v7762 = vsel %vm3423, %v7664, %v7666
  %v7763 = vsel %vm3423, %v7666, %v7668
  %v7764 = vsel %vm3423, %v7668, %v7670
  %v7765 = vsel %vm3423, %v7670, %v7672
  %v7766 = vsel %vm3423, %v7674, %v7676
  %v7767 = vsel %vm3423, %v7676, %v7678
  %v7768 = vsel %vm3423, %v7678, %v7680
  %v7769 = vsel %vm3423, %v7680, %v7682
  %v7770 = vsel %vm3423, %v7682, %v7684
  %v7771 = vsel %vm3423, %v7684, %v7686
  %v7772 = vsel %vm3423, %v7686, %v7688
  %v7773 = vsel %vm3423, %v7688, %v7690
  %v7774 = vsel %vm3423, %v7690, %v7692
  %v7775 = vsel %vm3423, %v7692, %v7694
  %v7776 = vsel %vm3423, %v7694, %v7696
  %v7777 = vsel %vm3423, %v7696, %v7698
  %v7778 = vsel %vm3423, %v7698, %v7700
  %7857 = vmatprep.subr.bf16.mxu0 %v7702
  %7858 = vmatpush1.bf16.msra.mxu0 %v7701
  %7859 = vmatprep.subr.bf16.mxu0 %v7715
  %7860 = vmatpush1.bf16.msra.mxu0 %v7714
  %7861 = vmatprep.subr.bf16.mxu0 %v7728
  %7862 = vmatpush1.bf16.msra.mxu0 %v7727
  %7863 = vmatprep.subr.bf16.mxu0 %v7741
  %7864 = vmatpush1.bf16.msra.mxu0 %v7740
  %7865 = vmatprep.subr.bf16.mxu0 %v7754
  %7866 = vmatpush1.bf16.msra.mxu0 %v7753
  %7867 = vmatprep.subr.bf16.mxu0 %v7767
  %7868 = vmatpush1.bf16.msra.mxu0 %v7766
  %7869 = vmatprep.subr.bf16.mxu0 0
  %7870 = vmatpush1.bf16.msra.mxu0 0
  %7871 = vmatprep.subr.bf16.mxu0 0
  %7872 = vmatpush1.bf16.msra.mxu0 0
  %7873 = vmatprep.subr.bf16.mxu0 0
  %7874 = vmatpush1.bf16.msra.mxu0 0
  %7875 = vmatprep.subr.bf16.mxu0 0
  %7876 = vmatpush1.bf16.msra.mxu0 0
  %7877 = vmatprep.subr.bf16.mxu0 0
  %7878 = vmatpush1.bf16.msra.mxu0 0
  %7879 = vmatprep.subr.bf16.mxu0 0
  %7880 = vmatpush1.bf16.msra.mxu0 0
  %7881 = vmatprep.subr.bf16.mxu0 0
  %7882 = vmatpush1.bf16.msra.mxu0 0
  %7883 = vmatprep.subr.bf16.mxu0 0
  %7884 = vmatpush1.bf16.msra.mxu0 0
  %7885 = vmatprep.subr.bf16.mxu0 0
  %7886 = vmatpush1.bf16.msra.mxu0 0
  %7887 = vmatprep.subr.bf16.mxu0 0
  %7888 = vmatpush1.bf16.msra.mxu0 0
  %7889 = vmatprep.mubr.bf16.mxu0 0
  %7890 = vmatmul.mubr.bf16.gmra.mrb[0].mxu0 %v3581
  %v7891 = vpop.f32.mrb[0].mxu0
  %v7892 = vadd.f32 0.0, %v7891
  %v7893 = vpop.f32.mrb[0].mxu0
  %v7894 = vadd.f32 0.0, %v7893
  %v7895 = vpop.f32.mrb[0].mxu0
  %v7896 = vadd.f32 0.0, %v7895
  %v7897 = vpop.f32.mrb[0].mxu0
  %v7898 = vadd.f32 0.0, %v7897
  %7899 = vdwg.mxu0
  %7900 = vmatprep.subr.bf16.mxu0 %v7704
  %7901 = vmatpush1.bf16.msra.mxu0 %v7703
  %7902 = vmatprep.subr.bf16.mxu0 %v7717
  %7903 = vmatpush1.bf16.msra.mxu0 %v7716
  %7904 = vmatprep.subr.bf16.mxu0 %v7730
  %7905 = vmatpush1.bf16.msra.mxu0 %v7729
  %7906 = vmatprep.subr.bf16.mxu0 %v7743
  %7907 = vmatpush1.bf16.msra.mxu0 %v7742
  %7908 = vmatprep.subr.bf16.mxu0 %v7756
  %7909 = vmatpush1.bf16.msra.mxu0 %v7755
  %7910 = vmatprep.subr.bf16.mxu0 %v7769
  %7911 = vmatpush1.bf16.msra.mxu0 %v7768
  %7912 = vmatprep.subr.bf16.mxu0 0
  %7913 = vmatpush1.bf16.msra.mxu0 0
  %7914 = vmatprep.subr.bf16.mxu0 0
  %7915 = vmatpush1.bf16.msra.mxu0 0
  %7916 = vmatprep.subr.bf16.mxu0 0
  %7917 = vmatpush1.bf16.msra.mxu0 0
  %7918 = vmatprep.subr.bf16.mxu0 0
  %7919 = vmatpush1.bf16.msra.mxu0 0
  %7920 = vmatprep.subr.bf16.mxu0 0
  %7921 = vmatpush1.bf16.msra.mxu0 0
  %7922 = vmatprep.subr.bf16.mxu0 0
  %7923 = vmatpush1.bf16.msra.mxu0 0
  %7924 = vmatprep.subr.bf16.mxu0 0
  %7925 = vmatpush1.bf16.msra.mxu0 0
  %7926 = vmatprep.subr.bf16.mxu0 0
  %7927 = vmatpush1.bf16.msra.mxu0 0
  %7928 = vmatprep.subr.bf16.mxu0 0
  %7929 = vmatpush1.bf16.msra.mxu0 0
  %7930 = vmatprep.subr.bf16.mxu0 0
  %7931 = vmatpush1.bf16.msra.mxu0 0
  %7932 = vmatprep.mubr.bf16.mxu0 0
  %7933 = vmatmul.mubr.bf16.gmra.mrb[0].mxu0 %v3581
  %v7934 = vpop.f32.mrb[0].mxu0
  %v7935 = vadd.f32 0.0, %v7934
  %v7936 = vpop.f32.mrb[0].mxu0
  %v7937 = vadd.f32 0.0, %v7936
  %v7938 = vpop.f32.mrb[0].mxu0
  %v7939 = vadd.f32 0.0, %v7938
  %v7940 = vpop.f32.mrb[0].mxu0
  %v7941 = vadd.f32 0.0, %v7940
  %7942 = vdwg.mxu0
  %7943 = vmatprep.subr.bf16.mxu0 %v7706
  %7944 = vmatpush1.bf16.msra.mxu0 %v7705
  %7945 = vmatprep.subr.bf16.mxu0 %v7719
  %7946 = vmatpush1.bf16.msra.mxu0 %v7718
  %7947 = vmatprep.subr.bf16.mxu0 %v7732
  %7948 = vmatpush1.bf16.msra.mxu0 %v7731
  %7949 = vmatprep.subr.bf16.mxu0 %v7745
  %7950 = vmatpush1.bf16.msra.mxu0 %v7744
  %7951 = vmatprep.subr.bf16.mxu0 %v7758
  %7952 = vmatpush1.bf16.msra.mxu0 %v7757
  %7953 = vmatprep.subr.bf16.mxu0 %v7771
  %7954 = vmatpush1.bf16.msra.mxu0 %v7770
  %7955 = vmatprep.subr.bf16.mxu0 0
  %7956 = vmatpush1.bf16.msra.mxu0 0
  %7957 = vmatprep.subr.bf16.mxu0 0
  %7958 = vmatpush1.bf16.msra.mxu0 0
  %7959 = vmatprep.subr.bf16.mxu0 0
  %7960 = vmatpush1.bf16.msra.mxu0 0
  %7961 = vmatprep.subr.bf16.mxu0 0
  %7962 = vmatpush1.bf16.msra.mxu0 0
  %7963 = vmatprep.subr.bf16.mxu0 0
  %7964 = vmatpush1.bf16.msra.mxu0 0
  %7965 = vmatprep.subr.bf16.mxu0 0
  %7966 = vmatpush1.bf16.msra.mxu0 0
  %7967 = vmatprep.subr.bf16.mxu0 0
  %7968 = vmatpush1.bf16.msra.mxu0 0
  %7969 = vmatprep.subr.bf16.mxu0 0
  %7970 = vmatpush1.bf16.msra.mxu0 0
  %7971 = vmatprep.subr.bf16.mxu0 0
  %7972 = vmatpush1.bf16.msra.mxu0 0
  %7973 = vmatprep.subr.bf16.mxu0 0
  %7974 = vmatpush1.bf16.msra.mxu0 0
  %7975 = vmatprep.mubr.bf16.mxu0 0
  %7976 = vmatmul.mubr.bf16.gmra.mrb[0].mxu0 %v3581
  %v7977 = vpop.f32.mrb[0].mxu0
  %v7978 = vadd.f32 0.0, %v7977
  %v7979 = vpop.f32.mrb[0].mxu0
  %v7980 = vadd.f32 0.0, %v7979
  %v7981 = vpop.f32.mrb[0].mxu0
  %v7982 = vadd.f32 0.0, %v7981
  %v7983 = vpop.f32.mrb[0].mxu0
  %v7984 = vadd.f32 0.0, %v7983
  %7985 = vdwg.mxu0
  %7986 = vmatprep.subr.bf16.mxu0 %v7708
  %7987 = vmatpush1.bf16.msra.mxu0 %v7707
  %7988 = vmatprep.subr.bf16.mxu0 %v7721
  %7989 = vmatpush1.bf16.msra.mxu0 %v7720
  %7990 = vmatprep.subr.bf16.mxu0 %v7734
  %7991 = vmatpush1.bf16.msra.mxu0 %v7733
  %7992 = vmatprep.subr.bf16.mxu0 %v7747
  %7993 = vmatpush1.bf16.msra.mxu0 %v7746
  %7994 = vmatprep.subr.bf16.mxu0 %v7760
  %7995 = vmatpush1.bf16.msra.mxu0 %v7759
  %7996 = vmatprep.subr.bf16.mxu0 %v7773
  %7997 = vmatpush1.bf16.msra.mxu0 %v7772
  %7998 = vmatprep.subr.bf16.mxu0 0
  %7999 = vmatpush1.bf16.msra.mxu0 0
  %8000 = vmatprep.subr.bf16.mxu0 0
  %8001 = vmatpush1.bf16.msra.mxu0 0
  %8002 = vmatprep.subr.bf16.mxu0 0
  %8003 = vmatpush1.bf16.msra.mxu0 0
  %8004 = vmatprep.subr.bf16.mxu0 0
  %8005 = vmatpush1.bf16.msra.mxu0 0
  %8006 = vmatprep.subr.bf16.mxu0 0
  %8007 = vmatpush1.bf16.msra.mxu0 0
  %8008 = vmatprep.subr.bf16.mxu0 0
  %8009 = vmatpush1.bf16.msra.mxu0 0
  %8010 = vmatprep.subr.bf16.mxu0 0
  %8011 = vmatpush1.bf16.msra.mxu0 0
  %8012 = vmatprep.subr.bf16.mxu0 0
  %8013 = vmatpush1.bf16.msra.mxu0 0
  %8014 = vmatprep.subr.bf16.mxu0 0
  %8015 = vmatpush1.bf16.msra.mxu0 0
  %8016 = vmatprep.subr.bf16.mxu0 0
  %8017 = vmatpush1.bf16.msra.mxu0 0
  %8018 = vmatprep.mubr.bf16.mxu0 0
  %8019 = vmatmul.mubr.bf16.gmra.mrb[0].mxu0 %v3581
  %v8020 = vpop.f32.mrb[0].mxu0
  %v8021 = vadd.f32 0.0, %v8020
  %v8022 = vpop.f32.mrb[0].mxu0
  %v8023 = vadd.f32 0.0, %v8022
  %v8024 = vpop.f32.mrb[0].mxu0
  %v8025 = vadd.f32 0.0, %v8024
  %v8026 = vpop.f32.mrb[0].mxu0
  %v8027 = vadd.f32 0.0, %v8026
  %8028 = vdwg.mxu0
  %8029 = vmatprep.subr.bf16.mxu0 %v7710
  %8030 = vmatpush1.bf16.msra.mxu0 %v7709
  %8031 = vmatprep.subr.bf16.mxu0 %v7723
  %8032 = vmatpush1.bf16.msra.mxu0 %v7722
  %8033 = vmatprep.subr.bf16.mxu0 %v7736
  %8034 = vmatpush1.bf16.msra.mxu0 %v7735
  %8035 = vmatprep.subr.bf16.mxu0 %v7749
  %8036 = vmatpush1.bf16.msra.mxu0 %v7748
  %8037 = vmatprep.subr.bf16.mxu0 %v7762
  %8038 = vmatpush1.bf16.msra.mxu0 %v7761
  %8039 = vmatprep.subr.bf16.mxu0 %v7775
  %8040 = vmatpush1.bf16.msra.mxu0 %v7774
  %8041 = vmatprep.subr.bf16.mxu0 0
  %8042 = vmatpush1.bf16.msra.mxu0 0
  %8043 = vmatprep.subr.bf16.mxu0 0
  %8044 = vmatpush1.bf16.msra.mxu0 0
  %8045 = vmatprep.subr.bf16.mxu0 0
  %8046 = vmatpush1.bf16.msra.mxu0 0
  %8047 = vmatprep.subr.bf16.mxu0 0
  %8048 = vmatpush1.bf16.msra.mxu0 0
  %8049 = vmatprep.subr.bf16.mxu0 0
  %8050 = vmatpush1.bf16.msra.mxu0 0
  %8051 = vmatprep.subr.bf16.mxu0 0
  %8052 = vmatpush1.bf16.msra.mxu0 0
  %8053 = vmatprep.subr.bf16.mxu0 0
  %8054 = vmatpush1.bf16.msra.mxu0 0
  %8055 = vmatprep.subr.bf16.mxu0 0
  %8056 = vmatpush1.bf16.msra.mxu0 0
  %8057 = vmatprep.subr.bf16.mxu0 0
  %8058 = vmatpush1.bf16.msra.mxu0 0
  %8059 = vmatprep.subr.bf16.mxu0 0
  %8060 = vmatpush1.bf16.msra.mxu0 0
  %8061 = vmatprep.mubr.bf16.mxu0 0
  %8062 = vmatmul.mubr.bf16.gmra.mrb[0].mxu0 %v3581
  %v8063 = vpop.f32.mrb[0].mxu0
  %v8064 = vadd.f32 0.0, %v8063
  %v8065 = vpop.f32.mrb[0].mxu0
  %v8066 = vadd.f32 0.0, %v8065
  %v8067 = vpop.f32.mrb[0].mxu0
  %v8068 = vadd.f32 0.0, %v8067
  %v8069 = vpop.f32.mrb[0].mxu0
  %v8070 = vadd.f32 0.0, %v8069
  %8071 = vdwg.mxu0
  %8072 = vmatprep.subr.bf16.mxu0 %v7712
  %8073 = vmatpush1.bf16.msra.mxu0 %v7711
  %8074 = vmatprep.subr.bf16.mxu0 %v7725
  %8075 = vmatpush1.bf16.msra.mxu0 %v7724
  %8076 = vmatprep.subr.bf16.mxu0 %v7738
  %8077 = vmatpush1.bf16.msra.mxu0 %v7737
  %8078 = vmatprep.subr.bf16.mxu0 %v7751
  %8079 = vmatpush1.bf16.msra.mxu0 %v7750
  %8080 = vmatprep.subr.bf16.mxu0 %v7764
  %8081 = vmatpush1.bf16.msra.mxu0 %v7763
  %8082 = vmatprep.subr.bf16.mxu0 %v7777
  %8083 = vmatpush1.bf16.msra.mxu0 %v7776
  %8084 = vmatprep.subr.bf16.mxu0 0
  %8085 = vmatpush1.bf16.msra.mxu0 0
  %8086 = vmatprep.subr.bf16.mxu0 0
  %8087 = vmatpush1.bf16.msra.mxu0 0
  %8088 = vmatprep.subr.bf16.mxu0 0
  %8089 = vmatpush1.bf16.msra.mxu0 0
  %8090 = vmatprep.subr.bf16.mxu0 0
  %8091 = vmatpush1.bf16.msra.mxu0 0
  %8092 = vmatprep.subr.bf16.mxu0 0
  %8093 = vmatpush1.bf16.msra.mxu0 0
  %8094 = vmatprep.subr.bf16.mxu0 0
  %8095 = vmatpush1.bf16.msra.mxu0 0
  %8096 = vmatprep.subr.bf16.mxu0 0
  %8097 = vmatpush1.bf16.msra.mxu0 0
  %8098 = vmatprep.subr.bf16.mxu0 0
  %8099 = vmatpush1.bf16.msra.mxu0 0
  %8100 = vmatprep.subr.bf16.mxu0 0
  %8101 = vmatpush1.bf16.msra.mxu0 0
  %8102 = vmatprep.subr.bf16.mxu0 0
  %8103 = vmatpush1.bf16.msra.mxu0 0
  %8104 = vmatprep.mubr.bf16.mxu0 0
  %8105 = vmatmul.mubr.bf16.gmra.mrb[0].mxu0 %v3581
  %v8106 = vpop.f32.mrb[0].mxu0
  %v8107 = vadd.f32 0.0, %v8106
  %v8108 = vpop.f32.mrb[0].mxu0
  %v8109 = vadd.f32 0.0, %v8108
  %v8110 = vpop.f32.mrb[0].mxu0
  %v8111 = vadd.f32 0.0, %v8110
  %v8112 = vpop.f32.mrb[0].mxu0
  %v8113 = vadd.f32 0.0, %v8112
  %8114 = vdwg.mxu0
  %8115 = vmatprep.subr.bf16.mxu0 0
  %8116 = vmatpush1.bf16.msra.mxu0 %v7713
  %8117 = vmatprep.subr.bf16.mxu0 0
  %8118 = vmatpush1.bf16.msra.mxu0 %v7726
  %8119 = vmatprep.subr.bf16.mxu0 0
  %8120 = vmatpush1.bf16.msra.mxu0 %v7739
  %8121 = vmatprep.subr.bf16.mxu0 0
  %8122 = vmatpush1.bf16.msra.mxu0 %v7752
  %8123 = vmatprep.subr.bf16.mxu0 0
  %8124 = vmatpush1.bf16.msra.mxu0 %v7765
  %8125 = vmatprep.subr.bf16.mxu0 0
  %8126 = vmatpush1.bf16.msra.mxu0 %v7778
  %8127 = vmatprep.subr.bf16.mxu0 0
  %8128 = vmatpush1.bf16.msra.mxu0 0
  %8129 = vmatprep.subr.bf16.mxu0 0
  %8130 = vmatpush1.bf16.msra.mxu0 0
  %8131 = vmatprep.subr.bf16.mxu0 0
  %8132 = vmatpush1.bf16.msra.mxu0 0
  %8133 = vmatprep.subr.bf16.mxu0 0
  %8134 = vmatpush1.bf16.msra.mxu0 0
  %8135 = vmatprep.subr.bf16.mxu0 0
  %8136 = vmatpush1.bf16.msra.mxu0 0
  %8137 = vmatprep.subr.bf16.mxu0 0
  %8138 = vmatpush1.bf16.msra.mxu0 0
  %8139 = vmatprep.subr.bf16.mxu0 0
  %8140 = vmatpush1.bf16.msra.mxu0 0
  %8141 = vmatprep.subr.bf16.mxu0 0
  %8142 = vmatpush1.bf16.msra.mxu0 0
  %8143 = vmatprep.subr.bf16.mxu0 0
  %8144 = vmatpush1.bf16.msra.mxu0 0
  %8145 = vmatprep.subr.bf16.mxu0 0
  %8146 = vmatpush1.bf16.msra.mxu0 0
  %8147 = vmatprep.mubr.bf16.mxu0 0
  %8148 = vmatmul.mubr.bf16.gmra.mrb[0].mxu0 %v3581
  %v8149 = vpop.f32.mrb[0].mxu0
  %v8150 = vadd.f32 0.0, %v8149
  %v8151 = vpop.f32.mrb[0].mxu0
  %v8152 = vpop.f32.mrb[0].mxu0
  %v8153 = vadd.f32 0.0, %v8152
  %v8154 = vpop.f32.mrb[0].mxu0
  %8155 = vdwg.mxu0
  %v8156 = vadd.f32 %v7087, %v7892
  %v8157 = vadd.f32 %v7088, %v7894
  %v8158 = vadd.f32 %v7089, %v7935
  %v8159 = vadd.f32 %v7090, %v7937
  %v8160 = vadd.f32 %v7091, %v7978
  %v8161 = vadd.f32 %v7092, %v7980
  %v8162 = vadd.f32 %v7093, %v8021
  %v8163 = vadd.f32 %v7094, %v8023
  %v8164 = vadd.f32 %v7095, %v8064
  %v8165 = vadd.f32 %v7096, %v8066
  %v8166 = vadd.f32 %v7097, %v8107
  %v8167 = vadd.f32 %v7098, %v8109
  %v8168 = vadd.f32 %v7099, %v8150
  %v8169 = vadd.f32 %v7100, %v7896
  %v8170 = vadd.f32 %v7101, %v7898
  %v8171 = vadd.f32 %v7102, %v7939
  %v8172 = vadd.f32 %v7103, %v7941
  %v8173 = vadd.f32 %v7104, %v7982
  %v8174 = vadd.f32 %v7105, %v7984
  %v8175 = vadd.f32 %v7106, %v8025
  %v8176 = vadd.f32 %v7107, %v8027
  %v8177 = vadd.f32 %v7108, %v8068
  %v8178 = vadd.f32 %v7109, %v8070
  %v8179 = vadd.f32 %v7110, %v8111
  %v8180 = vadd.f32 %v7111, %v8113
  %v8181 = vadd.f32 %v7112, %v8153
  %v8182 = vadd.f32 %v8156, %v3913
  %v8183 = vadd.f32 %v8157, %v3913
  %v8184 = vadd.f32 %v8158, %v3913
  %v8185 = vadd.f32 %v8159, %v3913
  %v8186 = vadd.f32 %v8160, %v3913
  %v8187 = vadd.f32 %v8161, %v3913
  %v8188 = vadd.f32 %v8162, %v3913
  %v8189 = vadd.f32 %v8163, %v3913
  %v8190 = vadd.f32 %v8164, %v3913
  %v8191 = vadd.f32 %v8165, %v3913
  %v8192 = vadd.f32 %v8166, %v3913
  %v8193 = vadd.f32 %v8167, %v3913
  %v8194 = vadd.f32 %v8168, %v3913
  %v8195 = vadd.f32 %v8169, %v3918
  %v8196 = vadd.f32 %v8170, %v3918
  %v8197 = vadd.f32 %v8171, %v3918
  %v8198 = vadd.f32 %v8172, %v3918
  %v8199 = vadd.f32 %v8173, %v3918
  %v8200 = vadd.f32 %v8174, %v3918
  %v8201 = vadd.f32 %v8175, %v3918
  %v8202 = vadd.f32 %v8176, %v3918
  %v8203 = vadd.f32 %v8177, %v3918
  %v8204 = vadd.f32 %v8178, %v3918
  %v8205 = vadd.f32 %v8179, %v3918
  %v8206 = vadd.f32 %v8180, %v3918
  %v8207 = vadd.f32 %v8181, %v3918
  %vm8208 = vcmp.gt.f32.partialorder %v8182, 0.0
  %vm8209 = vcmp.gt.f32.partialorder %v8183, 0.0
  %vm8210 = vcmp.gt.f32.partialorder %v8184, 0.0
  %vm8211 = vcmp.gt.f32.partialorder %v8185, 0.0
  %vm8212 = vcmp.gt.f32.partialorder %v8186, 0.0
  %vm8213 = vcmp.gt.f32.partialorder %v8187, 0.0
  %vm8214 = vcmp.gt.f32.partialorder %v8188, 0.0
  %vm8215 = vcmp.gt.f32.partialorder %v8189, 0.0
  %vm8216 = vcmp.gt.f32.partialorder %v8190, 0.0
  %vm8217 = vcmp.gt.f32.partialorder %v8191, 0.0
  %vm8218 = vcmp.gt.f32.partialorder %v8192, 0.0
  %vm8219 = vcmp.gt.f32.partialorder %v8193, 0.0
  %vm8220 = vcmp.gt.f32.partialorder %v8194, 0.0
  %vm8221 = vcmp.gt.f32.partialorder %v8195, 0.0
  %vm8222 = vcmp.gt.f32.partialorder %v8196, 0.0
  %vm8223 = vcmp.gt.f32.partialorder %v8197, 0.0
  %vm8224 = vcmp.gt.f32.partialorder %v8198, 0.0
  %vm8225 = vcmp.gt.f32.partialorder %v8199, 0.0
  %vm8226 = vcmp.gt.f32.partialorder %v8200, 0.0
  %vm8227 = vcmp.gt.f32.partialorder %v8201, 0.0
  %vm8228 = vcmp.gt.f32.partialorder %v8202, 0.0
  %vm8229 = vcmp.gt.f32.partialorder %v8203, 0.0
  %vm8230 = vcmp.gt.f32.partialorder %v8204, 0.0
  %vm8231 = vcmp.gt.f32.partialorder %v8205, 0.0
  %vm8232 = vcmp.gt.f32.partialorder %v8206, 0.0
  %vm8233 = vcmp.gt.f32.partialorder %v8207, 0.0
  %v8234 = vmul.f32 %v8182, -0.9
  %v8235 = vmul.f32 %v8183, -0.9
  %v8236 = vmul.f32 %v8184, -0.9
  %v8237 = vmul.f32 %v8185, -0.9
  %v8238 = vmul.f32 %v8186, -0.9
  %v8239 = vmul.f32 %v8187, -0.9
  %v8240 = vmul.f32 %v8188, -0.9
  %v8241 = vmul.f32 %v8189, -0.9
  %v8242 = vmul.f32 %v8190, -0.9
  %v8243 = vmul.f32 %v8191, -0.9
  %v8244 = vmul.f32 %v8192, -0.9
  %v8245 = vmul.f32 %v8193, -0.9
  %v8246 = vmul.f32 %v8194, -0.9
  %v8247 = vmul.f32 %v8195, -0.9
  %v8248 = vmul.f32 %v8196, -0.9
  %v8249 = vmul.f32 %v8197, -0.9
  %v8250 = vmul.f32 %v8198, -0.9
  %v8251 = vmul.f32 %v8199, -0.9
  %v8252 = vmul.f32 %v8200, -0.9
  %v8253 = vmul.f32 %v8201, -0.9
  %v8254 = vmul.f32 %v8202, -0.9
  %v8255 = vmul.f32 %v8203, -0.9
  %v8256 = vmul.f32 %v8204, -0.9
  %v8257 = vmul.f32 %v8205, -0.9
  %v8258 = vmul.f32 %v8206, -0.9
  %v8259 = vmul.f32 %v8207, -0.9
  %v8260 = vsel %vm8208, %v8182, %v8234
  %v8261 = vsel %vm8209, %v8183, %v8235
  %v8262 = vsel %vm8210, %v8184, %v8236
  %v8263 = vsel %vm8211, %v8185, %v8237
  %v8264 = vsel %vm8212, %v8186, %v8238
  %v8265 = vsel %vm8213, %v8187, %v8239
  %v8266 = vsel %vm8214, %v8188, %v8240
  %v8267 = vsel %vm8215, %v8189, %v8241
  %v8268 = vsel %vm8216, %v8190, %v8242
  %v8269 = vsel %vm8217, %v8191, %v8243
  %v8270 = vsel %vm8218, %v8192, %v8244
  %v8271 = vsel %vm8219, %v8193, %v8245
  %v8272 = vsel %vm8220, %v8194, %v8246
  %v8273 = vsel %vm8221, %v8195, %v8247
  %v8274 = vsel %vm8222, %v8196, %v8248
  %v8275 = vsel %vm8223, %v8197, %v8249
  %v8276 = vsel %vm8224, %v8198, %v8250
  %v8277 = vsel %vm8225, %v8199, %v8251
  %v8278 = vsel %vm8226, %v8200, %v8252
  %v8279 = vsel %vm8227, %v8201, %v8253
  %v8280 = vsel %vm8228, %v8202, %v8254
  %v8281 = vsel %vm8229, %v8203, %v8255
  %v8282 = vsel %vm8230, %v8204, %v8256
  %v8283 = vsel %vm8231, %v8205, %v8257
  %v8284 = vsel %vm8232, %v8206, %v8258
  %v8285 = vsel %vm8233, %v8207, %v8259
  %vm8286 = vcmp.gt.f32.partialorder %v8260, 0.0
  %vm8287 = vcmp.gt.f32.partialorder %v8261, 0.0
  %vm8288 = vcmp.gt.f32.partialorder %v8262, 0.0
  %vm8289 = vcmp.gt.f32.partialorder %v8263, 0.0
  %vm8290 = vcmp.gt.f32.partialorder %v8264, 0.0
  %vm8291 = vcmp.gt.f32.partialorder %v8265, 0.0
  %vm8292 = vcmp.gt.f32.partialorder %v8266, 0.0
  %vm8293 = vcmp.gt.f32.partialorder %v8267, 0.0
  %vm8294 = vcmp.gt.f32.partialorder %v8268, 0.0
  %vm8295 = vcmp.gt.f32.partialorder %v8269, 0.0
  %vm8296 = vcmp.gt.f32.partialorder %v8270, 0.0
  %vm8297 = vcmp.gt.f32.partialorder %v8271, 0.0
  %vm8298 = vcmp.gt.f32.partialorder %v8272, 0.0
  %vm8299 = vcmp.gt.f32.partialorder %v8273, 0.0
  %vm8300 = vcmp.gt.f32.partialorder %v8274, 0.0
  %vm8301 = vcmp.gt.f32.partialorder %v8275, 0.0
  %vm8302 = vcmp.gt.f32.partialorder %v8276, 0.0
  %vm8303 = vcmp.gt.f32.partialorder %v8277, 0.0
  %vm8304 = vcmp.gt.f32.partialorder %v8278, 0.0
  %vm8305 = vcmp.gt.f32.partialorder %v8279, 0.0
  %vm8306 = vcmp.gt.f32.partialorder %v8280, 0.0
  %vm8307 = vcmp.gt.f32.partialorder %v8281, 0.0
  %vm8308 = vcmp.gt.f32.partialorder %v8282, 0.0
  %vm8309 = vcmp.gt.f32.partialorder %v8283, 0.0
  %vm8310 = vcmp.gt.f32.partialorder %v8284, 0.0
  %vm8311 = vcmp.gt.f32.partialorder %v8285, 0.0
  %v8312 = vsel %vm8286, %v8260, 0.0
  %v8313 = vsel %vm8287, %v8261, 0.0
  %v8314 = vsel %vm8288, %v8262, 0.0
  %v8315 = vsel %vm8289, %v8263, 0.0
  %v8316 = vsel %vm8290, %v8264, 0.0
  %v8317 = vsel %vm8291, %v8265, 0.0
  %v8318 = vsel %vm8292, %v8266, 0.0
  %v8319 = vsel %vm8293, %v8267, 0.0
  %v8320 = vsel %vm8294, %v8268, 0.0
  %v8321 = vsel %vm8295, %v8269, 0.0
  %v8322 = vsel %vm8296, %v8270, 0.0
  %v8323 = vsel %vm8297, %v8271, 0.0
  %v8324 = vsel %vm8298, %v8272, 0.0
  %v8325 = vsel %vm8299, %v8273, 0.0
  %v8326 = vsel %vm8300, %v8274, 0.0
  %v8327 = vsel %vm8301, %v8275, 0.0
  %v8328 = vsel %vm8302, %v8276, 0.0
  %v8329 = vsel %vm8303, %v8277, 0.0
  %v8330 = vsel %vm8304, %v8278, 0.0
  %v8331 = vsel %vm8305, %v8279, 0.0
  %v8332 = vsel %vm8306, %v8280, 0.0
  %v8333 = vsel %vm8307, %v8281, 0.0
  %v8334 = vsel %vm8308, %v8282, 0.0
  %v8335 = vsel %vm8309, %v8283, 0.0
  %v8336 = vsel %vm8310, %v8284, 0.0
  %v8337 = vsel %vm8311, %v8285, 0.0
  %v8338 = vmul.f32 %v8312, %v4081
  %v8339 = vmul.f32 %v8313, %v4085
  %v8340 = vmul.f32 %v8314, %v4089
  %v8341 = vmul.f32 %v8315, %v4093
  %v8342 = vmul.f32 %v8316, %v4097
  %v8343 = vmul.f32 %v8317, %v4101
  %v8344 = vmul.f32 %v8318, %v4105
  %v8345 = vmul.f32 %v8319, %v4109
  %v8346 = vmul.f32 %v8320, %v4113
  %v8347 = vmul.f32 %v8321, %v4117
  %v8348 = vmul.f32 %v8322, %v4121
  %v8349 = vmul.f32 %v8323, %v4125
  %v8350 = vmul.f32 %v8324, %v4129
  %v8351 = vmul.f32 %v8325, %v4081
  %v8352 = vmul.f32 %v8326, %v4085
  %v8353 = vmul.f32 %v8327, %v4089
  %v8354 = vmul.f32 %v8328, %v4093
  %v8355 = vmul.f32 %v8329, %v4097
  %v8356 = vmul.f32 %v8330, %v4101
  %v8357 = vmul.f32 %v8331, %v4105
  %v8358 = vmul.f32 %v8332, %v4109
  %v8359 = vmul.f32 %v8333, %v4113
  %v8360 = vmul.f32 %v8334, %v4117
  %v8361 = vmul.f32 %v8335, %v4121
  %v8362 = vmul.f32 %v8336, %v4125
  %v8363 = vmul.f32 %v8337, %v4129
  %v8364 = vadd.f32 %v8338, %v8339
  %v8365 = vadd.f32 %v8364, %v8340
  %v8366 = vadd.f32 %v8365, %v8341
  %v8367 = vadd.f32 %v8366, %v8342
  %v8368 = vadd.f32 %v8367, %v8343
  %v8369 = vadd.f32 %v8368, %v8344
  %v8370 = vadd.f32 %v8369, %v8345
  %v8371 = vadd.f32 %v8370, %v8346
  %v8372 = vadd.f32 %v8371, %v8347
  %v8373 = vadd.f32 %v8372, %v8348
  %v8374 = vadd.f32 %v8373, %v8349
  %v8375 = vadd.f32 %v8374, %v8350
  %8376 = vadd.xlane.f32.xlu0 %v8375
  %v8377 = vpop.xlane.xlu0 %8376
  %v8378 = vsel %vm4183, %v8351, 0.0
  %v8379 = vsel %vm4183, %v8352, 0.0
  %v8380 = vadd.f32 %v8378, %v8379
  %v8381 = vsel %vm4183, %v8353, 0.0
  %v8382 = vadd.f32 %v8380, %v8381
  %v8383 = vsel %vm4183, %v8354, 0.0
  %v8384 = vadd.f32 %v8382, %v8383
  %v8385 = vsel %vm4183, %v8355, 0.0
  %v8386 = vadd.f32 %v8384, %v8385
  %v8387 = vsel %vm4183, %v8356, 0.0
  %v8388 = vadd.f32 %v8386, %v8387
  %v8389 = vsel %vm4183, %v8357, 0.0
  %v8390 = vadd.f32 %v8388, %v8389
  %v8391 = vsel %vm4183, %v8358, 0.0
  %v8392 = vadd.f32 %v8390, %v8391
  %v8393 = vsel %vm4183, %v8359, 0.0
  %v8394 = vadd.f32 %v8392, %v8393
  %v8395 = vsel %vm4183, %v8360, 0.0
  %v8396 = vadd.f32 %v8394, %v8395
  %v8397 = vsel %vm4183, %v8361, 0.0
  %v8398 = vadd.f32 %v8396, %v8397
  %v8399 = vsel %vm4183, %v8362, 0.0
  %v8400 = vadd.f32 %v8398, %v8399
  %v8401 = vsel %vm4183, %v8363, 0.0
  %v8402 = vadd.f32 %v8400, %v8401
  %8403 = vadd.xlane.f32.xlu0 %v8402
  %v8404 = vpop.xlane.xlu0 %8403
  %v8405 = vsel %vm8286, 0.0, %v4081
  %v8406 = vsel %vm8287, 0.0, %v4085
  %v8407 = vsel %vm8288, 0.0, %v4089
  %v8408 = vsel %vm8289, 0.0, %v4093
  %v8409 = vsel %vm8290, 0.0, %v4097
  %v8410 = vsel %vm8291, 0.0, %v4101
  %v8411 = vsel %vm8292, 0.0, %v4105
  %v8412 = vsel %vm8293, 0.0, %v4109
  %v8413 = vsel %vm8294, 0.0, %v4113
  %v8414 = vsel %vm8295, 0.0, %v4117
  %v8415 = vsel %vm8296, 0.0, %v4121
  %v8416 = vsel %vm8297, 0.0, %v4125
  %v8417 = vsel %vm8298, 0.0, %v4129
  %v8418 = vsel %vm8299, 0.0, %v4081
  %v8419 = vsel %vm8300, 0.0, %v4085
  %v8420 = vsel %vm8301, 0.0, %v4089
  %v8421 = vsel %vm8302, 0.0, %v4093
  %v8422 = vsel %vm8303, 0.0, %v4097
  %v8423 = vsel %vm8304, 0.0, %v4101
  %v8424 = vsel %vm8305, 0.0, %v4105
  %v8425 = vsel %vm8306, 0.0, %v4109
  %v8426 = vsel %vm8307, 0.0, %v4113
  %v8427 = vsel %vm8308, 0.0, %v4117
  %v8428 = vsel %vm8309, 0.0, %v4121
  %v8429 = vsel %vm8310, 0.0, %v4125
  %v8430 = vsel %vm8311, 0.0, %v4129
  %v8431 = vadd.f32 %v8405, %v8406
  %v8432 = vadd.f32 %v8431, %v8407
  %v8433 = vadd.f32 %v8432, %v8408
  %v8434 = vadd.f32 %v8433, %v8409
  %v8435 = vadd.f32 %v8434, %v8410
  %v8436 = vadd.f32 %v8435, %v8411
  %v8437 = vadd.f32 %v8436, %v8412
  %v8438 = vadd.f32 %v8437, %v8413
  %v8439 = vadd.f32 %v8438, %v8414
  %v8440 = vadd.f32 %v8439, %v8415
  %v8441 = vadd.f32 %v8440, %v8416
  %v8442 = vadd.f32 %v8441, %v8417
  %8443 = vadd.xlane.f32.xlu0 %v8442
  %v8444 = vpop.xlane.xlu0 %8443
  %v8445 = vsel %vm4183, %v8418, 0.0
  %v8446 = vsel %vm4183, %v8419, 0.0
  %v8447 = vadd.f32 %v8445, %v8446
  %v8448 = vsel %vm4183, %v8420, 0.0
  %v8449 = vadd.f32 %v8447, %v8448
  %v8450 = vsel %vm4183, %v8421, 0.0
  %v8451 = vadd.f32 %v8449, %v8450
  %v8452 = vsel %vm4183, %v8422, 0.0
  %v8453 = vadd.f32 %v8451, %v8452
  %v8454 = vsel %vm4183, %v8423, 0.0
  %v8455 = vadd.f32 %v8453, %v8454
  %v8456 = vsel %vm4183, %v8424, 0.0
  %v8457 = vadd.f32 %v8455, %v8456
  %v8458 = vsel %vm4183, %v8425, 0.0
  %v8459 = vadd.f32 %v8457, %v8458
  %v8460 = vsel %vm4183, %v8426, 0.0
  %v8461 = vadd.f32 %v8459, %v8460
  %v8462 = vsel %vm4183, %v8427, 0.0
  %v8463 = vadd.f32 %v8461, %v8462
  %v8464 = vsel %vm4183, %v8428, 0.0
  %v8465 = vadd.f32 %v8463, %v8464
  %v8466 = vsel %vm4183, %v8429, 0.0
  %v8467 = vadd.f32 %v8465, %v8466
  %v8468 = vsel %vm4183, %v8430, 0.0
  %v8469 = vadd.f32 %v8467, %v8468
  %8470 = vadd.xlane.f32.xlu0 %v8469
  %v8471 = vpop.xlane.xlu0 %8470
  %v8472 = vmul.f32 %v8260, %v4081
  %v8473 = vmul.f32 %v8261, %v4085
  %v8474 = vmul.f32 %v8262, %v4089
  %v8475 = vmul.f32 %v8263, %v4093
  %v8476 = vmul.f32 %v8264, %v4097
  %v8477 = vmul.f32 %v8265, %v4101
  %v8478 = vmul.f32 %v8266, %v4105
  %v8479 = vmul.f32 %v8267, %v4109
  %v8480 = vmul.f32 %v8268, %v4113
  %v8481 = vmul.f32 %v8269, %v4117
  %v8482 = vmul.f32 %v8270, %v4121
  %v8483 = vmul.f32 %v8271, %v4125
  %v8484 = vmul.f32 %v8272, %v4129
  %v8485 = vmul.f32 %v8273, %v4081
  %v8486 = vmul.f32 %v8274, %v4085
  %v8487 = vmul.f32 %v8275, %v4089
  %v8488 = vmul.f32 %v8276, %v4093
  %v8489 = vmul.f32 %v8277, %v4097
  %v8490 = vmul.f32 %v8278, %v4101
  %v8491 = vmul.f32 %v8279, %v4105
  %v8492 = vmul.f32 %v8280, %v4109
  %v8493 = vmul.f32 %v8281, %v4113
  %v8494 = vmul.f32 %v8282, %v4117
  %v8495 = vmul.f32 %v8283, %v4121
  %v8496 = vmul.f32 %v8284, %v4125
  %v8497 = vmul.f32 %v8285, %v4129
  %v8498 = vadd.f32 %v8472, %v8473
  %v8499 = vadd.f32 %v8498, %v8474
  %v8500 = vadd.f32 %v8499, %v8475
  %v8501 = vadd.f32 %v8500, %v8476
  %v8502 = vadd.f32 %v8501, %v8477
  %v8503 = vadd.f32 %v8502, %v8478
  %v8504 = vadd.f32 %v8503, %v8479
  %v8505 = vadd.f32 %v8504, %v8480
  %v8506 = vadd.f32 %v8505, %v8481
  %v8507 = vadd.f32 %v8506, %v8482
  %v8508 = vadd.f32 %v8507, %v8483
  %v8509 = vadd.f32 %v8508, %v8484
  %v8510 = vsel %vm4183, %v8485, 0.0
  %v8511 = vadd.f32 %v8509, %v8510
  %v8512 = vsel %vm4183, %v8486, 0.0
  %v8513 = vadd.f32 %v8511, %v8512
  %v8514 = vsel %vm4183, %v8487, 0.0
  %v8515 = vadd.f32 %v8513, %v8514
  %v8516 = vsel %vm4183, %v8488, 0.0
  %v8517 = vadd.f32 %v8515, %v8516
  %v8518 = vsel %vm4183, %v8489, 0.0
  %v8519 = vadd.f32 %v8517, %v8518
  %v8520 = vsel %vm4183, %v8490, 0.0
  %v8521 = vadd.f32 %v8519, %v8520
  %v8522 = vsel %vm4183, %v8491, 0.0
  %v8523 = vadd.f32 %v8521, %v8522
  %v8524 = vsel %vm4183, %v8492, 0.0
  %v8525 = vadd.f32 %v8523, %v8524
  %v8526 = vsel %vm4183, %v8493, 0.0
  %v8527 = vadd.f32 %v8525, %v8526
  %v8528 = vsel %vm4183, %v8494, 0.0
  %v8529 = vadd.f32 %v8527, %v8528
  %v8530 = vsel %vm4183, %v8495, 0.0
  %v8531 = vadd.f32 %v8529, %v8530
  %v8532 = vsel %vm4183, %v8496, 0.0
  %v8533 = vadd.f32 %v8531, %v8532
  %v8534 = vsel %vm4183, %v8497, 0.0
  %v8535 = vadd.f32 %v8533, %v8534
  %8536 = vadd.xlane.f32.xlu0 %v8535
  %v8537 = vpop.xlane.xlu0 %8536
  %v8538 = vrot.slane %v8537, 4
  %v8539 = vadd.f32 %v8537, %v8538
  %v8540 = vrot.slane %v8539, 2
  %v8541 = vadd.f32 %v8539, %v8540
  %v8542 = vrot.slane %v8541, 1
  %v8543 = vadd.f32 %v8541, %v8542
  %s8544 = vtos %v8543
  %v8545 = vstv %s8544
  %v8546 = vadd.f32 %v4351, %v8545
  %v8547 = vmul.f32 %v4250, %v8546
  %v8548 = vmul.f32 %v4277, %v8546
  %v8549 = vadd.f32 %v4182, %v8547
  %v8550 = vadd.f32 %v4210, %v8548
  %v8551 = vmul.f32 %v8549, 0.0007936508
  %v8552 = vmul.f32 %v8550, 0.0007936508
  %vm8553 = vcmask 7168
  %8554 = vst.msk [vmem:[%s4] sm:$0xff] %vm8553, %v8551
  %vm8555 = vcmask 3072
  %8556 = vst.msk [vmem:[%s4 + $0x8] sm:$0xf] %vm8555, %v8552
  %v8557 = vmul.f32 %v8444, %v8546
  %v8558 = vmul.f32 %v8471, %v8546
  %v8559 = vadd.f32 %v8377, %v8557
  %v8560 = vadd.f32 %v8404, %v8558
  %v8561 = vmul.f32 %v8559, 0.0007936508
  %v8562 = vmul.f32 %v8560, 0.0007936508
  %s8563 = scalar_lea.vmem %s4, 16
  %8564 = vst.msk [vmem:[%s8563] sm:$0xff] %vm8553, %v8561
  %8565 = vst.msk [vmem:[%s8563 + $0x8] sm:$0xf] %vm8555, %v8562
  // Predicated region
  $region18: #{model_forward_impl.1} parent=0 // pred_check
    _
  $region19: #{model_forward_impl.1} parent=0 // pred_check_branch
    %8567 = sbr.rel (0) target = $region21
  $region20: #{model_forward_impl.1} parent=0 // pred_region
    _
  $region21: #{model_forward_impl.1} parent=0 // pred_fallthru
    _
  // Predicated region
  $region22: #{model_forward_impl.1} parent=0 // pred_check
    _
  $region23: #{model_forward_impl.1} parent=0 // pred_check_branch
    %8569 = sbr.rel (0) target = $region25
  $region24: #{model_forward_impl.1} parent=0 // pred_region
    _
  $region25: #{model_forward_impl.1} parent=0 // pred_fallthru
    _

</llo_original>
